<compile_context>
chip_gen: v7x
topology: tpu7x:2x2x1
jax: 0.10.0
libtpu: 0.0.40
codegen_flags: <defaults>
</compile_context>

<pallas_src>
import functools
import math

import jax
import jax.numpy as jnp
from jax import lax
from jax.experimental import pallas as pl
from jax.experimental.pallas import tpu as pltpu

_VMEM_LIMIT = 48 * 1024 * 1024        # explicit cap, under v7x physical (64 MiB/TC)


def _pick_tile(dim, pref, align):
    """Largest tile <= pref that exactly divides dim (multiple of align), else full dim."""
    if dim <= pref:
        return dim
    t = (pref // align) * align
    while t >= align:
        if dim % t == 0:
            return t
        t -= align
    return dim


def _sigmoid(x):
    return 1.0 / (1.0 + jnp.exp(-x))


def _layer_norm(x, g, b):
    mu = jnp.mean(x, axis=-1, keepdims=True)
    var = jnp.mean(jnp.square(x - mu), axis=-1, keepdims=True)
    return (x - mu) * lax.rsqrt(var + 1e-5) * g + b


# ----------------------------------------------------------------------------
# Tiled fused Linear (+ReLU) (+LayerNorm-out), optional LayerNorm on the input.
# Two kernels: a K-tiled path with an f32 VMEM accumulator, and a single-K fast
# path with no scratch (used whenever K fits one block -- the common case here).
# ----------------------------------------------------------------------------
def _fused_linear_acc_kernel(*refs, act, ln_in, ln_out):
    it = iter(refs)
    x_ref, w_ref, b_ref = next(it), next(it), next(it)
    gin_ref = bin_ref = gout_ref = bout_ref = None
    if ln_in:
        gin_ref, bin_ref = next(it), next(it)
    if ln_out:
        gout_ref, bout_ref = next(it), next(it)
    o_ref, acc_ref = next(it), next(it)

    k = pl.program_id(2)

    @pl.when(k == 0)
    def _init():
        acc_ref[...] = jnp.zeros_like(acc_ref)

    x = x_ref[...]
    if ln_in:                                           # statistics in f32 (v5e-safe)
        x = _layer_norm(x.astype(jnp.float32), gin_ref[...], bin_ref[...])
    acc_ref[...] += jnp.dot(x.astype(jnp.bfloat16), w_ref[...],
                            preferred_element_type=jnp.float32)

    @pl.when(k == pl.num_programs(2) - 1)
    def _finalize():
        y = acc_ref[...] + b_ref[...]
        if act:
            y = jnp.maximum(y, 0.0)                     # config.activation == nn.ReLU
        if ln_out:
            y = _layer_norm(y, gout_ref[...], bout_ref[...])
        o_ref[...] = y.astype(o_ref.dtype)


def _fused_linear_single_kernel(*refs, act, ln_in, ln_out):
    it = iter(refs)
    x_ref, w_ref, b_ref = next(it), next(it), next(it)
    gin_ref = bin_ref = gout_ref = bout_ref = None
    if ln_in:
        gin_ref, bin_ref = next(it), next(it)
    if ln_out:
        gout_ref, bout_ref = next(it), next(it)
    o_ref = next(it)

    x = x_ref[...]
    if ln_in:
        x = _layer_norm(x.astype(jnp.float32), gin_ref[...], bin_ref[...])
    y = jnp.dot(x.astype(jnp.bfloat16), w_ref[...],
                preferred_element_type=jnp.float32) + b_ref[...]
    if act:
        y = jnp.maximum(y, 0.0)
    if ln_out:
        y = _layer_norm(y, gout_ref[...], bout_ref[...])
    o_ref[...] = y.astype(o_ref.dtype)


def fused_linear(x, w, b, *, act=False,
                 ln_in=False, gin=None, bin_=None,
                 ln_out=False, gout=None, bout=None):
    """y = LN_out(ReLU(LN_in(x) @ w + b)) with optional pieces. x: (M, K), w: (K, N)."""
    M, K = x.shape
    N = w.shape[1]
    tm = _pick_tile(M, 256, 8)
    tk = K if ln_in else _pick_tile(K, 1024, 128)       # LN over K needs the full row
    tn = N if ln_out else _pick_tile(N, 1024, 128)      # LN over N needs the full row
    gk = K // tk

    x_op = x.astype(jnp.float32) if ln_in else x.astype(jnp.bfloat16)
    b_op = b.reshape(1, N).astype(jnp.float32)

    if gk == 1:
        # Fast path: single K block, no accumulator scratch, no K grid axis.
        operands = [x_op, w.astype(jnp.bfloat16), b_op]
        in_specs = [
            pl.BlockSpec((tm, K), lambda i, j: (i, 0)),
            pl.BlockSpec((K, tn), lambda i, j: (0, j)),
            pl.BlockSpec((1, tn), lambda i, j: (0, j)),
        ]
        if ln_in:
            operands += [gin.reshape(1, K).astype(jnp.float32),
                         bin_.reshape(1, K).astype(jnp.float32)]
            in_specs += [pl.BlockSpec((1, K), lambda i, j: (0, 0))] * 2
        if ln_out:
            operands += [gout.reshape(1, N).astype(jnp.float32),
                         bout.reshape(1, N).astype(jnp.float32)]
            in_specs += [pl.BlockSpec((1, tn), lambda i, j: (0, j))] * 2
        kernel = functools.partial(_fused_linear_single_kernel,
                                   act=act, ln_in=ln_in, ln_out=ln_out)
        return pl.pallas_call(
            kernel,
            grid=(M // tm, N // tn),
            in_specs=in_specs,
            out_specs=pl.BlockSpec((tm, tn), lambda i, j: (i, j)),
            out_shape=jax.ShapeDtypeStruct((M, N), jnp.float32),
            compiler_params=pltpu.CompilerParams(
                dimension_semantics=("parallel", "parallel"),
                vmem_limit_bytes=_VMEM_LIMIT),
        )(*operands)

    operands = [x_op, w.astype(jnp.bfloat16), b_op]
    in_specs = [
        pl.BlockSpec((tm, tk), lambda i, j, k: (i, k)),
        pl.BlockSpec((tk, tn), lambda i, j, k: (k, j)),
        pl.BlockSpec((1, tn), lambda i, j, k: (0, j)),
    ]
    if ln_in:
        operands += [gin.reshape(1, K).astype(jnp.float32),
                     bin_.reshape(1, K).astype(jnp.float32)]
        in_specs += [pl.BlockSpec((1, tk), lambda i, j, k: (0, k))] * 2
    if ln_out:
        operands += [gout.reshape(1, N).astype(jnp.float32),
                     bout.reshape(1, N).astype(jnp.float32)]
        in_specs += [pl.BlockSpec((1, tn), lambda i, j, k: (0, j))] * 2

    kernel = functools.partial(_fused_linear_acc_kernel,
                               act=act, ln_in=ln_in, ln_out=ln_out)
    return pl.pallas_call(
        kernel,
        grid=(M // tm, N // tn, gk),
        in_specs=in_specs,
        out_specs=pl.BlockSpec((tm, tn), lambda i, j, k: (i, j)),
        out_shape=jax.ShapeDtypeStruct((M, N), jnp.float32),
        scratch_shapes=[pltpu.VMEM((tm, tn), jnp.float32)],
        compiler_params=pltpu.CompilerParams(
            dimension_semantics=("parallel", "parallel", "arbitrary"),
            vmem_limit_bytes=_VMEM_LIMIT),
    )(*operands)


# ----------------------------------------------------------------------------
# Grouped Linear(+ReLU)(+LN): one pallas_call for G layers with identical (K, N).
# ----------------------------------------------------------------------------
def _grouped_linear_kernel(*refs, act, ln):
    it = iter(refs)
    x_ref, w_ref, b_ref = next(it), next(it), next(it)
    g_ref = be_ref = None
    if ln:
        g_ref, be_ref = next(it), next(it)
    o_ref = next(it)

    y = jnp.dot(x_ref[0], w_ref[0], preferred_element_type=jnp.float32) + b_ref[0]
    if act:
        y = jnp.maximum(y, 0.0)
    if ln:
        y = _layer_norm(y, g_ref[0], be_ref[0])
    o_ref[0] = y.astype(o_ref.dtype)


def fused_linear_grouped(xs, ps, *, act=False, ln=False):
    """Batch G same-shape Linear(+ReLU)(+LN) layers into one call. Returns (G, M, N)."""
    G = len(xs)
    M, K = xs[0].shape
    N = ps[0]['w'].shape[1]
    X = jnp.stack([x.astype(jnp.bfloat16) for x in xs], axis=0)
    W = jnp.stack([p['w'].astype(jnp.bfloat16) for p in ps], axis=0)
    Bv = jnp.stack([p['b'].reshape(1, N).astype(jnp.float32) for p in ps], axis=0)
    operands = [X, W, Bv]
    in_specs = [
        pl.BlockSpec((1, M, K), lambda g: (g, 0, 0)),
        pl.BlockSpec((1, K, N), lambda g: (g, 0, 0)),
        pl.BlockSpec((1, 1, N), lambda g: (g, 0, 0)),
    ]
    if ln:
        Gm = jnp.stack([p['g'].reshape(1, N).astype(jnp.float32) for p in ps], axis=0)
        Be = jnp.stack([p['be'].reshape(1, N).astype(jnp.float32) for p in ps], axis=0)
        operands += [Gm, Be]
        in_specs += [pl.BlockSpec((1, 1, N), lambda g: (g, 0, 0))] * 2

    kernel = functools.partial(_grouped_linear_kernel, act=act, ln=ln)
    return pl.pallas_call(
        kernel,
        grid=(G,),
        in_specs=in_specs,
        out_specs=pl.BlockSpec((1, M, N), lambda g: (g, 0, 0)),
        out_shape=jax.ShapeDtypeStruct((G, M, N), jnp.float32),
        compiler_params=pltpu.CompilerParams(
            dimension_semantics=("parallel",),
            vmem_limit_bytes=_VMEM_LIMIT),
    )(*operands)


# ----------------------------------------------------------------------------
# Masked mean pooling over the sequence axis (BERT sentence pooling), tiled over batch.
# ----------------------------------------------------------------------------
def _masked_mean_kernel(x_ref, m_ref, o_ref):
    x = x_ref[...]                       # (tb, S, D)
    m = m_ref[...]                       # (tb, S, 1)
    num = jnp.sum(x * m, axis=1)
    den = jnp.sum(m, axis=1)
    # Guard all-padding rows (PyTorch would emit NaN); valid rows unchanged (den >= 1).
    o_ref[...] = num / jnp.maximum(den, 1.0)


def masked_mean(x, mask):
    B, S, D = x.shape
    tb = B if (B <= 8 or B % 8 != 0) else 8
    return pl.pallas_call(
        _masked_mean_kernel,
        grid=(B // tb,),
        in_specs=[pl.BlockSpec((tb, S, D), lambda i: (i, 0, 0)),
                  pl.BlockSpec((tb, S, 1), lambda i: (i, 0, 0))],
        out_specs=pl.BlockSpec((tb, D), lambda i: (i, 0)),
        out_shape=jax.ShapeDtypeStruct((B, D), jnp.float32),
        compiler_params=pltpu.CompilerParams(
            dimension_semantics=("parallel",),
            vmem_limit_bytes=_VMEM_LIMIT),
    )(x.astype(jnp.float32), mask.astype(jnp.float32).reshape(B, S, 1))


# ----------------------------------------------------------------------------
# Bidirectional masked LSTM: hoisted input projection + Pallas time-scan kernel.
# ----------------------------------------------------------------------------
def _bilstm_scan_kernel(xg_f_ref, xg_b_ref, m_f_ref, m_b_ref, whh_f_ref, whh_b_ref,
                        hout_f_ref, hout_b_ref, hfin_f_ref, hfin_b_ref,
                        h_f, c_f, h_b, c_b, *, hidden):
    s = pl.program_id(0)
    last = pl.num_programs(0) - 1

    @pl.when(s == 0)
    def _init():
        for ref in (h_f, c_f, h_b, c_b):
            ref[...] = jnp.zeros_like(ref)

    def direction(xg, m, whh, h_sc, c_sc, hout_ref, hfin_ref):
        h = h_sc[...]
        c = c_sc[...]
        # bf16 MXU operands, f32 accumulation; gate math stays f32.
        gates = xg + jnp.dot(h.astype(jnp.bfloat16), whh,
                             preferred_element_type=jnp.float32)
        i = _sigmoid(gates[:, 0 * hidden:1 * hidden])      # PyTorch gate order: i, f, g, o
        f = _sigmoid(gates[:, 1 * hidden:2 * hidden])
        g = jnp.tanh(gates[:, 2 * hidden:3 * hidden])
        o = _sigmoid(gates[:, 3 * hidden:4 * hidden])
        c_new = f * c + i * g
        h_new = o * jnp.tanh(c_new)
        hout_ref[0] = (m * h_new).astype(hout_ref.dtype)    # pad positions -> 0 (pad_packed)
        h_upd = m * h_new + (1.0 - m) * h                   # hold carry at padding
        c_upd = m * c_new + (1.0 - m) * c
        h_sc[...] = h_upd
        c_sc[...] = c_upd

        @pl.when(s == last)
        def _final():
            hfin_ref[...] = h_upd.astype(hfin_ref.dtype)

    direction(xg_f_ref[0], m_f_ref[0], whh_f_ref[...], h_f, c_f, hout_f_ref, hfin_f_ref)
    direction(xg_b_ref[0], m_b_ref[0], whh_b_ref[...], h_b, c_b, hout_b_ref, hfin_b_ref)


def _bilstm_scan(xg_f, xg_b, mask, whh_f, whh_b, hidden):
    S, B, _ = xg_f.shape
    H = hidden
    kernel = functools.partial(_bilstm_scan_kernel, hidden=H)
    outs = pl.pallas_call(
        kernel,
        grid=(S,),
        in_specs=[
            pl.BlockSpec((1, B, 4 * H), lambda s: (s, 0, 0)),
            pl.BlockSpec((1, B, 4 * H), lambda s: (S - 1 - s, 0, 0)),
            pl.BlockSpec((1, B, 1), lambda s: (s, 0, 0)),
            pl.BlockSpec((1, B, 1), lambda s: (S - 1 - s, 0, 0)),
            pl.BlockSpec((H, 4 * H), lambda s: (0, 0)),       # constant index -> VMEM-resident
            pl.BlockSpec((H, 4 * H), lambda s: (0, 0)),
        ],
        out_specs=[
            pl.BlockSpec((1, B, H), lambda s: (s, 0, 0)),
            pl.BlockSpec((1, B, H), lambda s: (S - 1 - s, 0, 0)),
            pl.BlockSpec((B, H), lambda s: (0, 0)),
            pl.BlockSpec((B, H), lambda s: (0, 0)),
        ],
        out_shape=[
            jax.ShapeDtypeStruct((S, B, H), jnp.float32),
            jax.ShapeDtypeStruct((S, B, H), jnp.float32),
            jax.ShapeDtypeStruct((B, H), jnp.float32),
            jax.ShapeDtypeStruct((B, H), jnp.float32),
        ],
        scratch_shapes=[pltpu.VMEM((B, H), jnp.float32)] * 4,
        compiler_params=pltpu.CompilerParams(
            dimension_semantics=("arbitrary",),
            vmem_limit_bytes=_VMEM_LIMIT),
    )(xg_f, xg_b, mask, mask, whh_f, whh_b)
    hout_f, hout_b, hfin_f, hfin_b = outs
    return jnp.concatenate([hout_f, hout_b], axis=-1), hfin_f, hfin_b


def bilstm(x_seq, lengths, p, ln_gamma=None, ln_beta=None):
    """x_seq: (S, B, D). Input projection (both directions) hoisted into one big matmul;
    the optional inter-layer LayerNorm is fused into it (ln_in)."""
    S, B, D = x_seq.shape
    H = p['fwd']['Whh'].shape[1]
    w_in = jnp.concatenate([p['fwd']['Wih'].T, p['bwd']['Wih'].T], axis=1)        # (D, 8H)
    b_in = jnp.concatenate([p['fwd']['bih'] + p['fwd']['bhh'],
                            p['bwd']['bih'] + p['bwd']['bhh']], axis=0)            # (8H,)
    xg = fused_linear(x_seq.reshape(S * B, D), w_in, b_in,
                      ln_in=ln_gamma is not None, gin=ln_gamma, bin_=ln_beta)
    xg = xg.reshape(S, B, 8 * H)
    mask = (jnp.arange(S)[:, None] < lengths[None, :]).astype(jnp.float32)[:, :, None]
    return _bilstm_scan(xg[..., :4 * H], xg[..., 4 * H:], mask,
                        p['fwd']['Whh'].T.astype(jnp.bfloat16),
                        p['bwd']['Whh'].T.astype(jnp.bfloat16), H)


def extract_features(seq, lengths, rnn1_p, rnn2_p, ln_g, ln_b):
    out1, hf1, hb1 = bilstm(seq, lengths, rnn1_p)
    final_h1 = jnp.stack([hf1, hb1], axis=0)                                       # (2, B, H)
    # The inter-layer LayerNorm is fused into rnn2's hoisted input projection.
    _, hf2, hb2 = bilstm(out1, lengths, rnn2_p, ln_gamma=ln_g, ln_beta=ln_b)
    final_h2 = jnp.stack([hf2, hb2], axis=0)
    return final_h1, final_h2


# ----------------------------------------------------------------------------
# fusion3: 3x Conv1d(k=3, p=1) + ReLU + global avg pool, all batches in one call.
# ----------------------------------------------------------------------------
def _fusion3_kernel(x_ref, w1_ref, b1_ref, w2_ref, b2_ref, w3_ref, b3_ref, o_ref, *, L):
    Bn = x_ref.shape[0]

    def conv3(h_pad, w, b):
        # Conv1d(kernel=3, stride=1, padding=1) as three shifted matmuls on a padded buffer.
        y = b                                                          # (1, Cout), broadcasts
        for kk in range(3):
            sl = h_pad[:, kk:kk + L, :].reshape(Bn * L, -1)
            y = y + jnp.dot(sl.astype(jnp.bfloat16), w[kk],
                            preferred_element_type=jnp.float32)
        return y                                                       # (Bn*L, Cout)

    h = jnp.maximum(conv3(x_ref[...], w1_ref[...], b1_ref[...]), 0.0)
    c1 = h.shape[-1]
    zpad = jnp.zeros((Bn, 1, c1), jnp.float32)
    h = jnp.maximum(conv3(jnp.concatenate([zpad, h.reshape(Bn, L, c1), zpad], axis=1),
                          w2_ref[...], b2_ref[...]), 0.0)              # Dropout -> identity
    hp = jnp.concatenate([zpad, h.reshape(Bn, L, c1), zpad], axis=1)

    # Final 1-output-channel conv as a VPU weighted sum (avoids an N=1 MXU matmul),
    # then AdaptiveAvgPool1d(1).
    w3 = w3_ref[...]                                                   # (3, C1p, 1) f32
    y = jnp.zeros((Bn, L), jnp.float32)
    for kk in range(3):
        y = y + jnp.sum(hp[:, kk:kk + L, :] * w3[kk, :, 0], axis=-1)
    pooled = jnp.mean(y, axis=1) + b3_ref[0, 0]                        # (Bn,)
    o_ref[...] = pooled.reshape(1, Bn)                                 # lane-dense slab


def _round_lanes(c):
    return ((c + 127) // 128) * 128


def fusion3_call(x_nlc, p):
    """fusion3 conv stack. x_nlc: (B, L, C). Returns (B, 1).
    Channels are zero-padded to 128 lanes (exact: padded weights are zero)."""
    B, L, C = x_nlc.shape
    C1 = p['w1'].shape[2]
    Cp, C1p = _round_lanes(C), _round_lanes(C1)
    x = jnp.pad(x_nlc.astype(jnp.float32), ((0, 0), (1, 1), (0, Cp - C)))
    w1 = jnp.pad(p['w1'], ((0, 0), (0, Cp - C), (0, C1p - C1))).astype(jnp.bfloat16)
    b1 = jnp.pad(p['b1'], ((0, 0), (0, C1p - C1)))
    w2 = jnp.pad(p['w2'], ((0, 0), (0, C1p - C1), (0, C1p - C1))).astype(jnp.bfloat16)
    b2 = jnp.pad(p['b2'], ((0, 0), (0, C1p - C1)))
    w3 = jnp.pad(p['w3'], ((0, 0), (0, C1p - C1), (0, 0)))             # f32 for the VPU sum
    b3 = p['b3']
    out = pl.pallas_call(
        functools.partial(_fusion3_kernel, L=L),
        out_shape=jax.ShapeDtypeStruct((1, B), jnp.float32),
        compiler_params=pltpu.CompilerParams(vmem_limit_bytes=_VMEM_LIMIT),
    )(x, w1, b1, w2, b2, w3, b3)
    return out.reshape(B, 1)


# ----------------------------------------------------------------------------
# AOTN forward
# ----------------------------------------------------------------------------
def shared_modaties(params, t_feature, v_feature, a_feature):
    B = t_feature.shape[0]

    t2 = jnp.concatenate([t_feature, t_feature], axis=0)   # == stack([x, x]).reshape(2B, .)
    v2 = jnp.concatenate([v_feature, v_feature], axis=0)
    a2 = jnp.concatenate([a_feature, a_feature], axis=0)

    # TODO(synk): MyTransformer is not defined in the reference source; each cross-modal
    # encoder stream is a shape-preserving Linear+ReLU+LayerNorm stand-in.  Streams with
    # identical (K, N) are batched into a single grouped pallas_call.
    A = fused_linear_grouped([a2, a2], [params['tf_priv_a_1'], params['tf_priv_t_2']],
                             act=True, ln=True)            # A_1, A_2
    V = fused_linear_grouped([v2, v2], [params['tf_priv_v_1'], params['tf_priv_a_2']],
                             act=True, ln=True)            # V_1, V_2
    T = fused_linear_grouped([t2, t2], [params['tf_priv_t_1'], params['tf_priv_v_2']],
                             act=True, ln=True)            # T_1, T_2

    private_a = ((A[0] + A[1]) / 2.0).reshape(2, B, -1)
    private_v = ((V[0] + V[1]) / 2.0).reshape(2, B, -1)
    private_t = ((T[0] + T[1]) / 2.0).reshape(2, B, -1)

    pt, pv, pa = params['project_t'], params['project_v'], params['project_a']
    t_proj = fused_linear(t_feature, pt['w'], pt['b'], act=True,
                          ln_out=True, gout=pt['g'], bout=pt['be'])
    if v_feature.shape[1] == a_feature.shape[1]:
        va = fused_linear_grouped([v_feature, a_feature], [pv, pa], act=True, ln=True)
        v_proj, a_proj = va[0], va[1]
    else:
        v_proj = fused_linear(v_feature, pv['w'], pv['b'], act=True,
                              ln_out=True, gout=pv['g'], bout=pv['be'])
        a_proj = fused_linear(a_feature, pa['w'], pa['b'], act=True,
                              ln_out=True, gout=pa['g'], bout=pa['be'])

    half = B // 2
    t_mix = jnp.concatenate([t_proj[:half], v_proj[:half]], axis=0)
    v_mix = jnp.concatenate([v_proj[:half], a_proj[:half]], axis=0)
    a_mix = jnp.concatenate([a_proj[:half], t_proj[:half]], axis=0)

    share = fused_linear_grouped(
        [jnp.concatenate([t_mix, t_proj], axis=0),
         jnp.concatenate([v_mix, v_proj], axis=0),
         jnp.concatenate([a_mix, a_proj], axis=0)],
        [params['tf_share_t'], params['tf_share_v'], params['tf_share_a']],
        act=True, ln=True)
    share_T = share[0].reshape(2, B, -1)
    share_V = share[1].reshape(2, B, -1)
    share_A = share[2].reshape(2, B, -1)
    return private_a, private_v, private_t, share_T, share_V, share_A


def aotn_forward(params, visual, acoustic, lengths, bert_sent, bert_sent_type,
                 bert_sent_mask):
    del bert_sent_type                       # unused by the stand-in text encoder
    B = lengths.shape[0]
    H = params['fc_t']['w'].shape[1]

    # TODO(synk): pretrained bert-base-uncased cannot be loaded in-script; replaced by a
    # deterministic embedding lookup producing (B, Sb, 768) hidden states.
    bert_hidden = params['bert_emb'][bert_sent]                       # (B, Sb, 768)
    t_feature = masked_mean(bert_hidden, bert_sent_mask)              # (B, 768)

    f1v, f2v = extract_features(visual, lengths, params['vrnn1'], params['vrnn2'],
                                params['vln_g'], params['vln_b'])
    video_feature = jnp.concatenate([f1v, f2v], axis=2).transpose(1, 0, 2).reshape(B, -1)

    f1a, f2a = extract_features(acoustic, lengths, params['arnn1'], params['arnn2'],
                                params['aln_g'], params['aln_b'])
    audio_feature = jnp.concatenate([f1a, f2a], axis=2).transpose(1, 0, 2).reshape(B, -1)

    priv_a, priv_v, priv_t, share_T, share_V, share_A = shared_modaties(
        params, t_feature, video_feature, audio_feature)

    pa2 = priv_a.reshape(2 * B, -1)
    pv2 = priv_v.reshape(2 * B, -1)
    pt2 = priv_t.reshape(2 * B, -1)
    if pa2.shape[1] == pv2.shape[1]:
        av = fused_linear_grouped([pa2, pv2], [params['fc_a'], params['fc_v']])
        priv_a = av[0].reshape(2, B, H)
        priv_v = av[1].reshape(2, B, H)
    else:
        priv_a = fused_linear(pa2, params['fc_a']['w'], params['fc_a']['b']).reshape(2, B, H)
        priv_v = fused_linear(pv2, params['fc_v']['w'], params['fc_v']['b']).reshape(2, B, H)
    priv_t = fused_linear(pt2, params['fc_t']['w'], params['fc_t']['b']).reshape(2, B, H)

    def btd(x):                                   # (2, B, H) -> (B, 2, H)
        return jnp.transpose(x, (1, 0, 2))

    all_modal = jnp.concatenate(
        [btd(priv_a), btd(priv_v), btd(priv_t), params['cls_token'],
         btd(share_T), btd(share_V), btd(share_A), params['cls_token']], axis=1)
    all_modal = all_modal + params['pos_embed']                       # (B, 14, H)

    # PyTorch: fusion3(all_modal.permute(0, 2, 1)) — our kernel consumes NLC directly.
    return fusion3_call(all_modal, params['fusion3'])                 # (B, 1)


# ----------------------------------------------------------------------------
# Deterministic parameter initialization
# ----------------------------------------------------------------------------
def _dense(key, fan_in, fan_out):
    k1, k2 = jax.random.split(key)
    bound = 1.0 / math.sqrt(fan_in)
    w = jax.random.uniform(k1, (fan_in, fan_out), jnp.float32, -bound, bound)
    b = jax.random.uniform(k2, (fan_out,), jnp.float32, -bound, bound)
    return w, b


def _dense_ln(key, fan_in, fan_out):
    w, b = _dense(key, fan_in, fan_out)
    return dict(w=w, b=b, g=jnp.ones((fan_out,), jnp.float32),
                be=jnp.zeros((fan_out,), jnp.float32))


def _lstm_dir(key, input_size, hidden):
    k1, k2, k3, k4 = jax.random.split(key, 4)
    bound = 1.0 / math.sqrt(hidden)
    u = lambda k, shape: jax.random.uniform(k, shape, jnp.float32, -bound, bound)
    return dict(Wih=u(k1, (4 * hidden, input_size)), Whh=u(k2, (4 * hidden, hidden)),
                bih=u(k3, (4 * hidden,)), bhh=u(k4, (4 * hidden,)))


def _bilstm_init(key, input_size, hidden):
    kf, kb = jax.random.split(key)
    return dict(fwd=_lstm_dir(kf, input_size, hidden),
                bwd=_lstm_dir(kb, input_size, hidden))


def init_params(key, *, batch_size, visual_size, acoustic_size, hidden_size, vocab=30):
    ks = iter(jax.random.split(key, 40))
    v4, a4 = 4 * visual_size, 4 * acoustic_size
    p = {}
    p['bert_emb'] = 0.02 * jax.random.normal(next(ks), (vocab, 768), jnp.float32)

    p['vrnn1'] = _bilstm_init(next(ks), visual_size, visual_size)
    p['vrnn2'] = _bilstm_init(next(ks), 2 * visual_size, visual_size)
    p['arnn1'] = _bilstm_init(next(ks), acoustic_size, acoustic_size)
    p['arnn2'] = _bilstm_init(next(ks), 2 * acoustic_size, acoustic_size)
    p['vln_g'] = jnp.ones((2 * visual_size,), jnp.float32)
    p['vln_b'] = jnp.zeros((2 * visual_size,), jnp.float32)
    p['aln_g'] = jnp.ones((2 * acoustic_size,), jnp.float32)
    p['aln_b'] = jnp.zeros((2 * acoustic_size,), jnp.float32)

    p['project_t'] = _dense_ln(next(ks), 768, hidden_size)
    p['project_v'] = _dense_ln(next(ks), v4, hidden_size)
    p['project_a'] = _dense_ln(next(ks), a4, hidden_size)

    p['tf_priv_a_1'] = _dense_ln(next(ks), a4, a4)
    p['tf_priv_a_2'] = _dense_ln(next(ks), v4, v4)
    p['tf_priv_v_1'] = _dense_ln(next(ks), v4, v4)
    p['tf_priv_v_2'] = _dense_ln(next(ks), 768, 768)
    p['tf_priv_t_1'] = _dense_ln(next(ks), 768, 768)
    p['tf_priv_t_2'] = _dense_ln(next(ks), a4, a4)
    p['tf_share_t'] = _dense_ln(next(ks), hidden_size, hidden_size)
    p['tf_share_v'] = _dense_ln(next(ks), hidden_size, hidden_size)
    p['tf_share_a'] = _dense_ln(next(ks), hidden_size, hidden_size)

    wa, ba = _dense(next(ks), a4, hidden_size)
    wv, bv = _dense(next(ks), v4, hidden_size)
    wt, bt = _dense(next(ks), 768, hidden_size)
    p['fc_a'] = dict(w=wa, b=ba)
    p['fc_v'] = dict(w=wv, b=bv)
    p['fc_t'] = dict(w=wt, b=bt)

    C, C1 = hidden_size, hidden_size // 2

    def conv_w(k, cin, cout):
        bound = 1.0 / math.sqrt(cin * 3)
        k1, k2 = jax.random.split(k)
        return (jax.random.uniform(k1, (3, cin, cout), jnp.float32, -bound, bound),
                jax.random.uniform(k2, (1, cout), jnp.float32, -bound, bound))

    w1, b1 = conv_w(next(ks), C, C1)
    w2, b2 = conv_w(next(ks), C1, C1)
    w3, b3 = conv_w(next(ks), C1, 1)
    p['fusion3'] = dict(w1=w1, b1=b1, w2=w2, b2=b2, w3=w3, b3=b3)

    p['cls_token'] = jnp.zeros((batch_size, 1, hidden_size), jnp.float32)
    p['pos_embed'] = jnp.zeros((batch_size, 12 + 2, hidden_size), jnp.float32)
    return p


# ----------------------------------------------------------------------------
# Demo
# ----------------------------------------------------------------------------
if __name__ == "__main__":
    B, S, SB = 2, 8, 8
    VISUAL, ACOUSTIC, HIDDEN = 16, 16, 32

    key = jax.random.PRNGKey(0)
    kp, kv, ka, kb = jax.random.split(key, 4)
    params = init_params(kp, batch_size=B, visual_size=VISUAL,
                         acoustic_size=ACOUSTIC, hidden_size=HIDDEN)

    visual = jax.random.normal(kv, (S, B, VISUAL), jnp.float32)      # (seq, batch, feat)
    acoustic = jax.random.normal(ka, (S, B, ACOUSTIC), jnp.float32)
    lengths = jnp.array([8, 6], dtype=jnp.int32)                     # sorted descending
    bert_sent = jax.random.randint(kb, (B, SB), 0, 30, dtype=jnp.int32)
    bert_sent_type = jnp.zeros((B, SB), jnp.int32)
    bert_sent_mask = jnp.array([[1] * 8, [1] * 5 + [0] * 3], dtype=jnp.float32)

    fwd = jax.jit(aotn_forward)
    out = fwd(params, visual, acoustic, lengths, bert_sent, bert_sent_type,
              bert_sent_mask)
    out = jax.block_until_ready(out)
    assert out.shape == (B, 1) and bool(jnp.all(jnp.isfinite(out)))
    print("KERNEL_OK")
</pallas_src>

<mosaic_0001>
module attributes {stable_mosaic.version = 11 : i64} {
  func.func @_fused_linear_single_kernel(%arg0: i32, %arg1: i32, %arg2: memref<16x16xbf16, #tpu.memory_space<vmem>>, %arg3: memref<16x128xbf16, #tpu.memory_space<vmem>>, %arg4: memref<1x128xf32, #tpu.memory_space<vmem>>, %arg5: memref<16x128xf32, #tpu.memory_space<vmem>>) attributes {dimension_semantics = [#tpu.dimension_semantics<parallel>, #tpu.dimension_semantics<parallel>], iteration_bounds = array<i64: 1, 1>, scalar_prefetch = 0 : i64, scratch_operands = 0 : i64, tpu.core_type = #tpu.core_type<tc>, window_params = [{transform_indices = @transform_0, window_bounds = array<i64: 16, 16>}, {transform_indices = @transform_1, window_bounds = array<i64: 16, 128>}, {transform_indices = @transform_2, window_bounds = array<i64: 1, 128>}, {transform_indices = @transform_3, window_bounds = array<i64: 16, 128>}]} {
    %c0 = arith.constant 0 : index
    %c0_0 = arith.constant 0 : index
    %0 = vector.load %arg2[%c0, %c0_0] : memref<16x16xbf16, #tpu.memory_space<vmem>>, vector<16x16xbf16>
    %c0_1 = arith.constant 0 : index
    %c0_2 = arith.constant 0 : index
    %1 = vector.load %arg3[%c0_1, %c0_2] : memref<16x128xbf16, #tpu.memory_space<vmem>>, vector<16x128xbf16>
    %cst = arith.constant dense<0.000000e+00> : vector<16x128xf32>
    %2 = tpu.matmul %0, %1, %cst {dimension_numbers = #tpu.dot_dimension_numbers<[1], [0], [0], [1], [0, 0, 1, 1], [], []>} : vector<16x16xbf16>, vector<16x128xbf16>, vector<16x128xf32> -> vector<16x128xf32>
    %c0_3 = arith.constant 0 : index
    %c0_4 = arith.constant 0 : index
    %3 = vector.load %arg4[%c0_3, %c0_4] : memref<1x128xf32, #tpu.memory_space<vmem>>, vector<1x128xf32>
    %4 = vector.broadcast %3 : vector<1x128xf32> to vector<16x128xf32>
    %5 = arith.addf %2, %4 : vector<16x128xf32>
    %c0_5 = arith.constant 0 : index
    %c0_6 = arith.constant 0 : index
    %6 = vector.load %arg5[%c0_5, %c0_6] : memref<16x128xf32, #tpu.memory_space<vmem>>, vector<16x128xf32>
    tpu.vector_store %arg5[%c0_5, %c0_6], %5 {strides = array<i32>} : memref<16x128xf32, #tpu.memory_space<vmem>>, vector<16x128xf32>,
    return
  }
  func.func @transform_0(%arg0: i32, %arg1: i32) -> (i32, i32) {
    %c0_i32 = arith.constant 0 : i32
    %c0_i32_0 = arith.constant 0 : i32
    return %arg0, %c0_i32 : i32, i32
  }
  func.func @transform_1(%arg0: i32, %arg1: i32) -> (i32, i32) {
    %c0_i32 = arith.constant 0 : i32
    %c0_i32_0 = arith.constant 0 : i32
    return %c0_i32, %arg1 : i32, i32
  }
  func.func @transform_2(%arg0: i32, %arg1: i32) -> (i32, i32) {
    %c0_i32 = arith.constant 0 : i32
    %c0_i32_0 = arith.constant 0 : i32
    return %c0_i32, %arg1 : i32, i32
  }
  func.func @transform_3(%arg0: i32, %arg1: i32) -> (i32, i32) {
    %c0_i32 = arith.constant 0 : i32
    return %arg0, %arg1 : i32, i32
  }
}

module attributes {stable_mosaic.version = 11 : i64} {
  func.func @_bilstm_scan_kernel(%arg0: i32, %arg1: memref<1x2x64xf32, #tpu.memory_space<vmem>>, %arg2: memref<1x2x64xf32, #tpu.memory_space<vmem>>, %arg3: memref<1x2x1xf32, #tpu.memory_space<vmem>>, %arg4: memref<1x2x1xf32, #tpu.memory_space<vmem>>, %arg5: memref<16x64xbf16, #tpu.memory_space<vmem>>, %arg6: memref<16x64xbf16, #tpu.memory_space<vmem>>, %arg7: memref<1x2x16xf32, #tpu.memory_space<vmem>>, %arg8: memref<1x2x16xf32, #tpu.memory_space<vmem>>, %arg9: memref<2x16xf32, #tpu.memory_space<vmem>>, %arg10: memref<2x16xf32, #tpu.memory_space<vmem>>, %arg11: memref<2x16xf32, #tpu.memory_space<vmem>>, %arg12: memref<2x16xf32, #tpu.memory_space<vmem>>, %arg13: memref<2x16xf32, #tpu.memory_space<vmem>>, %arg14: memref<2x16xf32, #tpu.memory_space<vmem>>) attributes {dimension_semantics = [#tpu.dimension_semantics<arbitrary>], iteration_bounds = array<i64: 8>, scalar_prefetch = 0 : i64, scratch_operands = 4 : i64, tpu.core_type = #tpu.core_type<tc>, window_params = [{transform_indices = @transform_0, window_bounds = array<i64: 1, 2, 64>}, {transform_indices = @transform_1, window_bounds = array<i64: 1, 2, 64>}, {transform_indices = @transform_2, window_bounds = array<i64: 1, 2, 1>}, {transform_indices = @transform_3, window_bounds = array<i64: 1, 2, 1>}, {pipeline_mode = #tpu.pipeline_mode<synchronous>, transform_indices = @transform_4, window_bounds = array<i64: 16, 64>}, {pipeline_mode = #tpu.pipeline_mode<synchronous>, transform_indices = @transform_5, window_bounds = array<i64: 16, 64>}, {transform_indices = @transform_6, window_bounds = array<i64: 1, 2, 16>}, {transform_indices = @transform_7, window_bounds = array<i64: 1, 2, 16>}, {pipeline_mode = #tpu.pipeline_mode<synchronous>, transform_indices = @transform_8, window_bounds = array<i64: 2, 16>}, {pipeline_mode = #tpu.pipeline_mode<synchronous>, transform_indices = @transform_9, window_bounds = array<i64: 2, 16>}]} {
    %c0_i32 = arith.constant 0 : i32
    %0 = arith.cmpi eq, %arg0, %c0_i32 : i32
    %1 = arith.extui %0 : i1 to i32
    %c0_i32_0 = arith.constant 0 : i32
    %2 = arith.cmpi ne, %1, %c0_i32_0 : i32
    scf.if %2 {
      %cst_64 = arith.constant 0.000000e+00 : f32
      %133 = vector.broadcast %cst_64 : f32 to vector<2x16xf32>
      %c0_65 = arith.constant 0 : index
      %c0_66 = arith.constant 0 : index
      %134 = vector.load %arg11[%c0_65, %c0_66] : memref<2x16xf32, #tpu.memory_space<vmem>>, vector<2x16xf32>
      tpu.vector_store %arg11[%c0_65, %c0_66], %133 {strides = array<i32>} : memref<2x16xf32, #tpu.memory_space<vmem>>, vector<2x16xf32>,
      %cst_67 = arith.constant 0.000000e+00 : f32
      %135 = vector.broadcast %cst_67 : f32 to vector<2x16xf32>
      %c0_68 = arith.constant 0 : index
      %c0_69 = arith.constant 0 : index
      %136 = vector.load %arg12[%c0_68, %c0_69] : memref<2x16xf32, #tpu.memory_space<vmem>>, vector<2x16xf32>
      tpu.vector_store %arg12[%c0_68, %c0_69], %135 {strides = array<i32>} : memref<2x16xf32, #tpu.memory_space<vmem>>, vector<2x16xf32>,
      %cst_70 = arith.constant 0.000000e+00 : f32
      %137 = vector.broadcast %cst_70 : f32 to vector<2x16xf32>
      %c0_71 = arith.constant 0 : index
      %c0_72 = arith.constant 0 : index
      %138 = vector.load %arg13[%c0_71, %c0_72] : memref<2x16xf32, #tpu.memory_space<vmem>>, vector<2x16xf32>
      tpu.vector_store %arg13[%c0_71, %c0_72], %137 {strides = array<i32>} : memref<2x16xf32, #tpu.memory_space<vmem>>, vector<2x16xf32>,
      %cst_73 = arith.constant 0.000000e+00 : f32
      %139 = vector.broadcast %cst_73 : f32 to vector<2x16xf32>
      %c0_74 = arith.constant 0 : index
      %c0_75 = arith.constant 0 : index
      %140 = vector.load %arg14[%c0_74, %c0_75] : memref<2x16xf32, #tpu.memory_space<vmem>>, vector<2x16xf32>
      tpu.vector_store %arg14[%c0_74, %c0_75], %139 {strides = array<i32>} : memref<2x16xf32, #tpu.memory_space<vmem>>, vector<2x16xf32>,
    } else {
    }
    %c0 = arith.constant 0 : index
    %c0_1 = arith.constant 0 : index
    %c0_2 = arith.constant 0 : index
    %3 = vector.load %arg1[%c0, %c0_1, %c0_2] : memref<1x2x64xf32, #tpu.memory_space<vmem>>, vector<1x2x64xf32>
    %4 = vector.shape_cast %3 : vector<1x2x64xf32> to vector<2x64xf32>
    %c0_3 = arith.constant 0 : index
    %c0_4 = arith.constant 0 : index
    %c0_5 = arith.constant 0 : index
    %5 = vector.load %arg3[%c0_3, %c0_4, %c0_5] : memref<1x2x1xf32, #tpu.memory_space<vmem>>, vector<1x2x1xf32>
    %6 = vector.shape_cast %5 : vector<1x2x1xf32> to vector<2x1xf32>
    %c0_6 = arith.constant 0 : index
    %c0_7 = arith.constant 0 : index
    %7 = vector.load %arg5[%c0_6, %c0_7] : memref<16x64xbf16, #tpu.memory_space<vmem>>, vector<16x64xbf16>
    %c0_8 = arith.constant 0 : index
    %c0_9 = arith.constant 0 : index
    %8 = vector.load %arg11[%c0_8, %c0_9] : memref<2x16xf32, #tpu.memory_space<vmem>>, vector<2x16xf32>
    %c0_10 = arith.constant 0 : index
    %c0_11 = arith.constant 0 : index
    %9 = vector.load %arg12[%c0_10, %c0_11] : memref<2x16xf32, #tpu.memory_space<vmem>>, vector<2x16xf32>
    %10 = arith.truncf %8 : vector<2x16xf32> to vector<2x16xbf16>
    %cst = arith.constant dense<0.000000e+00> : vector<2x64xf32>
    %11 = tpu.matmul %10, %7, %cst {dimension_numbers = #tpu.dot_dimension_numbers<[1], [0], [0], [1], [0, 0, 1, 1], [], []>} : vector<2x16xbf16>, vector<16x64xbf16>, vector<2x64xf32> -> vector<2x64xf32>
    %12 = arith.addf %4, %11 : vector<2x64xf32>
    %13 = vector.extract_strided_slice %12 {offsets = [0, 0], sizes = [2, 16], strides = [1, 1]} : vector<2x64xf32> to vector<2x16xf32>
    %cst_12 = arith.constant 0.000000e+00 : f32
    %14 = vector.broadcast %cst_12 : f32 to vector<2x16xf32>
    %15 = arith.subf %14, %13 : vector<2x16xf32>
    %16 = math.exp %15 : vector<2x16xf32>
    %cst_13 = arith.constant 1.000000e+00 : f32
    %17 = vector.broadcast %cst_13 : f32 to vector<2x16xf32>
    %18 = arith.addf %17, %16 : vector<2x16xf32>
    %cst_14 = arith.constant 1.000000e+00 : f32
    %19 = vector.broadcast %cst_14 : f32 to vector<2x16xf32>
    %20 = arith.divf %19, %18 : vector<2x16xf32>
    %21 = vector.extract_strided_slice %12 {offsets = [0, 16], sizes = [2, 16], strides = [1, 1]} : vector<2x64xf32> to vector<2x16xf32>
    %cst_15 = arith.constant 0.000000e+00 : f32
    %22 = vector.broadcast %cst_15 : f32 to vector<2x16xf32>
    %23 = arith.subf %22, %21 : vector<2x16xf32>
    %24 = math.exp %23 : vector<2x16xf32>
    %cst_16 = arith.constant 1.000000e+00 : f32
    %25 = vector.broadcast %cst_16 : f32 to vector<2x16xf32>
    %26 = arith.addf %25, %24 : vector<2x16xf32>
    %cst_17 = arith.constant 1.000000e+00 : f32
    %27 = vector.broadcast %cst_17 : f32 to vector<2x16xf32>
    %28 = arith.divf %27, %26 : vector<2x16xf32>
    %29 = vector.extract_strided_slice %12 {offsets = [0, 32], sizes = [2, 16], strides = [1, 1]} : vector<2x64xf32> to vector<2x16xf32>
    %30 = math.tanh %29 : vector<2x16xf32>
    %31 = vector.extract_strided_slice %12 {offsets = [0, 48], sizes = [2, 16], strides = [1, 1]} : vector<2x64xf32> to vector<2x16xf32>
    %cst_18 = arith.constant 0.000000e+00 : f32
    %32 = vector.broadcast %cst_18 : f32 to vector<2x16xf32>
    %33 = arith.subf %32, %31 : vector<2x16xf32>
    %34 = math.exp %33 : vector<2x16xf32>
    %cst_19 = arith.constant 1.000000e+00 : f32
    %35 = vector.broadcast %cst_19 : f32 to vector<2x16xf32>
    %36 = arith.addf %35, %34 : vector<2x16xf32>
    %cst_20 = arith.constant 1.000000e+00 : f32
    %37 = vector.broadcast %cst_20 : f32 to vector<2x16xf32>
    %38 = arith.divf %37, %36 : vector<2x16xf32>
    %39 = arith.mulf %28, %9 : vector<2x16xf32>
    %40 = arith.mulf %20, %30 : vector<2x16xf32>
    %41 = arith.addf %39, %40 : vector<2x16xf32>
    %42 = math.tanh %41 : vector<2x16xf32>
    %43 = arith.mulf %38, %42 : vector<2x16xf32>
    %44 = vector.broadcast %6 : vector<2x1xf32> to vector<2x16xf32>
    %45 = arith.mulf %44, %43 : vector<2x16xf32>
    %c0_21 = arith.constant 0 : index
    %c0_22 = arith.constant 0 : index
    %c0_23 = arith.constant 0 : index
    %46 = vector.load %arg7[%c0_21, %c0_22, %c0_23] : memref<1x2x16xf32, #tpu.memory_space<vmem>>, vector<1x2x16xf32>
    %47 = vector.shape_cast %46 : vector<1x2x16xf32> to vector<2x16xf32>
    %48 = vector.shape_cast %45 : vector<2x16xf32> to vector<1x2x16xf32>
    tpu.vector_store %arg7[%c0_21, %c0_22, %c0_23], %48 {strides = array<i32>} : memref<1x2x16xf32, #tpu.memory_space<vmem>>, vector<1x2x16xf32>,
    %49 = vector.broadcast %6 : vector<2x1xf32> to vector<2x16xf32>
    %50 = arith.mulf %49, %43 : vector<2x16xf32>
    %cst_24 = arith.constant 1.000000e+00 : f32
    %51 = vector.broadcast %cst_24 : f32 to vector<2x1xf32>
    %52 = arith.subf %51, %6 : vector<2x1xf32>
    %53 = vector.broadcast %52 : vector<2x1xf32> to vector<2x16xf32>
    %54 = arith.mulf %53, %8 : vector<2x16xf32>
    %55 = arith.addf %50, %54 : vector<2x16xf32>
    %56 = vector.broadcast %6 : vector<2x1xf32> to vector<2x16xf32>
    %57 = arith.mulf %56, %41 : vector<2x16xf32>
    %cst_25 = arith.constant 1.000000e+00 : f32
    %58 = vector.broadcast %cst_25 : f32 to vector<2x1xf32>
    %59 = arith.subf %58, %6 : vector<2x1xf32>
    %60 = vector.broadcast %59 : vector<2x1xf32> to vector<2x16xf32>
    %61 = arith.mulf %60, %9 : vector<2x16xf32>
    %62 = arith.addf %57, %61 : vector<2x16xf32>
    %c0_26 = arith.constant 0 : index
    %c0_27 = arith.constant 0 : index
    %63 = vector.load %arg11[%c0_26, %c0_27] : memref<2x16xf32, #tpu.memory_space<vmem>>, vector<2x16xf32>
    tpu.vector_store %arg11[%c0_26, %c0_27], %55 {strides = array<i32>} : memref<2x16xf32, #tpu.memory_space<vmem>>, vector<2x16xf32>,
    %c0_28 = arith.constant 0 : index
    %c0_29 = arith.constant 0 : index
    %64 = vector.load %arg12[%c0_28, %c0_29] : memref<2x16xf32, #tpu.memory_space<vmem>>, vector<2x16xf32>
    tpu.vector_store %arg12[%c0_28, %c0_29], %62 {strides = array<i32>} : memref<2x16xf32, #tpu.memory_space<vmem>>, vector<2x16xf32>,
    %c7_i32 = arith.constant 7 : i32
    %65 = arith.cmpi eq, %arg0, %c7_i32 : i32
    %66 = arith.extui %65 : i1 to i32
    %c0_i32_30 = arith.constant 0 : i32
    %67 = arith.cmpi ne, %66, %c0_i32_30 : i32
    scf.if %67 {
      %c0_64 = arith.constant 0 : index
      %c0_65 = arith.constant 0 : index
      %133 = vector.load %arg9[%c0_64, %c0_65] : memref<2x16xf32, #tpu.memory_space<vmem>>, vector<2x16xf32>
      tpu.vector_store %arg9[%c0_64, %c0_65], %55 {strides = array<i32>} : memref<2x16xf32, #tpu.memory_space<vmem>>, vector<2x16xf32>,
    } else {
    }
    %c0_31 = arith.constant 0 : index
    %c0_32 = arith.constant 0 : index
    %c0_33 = arith.constant 0 : index
    %68 = vector.load %arg2[%c0_31, %c0_32, %c0_33] : memref<1x2x64xf32, #tpu.memory_space<vmem>>, vector<1x2x64xf32>
    %69 = vector.shape_cast %68 : vector<1x2x64xf32> to vector<2x64xf32>
    %c0_34 = arith.constant 0 : index
    %c0_35 = arith.constant 0 : index
    %c0_36 = arith.constant 0 : index
    %70 = vector.load %arg4[%c0_34, %c0_35, %c0_36] : memref<1x2x1xf32, #tpu.memory_space<vmem>>, vector<1x2x1xf32>
    %71 = vector.shape_cast %70 : vector<1x2x1xf32> to vector<2x1xf32>
    %c0_37 = arith.constant 0 : index
    %c0_38 = arith.constant 0 : index
    %72 = vector.load %arg6[%c0_37, %c0_38] : memref<16x64xbf16, #tpu.memory_space<vmem>>, vector<16x64xbf16>
    %c0_39 = arith.constant 0 : index
    %c0_40 = arith.constant 0 : index
    %73 = vector.load %arg13[%c0_39, %c0_40] : memref<2x16xf32, #tpu.memory_space<vmem>>, vector<2x16xf32>
    %c0_41 = arith.constant 0 : index
    %c0_42 = arith.constant 0 : index
    %74 = vector.load %arg14[%c0_41, %c0_42] : memref<2x16xf32, #tpu.memory_space<vmem>>, vector<2x16xf32>
    %75 = arith.truncf %73 : vector<2x16xf32> to vector<2x16xbf16>
    %cst_43 = arith.constant dense<0.000000e+00> : vector<2x64xf32>
    %76 = tpu.matmul %75, %72, %cst_43 {dimension_numbers = #tpu.dot_dimension_numbers<[1], [0], [0], [1], [0, 0, 1, 1], [], []>} : vector<2x16xbf16>, vector<16x64xbf16>, vector<2x64xf32> -> vector<2x64xf32>
    %77 = arith.addf %69, %76 : vector<2x64xf32>
    %78 = vector.extract_strided_slice %77 {offsets = [0, 0], sizes = [2, 16], strides = [1, 1]} : vector<2x64xf32> to vector<2x16xf32>
    %cst_44 = arith.constant 0.000000e+00 : f32
    %79 = vector.broadcast %cst_44 : f32 to vector<2x16xf32>
    %80 = arith.subf %79, %78 : vector<2x16xf32>
    %81 = math.exp %80 : vector<2x16xf32>
    %cst_45 = arith.constant 1.000000e+00 : f32
    %82 = vector.broadcast %cst_45 : f32 to vector<2x16xf32>
    %83 = arith.addf %82, %81 : vector<2x16xf32>
    %cst_46 = arith.constant 1.000000e+00 : f32
    %84 = vector.broadcast %cst_46 : f32 to vector<2x16xf32>
    %85 = arith.divf %84, %83 : vector<2x16xf32>
    %86 = vector.extract_strided_slice %77 {offsets = [0, 16], sizes = [2, 16], strides = [1, 1]} : vector<2x64xf32> to vector<2x16xf32>
    %cst_47 = arith.constant 0.000000e+00 : f32
    %87 = vector.broadcast %cst_47 : f32 to vector<2x16xf32>
    %88 = arith.subf %87, %86 : vector<2x16xf32>
    %89 = math.exp %88 : vector<2x16xf32>
    %cst_48 = arith.constant 1.000000e+00 : f32
    %90 = vector.broadcast %cst_48 : f32 to vector<2x16xf32>
    %91 = arith.addf %90, %89 : vector<2x16xf32>
    %cst_49 = arith.constant 1.000000e+00 : f32
    %92 = vector.broadcast %cst_49 : f32 to vector<2x16xf32>
    %93 = arith.divf %92, %91 : vector<2x16xf32>
    %94 = vector.extract_strided_slice %77 {offsets = [0, 32], sizes = [2, 16], strides = [1, 1]} : vector<2x64xf32> to vector<2x16xf32>
    %95 = math.tanh %94 : vector<2x16xf32>
    %96 = vector.extract_strided_slice %77 {offsets = [0, 48], sizes = [2, 16], strides = [1, 1]} : vector<2x64xf32> to vector<2x16xf32>
    %cst_50 = arith.constant 0.000000e+00 : f32
    %97 = vector.broadcast %cst_50 : f32 to vector<2x16xf32>
    %98 = arith.subf %97, %96 : vector<2x16xf32>
    %99 = math.exp %98 : vector<2x16xf32>
    %cst_51 = arith.constant 1.000000e+00 : f32
    %100 = vector.broadcast %cst_51 : f32 to vector<2x16xf32>
    %101 = arith.addf %100, %99 : vector<2x16xf32>
    %cst_52 = arith.constant 1.000000e+00 : f32
    %102 = vector.broadcast %cst_52 : f32 to vector<2x16xf32>
    %103 = arith.divf %102, %101 : vector<2x16xf32>
    %104 = arith.mulf %93, %74 : vector<2x16xf32>
    %105 = arith.mulf %85, %95 : vector<2x16xf32>
    %106 = arith.addf %104, %105 : vector<2x16xf32>
    %107 = math.tanh %106 : vector<2x16xf32>
    %108 = arith.mulf %103, %107 : vector<2x16xf32>
    %109 = vector.broadcast %71 : vector<2x1xf32> to vector<2x16xf32>
    %110 = arith.mulf %109, %108 : vector<2x16xf32>
    %c0_53 = arith.constant 0 : index
    %c0_54 = arith.constant 0 : index
    %c0_55 = arith.constant 0 : index
    %111 = vector.load %arg8[%c0_53, %c0_54, %c0_55] : memref<1x2x16xf32, #tpu.memory_space<vmem>>, vector<1x2x16xf32>
    %112 = vector.shape_cast %111 : vector<1x2x16xf32> to vector<2x16xf32>
    %113 = vector.shape_cast %110 : vector<2x16xf32> to vector<1x2x16xf32>
    tpu.vector_store %arg8[%c0_53, %c0_54, %c0_55], %113 {strides = array<i32>} : memref<1x2x16xf32, #tpu.memory_space<vmem>>, vector<1x2x16xf32>,
    %114 = vector.broadcast %71 : vector<2x1xf32> to vector<2x16xf32>
    %115 = arith.mulf %114, %108 : vector<2x16xf32>
    %cst_56 = arith.constant 1.000000e+00 : f32
    %116 = vector.broadcast %cst_56 : f32 to vector<2x1xf32>
    %117 = arith.subf %116, %71 : vector<2x1xf32>
    %118 = vector.broadcast %117 : vector<2x1xf32> to vector<2x16xf32>
    %119 = arith.mulf %118, %73 : vector<2x16xf32>
    %120 = arith.addf %115, %119 : vector<2x16xf32>
    %121 = vector.broadcast %71 : vector<2x1xf32> to vector<2x16xf32>
    %122 = arith.mulf %121, %106 : vector<2x16xf32>
    %cst_57 = arith.constant 1.000000e+00 : f32
    %123 = vector.broadcast %cst_57 : f32 to vector<2x1xf32>
    %124 = arith.subf %123, %71 : vector<2x1xf32>
    %125 = vector.broadcast %124 : vector<2x1xf32> to vector<2x16xf32>
    %126 = arith.mulf %125, %74 : vector<2x16xf32>
    %127 = arith.addf %122, %126 : vector<2x16xf32>
    %c0_58 = arith.constant 0 : index
    %c0_59 = arith.constant 0 : index
    %128 = vector.load %arg13[%c0_58, %c0_59] : memref<2x16xf32, #tpu.memory_space<vmem>>, vector<2x16xf32>
    tpu.vector_store %arg13[%c0_58, %c0_59], %120 {strides = array<i32>} : memref<2x16xf32, #tpu.memory_space<vmem>>, vector<2x16xf32>,
    %c0_60 = arith.constant 0 : index
    %c0_61 = arith.constant 0 : index
    %129 = vector.load %arg14[%c0_60, %c0_61] : memref<2x16xf32, #tpu.memory_space<vmem>>, vector<2x16xf32>
    tpu.vector_store %arg14[%c0_60, %c0_61], %127 {strides = array<i32>} : memref<2x16xf32, #tpu.memory_space<vmem>>, vector<2x16xf32>,
    %c7_i32_62 = arith.constant 7 : i32
    %130 = arith.cmpi eq, %arg0, %c7_i32_62 : i32
    %131 = arith.extui %130 : i1 to i32
    %c0_i32_63 = arith.constant 0 : i32
    %132 = arith.cmpi ne, %131, %c0_i32_63 : i32
    scf.if %132 {
      %c0_64 = arith.constant 0 : index
      %c0_65 = arith.constant 0 : index
      %133 = vector.load %arg10[%c0_64, %c0_65] : memref<2x16xf32, #tpu.memory_space<vmem>>, vector<2x16xf32>
      tpu.vector_store %arg10[%c0_64, %c0_65], %120 {strides = array<i32>} : memref<2x16xf32, #tpu.memory_space<vmem>>, vector<2x16xf32>,
    } else {
    }
    return
  }
  func.func @transform_0(%arg0: i32) -> (i32, i32, i32) {
    %c0_i32 = arith.constant 0 : i32
    %c0_i32_0 = arith.constant 0 : i32
    %c0_i32_1 = arith.constant 0 : i32
    return %arg0, %c0_i32, %c0_i32_0 : i32, i32, i32
  }
  func.func @transform_1(%arg0: i32) -> (i32, i32, i32) {
    %c7_i32 = arith.constant 7 : i32
    %0 = arith.subi %c7_i32, %arg0 : i32
    %c0_i32 = arith.constant 0 : i32
    %c0_i32_0 = arith.constant 0 : i32
    %c0_i32_1 = arith.constant 0 : i32
    return %0, %c0_i32, %c0_i32_0 : i32, i32, i32
  }
  func.func @transform_2(%arg0: i32) -> (i32, i32, i32) {
    %c0_i32 = arith.constant 0 : i32
    %c0_i32_0 = arith.constant 0 : i32
    %c0_i32_1 = arith.constant 0 : i32
    return %arg0, %c0_i32, %c0_i32_0 : i32, i32, i32
  }
  func.func @transform_3(%arg0: i32) -> (i32, i32, i32) {
    %c7_i32 = arith.constant 7 : i32
    %0 = arith.subi %c7_i32, %arg0 : i32
    %c0_i32 = arith.constant 0 : i32
    %c0_i32_0 = arith.constant 0 : i32
    %c0_i32_1 = arith.constant 0 : i32
    return %0, %c0_i32, %c0_i32_0 : i32, i32, i32
  }
  func.func @transform_4(%arg0: i32) -> (i32, i32) {
    %c0_i32 = arith.constant 0 : i32
    %c0_i32_0 = arith.constant 0 : i32
    %c0_i32_1 = arith.constant 0 : i32
    return %c0_i32, %c0_i32_0 : i32, i32
  }
  func.func @transform_5(%arg0: i32) -> (i32, i32) {
    %c0_i32 = arith.constant 0 : i32
    %c0_i32_0 = arith.constant 0 : i32
    %c0_i32_1 = arith.constant 0 : i32
    return %c0_i32, %c0_i32_0 : i32, i32
  }
  func.func @transform_6(%arg0: i32) -> (i32, i32, i32) {
    %c0_i32 = arith.constant 0 : i32
    %c0_i32_0 = arith.constant 0 : i32
    %c0_i32_1 = arith.constant 0 : i32
    return %arg0, %c0_i32, %c0_i32_0 : i32, i32, i32
  }
  func.func @transform_7(%arg0: i32) -> (i32, i32, i32) {
    %c7_i32 = arith.constant 7 : i32
    %0 = arith.subi %c7_i32, %arg0 : i32
    %c0_i32 = arith.constant 0 : i32
    %c0_i32_0 = arith.constant 0 : i32
    %c0_i32_1 = arith.constant 0 : i32
    return %0, %c0_i32, %c0_i32_0 : i32, i32, i32
  }
  func.func @transform_8(%arg0: i32) -> (i32, i32) {
    %c0_i32 = arith.constant 0 : i32
    %c0_i32_0 = arith.constant 0 : i32
    %c0_i32_1 = arith.constant 0 : i32
    return %c0_i32, %c0_i32_0 : i32, i32
  }
  func.func @transform_9(%arg0: i32) -> (i32, i32) {
    %c0_i32 = arith.constant 0 : i32
    %c0_i32_0 = arith.constant 0 : i32
    %c0_i32_1 = arith.constant 0 : i32
    return %c0_i32, %c0_i32_0 : i32, i32
  }
}

module attributes {stable_mosaic.version = 11 : i64} {
  func.func @_fused_linear_single_kernel(%arg0: i32, %arg1: i32, %arg2: memref<16x32xf32, #tpu.memory_space<vmem>>, %arg3: memref<32x128xbf16, #tpu.memory_space<vmem>>, %arg4: memref<1x128xf32, #tpu.memory_space<vmem>>, %arg5: memref<1x32xf32, #tpu.memory_space<vmem>>, %arg6: memref<1x32xf32, #tpu.memory_space<vmem>>, %arg7: memref<16x128xf32, #tpu.memory_space<vmem>>) attributes {dimension_semantics = [#tpu.dimension_semantics<parallel>, #tpu.dimension_semantics<parallel>], iteration_bounds = array<i64: 1, 1>, scalar_prefetch = 0 : i64, scratch_operands = 0 : i64, tpu.core_type = #tpu.core_type<tc>, window_params = [{transform_indices = @transform_0, window_bounds = array<i64: 16, 32>}, {transform_indices = @transform_1, window_bounds = array<i64: 32, 128>}, {transform_indices = @transform_2, window_bounds = array<i64: 1, 128>}, {pipeline_mode = #tpu.pipeline_mode<synchronous>, transform_indices = @transform_3, window_bounds = array<i64: 1, 32>}, {pipeline_mode = #tpu.pipeline_mode<synchronous>, transform_indices = @transform_4, window_bounds = array<i64: 1, 32>}, {transform_indices = @transform_5, window_bounds = array<i64: 16, 128>}]} {
    %c0 = arith.constant 0 : index
    %c0_0 = arith.constant 0 : index
    %0 = vector.load %arg2[%c0, %c0_0] : memref<16x32xf32, #tpu.memory_space<vmem>>, vector<16x32xf32>
    %c0_1 = arith.constant 0 : index
    %c0_2 = arith.constant 0 : index
    %1 = vector.load %arg5[%c0_1, %c0_2] : memref<1x32xf32, #tpu.memory_space<vmem>>, vector<1x32xf32>
    %c0_3 = arith.constant 0 : index
    %c0_4 = arith.constant 0 : index
    %2 = vector.load %arg6[%c0_3, %c0_4] : memref<1x32xf32, #tpu.memory_space<vmem>>, vector<1x32xf32>
    %cst = arith.constant dense<0.000000e+00> : vector<16xf32>
    %3 = vector.multi_reduction <add>, %0, %cst [1] : vector<16x32xf32> to vector<16xf32>
    %4 = vector.shape_cast %3 : vector<16xf32> to vector<16x1xf32>
    %cst_5 = arith.constant 3.200000e+01 : f32
    %5 = vector.broadcast %cst_5 : f32 to vector<16x1xf32>
    %6 = arith.divf %4, %5 : vector<16x1xf32>
    %7 = vector.broadcast %6 : vector<16x1xf32> to vector<16x32xf32>
    %8 = arith.subf %0, %7 : vector<16x32xf32>
    %9 = arith.mulf %8, %8 : vector<16x32xf32>
    %cst_6 = arith.constant dense<0.000000e+00> : vector<16xf32>
    %10 = vector.multi_reduction <add>, %9, %cst_6 [1] : vector<16x32xf32> to vector<16xf32>
    %11 = vector.shape_cast %10 : vector<16xf32> to vector<16x1xf32>
    %cst_7 = arith.constant 3.200000e+01 : f32
    %12 = vector.broadcast %cst_7 : f32 to vector<16x1xf32>
    %13 = arith.divf %11, %12 : vector<16x1xf32>
    %14 = vector.broadcast %6 : vector<16x1xf32> to vector<16x32xf32>
    %15 = arith.subf %0, %14 : vector<16x32xf32>
    %cst_8 = arith.constant 9.99999974E-6 : f32
    %16 = vector.broadcast %cst_8 : f32 to vector<16x1xf32>
    %17 = arith.addf %13, %16 : vector<16x1xf32>
    %18 = math.rsqrt %17 : vector<16x1xf32>
    %19 = vector.broadcast %18 : vector<16x1xf32> to vector<16x32xf32>
    %20 = arith.mulf %15, %19 : vector<16x32xf32>
    %21 = vector.broadcast %1 : vector<1x32xf32> to vector<16x32xf32>
    %22 = arith.mulf %20, %21 : vector<16x32xf32>
    %23 = vector.broadcast %2 : vector<1x32xf32> to vector<16x32xf32>
    %24 = arith.addf %22, %23 : vector<16x32xf32>
    %25 = arith.truncf %24 : vector<16x32xf32> to vector<16x32xbf16>
    %c0_9 = arith.constant 0 : index
    %c0_10 = arith.constant 0 : index
    %26 = vector.load %arg3[%c0_9, %c0_10] : memref<32x128xbf16, #tpu.memory_space<vmem>>, vector<32x128xbf16>
    %cst_11 = arith.constant dense<0.000000e+00> : vector<16x128xf32>
    %27 = tpu.matmul %25, %26, %cst_11 {dimension_numbers = #tpu.dot_dimension_numbers<[1], [0], [0], [1], [0, 0, 1, 1], [], []>} : vector<16x32xbf16>, vector<32x128xbf16>, vector<16x128xf32> -> vector<16x128xf32>
    %c0_12 = arith.constant 0 : index
    %c0_13 = arith.constant 0 : index
    %28 = vector.load %arg4[%c0_12, %c0_13] : memref<1x128xf32, #tpu.memory_space<vmem>>, vector<1x128xf32>
    %29 = vector.broadcast %28 : vector<1x128xf32> to vector<16x128xf32>
    %30 = arith.addf %27, %29 : vector<16x128xf32>
    %c0_14 = arith.constant 0 : index
    %c0_15 = arith.constant 0 : index
    %31 = vector.load %arg7[%c0_14, %c0_15] : memref<16x128xf32, #tpu.memory_space<vmem>>, vector<16x128xf32>
    tpu.vector_store %arg7[%c0_14, %c0_15], %30 {strides = array<i32>} : memref<16x128xf32, #tpu.memory_space<vmem>>, vector<16x128xf32>,
    return
  }
  func.func @transform_0(%arg0: i32, %arg1: i32) -> (i32, i32) {
    %c0_i32 = arith.constant 0 : i32
    %c0_i32_0 = arith.constant 0 : i32
    return %arg0, %c0_i32 : i32, i32
  }
  func.func @transform_1(%arg0: i32, %arg1: i32) -> (i32, i32) {
    %c0_i32 = arith.constant 0 : i32
    %c0_i32_0 = arith.constant 0 : i32
    return %c0_i32, %arg1 : i32, i32
  }
  func.func @transform_2(%arg0: i32, %arg1: i32) -> (i32, i32) {
    %c0_i32 = arith.constant 0 : i32
    %c0_i32_0 = arith.constant 0 : i32
    return %c0_i32, %arg1 : i32, i32
  }
  func.func @transform_3(%arg0: i32, %arg1: i32) -> (i32, i32) {
    %c0_i32 = arith.constant 0 : i32
    %c0_i32_0 = arith.constant 0 : i32
    %c0_i32_1 = arith.constant 0 : i32
    return %c0_i32, %c0_i32_0 : i32, i32
  }
  func.func @transform_4(%arg0: i32, %arg1: i32) -> (i32, i32) {
    %c0_i32 = arith.constant 0 : i32
    %c0_i32_0 = arith.constant 0 : i32
    %c0_i32_1 = arith.constant 0 : i32
    return %c0_i32, %c0_i32_0 : i32, i32
  }
  func.func @transform_5(%arg0: i32, %arg1: i32) -> (i32, i32) {
    %c0_i32 = arith.constant 0 : i32
    return %arg0, %arg1 : i32, i32
  }
}

module attributes {stable_mosaic.version = 11 : i64} {
  func.func @_bilstm_scan_kernel(%arg0: i32, %arg1: memref<1x2x64xf32, #tpu.memory_space<vmem>>, %arg2: memref<1x2x64xf32, #tpu.memory_space<vmem>>, %arg3: memref<1x2x1xf32, #tpu.memory_space<vmem>>, %arg4: memref<1x2x1xf32, #tpu.memory_space<vmem>>, %arg5: memref<16x64xbf16, #tpu.memory_space<vmem>>, %arg6: memref<16x64xbf16, #tpu.memory_space<vmem>>, %arg7: memref<1x2x16xf32, #tpu.memory_space<vmem>>, %arg8: memref<1x2x16xf32, #tpu.memory_space<vmem>>, %arg9: memref<2x16xf32, #tpu.memory_space<vmem>>, %arg10: memref<2x16xf32, #tpu.memory_space<vmem>>, %arg11: memref<2x16xf32, #tpu.memory_space<vmem>>, %arg12: memref<2x16xf32, #tpu.memory_space<vmem>>, %arg13: memref<2x16xf32, #tpu.memory_space<vmem>>, %arg14: memref<2x16xf32, #tpu.memory_space<vmem>>) attributes {dimension_semantics = [#tpu.dimension_semantics<arbitrary>], iteration_bounds = array<i64: 8>, scalar_prefetch = 0 : i64, scratch_operands = 4 : i64, tpu.core_type = #tpu.core_type<tc>, window_params = [{transform_indices = @transform_0, window_bounds = array<i64: 1, 2, 64>}, {transform_indices = @transform_1, window_bounds = array<i64: 1, 2, 64>}, {transform_indices = @transform_2, window_bounds = array<i64: 1, 2, 1>}, {transform_indices = @transform_3, window_bounds = array<i64: 1, 2, 1>}, {pipeline_mode = #tpu.pipeline_mode<synchronous>, transform_indices = @transform_4, window_bounds = array<i64: 16, 64>}, {pipeline_mode = #tpu.pipeline_mode<synchronous>, transform_indices = @transform_5, window_bounds = array<i64: 16, 64>}, {transform_indices = @transform_6, window_bounds = array<i64: 1, 2, 16>}, {transform_indices = @transform_7, window_bounds = array<i64: 1, 2, 16>}, {pipeline_mode = #tpu.pipeline_mode<synchronous>, transform_indices = @transform_8, window_bounds = array<i64: 2, 16>}, {pipeline_mode = #tpu.pipeline_mode<synchronous>, transform_indices = @transform_9, window_bounds = array<i64: 2, 16>}]} {
    %c0_i32 = arith.constant 0 : i32
    %0 = arith.cmpi eq, %arg0, %c0_i32 : i32
    %1 = arith.extui %0 : i1 to i32
    %c0_i32_0 = arith.constant 0 : i32
    %2 = arith.cmpi ne, %1, %c0_i32_0 : i32
    scf.if %2 {
      %cst_64 = arith.constant 0.000000e+00 : f32
      %133 = vector.broadcast %cst_64 : f32 to vector<2x16xf32>
      %c0_65 = arith.constant 0 : index
      %c0_66 = arith.constant 0 : index
      %134 = vector.load %arg11[%c0_65, %c0_66] : memref<2x16xf32, #tpu.memory_space<vmem>>, vector<2x16xf32>
      tpu.vector_store %arg11[%c0_65, %c0_66], %133 {strides = array<i32>} : memref<2x16xf32, #tpu.memory_space<vmem>>, vector<2x16xf32>,
      %cst_67 = arith.constant 0.000000e+00 : f32
      %135 = vector.broadcast %cst_67 : f32 to vector<2x16xf32>
      %c0_68 = arith.constant 0 : index
      %c0_69 = arith.constant 0 : index
      %136 = vector.load %arg12[%c0_68, %c0_69] : memref<2x16xf32, #tpu.memory_space<vmem>>, vector<2x16xf32>
      tpu.vector_store %arg12[%c0_68, %c0_69], %135 {strides = array<i32>} : memref<2x16xf32, #tpu.memory_space<vmem>>, vector<2x16xf32>,
      %cst_70 = arith.constant 0.000000e+00 : f32
      %137 = vector.broadcast %cst_70 : f32 to vector<2x16xf32>
      %c0_71 = arith.constant 0 : index
      %c0_72 = arith.constant 0 : index
      %138 = vector.load %arg13[%c0_71, %c0_72] : memref<2x16xf32, #tpu.memory_space<vmem>>, vector<2x16xf32>
      tpu.vector_store %arg13[%c0_71, %c0_72], %137 {strides = array<i32>} : memref<2x16xf32, #tpu.memory_space<vmem>>, vector<2x16xf32>,
      %cst_73 = arith.constant 0.000000e+00 : f32
      %139 = vector.broadcast %cst_73 : f32 to vector<2x16xf32>
      %c0_74 = arith.constant 0 : index
      %c0_75 = arith.constant 0 : index
      %140 = vector.load %arg14[%c0_74, %c0_75] : memref<2x16xf32, #tpu.memory_space<vmem>>, vector<2x16xf32>
      tpu.vector_store %arg14[%c0_74, %c0_75], %139 {strides = array<i32>} : memref<2x16xf32, #tpu.memory_space<vmem>>, vector<2x16xf32>,
    } else {
    }
    %c0 = arith.constant 0 : index
    %c0_1 = arith.constant 0 : index
    %c0_2 = arith.constant 0 : index
    %3 = vector.load %arg1[%c0, %c0_1, %c0_2] : memref<1x2x64xf32, #tpu.memory_space<vmem>>, vector<1x2x64xf32>
    %4 = vector.shape_cast %3 : vector<1x2x64xf32> to vector<2x64xf32>
    %c0_3 = arith.constant 0 : index
    %c0_4 = arith.constant 0 : index
    %c0_5 = arith.constant 0 : index
    %5 = vector.load %arg3[%c0_3, %c0_4, %c0_5] : memref<1x2x1xf32, #tpu.memory_space<vmem>>, vector<1x2x1xf32>
    %6 = vector.shape_cast %5 : vector<1x2x1xf32> to vector<2x1xf32>
    %c0_6 = arith.constant 0 : index
    %c0_7 = arith.constant 0 : index
    %7 = vector.load %arg5[%c0_6, %c0_7] : memref<16x64xbf16, #tpu.memory_space<vmem>>, vector<16x64xbf16>
    %c0_8 = arith.constant 0 : index
    %c0_9 = arith.constant 0 : index
    %8 = vector.load %arg11[%c0_8, %c0_9] : memref<2x16xf32, #tpu.memory_space<vmem>>, vector<2x16xf32>
    %c0_10 = arith.constant 0 : index
    %c0_11 = arith.constant 0 : index
    %9 = vector.load %arg12[%c0_10, %c0_11] : memref<2x16xf32, #tpu.memory_space<vmem>>, vector<2x16xf32>
    %10 = arith.truncf %8 : vector<2x16xf32> to vector<2x16xbf16>
    %cst = arith.constant dense<0.000000e+00> : vector<2x64xf32>
    %11 = tpu.matmul %10, %7, %cst {dimension_numbers = #tpu.dot_dimension_numbers<[1], [0], [0], [1], [0, 0, 1, 1], [], []>} : vector<2x16xbf16>, vector<16x64xbf16>, vector<2x64xf32> -> vector<2x64xf32>
    %12 = arith.addf %4, %11 : vector<2x64xf32>
    %13 = vector.extract_strided_slice %12 {offsets = [0, 0], sizes = [2, 16], strides = [1, 1]} : vector<2x64xf32> to vector<2x16xf32>
    %cst_12 = arith.constant 0.000000e+00 : f32
    %14 = vector.broadcast %cst_12 : f32 to vector<2x16xf32>
    %15 = arith.subf %14, %13 : vector<2x16xf32>
    %16 = math.exp %15 : vector<2x16xf32>
    %cst_13 = arith.constant 1.000000e+00 : f32
    %17 = vector.broadcast %cst_13 : f32 to vector<2x16xf32>
    %18 = arith.addf %17, %16 : vector<2x16xf32>
    %cst_14 = arith.constant 1.000000e+00 : f32
    %19 = vector.broadcast %cst_14 : f32 to vector<2x16xf32>
    %20 = arith.divf %19, %18 : vector<2x16xf32>
    %21 = vector.extract_strided_slice %12 {offsets = [0, 16], sizes = [2, 16], strides = [1, 1]} : vector<2x64xf32> to vector<2x16xf32>
    %cst_15 = arith.constant 0.000000e+00 : f32
    %22 = vector.broadcast %cst_15 : f32 to vector<2x16xf32>
    %23 = arith.subf %22, %21 : vector<2x16xf32>
    %24 = math.exp %23 : vector<2x16xf32>
    %cst_16 = arith.constant 1.000000e+00 : f32
    %25 = vector.broadcast %cst_16 : f32 to vector<2x16xf32>
    %26 = arith.addf %25, %24 : vector<2x16xf32>
    %cst_17 = arith.constant 1.000000e+00 : f32
    %27 = vector.broadcast %cst_17 : f32 to vector<2x16xf32>
    %28 = arith.divf %27, %26 : vector<2x16xf32>
    %29 = vector.extract_strided_slice %12 {offsets = [0, 32], sizes = [2, 16], strides = [1, 1]} : vector<2x64xf32> to vector<2x16xf32>
    %30 = math.tanh %29 : vector<2x16xf32>
    %31 = vector.extract_strided_slice %12 {offsets = [0, 48], sizes = [2, 16], strides = [1, 1]} : vector<2x64xf32> to vector<2x16xf32>
    %cst_18 = arith.constant 0.000000e+00 : f32
    %32 = vector.broadcast %cst_18 : f32 to vector<2x16xf32>
    %33 = arith.subf %32, %31 : vector<2x16xf32>
    %34 = math.exp %33 : vector<2x16xf32>
    %cst_19 = arith.constant 1.000000e+00 : f32
    %35 = vector.broadcast %cst_19 : f32 to vector<2x16xf32>
    %36 = arith.addf %35, %34 : vector<2x16xf32>
    %cst_20 = arith.constant 1.000000e+00 : f32
    %37 = vector.broadcast %cst_20 : f32 to vector<2x16xf32>
    %38 = arith.divf %37, %36 : vector<2x16xf32>
    %39 = arith.mulf %28, %9 : vector<2x16xf32>
    %40 = arith.mulf %20, %30 : vector<2x16xf32>
    %41 = arith.addf %39, %40 : vector<2x16xf32>
    %42 = math.tanh %41 : vector<2x16xf32>
    %43 = arith.mulf %38, %42 : vector<2x16xf32>
    %44 = vector.broadcast %6 : vector<2x1xf32> to vector<2x16xf32>
    %45 = arith.mulf %44, %43 : vector<2x16xf32>
    %c0_21 = arith.constant 0 : index
    %c0_22 = arith.constant 0 : index
    %c0_23 = arith.constant 0 : index
    %46 = vector.load %arg7[%c0_21, %c0_22, %c0_23] : memref<1x2x16xf32, #tpu.memory_space<vmem>>, vector<1x2x16xf32>
    %47 = vector.shape_cast %46 : vector<1x2x16xf32> to vector<2x16xf32>
    %48 = vector.shape_cast %45 : vector<2x16xf32> to vector<1x2x16xf32>
    tpu.vector_store %arg7[%c0_21, %c0_22, %c0_23], %48 {strides = array<i32>} : memref<1x2x16xf32, #tpu.memory_space<vmem>>, vector<1x2x16xf32>,
    %49 = vector.broadcast %6 : vector<2x1xf32> to vector<2x16xf32>
    %50 = arith.mulf %49, %43 : vector<2x16xf32>
    %cst_24 = arith.constant 1.000000e+00 : f32
    %51 = vector.broadcast %cst_24 : f32 to vector<2x1xf32>
    %52 = arith.subf %51, %6 : vector<2x1xf32>
    %53 = vector.broadcast %52 : vector<2x1xf32> to vector<2x16xf32>
    %54 = arith.mulf %53, %8 : vector<2x16xf32>
    %55 = arith.addf %50, %54 : vector<2x16xf32>
    %56 = vector.broadcast %6 : vector<2x1xf32> to vector<2x16xf32>
    %57 = arith.mulf %56, %41 : vector<2x16xf32>
    %cst_25 = arith.constant 1.000000e+00 : f32
    %58 = vector.broadcast %cst_25 : f32 to vector<2x1xf32>
    %59 = arith.subf %58, %6 : vector<2x1xf32>
    %60 = vector.broadcast %59 : vector<2x1xf32> to vector<2x16xf32>
    %61 = arith.mulf %60, %9 : vector<2x16xf32>
    %62 = arith.addf %57, %61 : vector<2x16xf32>
    %c0_26 = arith.constant 0 : index
    %c0_27 = arith.constant 0 : index
    %63 = vector.load %arg11[%c0_26, %c0_27] : memref<2x16xf32, #tpu.memory_space<vmem>>, vector<2x16xf32>
    tpu.vector_store %arg11[%c0_26, %c0_27], %55 {strides = array<i32>} : memref<2x16xf32, #tpu.memory_space<vmem>>, vector<2x16xf32>,
    %c0_28 = arith.constant 0 : index
    %c0_29 = arith.constant 0 : index
    %64 = vector.load %arg12[%c0_28, %c0_29] : memref<2x16xf32, #tpu.memory_space<vmem>>, vector<2x16xf32>
    tpu.vector_store %arg12[%c0_28, %c0_29], %62 {strides = array<i32>} : memref<2x16xf32, #tpu.memory_space<vmem>>, vector<2x16xf32>,
    %c7_i32 = arith.constant 7 : i32
    %65 = arith.cmpi eq, %arg0, %c7_i32 : i32
    %66 = arith.extui %65 : i1 to i32
    %c0_i32_30 = arith.constant 0 : i32
    %67 = arith.cmpi ne, %66, %c0_i32_30 : i32
    scf.if %67 {
      %c0_64 = arith.constant 0 : index
      %c0_65 = arith.constant 0 : index
      %133 = vector.load %arg9[%c0_64, %c0_65] : memref<2x16xf32, #tpu.memory_space<vmem>>, vector<2x16xf32>
      tpu.vector_store %arg9[%c0_64, %c0_65], %55 {strides = array<i32>} : memref<2x16xf32, #tpu.memory_space<vmem>>, vector<2x16xf32>,
    } else {
    }
    %c0_31 = arith.constant 0 : index
    %c0_32 = arith.constant 0 : index
    %c0_33 = arith.constant 0 : index
    %68 = vector.load %arg2[%c0_31, %c0_32, %c0_33] : memref<1x2x64xf32, #tpu.memory_space<vmem>>, vector<1x2x64xf32>
    %69 = vector.shape_cast %68 : vector<1x2x64xf32> to vector<2x64xf32>
    %c0_34 = arith.constant 0 : index
    %c0_35 = arith.constant 0 : index
    %c0_36 = arith.constant 0 : index
    %70 = vector.load %arg4[%c0_34, %c0_35, %c0_36] : memref<1x2x1xf32, #tpu.memory_space<vmem>>, vector<1x2x1xf32>
    %71 = vector.shape_cast %70 : vector<1x2x1xf32> to vector<2x1xf32>
    %c0_37 = arith.constant 0 : index
    %c0_38 = arith.constant 0 : index
    %72 = vector.load %arg6[%c0_37, %c0_38] : memref<16x64xbf16, #tpu.memory_space<vmem>>, vector<16x64xbf16>
    %c0_39 = arith.constant 0 : index
    %c0_40 = arith.constant 0 : index
    %73 = vector.load %arg13[%c0_39, %c0_40] : memref<2x16xf32, #tpu.memory_space<vmem>>, vector<2x16xf32>
    %c0_41 = arith.constant 0 : index
    %c0_42 = arith.constant 0 : index
    %74 = vector.load %arg14[%c0_41, %c0_42] : memref<2x16xf32, #tpu.memory_space<vmem>>, vector<2x16xf32>
    %75 = arith.truncf %73 : vector<2x16xf32> to vector<2x16xbf16>
    %cst_43 = arith.constant dense<0.000000e+00> : vector<2x64xf32>
    %76 = tpu.matmul %75, %72, %cst_43 {dimension_numbers = #tpu.dot_dimension_numbers<[1], [0], [0], [1], [0, 0, 1, 1], [], []>} : vector<2x16xbf16>, vector<16x64xbf16>, vector<2x64xf32> -> vector<2x64xf32>
    %77 = arith.addf %69, %76 : vector<2x64xf32>
    %78 = vector.extract_strided_slice %77 {offsets = [0, 0], sizes = [2, 16], strides = [1, 1]} : vector<2x64xf32> to vector<2x16xf32>
    %cst_44 = arith.constant 0.000000e+00 : f32
    %79 = vector.broadcast %cst_44 : f32 to vector<2x16xf32>
    %80 = arith.subf %79, %78 : vector<2x16xf32>
    %81 = math.exp %80 : vector<2x16xf32>
    %cst_45 = arith.constant 1.000000e+00 : f32
    %82 = vector.broadcast %cst_45 : f32 to vector<2x16xf32>
    %83 = arith.addf %82, %81 : vector<2x16xf32>
    %cst_46 = arith.constant 1.000000e+00 : f32
    %84 = vector.broadcast %cst_46 : f32 to vector<2x16xf32>
    %85 = arith.divf %84, %83 : vector<2x16xf32>
    %86 = vector.extract_strided_slice %77 {offsets = [0, 16], sizes = [2, 16], strides = [1, 1]} : vector<2x64xf32> to vector<2x16xf32>
    %cst_47 = arith.constant 0.000000e+00 : f32
    %87 = vector.broadcast %cst_47 : f32 to vector<2x16xf32>
    %88 = arith.subf %87, %86 : vector<2x16xf32>
    %89 = math.exp %88 : vector<2x16xf32>
    %cst_48 = arith.constant 1.000000e+00 : f32
    %90 = vector.broadcast %cst_48 : f32 to vector<2x16xf32>
    %91 = arith.addf %90, %89 : vector<2x16xf32>
    %cst_49 = arith.constant 1.000000e+00 : f32
    %92 = vector.broadcast %cst_49 : f32 to vector<2x16xf32>
    %93 = arith.divf %92, %91 : vector<2x16xf32>
    %94 = vector.extract_strided_slice %77 {offsets = [0, 32], sizes = [2, 16], strides = [1, 1]} : vector<2x64xf32> to vector<2x16xf32>
    %95 = math.tanh %94 : vector<2x16xf32>
    %96 = vector.extract_strided_slice %77 {offsets = [0, 48], sizes = [2, 16], strides = [1, 1]} : vector<2x64xf32> to vector<2x16xf32>
    %cst_50 = arith.constant 0.000000e+00 : f32
    %97 = vector.broadcast %cst_50 : f32 to vector<2x16xf32>
    %98 = arith.subf %97, %96 : vector<2x16xf32>
    %99 = math.exp %98 : vector<2x16xf32>
    %cst_51 = arith.constant 1.000000e+00 : f32
    %100 = vector.broadcast %cst_51 : f32 to vector<2x16xf32>
    %101 = arith.addf %100, %99 : vector<2x16xf32>
    %cst_52 = arith.constant 1.000000e+00 : f32
    %102 = vector.broadcast %cst_52 : f32 to vector<2x16xf32>
    %103 = arith.divf %102, %101 : vector<2x16xf32>
    %104 = arith.mulf %93, %74 : vector<2x16xf32>
    %105 = arith.mulf %85, %95 : vector<2x16xf32>
    %106 = arith.addf %104, %105 : vector<2x16xf32>
    %107 = math.tanh %106 : vector<2x16xf32>
    %108 = arith.mulf %103, %107 : vector<2x16xf32>
    %109 = vector.broadcast %71 : vector<2x1xf32> to vector<2x16xf32>
    %110 = arith.mulf %109, %108 : vector<2x16xf32>
    %c0_53 = arith.constant 0 : index
    %c0_54 = arith.constant 0 : index
    %c0_55 = arith.constant 0 : index
    %111 = vector.load %arg8[%c0_53, %c0_54, %c0_55] : memref<1x2x16xf32, #tpu.memory_space<vmem>>, vector<1x2x16xf32>
    %112 = vector.shape_cast %111 : vector<1x2x16xf32> to vector<2x16xf32>
    %113 = vector.shape_cast %110 : vector<2x16xf32> to vector<1x2x16xf32>
    tpu.vector_store %arg8[%c0_53, %c0_54, %c0_55], %113 {strides = array<i32>} : memref<1x2x16xf32, #tpu.memory_space<vmem>>, vector<1x2x16xf32>,
    %114 = vector.broadcast %71 : vector<2x1xf32> to vector<2x16xf32>
    %115 = arith.mulf %114, %108 : vector<2x16xf32>
    %cst_56 = arith.constant 1.000000e+00 : f32
    %116 = vector.broadcast %cst_56 : f32 to vector<2x1xf32>
    %117 = arith.subf %116, %71 : vector<2x1xf32>
    %118 = vector.broadcast %117 : vector<2x1xf32> to vector<2x16xf32>
    %119 = arith.mulf %118, %73 : vector<2x16xf32>
    %120 = arith.addf %115, %119 : vector<2x16xf32>
    %121 = vector.broadcast %71 : vector<2x1xf32> to vector<2x16xf32>
    %122 = arith.mulf %121, %106 : vector<2x16xf32>
    %cst_57 = arith.constant 1.000000e+00 : f32
    %123 = vector.broadcast %cst_57 : f32 to vector<2x1xf32>
    %124 = arith.subf %123, %71 : vector<2x1xf32>
    %125 = vector.broadcast %124 : vector<2x1xf32> to vector<2x16xf32>
    %126 = arith.mulf %125, %74 : vector<2x16xf32>
    %127 = arith.addf %122, %126 : vector<2x16xf32>
    %c0_58 = arith.constant 0 : index
    %c0_59 = arith.constant 0 : index
    %128 = vector.load %arg13[%c0_58, %c0_59] : memref<2x16xf32, #tpu.memory_space<vmem>>, vector<2x16xf32>
    tpu.vector_store %arg13[%c0_58, %c0_59], %120 {strides = array<i32>} : memref<2x16xf32, #tpu.memory_space<vmem>>, vector<2x16xf32>,
    %c0_60 = arith.constant 0 : index
    %c0_61 = arith.constant 0 : index
    %129 = vector.load %arg14[%c0_60, %c0_61] : memref<2x16xf32, #tpu.memory_space<vmem>>, vector<2x16xf32>
    tpu.vector_store %arg14[%c0_60, %c0_61], %127 {strides = array<i32>} : memref<2x16xf32, #tpu.memory_space<vmem>>, vector<2x16xf32>,
    %c7_i32_62 = arith.constant 7 : i32
    %130 = arith.cmpi eq, %arg0, %c7_i32_62 : i32
    %131 = arith.extui %130 : i1 to i32
    %c0_i32_63 = arith.constant 0 : i32
    %132 = arith.cmpi ne, %131, %c0_i32_63 : i32
    scf.if %132 {
      %c0_64 = arith.constant 0 : index
      %c0_65 = arith.constant 0 : index
      %133 = vector.load %arg10[%c0_64, %c0_65] : memref<2x16xf32, #tpu.memory_space<vmem>>, vector<2x16xf32>
      tpu.vector_store %arg10[%c0_64, %c0_65], %120 {strides = array<i32>} : memref<2x16xf32, #tpu.memory_space<vmem>>, vector<2x16xf32>,
    } else {
    }
    return
  }
  func.func @transform_0(%arg0: i32) -> (i32, i32, i32) {
    %c0_i32 = arith.constant 0 : i32
    %c0_i32_0 = arith.constant 0 : i32
    %c0_i32_1 = arith.constant 0 : i32
    return %arg0, %c0_i32, %c0_i32_0 : i32, i32, i32
  }
  func.func @transform_1(%arg0: i32) -> (i32, i32, i32) {
    %c7_i32 = arith.constant 7 : i32
    %0 = arith.subi %c7_i32, %arg0 : i32
    %c0_i32 = arith.constant 0 : i32
    %c0_i32_0 = arith.constant 0 : i32
    %c0_i32_1 = arith.constant 0 : i32
    return %0, %c0_i32, %c0_i32_0 : i32, i32, i32
  }
  func.func @transform_2(%arg0: i32) -> (i32, i32, i32) {
    %c0_i32 = arith.constant 0 : i32
    %c0_i32_0 = arith.constant 0 : i32
    %c0_i32_1 = arith.constant 0 : i32
    return %arg0, %c0_i32, %c0_i32_0 : i32, i32, i32
  }
  func.func @transform_3(%arg0: i32) -> (i32, i32, i32) {
    %c7_i32 = arith.constant 7 : i32
    %0 = arith.subi %c7_i32, %arg0 : i32
    %c0_i32 = arith.constant 0 : i32
    %c0_i32_0 = arith.constant 0 : i32
    %c0_i32_1 = arith.constant 0 : i32
    return %0, %c0_i32, %c0_i32_0 : i32, i32, i32
  }
  func.func @transform_4(%arg0: i32) -> (i32, i32) {
    %c0_i32 = arith.constant 0 : i32
    %c0_i32_0 = arith.constant 0 : i32
    %c0_i32_1 = arith.constant 0 : i32
    return %c0_i32, %c0_i32_0 : i32, i32
  }
  func.func @transform_5(%arg0: i32) -> (i32, i32) {
    %c0_i32 = arith.constant 0 : i32
    %c0_i32_0 = arith.constant 0 : i32
    %c0_i32_1 = arith.constant 0 : i32
    return %c0_i32, %c0_i32_0 : i32, i32
  }
  func.func @transform_6(%arg0: i32) -> (i32, i32, i32) {
    %c0_i32 = arith.constant 0 : i32
    %c0_i32_0 = arith.constant 0 : i32
    %c0_i32_1 = arith.constant 0 : i32
    return %arg0, %c0_i32, %c0_i32_0 : i32, i32, i32
  }
  func.func @transform_7(%arg0: i32) -> (i32, i32, i32) {
    %c7_i32 = arith.constant 7 : i32
    %0 = arith.subi %c7_i32, %arg0 : i32
    %c0_i32 = arith.constant 0 : i32
    %c0_i32_0 = arith.constant 0 : i32
    %c0_i32_1 = arith.constant 0 : i32
    return %0, %c0_i32, %c0_i32_0 : i32, i32, i32
  }
  func.func @transform_8(%arg0: i32) -> (i32, i32) {
    %c0_i32 = arith.constant 0 : i32
    %c0_i32_0 = arith.constant 0 : i32
    %c0_i32_1 = arith.constant 0 : i32
    return %c0_i32, %c0_i32_0 : i32, i32
  }
  func.func @transform_9(%arg0: i32) -> (i32, i32) {
    %c0_i32 = arith.constant 0 : i32
    %c0_i32_0 = arith.constant 0 : i32
    %c0_i32_1 = arith.constant 0 : i32
    return %c0_i32, %c0_i32_0 : i32, i32
  }
}

module attributes {stable_mosaic.version = 11 : i64} {
  func.func @_grouped_linear_kernel(%arg0: i32, %arg1: memref<1x2x64xbf16, #tpu.memory_space<vmem>>, %arg2: memref<1x64x32xbf16, #tpu.memory_space<vmem>>, %arg3: memref<1x1x32xf32, #tpu.memory_space<vmem>>, %arg4: memref<1x1x32xf32, #tpu.memory_space<vmem>>, %arg5: memref<1x1x32xf32, #tpu.memory_space<vmem>>, %arg6: memref<1x2x32xf32, #tpu.memory_space<vmem>>) attributes {dimension_semantics = [#tpu.dimension_semantics<parallel>], iteration_bounds = array<i64: 2>, scalar_prefetch = 0 : i64, scratch_operands = 0 : i64, tpu.core_type = #tpu.core_type<tc>, window_params = [{transform_indices = @transform_0, window_bounds = array<i64: 1, 2, 64>}, {transform_indices = @transform_1, window_bounds = array<i64: 1, 64, 32>}, {transform_indices = @transform_2, window_bounds = array<i64: 1, 1, 32>}, {transform_indices = @transform_3, window_bounds = array<i64: 1, 1, 32>}, {transform_indices = @transform_4, window_bounds = array<i64: 1, 1, 32>}, {transform_indices = @transform_5, window_bounds = array<i64: 1, 2, 32>}]} {
    %c0 = arith.constant 0 : index
    %c0_0 = arith.constant 0 : index
    %c0_1 = arith.constant 0 : index
    %0 = vector.load %arg1[%c0, %c0_0, %c0_1] : memref<1x2x64xbf16, #tpu.memory_space<vmem>>, vector<1x2x64xbf16>
    %1 = vector.shape_cast %0 : vector<1x2x64xbf16> to vector<2x64xbf16>
    %c0_2 = arith.constant 0 : index
    %c0_3 = arith.constant 0 : index
    %c0_4 = arith.constant 0 : index
    %2 = vector.load %arg2[%c0_2, %c0_3, %c0_4] : memref<1x64x32xbf16, #tpu.memory_space<vmem>>, vector<1x64x32xbf16>
    %3 = vector.shape_cast %2 : vector<1x64x32xbf16> to vector<64x32xbf16>
    %cst = arith.constant dense<0.000000e+00> : vector<2x32xf32>
    %4 = tpu.matmul %1, %3, %cst {dimension_numbers = #tpu.dot_dimension_numbers<[1], [0], [0], [1], [0, 0, 1, 1], [], []>} : vector<2x64xbf16>, vector<64x32xbf16>, vector<2x32xf32> -> vector<2x32xf32>
    %c0_5 = arith.constant 0 : index
    %c0_6 = arith.constant 0 : index
    %c0_7 = arith.constant 0 : index
    %5 = vector.load %arg3[%c0_5, %c0_6, %c0_7] : memref<1x1x32xf32, #tpu.memory_space<vmem>>, vector<1x1x32xf32>
    %6 = vector.shape_cast %5 : vector<1x1x32xf32> to vector<1x32xf32>
    %7 = vector.broadcast %6 : vector<1x32xf32> to vector<2x32xf32>
    %8 = arith.addf %4, %7 : vector<2x32xf32>
    %cst_8 = arith.constant 0.000000e+00 : f32
    %9 = vector.broadcast %cst_8 : f32 to vector<2x32xf32>
    %10 = arith.maximumf %8, %9 : vector<2x32xf32>
    %c0_9 = arith.constant 0 : index
    %c0_10 = arith.constant 0 : index
    %c0_11 = arith.constant 0 : index
    %11 = vector.load %arg4[%c0_9, %c0_10, %c0_11] : memref<1x1x32xf32, #tpu.memory_space<vmem>>, vector<1x1x32xf32>
    %12 = vector.shape_cast %11 : vector<1x1x32xf32> to vector<1x32xf32>
    %c0_12 = arith.constant 0 : index
    %c0_13 = arith.constant 0 : index
    %c0_14 = arith.constant 0 : index
    %13 = vector.load %arg5[%c0_12, %c0_13, %c0_14] : memref<1x1x32xf32, #tpu.memory_space<vmem>>, vector<1x1x32xf32>
    %14 = vector.shape_cast %13 : vector<1x1x32xf32> to vector<1x32xf32>
    %cst_15 = arith.constant dense<0.000000e+00> : vector<2xf32>
    %15 = vector.multi_reduction <add>, %10, %cst_15 [1] : vector<2x32xf32> to vector<2xf32>
    %16 = vector.shape_cast %15 : vector<2xf32> to vector<2x1xf32>
    %cst_16 = arith.constant 3.200000e+01 : f32
    %17 = vector.broadcast %cst_16 : f32 to vector<2x1xf32>
    %18 = arith.divf %16, %17 : vector<2x1xf32>
    %19 = vector.broadcast %18 : vector<2x1xf32> to vector<2x32xf32>
    %20 = arith.subf %10, %19 : vector<2x32xf32>
    %21 = arith.mulf %20, %20 : vector<2x32xf32>
    %cst_17 = arith.constant dense<0.000000e+00> : vector<2xf32>
    %22 = vector.multi_reduction <add>, %21, %cst_17 [1] : vector<2x32xf32> to vector<2xf32>
    %23 = vector.shape_cast %22 : vector<2xf32> to vector<2x1xf32>
    %cst_18 = arith.constant 3.200000e+01 : f32
    %24 = vector.broadcast %cst_18 : f32 to vector<2x1xf32>
    %25 = arith.divf %23, %24 : vector<2x1xf32>
    %26 = vector.broadcast %18 : vector<2x1xf32> to vector<2x32xf32>
    %27 = arith.subf %10, %26 : vector<2x32xf32>
    %cst_19 = arith.constant 9.99999974E-6 : f32
    %28 = vector.broadcast %cst_19 : f32 to vector<2x1xf32>
    %29 = arith.addf %25, %28 : vector<2x1xf32>
    %30 = math.rsqrt %29 : vector<2x1xf32>
    %31 = vector.broadcast %30 : vector<2x1xf32> to vector<2x32xf32>
    %32 = arith.mulf %27, %31 : vector<2x32xf32>
    %33 = vector.broadcast %12 : vector<1x32xf32> to vector<2x32xf32>
    %34 = arith.mulf %32, %33 : vector<2x32xf32>
    %35 = vector.broadcast %14 : vector<1x32xf32> to vector<2x32xf32>
    %36 = arith.addf %34, %35 : vector<2x32xf32>
    %c0_20 = arith.constant 0 : index
    %c0_21 = arith.constant 0 : index
    %c0_22 = arith.constant 0 : index
    %37 = vector.load %arg6[%c0_20, %c0_21, %c0_22] : memref<1x2x32xf32, #tpu.memory_space<vmem>>, vector<1x2x32xf32>
    %38 = vector.shape_cast %37 : vector<1x2x32xf32> to vector<2x32xf32>
    %39 = vector.shape_cast %36 : vector<2x32xf32> to vector<1x2x32xf32>
    tpu.vector_store %arg6[%c0_20, %c0_21, %c0_22], %39 {strides = array<i32>} : memref<1x2x32xf32, #tpu.memory_space<vmem>>, vector<1x2x32xf32>,
    return
  }
  func.func @transform_0(%arg0: i32) -> (i32, i32, i32) {
    %c0_i32 = arith.constant 0 : i32
    %c0_i32_0 = arith.constant 0 : i32
    %c0_i32_1 = arith.constant 0 : i32
    return %arg0, %c0_i32, %c0_i32_0 : i32, i32, i32
  }
  func.func @transform_1(%arg0: i32) -> (i32, i32, i32) {
    %c0_i32 = arith.constant 0 : i32
    %c0_i32_0 = arith.constant 0 : i32
    %c0_i32_1 = arith.constant 0 : i32
    return %arg0, %c0_i32, %c0_i32_0 : i32, i32, i32
  }
  func.func @transform_2(%arg0: i32) -> (i32, i32, i32) {
    %c0_i32 = arith.constant 0 : i32
    %c0_i32_0 = arith.constant 0 : i32
    %c0_i32_1 = arith.constant 0 : i32
    return %arg0, %c0_i32, %c0_i32_0 : i32, i32, i32
  }
  func.func @transform_3(%arg0: i32) -> (i32, i32, i32) {
    %c0_i32 = arith.constant 0 : i32
    %c0_i32_0 = arith.constant 0 : i32
    %c0_i32_1 = arith.constant 0 : i32
    return %arg0, %c0_i32, %c0_i32_0 : i32, i32, i32
  }
  func.func @transform_4(%arg0: i32) -> (i32, i32, i32) {
    %c0_i32 = arith.constant 0 : i32
    %c0_i32_0 = arith.constant 0 : i32
    %c0_i32_1 = arith.constant 0 : i32
    return %arg0, %c0_i32, %c0_i32_0 : i32, i32, i32
  }
  func.func @transform_5(%arg0: i32) -> (i32, i32, i32) {
    %c0_i32 = arith.constant 0 : i32
    %c0_i32_0 = arith.constant 0 : i32
    %c0_i32_1 = arith.constant 0 : i32
    return %arg0, %c0_i32, %c0_i32_0 : i32, i32, i32
  }
}

module attributes {stable_mosaic.version = 11 : i64} {
  func.func @_masked_mean_kernel(%arg0: i32, %arg1: memref<2x8x768xf32, #tpu.memory_space<vmem>>, %arg2: memref<2x8x1xf32, #tpu.memory_space<vmem>>, %arg3: memref<2x768xf32, #tpu.memory_space<vmem>>) attributes {dimension_semantics = [#tpu.dimension_semantics<parallel>], iteration_bounds = array<i64: 1>, scalar_prefetch = 0 : i64, scratch_operands = 0 : i64, tpu.core_type = #tpu.core_type<tc>, window_params = [{transform_indices = @transform_0, window_bounds = array<i64: 2, 8, 768>}, {transform_indices = @transform_1, window_bounds = array<i64: 2, 8, 1>}, {transform_indices = @transform_2, window_bounds = array<i64: 2, 768>}]} {
    %c0 = arith.constant 0 : index
    %c0_0 = arith.constant 0 : index
    %c0_1 = arith.constant 0 : index
    %0 = vector.load %arg1[%c0, %c0_0, %c0_1] : memref<2x8x768xf32, #tpu.memory_space<vmem>>, vector<2x8x768xf32>
    %c0_2 = arith.constant 0 : index
    %c0_3 = arith.constant 0 : index
    %c0_4 = arith.constant 0 : index
    %1 = vector.load %arg2[%c0_2, %c0_3, %c0_4] : memref<2x8x1xf32, #tpu.memory_space<vmem>>, vector<2x8x1xf32>
    %2 = vector.broadcast %1 : vector<2x8x1xf32> to vector<2x8x768xf32>
    %3 = arith.mulf %0, %2 : vector<2x8x768xf32>
    %cst = arith.constant dense<0.000000e+00> : vector<2x768xf32>
    %4 = vector.multi_reduction <add>, %3, %cst [1] : vector<2x8x768xf32> to vector<2x768xf32>
    %cst_5 = arith.constant dense<0.000000e+00> : vector<2x1xf32>
    %5 = vector.multi_reduction <add>, %1, %cst_5 [1] : vector<2x8x1xf32> to vector<2x1xf32>
    %cst_6 = arith.constant 1.000000e+00 : f32
    %6 = vector.broadcast %cst_6 : f32 to vector<2x1xf32>
    %7 = arith.maximumf %5, %6 : vector<2x1xf32>
    %8 = vector.broadcast %7 : vector<2x1xf32> to vector<2x768xf32>
    %9 = arith.divf %4, %8 : vector<2x768xf32>
    %c0_7 = arith.constant 0 : index
    %c0_8 = arith.constant 0 : index
    %10 = vector.load %arg3[%c0_7, %c0_8] : memref<2x768xf32, #tpu.memory_space<vmem>>, vector<2x768xf32>
    tpu.vector_store %arg3[%c0_7, %c0_8], %9 {strides = array<i32>} : memref<2x768xf32, #tpu.memory_space<vmem>>, vector<2x768xf32>,
    return
  }
  func.func @transform_0(%arg0: i32) -> (i32, i32, i32) {
    %c0_i32 = arith.constant 0 : i32
    %c0_i32_0 = arith.constant 0 : i32
    %c0_i32_1 = arith.constant 0 : i32
    return %arg0, %c0_i32, %c0_i32_0 : i32, i32, i32
  }
  func.func @transform_1(%arg0: i32) -> (i32, i32, i32) {
    %c0_i32 = arith.constant 0 : i32
    %c0_i32_0 = arith.constant 0 : i32
    %c0_i32_1 = arith.constant 0 : i32
    return %arg0, %c0_i32, %c0_i32_0 : i32, i32, i32
  }
  func.func @transform_2(%arg0: i32) -> (i32, i32) {
    %c0_i32 = arith.constant 0 : i32
    %c0_i32_0 = arith.constant 0 : i32
    return %arg0, %c0_i32 : i32, i32
  }
}

module attributes {stable_mosaic.version = 11 : i64} {
  func.func @_fused_linear_single_kernel(%arg0: i32, %arg1: i32, %arg2: memref<2x768xbf16, #tpu.memory_space<vmem>>, %arg3: memref<768x32xbf16, #tpu.memory_space<vmem>>, %arg4: memref<1x32xf32, #tpu.memory_space<vmem>>, %arg5: memref<1x32xf32, #tpu.memory_space<vmem>>, %arg6: memref<1x32xf32, #tpu.memory_space<vmem>>, %arg7: memref<2x32xf32, #tpu.memory_space<vmem>>) attributes {dimension_semantics = [#tpu.dimension_semantics<parallel>, #tpu.dimension_semantics<parallel>], iteration_bounds = array<i64: 1, 1>, scalar_prefetch = 0 : i64, scratch_operands = 0 : i64, tpu.core_type = #tpu.core_type<tc>, window_params = [{transform_indices = @transform_0, window_bounds = array<i64: 2, 768>}, {transform_indices = @transform_1, window_bounds = array<i64: 768, 32>}, {transform_indices = @transform_2, window_bounds = array<i64: 1, 32>}, {transform_indices = @transform_3, window_bounds = array<i64: 1, 32>}, {transform_indices = @transform_4, window_bounds = array<i64: 1, 32>}, {transform_indices = @transform_5, window_bounds = array<i64: 2, 32>}]} {
    %c0 = arith.constant 0 : index
    %c0_0 = arith.constant 0 : index
    %0 = vector.load %arg2[%c0, %c0_0] : memref<2x768xbf16, #tpu.memory_space<vmem>>, vector<2x768xbf16>
    %c0_1 = arith.constant 0 : index
    %c0_2 = arith.constant 0 : index
    %1 = vector.load %arg3[%c0_1, %c0_2] : memref<768x32xbf16, #tpu.memory_space<vmem>>, vector<768x32xbf16>
    %cst = arith.constant dense<0.000000e+00> : vector<2x32xf32>
    %2 = tpu.matmul %0, %1, %cst {dimension_numbers = #tpu.dot_dimension_numbers<[1], [0], [0], [1], [0, 0, 1, 1], [], []>} : vector<2x768xbf16>, vector<768x32xbf16>, vector<2x32xf32> -> vector<2x32xf32>
    %c0_3 = arith.constant 0 : index
    %c0_4 = arith.constant 0 : index
    %3 = vector.load %arg4[%c0_3, %c0_4] : memref<1x32xf32, #tpu.memory_space<vmem>>, vector<1x32xf32>
    %4 = vector.broadcast %3 : vector<1x32xf32> to vector<2x32xf32>
    %5 = arith.addf %2, %4 : vector<2x32xf32>
    %cst_5 = arith.constant 0.000000e+00 : f32
    %6 = vector.broadcast %cst_5 : f32 to vector<2x32xf32>
    %7 = arith.maximumf %5, %6 : vector<2x32xf32>
    %c0_6 = arith.constant 0 : index
    %c0_7 = arith.constant 0 : index
    %8 = vector.load %arg5[%c0_6, %c0_7] : memref<1x32xf32, #tpu.memory_space<vmem>>, vector<1x32xf32>
    %c0_8 = arith.constant 0 : index
    %c0_9 = arith.constant 0 : index
    %9 = vector.load %arg6[%c0_8, %c0_9] : memref<1x32xf32, #tpu.memory_space<vmem>>, vector<1x32xf32>
    %cst_10 = arith.constant dense<0.000000e+00> : vector<2xf32>
    %10 = vector.multi_reduction <add>, %7, %cst_10 [1] : vector<2x32xf32> to vector<2xf32>
    %11 = vector.shape_cast %10 : vector<2xf32> to vector<2x1xf32>
    %cst_11 = arith.constant 3.200000e+01 : f32
    %12 = vector.broadcast %cst_11 : f32 to vector<2x1xf32>
    %13 = arith.divf %11, %12 : vector<2x1xf32>
    %14 = vector.broadcast %13 : vector<2x1xf32> to vector<2x32xf32>
    %15 = arith.subf %7, %14 : vector<2x32xf32>
    %16 = arith.mulf %15, %15 : vector<2x32xf32>
    %cst_12 = arith.constant dense<0.000000e+00> : vector<2xf32>
    %17 = vector.multi_reduction <add>, %16, %cst_12 [1] : vector<2x32xf32> to vector<2xf32>
    %18 = vector.shape_cast %17 : vector<2xf32> to vector<2x1xf32>
    %cst_13 = arith.constant 3.200000e+01 : f32
    %19 = vector.broadcast %cst_13 : f32 to vector<2x1xf32>
    %20 = arith.divf %18, %19 : vector<2x1xf32>
    %21 = vector.broadcast %13 : vector<2x1xf32> to vector<2x32xf32>
    %22 = arith.subf %7, %21 : vector<2x32xf32>
    %cst_14 = arith.constant 9.99999974E-6 : f32
    %23 = vector.broadcast %cst_14 : f32 to vector<2x1xf32>
    %24 = arith.addf %20, %23 : vector<2x1xf32>
    %25 = math.rsqrt %24 : vector<2x1xf32>
    %26 = vector.broadcast %25 : vector<2x1xf32> to vector<2x32xf32>
    %27 = arith.mulf %22, %26 : vector<2x32xf32>
    %28 = vector.broadcast %8 : vector<1x32xf32> to vector<2x32xf32>
    %29 = arith.mulf %27, %28 : vector<2x32xf32>
    %30 = vector.broadcast %9 : vector<1x32xf32> to vector<2x32xf32>
    %31 = arith.addf %29, %30 : vector<2x32xf32>
    %c0_15 = arith.constant 0 : index
    %c0_16 = arith.constant 0 : index
    %32 = vector.load %arg7[%c0_15, %c0_16] : memref<2x32xf32, #tpu.memory_space<vmem>>, vector<2x32xf32>
    tpu.vector_store %arg7[%c0_15, %c0_16], %31 {strides = array<i32>} : memref<2x32xf32, #tpu.memory_space<vmem>>, vector<2x32xf32>,
    return
  }
  func.func @transform_0(%arg0: i32, %arg1: i32) -> (i32, i32) {
    %c0_i32 = arith.constant 0 : i32
    %c0_i32_0 = arith.constant 0 : i32
    return %arg0, %c0_i32 : i32, i32
  }
  func.func @transform_1(%arg0: i32, %arg1: i32) -> (i32, i32) {
    %c0_i32 = arith.constant 0 : i32
    %c0_i32_0 = arith.constant 0 : i32
    return %c0_i32, %arg1 : i32, i32
  }
  func.func @transform_2(%arg0: i32, %arg1: i32) -> (i32, i32) {
    %c0_i32 = arith.constant 0 : i32
    %c0_i32_0 = arith.constant 0 : i32
    return %c0_i32, %arg1 : i32, i32
  }
  func.func @transform_3(%arg0: i32, %arg1: i32) -> (i32, i32) {
    %c0_i32 = arith.constant 0 : i32
    %c0_i32_0 = arith.constant 0 : i32
    return %c0_i32, %arg1 : i32, i32
  }
  func.func @transform_4(%arg0: i32, %arg1: i32) -> (i32, i32) {
    %c0_i32 = arith.constant 0 : i32
    %c0_i32_0 = arith.constant 0 : i32
    return %c0_i32, %arg1 : i32, i32
  }
  func.func @transform_5(%arg0: i32, %arg1: i32) -> (i32, i32) {
    %c0_i32 = arith.constant 0 : i32
    return %arg0, %arg1 : i32, i32
  }
}

module attributes {stable_mosaic.version = 11 : i64} {
  func.func @_grouped_linear_kernel(%arg0: i32, %arg1: memref<1x4x32xbf16, #tpu.memory_space<vmem>>, %arg2: memref<1x32x32xbf16, #tpu.memory_space<vmem>>, %arg3: memref<1x1x32xf32, #tpu.memory_space<vmem>>, %arg4: memref<1x1x32xf32, #tpu.memory_space<vmem>>, %arg5: memref<1x1x32xf32, #tpu.memory_space<vmem>>, %arg6: memref<1x4x32xf32, #tpu.memory_space<vmem>>) attributes {dimension_semantics = [#tpu.dimension_semantics<parallel>], iteration_bounds = array<i64: 3>, scalar_prefetch = 0 : i64, scratch_operands = 0 : i64, tpu.core_type = #tpu.core_type<tc>, window_params = [{transform_indices = @transform_0, window_bounds = array<i64: 1, 4, 32>}, {transform_indices = @transform_1, window_bounds = array<i64: 1, 32, 32>}, {transform_indices = @transform_2, window_bounds = array<i64: 1, 1, 32>}, {transform_indices = @transform_3, window_bounds = array<i64: 1, 1, 32>}, {transform_indices = @transform_4, window_bounds = array<i64: 1, 1, 32>}, {transform_indices = @transform_5, window_bounds = array<i64: 1, 4, 32>}]} {
    %c0 = arith.constant 0 : index
    %c0_0 = arith.constant 0 : index
    %c0_1 = arith.constant 0 : index
    %0 = vector.load %arg1[%c0, %c0_0, %c0_1] : memref<1x4x32xbf16, #tpu.memory_space<vmem>>, vector<1x4x32xbf16>
    %1 = vector.shape_cast %0 : vector<1x4x32xbf16> to vector<4x32xbf16>
    %c0_2 = arith.constant 0 : index
    %c0_3 = arith.constant 0 : index
    %c0_4 = arith.constant 0 : index
    %2 = vector.load %arg2[%c0_2, %c0_3, %c0_4] : memref<1x32x32xbf16, #tpu.memory_space<vmem>>, vector<1x32x32xbf16>
    %3 = vector.shape_cast %2 : vector<1x32x32xbf16> to vector<32x32xbf16>
    %cst = arith.constant dense<0.000000e+00> : vector<4x32xf32>
    %4 = tpu.matmul %1, %3, %cst {dimension_numbers = #tpu.dot_dimension_numbers<[1], [0], [0], [1], [0, 0, 1, 1], [], []>} : vector<4x32xbf16>, vector<32x32xbf16>, vector<4x32xf32> -> vector<4x32xf32>
    %c0_5 = arith.constant 0 : index
    %c0_6 = arith.constant 0 : index
    %c0_7 = arith.constant 0 : index
    %5 = vector.load %arg3[%c0_5, %c0_6, %c0_7] : memref<1x1x32xf32, #tpu.memory_space<vmem>>, vector<1x1x32xf32>
    %6 = vector.shape_cast %5 : vector<1x1x32xf32> to vector<1x32xf32>
    %7 = vector.broadcast %6 : vector<1x32xf32> to vector<4x32xf32>
    %8 = arith.addf %4, %7 : vector<4x32xf32>
    %cst_8 = arith.constant 0.000000e+00 : f32
    %9 = vector.broadcast %cst_8 : f32 to vector<4x32xf32>
    %10 = arith.maximumf %8, %9 : vector<4x32xf32>
    %c0_9 = arith.constant 0 : index
    %c0_10 = arith.constant 0 : index
    %c0_11 = arith.constant 0 : index
    %11 = vector.load %arg4[%c0_9, %c0_10, %c0_11] : memref<1x1x32xf32, #tpu.memory_space<vmem>>, vector<1x1x32xf32>
    %12 = vector.shape_cast %11 : vector<1x1x32xf32> to vector<1x32xf32>
    %c0_12 = arith.constant 0 : index
    %c0_13 = arith.constant 0 : index
    %c0_14 = arith.constant 0 : index
    %13 = vector.load %arg5[%c0_12, %c0_13, %c0_14] : memref<1x1x32xf32, #tpu.memory_space<vmem>>, vector<1x1x32xf32>
    %14 = vector.shape_cast %13 : vector<1x1x32xf32> to vector<1x32xf32>
    %cst_15 = arith.constant dense<0.000000e+00> : vector<4xf32>
    %15 = vector.multi_reduction <add>, %10, %cst_15 [1] : vector<4x32xf32> to vector<4xf32>
    %16 = vector.shape_cast %15 : vector<4xf32> to vector<4x1xf32>
    %cst_16 = arith.constant 3.200000e+01 : f32
    %17 = vector.broadcast %cst_16 : f32 to vector<4x1xf32>
    %18 = arith.divf %16, %17 : vector<4x1xf32>
    %19 = vector.broadcast %18 : vector<4x1xf32> to vector<4x32xf32>
    %20 = arith.subf %10, %19 : vector<4x32xf32>
    %21 = arith.mulf %20, %20 : vector<4x32xf32>
    %cst_17 = arith.constant dense<0.000000e+00> : vector<4xf32>
    %22 = vector.multi_reduction <add>, %21, %cst_17 [1] : vector<4x32xf32> to vector<4xf32>
    %23 = vector.shape_cast %22 : vector<4xf32> to vector<4x1xf32>
    %cst_18 = arith.constant 3.200000e+01 : f32
    %24 = vector.broadcast %cst_18 : f32 to vector<4x1xf32>
    %25 = arith.divf %23, %24 : vector<4x1xf32>
    %26 = vector.broadcast %18 : vector<4x1xf32> to vector<4x32xf32>
    %27 = arith.subf %10, %26 : vector<4x32xf32>
    %cst_19 = arith.constant 9.99999974E-6 : f32
    %28 = vector.broadcast %cst_19 : f32 to vector<4x1xf32>
    %29 = arith.addf %25, %28 : vector<4x1xf32>
    %30 = math.rsqrt %29 : vector<4x1xf32>
    %31 = vector.broadcast %30 : vector<4x1xf32> to vector<4x32xf32>
    %32 = arith.mulf %27, %31 : vector<4x32xf32>
    %33 = vector.broadcast %12 : vector<1x32xf32> to vector<4x32xf32>
    %34 = arith.mulf %32, %33 : vector<4x32xf32>
    %35 = vector.broadcast %14 : vector<1x32xf32> to vector<4x32xf32>
    %36 = arith.addf %34, %35 : vector<4x32xf32>
    %c0_20 = arith.constant 0 : index
    %c0_21 = arith.constant 0 : index
    %c0_22 = arith.constant 0 : index
    %37 = vector.load %arg6[%c0_20, %c0_21, %c0_22] : memref<1x4x32xf32, #tpu.memory_space<vmem>>, vector<1x4x32xf32>
    %38 = vector.shape_cast %37 : vector<1x4x32xf32> to vector<4x32xf32>
    %39 = vector.shape_cast %36 : vector<4x32xf32> to vector<1x4x32xf32>
    tpu.vector_store %arg6[%c0_20, %c0_21, %c0_22], %39 {strides = array<i32>} : memref<1x4x32xf32, #tpu.memory_space<vmem>>, vector<1x4x32xf32>,
    return
  }
  func.func @transform_0(%arg0: i32) -> (i32, i32, i32) {
    %c0_i32 = arith.constant 0 : i32
    %c0_i32_0 = arith.constant 0 : i32
    %c0_i32_1 = arith.constant 0 : i32
    return %arg0, %c0_i32, %c0_i32_0 : i32, i32, i32
  }
  func.func @transform_1(%arg0: i32) -> (i32, i32, i32) {
    %c0_i32 = arith.constant 0 : i32
    %c0_i32_0 = arith.constant 0 : i32
    %c0_i32_1 = arith.constant 0 : i32
    return %arg0, %c0_i32, %c0_i32_0 : i32, i32, i32
  }
  func.func @transform_2(%arg0: i32) -> (i32, i32, i32) {
    %c0_i32 = arith.constant 0 : i32
    %c0_i32_0 = arith.constant 0 : i32
    %c0_i32_1 = arith.constant 0 : i32
    return %arg0, %c0_i32, %c0_i32_0 : i32, i32, i32
  }
  func.func @transform_3(%arg0: i32) -> (i32, i32, i32) {
    %c0_i32 = arith.constant 0 : i32
    %c0_i32_0 = arith.constant 0 : i32
    %c0_i32_1 = arith.constant 0 : i32
    return %arg0, %c0_i32, %c0_i32_0 : i32, i32, i32
  }
  func.func @transform_4(%arg0: i32) -> (i32, i32, i32) {
    %c0_i32 = arith.constant 0 : i32
    %c0_i32_0 = arith.constant 0 : i32
    %c0_i32_1 = arith.constant 0 : i32
    return %arg0, %c0_i32, %c0_i32_0 : i32, i32, i32
  }
  func.func @transform_5(%arg0: i32) -> (i32, i32, i32) {
    %c0_i32 = arith.constant 0 : i32
    %c0_i32_0 = arith.constant 0 : i32
    %c0_i32_1 = arith.constant 0 : i32
    return %arg0, %c0_i32, %c0_i32_0 : i32, i32, i32
  }
}

module attributes {stable_mosaic.version = 11 : i64} {
  func.func @_grouped_linear_kernel(%arg0: i32, %arg1: memref<1x4x64xbf16, #tpu.memory_space<vmem>>, %arg2: memref<1x64x64xbf16, #tpu.memory_space<vmem>>, %arg3: memref<1x1x64xf32, #tpu.memory_space<vmem>>, %arg4: memref<1x1x64xf32, #tpu.memory_space<vmem>>, %arg5: memref<1x1x64xf32, #tpu.memory_space<vmem>>, %arg6: memref<1x4x64xf32, #tpu.memory_space<vmem>>) attributes {dimension_semantics = [#tpu.dimension_semantics<parallel>], iteration_bounds = array<i64: 2>, scalar_prefetch = 0 : i64, scratch_operands = 0 : i64, tpu.core_type = #tpu.core_type<tc>, window_params = [{transform_indices = @transform_0, window_bounds = array<i64: 1, 4, 64>}, {transform_indices = @transform_1, window_bounds = array<i64: 1, 64, 64>}, {transform_indices = @transform_2, window_bounds = array<i64: 1, 1, 64>}, {transform_indices = @transform_3, window_bounds = array<i64: 1, 1, 64>}, {transform_indices = @transform_4, window_bounds = array<i64: 1, 1, 64>}, {transform_indices = @transform_5, window_bounds = array<i64: 1, 4, 64>}]} {
    %c0 = arith.constant 0 : index
    %c0_0 = arith.constant 0 : index
    %c0_1 = arith.constant 0 : index
    %0 = vector.load %arg1[%c0, %c0_0, %c0_1] : memref<1x4x64xbf16, #tpu.memory_space<vmem>>, vector<1x4x64xbf16>
    %1 = vector.shape_cast %0 : vector<1x4x64xbf16> to vector<4x64xbf16>
    %c0_2 = arith.constant 0 : index
    %c0_3 = arith.constant 0 : index
    %c0_4 = arith.constant 0 : index
    %2 = vector.load %arg2[%c0_2, %c0_3, %c0_4] : memref<1x64x64xbf16, #tpu.memory_space<vmem>>, vector<1x64x64xbf16>
    %3 = vector.shape_cast %2 : vector<1x64x64xbf16> to vector<64x64xbf16>
    %cst = arith.constant dense<0.000000e+00> : vector<4x64xf32>
    %4 = tpu.matmul %1, %3, %cst {dimension_numbers = #tpu.dot_dimension_numbers<[1], [0], [0], [1], [0, 0, 1, 1], [], []>} : vector<4x64xbf16>, vector<64x64xbf16>, vector<4x64xf32> -> vector<4x64xf32>
    %c0_5 = arith.constant 0 : index
    %c0_6 = arith.constant 0 : index
    %c0_7 = arith.constant 0 : index
    %5 = vector.load %arg3[%c0_5, %c0_6, %c0_7] : memref<1x1x64xf32, #tpu.memory_space<vmem>>, vector<1x1x64xf32>
    %6 = vector.shape_cast %5 : vector<1x1x64xf32> to vector<1x64xf32>
    %7 = vector.broadcast %6 : vector<1x64xf32> to vector<4x64xf32>
    %8 = arith.addf %4, %7 : vector<4x64xf32>
    %cst_8 = arith.constant 0.000000e+00 : f32
    %9 = vector.broadcast %cst_8 : f32 to vector<4x64xf32>
    %10 = arith.maximumf %8, %9 : vector<4x64xf32>
    %c0_9 = arith.constant 0 : index
    %c0_10 = arith.constant 0 : index
    %c0_11 = arith.constant 0 : index
    %11 = vector.load %arg4[%c0_9, %c0_10, %c0_11] : memref<1x1x64xf32, #tpu.memory_space<vmem>>, vector<1x1x64xf32>
    %12 = vector.shape_cast %11 : vector<1x1x64xf32> to vector<1x64xf32>
    %c0_12 = arith.constant 0 : index
    %c0_13 = arith.constant 0 : index
    %c0_14 = arith.constant 0 : index
    %13 = vector.load %arg5[%c0_12, %c0_13, %c0_14] : memref<1x1x64xf32, #tpu.memory_space<vmem>>, vector<1x1x64xf32>
    %14 = vector.shape_cast %13 : vector<1x1x64xf32> to vector<1x64xf32>
    %cst_15 = arith.constant dense<0.000000e+00> : vector<4xf32>
    %15 = vector.multi_reduction <add>, %10, %cst_15 [1] : vector<4x64xf32> to vector<4xf32>
    %16 = vector.shape_cast %15 : vector<4xf32> to vector<4x1xf32>
    %cst_16 = arith.constant 6.400000e+01 : f32
    %17 = vector.broadcast %cst_16 : f32 to vector<4x1xf32>
    %18 = arith.divf %16, %17 : vector<4x1xf32>
    %19 = vector.broadcast %18 : vector<4x1xf32> to vector<4x64xf32>
    %20 = arith.subf %10, %19 : vector<4x64xf32>
    %21 = arith.mulf %20, %20 : vector<4x64xf32>
    %cst_17 = arith.constant dense<0.000000e+00> : vector<4xf32>
    %22 = vector.multi_reduction <add>, %21, %cst_17 [1] : vector<4x64xf32> to vector<4xf32>
    %23 = vector.shape_cast %22 : vector<4xf32> to vector<4x1xf32>
    %cst_18 = arith.constant 6.400000e+01 : f32
    %24 = vector.broadcast %cst_18 : f32 to vector<4x1xf32>
    %25 = arith.divf %23, %24 : vector<4x1xf32>
    %26 = vector.broadcast %18 : vector<4x1xf32> to vector<4x64xf32>
    %27 = arith.subf %10, %26 : vector<4x64xf32>
    %cst_19 = arith.constant 9.99999974E-6 : f32
    %28 = vector.broadcast %cst_19 : f32 to vector<4x1xf32>
    %29 = arith.addf %25, %28 : vector<4x1xf32>
    %30 = math.rsqrt %29 : vector<4x1xf32>
    %31 = vector.broadcast %30 : vector<4x1xf32> to vector<4x64xf32>
    %32 = arith.mulf %27, %31 : vector<4x64xf32>
    %33 = vector.broadcast %12 : vector<1x64xf32> to vector<4x64xf32>
    %34 = arith.mulf %32, %33 : vector<4x64xf32>
    %35 = vector.broadcast %14 : vector<1x64xf32> to vector<4x64xf32>
    %36 = arith.addf %34, %35 : vector<4x64xf32>
    %c0_20 = arith.constant 0 : index
    %c0_21 = arith.constant 0 : index
    %c0_22 = arith.constant 0 : index
    %37 = vector.load %arg6[%c0_20, %c0_21, %c0_22] : memref<1x4x64xf32, #tpu.memory_space<vmem>>, vector<1x4x64xf32>
    %38 = vector.shape_cast %37 : vector<1x4x64xf32> to vector<4x64xf32>
    %39 = vector.shape_cast %36 : vector<4x64xf32> to vector<1x4x64xf32>
    tpu.vector_store %arg6[%c0_20, %c0_21, %c0_22], %39 {strides = array<i32>} : memref<1x4x64xf32, #tpu.memory_space<vmem>>, vector<1x4x64xf32>,
    return
  }
  func.func @transform_0(%arg0: i32) -> (i32, i32, i32) {
    %c0_i32 = arith.constant 0 : i32
    %c0_i32_0 = arith.constant 0 : i32
    %c0_i32_1 = arith.constant 0 : i32
    return %arg0, %c0_i32, %c0_i32_0 : i32, i32, i32
  }
  func.func @transform_1(%arg0: i32) -> (i32, i32, i32) {
    %c0_i32 = arith.constant 0 : i32
    %c0_i32_0 = arith.constant 0 : i32
    %c0_i32_1 = arith.constant 0 : i32
    return %arg0, %c0_i32, %c0_i32_0 : i32, i32, i32
  }
  func.func @transform_2(%arg0: i32) -> (i32, i32, i32) {
    %c0_i32 = arith.constant 0 : i32
    %c0_i32_0 = arith.constant 0 : i32
    %c0_i32_1 = arith.constant 0 : i32
    return %arg0, %c0_i32, %c0_i32_0 : i32, i32, i32
  }
  func.func @transform_3(%arg0: i32) -> (i32, i32, i32) {
    %c0_i32 = arith.constant 0 : i32
    %c0_i32_0 = arith.constant 0 : i32
    %c0_i32_1 = arith.constant 0 : i32
    return %arg0, %c0_i32, %c0_i32_0 : i32, i32, i32
  }
  func.func @transform_4(%arg0: i32) -> (i32, i32, i32) {
    %c0_i32 = arith.constant 0 : i32
    %c0_i32_0 = arith.constant 0 : i32
    %c0_i32_1 = arith.constant 0 : i32
    return %arg0, %c0_i32, %c0_i32_0 : i32, i32, i32
  }
  func.func @transform_5(%arg0: i32) -> (i32, i32, i32) {
    %c0_i32 = arith.constant 0 : i32
    %c0_i32_0 = arith.constant 0 : i32
    %c0_i32_1 = arith.constant 0 : i32
    return %arg0, %c0_i32, %c0_i32_0 : i32, i32, i32
  }
}

module attributes {stable_mosaic.version = 11 : i64} {
  func.func @_grouped_linear_kernel(%arg0: i32, %arg1: memref<1x4x64xbf16, #tpu.memory_space<vmem>>, %arg2: memref<1x64x32xbf16, #tpu.memory_space<vmem>>, %arg3: memref<1x1x32xf32, #tpu.memory_space<vmem>>, %arg4: memref<1x4x32xf32, #tpu.memory_space<vmem>>) attributes {dimension_semantics = [#tpu.dimension_semantics<parallel>], iteration_bounds = array<i64: 2>, scalar_prefetch = 0 : i64, scratch_operands = 0 : i64, tpu.core_type = #tpu.core_type<tc>, window_params = [{transform_indices = @transform_0, window_bounds = array<i64: 1, 4, 64>}, {transform_indices = @transform_1, window_bounds = array<i64: 1, 64, 32>}, {transform_indices = @transform_2, window_bounds = array<i64: 1, 1, 32>}, {transform_indices = @transform_3, window_bounds = array<i64: 1, 4, 32>}]} {
    %c0 = arith.constant 0 : index
    %c0_0 = arith.constant 0 : index
    %c0_1 = arith.constant 0 : index
    %0 = vector.load %arg1[%c0, %c0_0, %c0_1] : memref<1x4x64xbf16, #tpu.memory_space<vmem>>, vector<1x4x64xbf16>
    %1 = vector.shape_cast %0 : vector<1x4x64xbf16> to vector<4x64xbf16>
    %c0_2 = arith.constant 0 : index
    %c0_3 = arith.constant 0 : index
    %c0_4 = arith.constant 0 : index
    %2 = vector.load %arg2[%c0_2, %c0_3, %c0_4] : memref<1x64x32xbf16, #tpu.memory_space<vmem>>, vector<1x64x32xbf16>
    %3 = vector.shape_cast %2 : vector<1x64x32xbf16> to vector<64x32xbf16>
    %cst = arith.constant dense<0.000000e+00> : vector<4x32xf32>
    %4 = tpu.matmul %1, %3, %cst {dimension_numbers = #tpu.dot_dimension_numbers<[1], [0], [0], [1], [0, 0, 1, 1], [], []>} : vector<4x64xbf16>, vector<64x32xbf16>, vector<4x32xf32> -> vector<4x32xf32>
    %c0_5 = arith.constant 0 : index
    %c0_6 = arith.constant 0 : index
    %c0_7 = arith.constant 0 : index
    %5 = vector.load %arg3[%c0_5, %c0_6, %c0_7] : memref<1x1x32xf32, #tpu.memory_space<vmem>>, vector<1x1x32xf32>
    %6 = vector.shape_cast %5 : vector<1x1x32xf32> to vector<1x32xf32>
    %7 = vector.broadcast %6 : vector<1x32xf32> to vector<4x32xf32>
    %8 = arith.addf %4, %7 : vector<4x32xf32>
    %c0_8 = arith.constant 0 : index
    %c0_9 = arith.constant 0 : index
    %c0_10 = arith.constant 0 : index
    %9 = vector.load %arg4[%c0_8, %c0_9, %c0_10] : memref<1x4x32xf32, #tpu.memory_space<vmem>>, vector<1x4x32xf32>
    %10 = vector.shape_cast %9 : vector<1x4x32xf32> to vector<4x32xf32>
    %11 = vector.shape_cast %8 : vector<4x32xf32> to vector<1x4x32xf32>
    tpu.vector_store %arg4[%c0_8, %c0_9, %c0_10], %11 {strides = array<i32>} : memref<1x4x32xf32, #tpu.memory_space<vmem>>, vector<1x4x32xf32>,
    return
  }
  func.func @transform_0(%arg0: i32) -> (i32, i32, i32) {
    %c0_i32 = arith.constant 0 : i32
    %c0_i32_0 = arith.constant 0 : i32
    %c0_i32_1 = arith.constant 0 : i32
    return %arg0, %c0_i32, %c0_i32_0 : i32, i32, i32
  }
  func.func @transform_1(%arg0: i32) -> (i32, i32, i32) {
    %c0_i32 = arith.constant 0 : i32
    %c0_i32_0 = arith.constant 0 : i32
    %c0_i32_1 = arith.constant 0 : i32
    return %arg0, %c0_i32, %c0_i32_0 : i32, i32, i32
  }
  func.func @transform_2(%arg0: i32) -> (i32, i32, i32) {
    %c0_i32 = arith.constant 0 : i32
    %c0_i32_0 = arith.constant 0 : i32
    %c0_i32_1 = arith.constant 0 : i32
    return %arg0, %c0_i32, %c0_i32_0 : i32, i32, i32
  }
  func.func @transform_3(%arg0: i32) -> (i32, i32, i32) {
    %c0_i32 = arith.constant 0 : i32
    %c0_i32_0 = arith.constant 0 : i32
    %c0_i32_1 = arith.constant 0 : i32
    return %arg0, %c0_i32, %c0_i32_0 : i32, i32, i32
  }
}

module attributes {stable_mosaic.version = 11 : i64} {
  func.func @_grouped_linear_kernel(%arg0: i32, %arg1: memref<1x4x768xbf16, #tpu.memory_space<vmem>>, %arg2: memref<1x768x768xbf16, #tpu.memory_space<vmem>>, %arg3: memref<1x1x768xf32, #tpu.memory_space<vmem>>, %arg4: memref<1x1x768xf32, #tpu.memory_space<vmem>>, %arg5: memref<1x1x768xf32, #tpu.memory_space<vmem>>, %arg6: memref<1x4x768xf32, #tpu.memory_space<vmem>>) attributes {dimension_semantics = [#tpu.dimension_semantics<parallel>], iteration_bounds = array<i64: 2>, scalar_prefetch = 0 : i64, scratch_operands = 0 : i64, tpu.core_type = #tpu.core_type<tc>, window_params = [{transform_indices = @transform_0, window_bounds = array<i64: 1, 4, 768>}, {transform_indices = @transform_1, window_bounds = array<i64: 1, 768, 768>}, {transform_indices = @transform_2, window_bounds = array<i64: 1, 1, 768>}, {transform_indices = @transform_3, window_bounds = array<i64: 1, 1, 768>}, {transform_indices = @transform_4, window_bounds = array<i64: 1, 1, 768>}, {transform_indices = @transform_5, window_bounds = array<i64: 1, 4, 768>}]} {
    %c0 = arith.constant 0 : index
    %c0_0 = arith.constant 0 : index
    %c0_1 = arith.constant 0 : index
    %0 = vector.load %arg1[%c0, %c0_0, %c0_1] : memref<1x4x768xbf16, #tpu.memory_space<vmem>>, vector<1x4x768xbf16>
    %1 = vector.shape_cast %0 : vector<1x4x768xbf16> to vector<4x768xbf16>
    %c0_2 = arith.constant 0 : index
    %c0_3 = arith.constant 0 : index
    %c0_4 = arith.constant 0 : index
    %2 = vector.load %arg2[%c0_2, %c0_3, %c0_4] : memref<1x768x768xbf16, #tpu.memory_space<vmem>>, vector<1x768x768xbf16>
    %3 = vector.shape_cast %2 : vector<1x768x768xbf16> to vector<768x768xbf16>
    %cst = arith.constant dense<0.000000e+00> : vector<4x768xf32>
    %4 = tpu.matmul %1, %3, %cst {dimension_numbers = #tpu.dot_dimension_numbers<[1], [0], [0], [1], [0, 0, 1, 1], [], []>} : vector<4x768xbf16>, vector<768x768xbf16>, vector<4x768xf32> -> vector<4x768xf32>
    %c0_5 = arith.constant 0 : index
    %c0_6 = arith.constant 0 : index
    %c0_7 = arith.constant 0 : index
    %5 = vector.load %arg3[%c0_5, %c0_6, %c0_7] : memref<1x1x768xf32, #tpu.memory_space<vmem>>, vector<1x1x768xf32>
    %6 = vector.shape_cast %5 : vector<1x1x768xf32> to vector<1x768xf32>
    %7 = vector.broadcast %6 : vector<1x768xf32> to vector<4x768xf32>
    %8 = arith.addf %4, %7 : vector<4x768xf32>
    %cst_8 = arith.constant 0.000000e+00 : f32
    %9 = vector.broadcast %cst_8 : f32 to vector<4x768xf32>
    %10 = arith.maximumf %8, %9 : vector<4x768xf32>
    %c0_9 = arith.constant 0 : index
    %c0_10 = arith.constant 0 : index
    %c0_11 = arith.constant 0 : index
    %11 = vector.load %arg4[%c0_9, %c0_10, %c0_11] : memref<1x1x768xf32, #tpu.memory_space<vmem>>, vector<1x1x768xf32>
    %12 = vector.shape_cast %11 : vector<1x1x768xf32> to vector<1x768xf32>
    %c0_12 = arith.constant 0 : index
    %c0_13 = arith.constant 0 : index
    %c0_14 = arith.constant 0 : index
    %13 = vector.load %arg5[%c0_12, %c0_13, %c0_14] : memref<1x1x768xf32, #tpu.memory_space<vmem>>, vector<1x1x768xf32>
    %14 = vector.shape_cast %13 : vector<1x1x768xf32> to vector<1x768xf32>
    %cst_15 = arith.constant dense<0.000000e+00> : vector<4xf32>
    %15 = vector.multi_reduction <add>, %10, %cst_15 [1] : vector<4x768xf32> to vector<4xf32>
    %16 = vector.shape_cast %15 : vector<4xf32> to vector<4x1xf32>
    %cst_16 = arith.constant 7.680000e+02 : f32
    %17 = vector.broadcast %cst_16 : f32 to vector<4x1xf32>
    %18 = arith.divf %16, %17 : vector<4x1xf32>
    %19 = vector.broadcast %18 : vector<4x1xf32> to vector<4x768xf32>
    %20 = arith.subf %10, %19 : vector<4x768xf32>
    %21 = arith.mulf %20, %20 : vector<4x768xf32>
    %cst_17 = arith.constant dense<0.000000e+00> : vector<4xf32>
    %22 = vector.multi_reduction <add>, %21, %cst_17 [1] : vector<4x768xf32> to vector<4xf32>
    %23 = vector.shape_cast %22 : vector<4xf32> to vector<4x1xf32>
    %cst_18 = arith.constant 7.680000e+02 : f32
    %24 = vector.broadcast %cst_18 : f32 to vector<4x1xf32>
    %25 = arith.divf %23, %24 : vector<4x1xf32>
    %26 = vector.broadcast %18 : vector<4x1xf32> to vector<4x768xf32>
    %27 = arith.subf %10, %26 : vector<4x768xf32>
    %cst_19 = arith.constant 9.99999974E-6 : f32
    %28 = vector.broadcast %cst_19 : f32 to vector<4x1xf32>
    %29 = arith.addf %25, %28 : vector<4x1xf32>
    %30 = math.rsqrt %29 : vector<4x1xf32>
    %31 = vector.broadcast %30 : vector<4x1xf32> to vector<4x768xf32>
    %32 = arith.mulf %27, %31 : vector<4x768xf32>
    %33 = vector.broadcast %12 : vector<1x768xf32> to vector<4x768xf32>
    %34 = arith.mulf %32, %33 : vector<4x768xf32>
    %35 = vector.broadcast %14 : vector<1x768xf32> to vector<4x768xf32>
    %36 = arith.addf %34, %35 : vector<4x768xf32>
    %c0_20 = arith.constant 0 : index
    %c0_21 = arith.constant 0 : index
    %c0_22 = arith.constant 0 : index
    %37 = vector.load %arg6[%c0_20, %c0_21, %c0_22] : memref<1x4x768xf32, #tpu.memory_space<vmem>>, vector<1x4x768xf32>
    %38 = vector.shape_cast %37 : vector<1x4x768xf32> to vector<4x768xf32>
    %39 = vector.shape_cast %36 : vector<4x768xf32> to vector<1x4x768xf32>
    tpu.vector_store %arg6[%c0_20, %c0_21, %c0_22], %39 {strides = array<i32>} : memref<1x4x768xf32, #tpu.memory_space<vmem>>, vector<1x4x768xf32>,
    return
  }
  func.func @transform_0(%arg0: i32) -> (i32, i32, i32) {
    %c0_i32 = arith.constant 0 : i32
    %c0_i32_0 = arith.constant 0 : i32
    %c0_i32_1 = arith.constant 0 : i32
    return %arg0, %c0_i32, %c0_i32_0 : i32, i32, i32
  }
  func.func @transform_1(%arg0: i32) -> (i32, i32, i32) {
    %c0_i32 = arith.constant 0 : i32
    %c0_i32_0 = arith.constant 0 : i32
    %c0_i32_1 = arith.constant 0 : i32
    return %arg0, %c0_i32, %c0_i32_0 : i32, i32, i32
  }
  func.func @transform_2(%arg0: i32) -> (i32, i32, i32) {
    %c0_i32 = arith.constant 0 : i32
    %c0_i32_0 = arith.constant 0 : i32
    %c0_i32_1 = arith.constant 0 : i32
    return %arg0, %c0_i32, %c0_i32_0 : i32, i32, i32
  }
  func.func @transform_3(%arg0: i32) -> (i32, i32, i32) {
    %c0_i32 = arith.constant 0 : i32
    %c0_i32_0 = arith.constant 0 : i32
    %c0_i32_1 = arith.constant 0 : i32
    return %arg0, %c0_i32, %c0_i32_0 : i32, i32, i32
  }
  func.func @transform_4(%arg0: i32) -> (i32, i32, i32) {
    %c0_i32 = arith.constant 0 : i32
    %c0_i32_0 = arith.constant 0 : i32
    %c0_i32_1 = arith.constant 0 : i32
    return %arg0, %c0_i32, %c0_i32_0 : i32, i32, i32
  }
  func.func @transform_5(%arg0: i32) -> (i32, i32, i32) {
    %c0_i32 = arith.constant 0 : i32
    %c0_i32_0 = arith.constant 0 : i32
    %c0_i32_1 = arith.constant 0 : i32
    return %arg0, %c0_i32, %c0_i32_0 : i32, i32, i32
  }
}

module attributes {stable_mosaic.version = 11 : i64} {
  func.func @_fused_linear_single_kernel(%arg0: i32, %arg1: i32, %arg2: memref<4x768xbf16, #tpu.memory_space<vmem>>, %arg3: memref<768x32xbf16, #tpu.memory_space<vmem>>, %arg4: memref<1x32xf32, #tpu.memory_space<vmem>>, %arg5: memref<4x32xf32, #tpu.memory_space<vmem>>) attributes {dimension_semantics = [#tpu.dimension_semantics<parallel>, #tpu.dimension_semantics<parallel>], iteration_bounds = array<i64: 1, 1>, scalar_prefetch = 0 : i64, scratch_operands = 0 : i64, tpu.core_type = #tpu.core_type<tc>, window_params = [{transform_indices = @transform_0, window_bounds = array<i64: 4, 768>}, {transform_indices = @transform_1, window_bounds = array<i64: 768, 32>}, {transform_indices = @transform_2, window_bounds = array<i64: 1, 32>}, {transform_indices = @transform_3, window_bounds = array<i64: 4, 32>}]} {
    %c0 = arith.constant 0 : index
    %c0_0 = arith.constant 0 : index
    %0 = vector.load %arg2[%c0, %c0_0] : memref<4x768xbf16, #tpu.memory_space<vmem>>, vector<4x768xbf16>
    %c0_1 = arith.constant 0 : index
    %c0_2 = arith.constant 0 : index
    %1 = vector.load %arg3[%c0_1, %c0_2] : memref<768x32xbf16, #tpu.memory_space<vmem>>, vector<768x32xbf16>
    %cst = arith.constant dense<0.000000e+00> : vector<4x32xf32>
    %2 = tpu.matmul %0, %1, %cst {dimension_numbers = #tpu.dot_dimension_numbers<[1], [0], [0], [1], [0, 0, 1, 1], [], []>} : vector<4x768xbf16>, vector<768x32xbf16>, vector<4x32xf32> -> vector<4x32xf32>
    %c0_3 = arith.constant 0 : index
    %c0_4 = arith.constant 0 : index
    %3 = vector.load %arg4[%c0_3, %c0_4] : memref<1x32xf32, #tpu.memory_space<vmem>>, vector<1x32xf32>
    %4 = vector.broadcast %3 : vector<1x32xf32> to vector<4x32xf32>
    %5 = arith.addf %2, %4 : vector<4x32xf32>
    %c0_5 = arith.constant 0 : index
    %c0_6 = arith.constant 0 : index
    %6 = vector.load %arg5[%c0_5, %c0_6] : memref<4x32xf32, #tpu.memory_space<vmem>>, vector<4x32xf32>
    tpu.vector_store %arg5[%c0_5, %c0_6], %5 {strides = array<i32>} : memref<4x32xf32, #tpu.memory_space<vmem>>, vector<4x32xf32>,
    return
  }
  func.func @transform_0(%arg0: i32, %arg1: i32) -> (i32, i32) {
    %c0_i32 = arith.constant 0 : i32
    %c0_i32_0 = arith.constant 0 : i32
    return %arg0, %c0_i32 : i32, i32
  }
  func.func @transform_1(%arg0: i32, %arg1: i32) -> (i32, i32) {
    %c0_i32 = arith.constant 0 : i32
    %c0_i32_0 = arith.constant 0 : i32
    return %c0_i32, %arg1 : i32, i32
  }
  func.func @transform_2(%arg0: i32, %arg1: i32) -> (i32, i32) {
    %c0_i32 = arith.constant 0 : i32
    %c0_i32_0 = arith.constant 0 : i32
    return %c0_i32, %arg1 : i32, i32
  }
  func.func @transform_3(%arg0: i32, %arg1: i32) -> (i32, i32) {
    %c0_i32 = arith.constant 0 : i32
    return %arg0, %arg1 : i32, i32
  }
}

module attributes {stable_mosaic.version = 11 : i64} {
  func.func @_fusion3_kernel(%arg0: memref<2x16x128xf32, #tpu.memory_space<vmem>>, %arg1: memref<3x128x128xbf16, #tpu.memory_space<vmem>>, %arg2: memref<1x128xf32, #tpu.memory_space<vmem>>, %arg3: memref<3x128x128xbf16, #tpu.memory_space<vmem>>, %arg4: memref<1x128xf32, #tpu.memory_space<vmem>>, %arg5: memref<3x128x1xf32, #tpu.memory_space<vmem>>, %arg6: memref<1x1xf32, #tpu.memory_space<vmem>>, %arg7: memref<1x2xf32, #tpu.memory_space<vmem>>) attributes {dimension_semantics = [], scalar_prefetch = 0 : i64, scratch_operands = 0 : i64, tpu.core_type = #tpu.core_type<tc>} {
    %c0 = arith.constant 0 : index
    %c0_0 = arith.constant 0 : index
    %c0_1 = arith.constant 0 : index
    %0 = vector.load %arg0[%c0, %c0_0, %c0_1] : memref<2x16x128xf32, #tpu.memory_space<vmem>>, vector<2x16x128xf32>
    %c0_2 = arith.constant 0 : index
    %c0_3 = arith.constant 0 : index
    %c0_4 = arith.constant 0 : index
    %1 = vector.load %arg1[%c0_2, %c0_3, %c0_4] : memref<3x128x128xbf16, #tpu.memory_space<vmem>>, vector<3x128x128xbf16>
    %c0_5 = arith.constant 0 : index
    %c0_6 = arith.constant 0 : index
    %2 = vector.load %arg2[%c0_5, %c0_6] : memref<1x128xf32, #tpu.memory_space<vmem>>, vector<1x128xf32>
    %3 = vector.extract_strided_slice %0 {offsets = [0, 0, 0], sizes = [2, 14, 128], strides = [1, 1, 1]} : vector<2x16x128xf32> to vector<2x14x128xf32>
    %4 = vector.shape_cast %3 : vector<2x14x128xf32> to vector<28x128xf32>
    %5 = arith.truncf %4 : vector<28x128xf32> to vector<28x128xbf16>
    %6 = vector.extract_strided_slice %1 {offsets = [0, 0, 0], sizes = [1, 128, 128], strides = [1, 1, 1]} : vector<3x128x128xbf16> to vector<1x128x128xbf16>
    %7 = vector.shape_cast %6 : vector<1x128x128xbf16> to vector<128x128xbf16>
    %cst = arith.constant dense<0.000000e+00> : vector<28x128xf32>
    %8 = tpu.matmul %5, %7, %cst {dimension_numbers = #tpu.dot_dimension_numbers<[1], [0], [0], [1], [0, 0, 1, 1], [], []>} : vector<28x128xbf16>, vector<128x128xbf16>, vector<28x128xf32> -> vector<28x128xf32>
    %9 = vector.broadcast %2 : vector<1x128xf32> to vector<28x128xf32>
    %10 = arith.addf %9, %8 : vector<28x128xf32>
    %11 = vector.extract_strided_slice %0 {offsets = [0, 1, 0], sizes = [2, 14, 128], strides = [1, 1, 1]} : vector<2x16x128xf32> to vector<2x14x128xf32>
    %12 = vector.shape_cast %11 : vector<2x14x128xf32> to vector<28x128xf32>
    %13 = arith.truncf %12 : vector<28x128xf32> to vector<28x128xbf16>
    %14 = vector.extract_strided_slice %1 {offsets = [1, 0, 0], sizes = [1, 128, 128], strides = [1, 1, 1]} : vector<3x128x128xbf16> to vector<1x128x128xbf16>
    %15 = vector.shape_cast %14 : vector<1x128x128xbf16> to vector<128x128xbf16>
    %cst_7 = arith.constant dense<0.000000e+00> : vector<28x128xf32>
    %16 = tpu.matmul %13, %15, %cst_7 {dimension_numbers = #tpu.dot_dimension_numbers<[1], [0], [0], [1], [0, 0, 1, 1], [], []>} : vector<28x128xbf16>, vector<128x128xbf16>, vector<28x128xf32> -> vector<28x128xf32>
    %17 = arith.addf %10, %16 : vector<28x128xf32>
    %18 = vector.extract_strided_slice %0 {offsets = [0, 2, 0], sizes = [2, 14, 128], strides = [1, 1, 1]} : vector<2x16x128xf32> to vector<2x14x128xf32>
    %19 = vector.shape_cast %18 : vector<2x14x128xf32> to vector<28x128xf32>
    %20 = arith.truncf %19 : vector<28x128xf32> to vector<28x128xbf16>
    %21 = vector.extract_strided_slice %1 {offsets = [2, 0, 0], sizes = [1, 128, 128], strides = [1, 1, 1]} : vector<3x128x128xbf16> to vector<1x128x128xbf16>
    %22 = vector.shape_cast %21 : vector<1x128x128xbf16> to vector<128x128xbf16>
    %cst_8 = arith.constant dense<0.000000e+00> : vector<28x128xf32>
    %23 = tpu.matmul %20, %22, %cst_8 {dimension_numbers = #tpu.dot_dimension_numbers<[1], [0], [0], [1], [0, 0, 1, 1], [], []>} : vector<28x128xbf16>, vector<128x128xbf16>, vector<28x128xf32> -> vector<28x128xf32>
    %24 = arith.addf %17, %23 : vector<28x128xf32>
    %cst_9 = arith.constant 0.000000e+00 : f32
    %25 = vector.broadcast %cst_9 : f32 to vector<28x128xf32>
    %26 = arith.maximumf %24, %25 : vector<28x128xf32>
    %cst_10 = arith.constant 0.000000e+00 : f32
    %27 = vector.broadcast %cst_10 : f32 to vector<2x1x128xf32>
    %28 = vector.shape_cast %26 : vector<28x128xf32> to vector<2x14x128xf32>
    %29 = tpu.concatenate %27, %28, %27 in 1 : vector<2x1x128xf32>, vector<2x14x128xf32>, vector<2x1x128xf32> -> vector<2x16x128xf32>
    %c0_11 = arith.constant 0 : index
    %c0_12 = arith.constant 0 : index
    %c0_13 = arith.constant 0 : index
    %30 = vector.load %arg3[%c0_11, %c0_12, %c0_13] : memref<3x128x128xbf16, #tpu.memory_space<vmem>>, vector<3x128x128xbf16>
    %c0_14 = arith.constant 0 : index
    %c0_15 = arith.constant 0 : index
    %31 = vector.load %arg4[%c0_14, %c0_15] : memref<1x128xf32, #tpu.memory_space<vmem>>, vector<1x128xf32>
    %32 = vector.extract_strided_slice %29 {offsets = [0, 0, 0], sizes = [2, 14, 128], strides = [1, 1, 1]} : vector<2x16x128xf32> to vector<2x14x128xf32>
    %33 = vector.shape_cast %32 : vector<2x14x128xf32> to vector<28x128xf32>
    %34 = arith.truncf %33 : vector<28x128xf32> to vector<28x128xbf16>
    %35 = vector.extract_strided_slice %30 {offsets = [0, 0, 0], sizes = [1, 128, 128], strides = [1, 1, 1]} : vector<3x128x128xbf16> to vector<1x128x128xbf16>
    %36 = vector.shape_cast %35 : vector<1x128x128xbf16> to vector<128x128xbf16>
    %cst_16 = arith.constant dense<0.000000e+00> : vector<28x128xf32>
    %37 = tpu.matmul %34, %36, %cst_16 {dimension_numbers = #tpu.dot_dimension_numbers<[1], [0], [0], [1], [0, 0, 1, 1], [], []>} : vector<28x128xbf16>, vector<128x128xbf16>, vector<28x128xf32> -> vector<28x128xf32>
    %38 = vector.broadcast %31 : vector<1x128xf32> to vector<28x128xf32>
    %39 = arith.addf %38, %37 : vector<28x128xf32>
    %40 = vector.extract_strided_slice %29 {offsets = [0, 1, 0], sizes = [2, 14, 128], strides = [1, 1, 1]} : vector<2x16x128xf32> to vector<2x14x128xf32>
    %41 = vector.shape_cast %40 : vector<2x14x128xf32> to vector<28x128xf32>
    %42 = arith.truncf %41 : vector<28x128xf32> to vector<28x128xbf16>
    %43 = vector.extract_strided_slice %30 {offsets = [1, 0, 0], sizes = [1, 128, 128], strides = [1, 1, 1]} : vector<3x128x128xbf16> to vector<1x128x128xbf16>
    %44 = vector.shape_cast %43 : vector<1x128x128xbf16> to vector<128x128xbf16>
    %cst_17 = arith.constant dense<0.000000e+00> : vector<28x128xf32>
    %45 = tpu.matmul %42, %44, %cst_17 {dimension_numbers = #tpu.dot_dimension_numbers<[1], [0], [0], [1], [0, 0, 1, 1], [], []>} : vector<28x128xbf16>, vector<128x128xbf16>, vector<28x128xf32> -> vector<28x128xf32>
    %46 = arith.addf %39, %45 : vector<28x128xf32>
    %47 = vector.extract_strided_slice %29 {offsets = [0, 2, 0], sizes = [2, 14, 128], strides = [1, 1, 1]} : vector<2x16x128xf32> to vector<2x14x128xf32>
    %48 = vector.shape_cast %47 : vector<2x14x128xf32> to vector<28x128xf32>
    %49 = arith.truncf %48 : vector<28x128xf32> to vector<28x128xbf16>
    %50 = vector.extract_strided_slice %30 {offsets = [2, 0, 0], sizes = [1, 128, 128], strides = [1, 1, 1]} : vector<3x128x128xbf16> to vector<1x128x128xbf16>
    %51 = vector.shape_cast %50 : vector<1x128x128xbf16> to vector<128x128xbf16>
    %cst_18 = arith.constant dense<0.000000e+00> : vector<28x128xf32>
    %52 = tpu.matmul %49, %51, %cst_18 {dimension_numbers = #tpu.dot_dimension_numbers<[1], [0], [0], [1], [0, 0, 1, 1], [], []>} : vector<28x128xbf16>, vector<128x128xbf16>, vector<28x128xf32> -> vector<28x128xf32>
    %53 = arith.addf %46, %52 : vector<28x128xf32>
    %cst_19 = arith.constant 0.000000e+00 : f32
    %54 = vector.broadcast %cst_19 : f32 to vector<28x128xf32>
    %55 = arith.maximumf %53, %54 : vector<28x128xf32>
    %56 = vector.shape_cast %55 : vector<28x128xf32> to vector<2x14x128xf32>
    %57 = tpu.concatenate %27, %56, %27 in 1 : vector<2x1x128xf32>, vector<2x14x128xf32>, vector<2x1x128xf32> -> vector<2x16x128xf32>
    %c0_20 = arith.constant 0 : index
    %c0_21 = arith.constant 0 : index
    %c0_22 = arith.constant 0 : index
    %58 = vector.load %arg5[%c0_20, %c0_21, %c0_22] : memref<3x128x1xf32, #tpu.memory_space<vmem>>, vector<3x128x1xf32>
    %cst_23 = arith.constant 0.000000e+00 : f32
    %59 = vector.broadcast %cst_23 : f32 to vector<2x14xf32>
    %60 = vector.extract_strided_slice %57 {offsets = [0, 0, 0], sizes = [2, 14, 128], strides = [1, 1, 1]} : vector<2x16x128xf32> to vector<2x14x128xf32>
    %61 = vector.extract_strided_slice %58 {offsets = [0, 0, 0], sizes = [1, 128, 1], strides = [1, 1, 1]} : vector<3x128x1xf32> to vector<1x128x1xf32>
    %62 = vector.shape_cast %61 : vector<1x128x1xf32> to vector<128xf32>
    %63 = vector.shape_cast %62 : vector<128xf32> to vector<1x1x128xf32>
    %64 = vector.broadcast %63 : vector<1x1x128xf32> to vector<2x14x128xf32>
    %65 = arith.mulf %60, %64 : vector<2x14x128xf32>
    %cst_24 = arith.constant dense<0.000000e+00> : vector<2x14xf32>
    %66 = vector.multi_reduction <add>, %65, %cst_24 [2] : vector<2x14x128xf32> to vector<2x14xf32>
    %67 = arith.addf %59, %66 : vector<2x14xf32>
    %68 = vector.extract_strided_slice %57 {offsets = [0, 1, 0], sizes = [2, 14, 128], strides = [1, 1, 1]} : vector<2x16x128xf32> to vector<2x14x128xf32>
    %69 = vector.extract_strided_slice %58 {offsets = [1, 0, 0], sizes = [1, 128, 1], strides = [1, 1, 1]} : vector<3x128x1xf32> to vector<1x128x1xf32>
    %70 = vector.shape_cast %69 : vector<1x128x1xf32> to vector<128xf32>
    %71 = vector.shape_cast %70 : vector<128xf32> to vector<1x1x128xf32>
    %72 = vector.broadcast %71 : vector<1x1x128xf32> to vector<2x14x128xf32>
    %73 = arith.mulf %68, %72 : vector<2x14x128xf32>
    %cst_25 = arith.constant dense<0.000000e+00> : vector<2x14xf32>
    %74 = vector.multi_reduction <add>, %73, %cst_25 [2] : vector<2x14x128xf32> to vector<2x14xf32>
    %75 = arith.addf %67, %74 : vector<2x14xf32>
    %76 = vector.extract_strided_slice %57 {offsets = [0, 2, 0], sizes = [2, 14, 128], strides = [1, 1, 1]} : vector<2x16x128xf32> to vector<2x14x128xf32>
    %77 = vector.extract_strided_slice %58 {offsets = [2, 0, 0], sizes = [1, 128, 1], strides = [1, 1, 1]} : vector<3x128x1xf32> to vector<1x128x1xf32>
    %78 = vector.shape_cast %77 : vector<1x128x1xf32> to vector<128xf32>
    %79 = vector.shape_cast %78 : vector<128xf32> to vector<1x1x128xf32>
    %80 = vector.broadcast %79 : vector<1x1x128xf32> to vector<2x14x128xf32>
    %81 = arith.mulf %76, %80 : vector<2x14x128xf32>
    %cst_26 = arith.constant dense<0.000000e+00> : vector<2x14xf32>
    %82 = vector.multi_reduction <add>, %81, %cst_26 [2] : vector<2x14x128xf32> to vector<2x14xf32>
    %83 = arith.addf %75, %82 : vector<2x14xf32>
    %cst_27 = arith.constant dense<0.000000e+00> : vector<2xf32>
    %84 = vector.multi_reduction <add>, %83, %cst_27 [1] : vector<2x14xf32> to vector<2xf32>
    %cst_28 = arith.constant 1.400000e+01 : f32
    %85 = vector.broadcast %cst_28 : f32 to vector<2xf32>
    %86 = arith.divf %84, %85 : vector<2xf32>
    %c0_29 = arith.constant 0 : index
    %c0_30 = arith.constant 0 : index
    %87 = vector.load %arg6[%c0_29, %c0_30] : memref<1x1xf32, #tpu.memory_space<vmem>>, vector<1x1xf32>
    %88 = vector.extract %87[0, 0] : f32 from vector<1x1xf32>
    %89 = vector.broadcast %88 : f32 to vector<2xf32>
    %90 = arith.addf %86, %89 : vector<2xf32>
    %91 = vector.shape_cast %90 : vector<2xf32> to vector<1x2xf32>
    %c0_31 = arith.constant 0 : index
    %c0_32 = arith.constant 0 : index
    %92 = vector.load %arg7[%c0_31, %c0_32] : memref<1x2xf32, #tpu.memory_space<vmem>>, vector<1x2xf32>
    tpu.vector_store %arg7[%c0_31, %c0_32], %91 {strides = array<i32>} : memref<1x2xf32, #tpu.memory_space<vmem>>, vector<1x2xf32>,
    return
  }
}

</mosaic_0001>

<llo_original>
// kernel: aotn_forward.23
$region0: #{aotn_forward.23}
  #allocation0 [shape = 'u32[]', space=smem, size = 0x4, offset = 0x4, fixed_abs, tag = 'smem constant byte address 0x4 - core index']
  #allocation1 [shape = 'u32[144,128]{1,0:T(1,128)}', space=vmem, size = 0x12000, scoped, tag = 'internal scratch']
  %s0 = inlined_call_operand.vmem [shape: bf16[16,16], index: 0, kind: input, shape index: {}]
  %s1 = inlined_call_operand.vmem [shape: bf16[16,128], index: 1, kind: input, shape index: {}]
  %s2 = inlined_call_operand.vmem [shape: f32[1,128], index: 2, kind: input, shape index: {}]
  %s3 = inlined_call_operand.vmem [shape: f32[16,128], index: 3, kind: output, shape index: {}]
  %s4 = sld [smem:[#allocation0]]
  $region22: #{aotn_forward.23} parent=0
    _
  %s6 = ssub.s32 1, %s4
  %s7 = scalar_select 0, %s6, %s4
  // Predicated region
  $region2: #{aotn_forward.23} parent=0 // pred_check
    _
  $region3: #{aotn_forward.23} parent=0 // pred_check_branch
    %9 = sbr.rel (0) target = $region5
  $region4: #{aotn_forward.23} parent=0 // pred_region
    _
  $region5: #{aotn_forward.23} parent=0 // pred_fallthru
    _
  // Predicated region
  $region6: #{aotn_forward.23} parent=0 // pred_check
    _
  $region7: #{aotn_forward.23} parent=0 // pred_check_branch
    %11 = sbr.rel (0) target = $region9
  $region8: #{aotn_forward.23} parent=0 // pred_region
    _
  $region9: #{aotn_forward.23} parent=0 // pred_fallthru
    _
  // Predicated region
  $region10: #{aotn_forward.23} parent=0 // pred_check
    _
  $region11: #{aotn_forward.23} parent=0 // pred_check_branch
    %13 = sbr.rel (0) target = $region13
  $region12: #{aotn_forward.23} parent=0 // pred_region
    _
  $region13: #{aotn_forward.23} parent=0 // pred_fallthru
    _
  %v15 = vld [vmem:[%s0] sm:$0xf]
  %v16 = vld [vmem:[%s0 + $0x4] sm:$0xf]
  %v17 = vld [vmem:[%s1] sm:$0xf]
  %v18 = vld [vmem:[%s1 + $0x4] sm:$0xf]
  %v19 = vld [vmem:[%s2] sm:$0x1]
  %v21 = vlaneseq
  %v22 = vshrl.u32 %v21, 7
  %v23 = vsub.s32 0, %v22
  %v24 = vrot.slane %v19, %v23
  %v28 = vunpack.c.l.b16 %v15
  %v29 = vunpack.c.l.b16 %v16
  %v30 = vpack.c.b16 %v29, %v28
  %v33 = vunpack.c.l.b16 %v17
  %v34 = vunpack.c.l.b16 %v18
  %v35 = vpack.c.b16 %v34, %v33
  %vm37 = vcmask 130048
  %v39 = vsel %vm37, %v30, 0
  %41 = vmatprep.subr.bf16.mxu0 0
  %42 = vmatpush1.bf16.msra.mxu0 %v35
  %43 = vmatprep.subr.bf16.mxu0 0
  %44 = vmatpush1.bf16.msra.mxu0 0
  %45 = vmatprep.subr.bf16.mxu0 0
  %46 = vmatpush1.bf16.msra.mxu0 0
  %47 = vmatprep.subr.bf16.mxu0 0
  %48 = vmatpush1.bf16.msra.mxu0 0
  %49 = vmatprep.subr.bf16.mxu0 0
  %50 = vmatpush1.bf16.msra.mxu0 0
  %51 = vmatprep.subr.bf16.mxu0 0
  %52 = vmatpush1.bf16.msra.mxu0 0
  %53 = vmatprep.subr.bf16.mxu0 0
  %54 = vmatpush1.bf16.msra.mxu0 0
  %55 = vmatprep.subr.bf16.mxu0 0
  %56 = vmatpush1.bf16.msra.mxu0 0
  %57 = vmatprep.subr.bf16.mxu0 0
  %58 = vmatpush1.bf16.msra.mxu0 0
  %59 = vmatprep.subr.bf16.mxu0 0
  %60 = vmatpush1.bf16.msra.mxu0 0
  %61 = vmatprep.subr.bf16.mxu0 0
  %62 = vmatpush1.bf16.msra.mxu0 0
  %63 = vmatprep.subr.bf16.mxu0 0
  %64 = vmatpush1.bf16.msra.mxu0 0
  %65 = vmatprep.subr.bf16.mxu0 0
  %66 = vmatpush1.bf16.msra.mxu0 0
  %67 = vmatprep.subr.bf16.mxu0 0
  %68 = vmatpush1.bf16.msra.mxu0 0
  %69 = vmatprep.subr.bf16.mxu0 0
  %70 = vmatpush1.bf16.msra.mxu0 0
  %71 = vmatprep.subr.bf16.mxu0 0
  %72 = vmatpush1.bf16.msra.mxu0 0
  %73 = vmatprep.mubr.bf16.mxu0 0
  %74 = vmatmul.mubr.bf16.gmra.mrb[0].mxu0 %v39
  %v75 = vpop.f32.mrb[0].mxu0
  %v76 = vadd.f32 %v24, %v75
  %v77 = vpop.f32.mrb[0].mxu0
  %v78 = vpop.f32.mrb[0].mxu0
  %v79 = vadd.f32 %v24, %v78
  %v80 = vpop.f32.mrb[0].mxu0
  %81 = vdwg.mxu0
  %82 = vst [vmem:[%s3] sm:$0xff] %v76
  %83 = vst [vmem:[%s3 + $0x8] sm:$0xff] %v79
  // Predicated region
  $region14: #{aotn_forward.23} parent=0 // pred_check
    _
  $region15: #{aotn_forward.23} parent=0 // pred_check_branch
    %85 = sbr.rel (0) target = $region17
  $region16: #{aotn_forward.23} parent=0 // pred_region
    _
  $region17: #{aotn_forward.23} parent=0 // pred_fallthru
    _
  // Predicated region
  $region18: #{aotn_forward.23} parent=0 // pred_check
    _
  $region19: #{aotn_forward.23} parent=0 // pred_check_branch
    %87 = sbr.rel (0) target = $region21
  $region20: #{aotn_forward.23} parent=0 // pred_region
    _
  $region21: #{aotn_forward.23} parent=0 // pred_fallthru
    _

// kernel: aotn_forward.25
$region0: #{aotn_forward.25}
  #allocation0 [shape = 'u32[]', space=smem, size = 0x4, offset = 0x4, fixed_abs, tag = 'smem constant byte address 0x4 - core index']
  #allocation1 [shape = 'u32[144,128]{1,0:T(1,128)}', space=vmem, size = 0x12000, scoped, tag = 'internal scratch']
  %s0 = inlined_call_operand.vmem [shape: f32[16,32], index: 0, kind: input, shape index: {}]
  %s1 = inlined_call_operand.vmem [shape: bf16[32,128], index: 1, kind: input, shape index: {}]
  %s2 = inlined_call_operand.vmem [shape: f32[1,128], index: 2, kind: input, shape index: {}]
  %s3 = inlined_call_operand.hbm [shape: f32[1,32], index: 3, kind: input, shape index: {}]
  %s4 = inlined_call_operand.hbm [shape: f32[1,32], index: 4, kind: input, shape index: {}]
  %s5 = inlined_call_operand.vmem [shape: f32[16,128], index: 5, kind: output, shape index: {}]
  %s6 = sld [smem:[#allocation0]]
  $region38: #{aotn_forward.25} parent=0
    _
  %s8 = ssub.s32 1, %s6
  %s9 = scalar_select 0, %s8, %s6
  $region1: #{aotn_forward.25} parent=0
    #allocation2 [shape = 'u8[512]{0}', space=vmem, size = 0x400, scoped, tag = 'input window, operand 3, single buffered']
    #allocation3 [shape = 's32[1]{0}', space=sflag, size = 0x4, scoped, tag = 'scoped memory for aotn_forward.25']
    #allocation4 [shape = 'u8[512]{0}', space=vmem, size = 0x400, scoped, tag = 'input window, operand 4, single buffered']
    #allocation5 [shape = 's32[1]{0}', space=sflag, size = 0x4, scoped, tag = 'scoped memory for aotn_forward.25']
    %10 = vsyncpa [#allocation3], 0
    %11 = vsyncpa [#allocation5], 0
    // Predicated region
    $region2: #{aotn_forward.25} parent=1 // pred_check
      _
    $region3: #{aotn_forward.25} parent=1 // pred_check_branch
      %13 = sbr.rel (0) target = $region5
    $region4: #{aotn_forward.25} parent=1 // pred_region
      _
    $region5: #{aotn_forward.25} parent=1 // pred_fallthru
      _
    // Predicated region
    $region6: #{aotn_forward.25} parent=1 // pred_check
      _
    $region7: #{aotn_forward.25} parent=1 // pred_check_branch
      %15 = sbr.rel (0) target = $region9
    $region8: #{aotn_forward.25} parent=1 // pred_region
      _
    $region9: #{aotn_forward.25} parent=1 // pred_fallthru
      _
    // Predicated region
    $region10: #{aotn_forward.25} parent=1 // pred_check
      _
    $region11: #{aotn_forward.25} parent=1 // pred_check_branch
      %17 = sbr.rel (0) target = $region13
    $region12: #{aotn_forward.25} parent=1 // pred_region
      _
    $region13: #{aotn_forward.25} parent=1 // pred_fallthru
      _
    // Predicated region
    $region14: #{aotn_forward.25} parent=1 // pred_check
      _
    $region15: #{aotn_forward.25} parent=1 // pred_check_branch
      %19 = sbr.rel (0) target = $region17
    $region16: #{aotn_forward.25} parent=1 // pred_region
      %s21 = ssub.s32 16, 16
      %22 = vsyncadd [#allocation3], %s21
      %s24 = sshll.u32 [#allocation2], 4
      %s25 = int_to_ptr.vmem [resolvable:$true] %s24
      %27 = dma.hbm_to_vmem [thread:$0]  %s3, 16, %s25, [#allocation3]
    $region17: #{aotn_forward.25} parent=1 // pred_fallthru
      _
    // Predicated region
    $region18: #{aotn_forward.25} parent=1 // pred_check
      _
    $region19: #{aotn_forward.25} parent=1 // pred_check_branch
      %29 = sbr.rel (0) target = $region21
    $region20: #{aotn_forward.25} parent=1 // pred_region
      %s31 = ssub.s32 16, 16
      %32 = vsyncadd [#allocation5], %s31
      %s34 = sshll.u32 [#allocation4], 4
      %s35 = int_to_ptr.vmem [resolvable:$true] %s34
      %37 = dma.hbm_to_vmem [thread:$0]  %s4, 16, %s35, [#allocation5]
    $region21: #{aotn_forward.25} parent=1 // pred_fallthru
      _
    // Predicated region
    $region22: #{aotn_forward.25} parent=1 // pred_check
      _
    $region23: #{aotn_forward.25} parent=1 // pred_check_branch
      %39 = sbr.rel (0) target = $region25
    $region24: #{aotn_forward.25} parent=1 // pred_region
      %40 = dma.done [#allocation3], 16
    $region25: #{aotn_forward.25} parent=1 // pred_fallthru
      _
    // Predicated region
    $region26: #{aotn_forward.25} parent=1 // pred_check
      _
    $region27: #{aotn_forward.25} parent=1 // pred_check_branch
      %42 = sbr.rel (0) target = $region29
    $region28: #{aotn_forward.25} parent=1 // pred_region
      %43 = dma.done [#allocation5], 16
    $region29: #{aotn_forward.25} parent=1 // pred_fallthru
      _
    %v45 = vld [vmem:[%s0] sm:$0xff]
    %v46 = vld [vmem:[%s0 + $0x8] sm:$0xff]
    %v47 = vld [vmem:[#allocation2] sm:$0x1]
    %v48 = vld [vmem:[#allocation4] sm:$0x1]
    %vm49 = vcmask 261120
    %v50 = vsel %vm49, %v45, 0.0
    %51 = vadd.xlane.f32.xlu0 %v50
    %v52 = vpop.xlane.xlu0 %51
    %v53 = vsel %vm49, %v46, 0.0
    %54 = vadd.xlane.f32.xlu0 %v53
    %v55 = vpop.xlane.xlu0 %54
    %v56 = vrcp.pop 32.0
    %v57 = vmul.f32 %v52, %v56
    %v58 = vmul.f32 %v55, %v56
    %v59 = vsub.f32 %v45, %v57
    %v60 = vsub.f32 %v46, %v58
    %v61 = vmul.f32 %v59, %v59
    %v62 = vmul.f32 %v60, %v60
    %v63 = vsel %vm49, %v61, 0.0
    %64 = vadd.xlane.f32.xlu0 %v63
    %v65 = vpop.xlane.xlu0 %64
    %v66 = vsel %vm49, %v62, 0.0
    %67 = vadd.xlane.f32.xlu0 %v66
    %v68 = vpop.xlane.xlu0 %67
    %v69 = vmul.f32 %v65, %v56
    %v70 = vmul.f32 %v68, %v56
    %v71 = vadd.f32 %v69, 1e-05
    %v72 = vadd.f32 %v70, 1e-05
    %v73 = vrsqrt.pop %v71
    %v74 = vrsqrt.pop %v72
    %v75 = vmul.f32 %v59, %v73
    %v76 = vmul.f32 %v60, %v74
    %v78 = vlaneseq
    %v79 = vshrl.u32 %v78, 7
    %v80 = vsub.s32 0, %v79
    %v81 = vrot.slane %v47, %v80
    %v83 = vmul.f32 %v75, %v81
    %v84 = vmul.f32 %v76, %v81
    %v86 = vlaneseq
    %v87 = vshrl.u32 %v86, 7
    %v88 = vsub.s32 0, %v87
    %v89 = vrot.slane %v48, %v88
    %v91 = vadd.f32 %v83, %v89
    %v92 = vadd.f32 %v84, %v89
    %v93 = vpack.c.bf16 %v92, %v91
    %v94 = vld [vmem:[%s1] sm:$0xf]
    %v95 = vld [vmem:[%s1 + $0x4] sm:$0xf]
    %v96 = vld [vmem:[%s1 + $0x8] sm:$0xf]
    %v97 = vld [vmem:[%s1 + $0xc] sm:$0xf]
    %v98 = vld [vmem:[%s2] sm:$0x1]
    %v100 = vlaneseq
    %v101 = vshrl.u32 %v100, 7
    %v102 = vsub.s32 0, %v101
    %v103 = vrot.slane %v98, %v102
    %v109 = vunpack.c.l.b16 %v94
    %v110 = vunpack.c.l.b16 %v95
    %v111 = vunpack.c.l.b16 %v96
    %v112 = vunpack.c.l.b16 %v97
    %v113 = vpack.c.b16 %v110, %v109
    %v114 = vpack.c.b16 %v112, %v111
    %v118 = vsel %vm49, %v93, 0
    %120 = vmatprep.subr.bf16.mxu0 0
    %121 = vmatpush1.bf16.msra.mxu0 %v113
    %122 = vmatprep.subr.bf16.mxu0 0
    %123 = vmatpush1.bf16.msra.mxu0 %v114
    %124 = vmatprep.subr.bf16.mxu0 0
    %125 = vmatpush1.bf16.msra.mxu0 0
    %126 = vmatprep.subr.bf16.mxu0 0
    %127 = vmatpush1.bf16.msra.mxu0 0
    %128 = vmatprep.subr.bf16.mxu0 0
    %129 = vmatpush1.bf16.msra.mxu0 0
    %130 = vmatprep.subr.bf16.mxu0 0
    %131 = vmatpush1.bf16.msra.mxu0 0
    %132 = vmatprep.subr.bf16.mxu0 0
    %133 = vmatpush1.bf16.msra.mxu0 0
    %134 = vmatprep.subr.bf16.mxu0 0
    %135 = vmatpush1.bf16.msra.mxu0 0
    %136 = vmatprep.subr.bf16.mxu0 0
    %137 = vmatpush1.bf16.msra.mxu0 0
    %138 = vmatprep.subr.bf16.mxu0 0
    %139 = vmatpush1.bf16.msra.mxu0 0
    %140 = vmatprep.subr.bf16.mxu0 0
    %141 = vmatpush1.bf16.msra.mxu0 0
    %142 = vmatprep.subr.bf16.mxu0 0
    %143 = vmatpush1.bf16.msra.mxu0 0
    %144 = vmatprep.subr.bf16.mxu0 0
    %145 = vmatpush1.bf16.msra.mxu0 0
    %146 = vmatprep.subr.bf16.mxu0 0
    %147 = vmatpush1.bf16.msra.mxu0 0
    %148 = vmatprep.subr.bf16.mxu0 0
    %149 = vmatpush1.bf16.msra.mxu0 0
    %150 = vmatprep.subr.bf16.mxu0 0
    %151 = vmatpush1.bf16.msra.mxu0 0
    %152 = vmatprep.mubr.bf16.mxu0 0
    %153 = vmatmul.mubr.bf16.gmra.mrb[0].mxu0 %v118
    %v154 = vpop.f32.mrb[0].mxu0
    %v155 = vadd.f32 %v103, %v154
    %v156 = vpop.f32.mrb[0].mxu0
    %v157 = vpop.f32.mrb[0].mxu0
    %v158 = vadd.f32 %v103, %v157
    %v159 = vpop.f32.mrb[0].mxu0
    %160 = vdwg.mxu0
    %161 = vst [vmem:[%s5] sm:$0xff] %v155
    %162 = vst [vmem:[%s5 + $0x8] sm:$0xff] %v158
    // Predicated region
    $region30: #{aotn_forward.25} parent=1 // pred_check
      _
    $region31: #{aotn_forward.25} parent=1 // pred_check_branch
      %164 = sbr.rel (0) target = $region33
    $region32: #{aotn_forward.25} parent=1 // pred_region
      _
    $region33: #{aotn_forward.25} parent=1 // pred_fallthru
      _
    // Predicated region
    $region34: #{aotn_forward.25} parent=1 // pred_check
      _
    $region35: #{aotn_forward.25} parent=1 // pred_check_branch
      %166 = sbr.rel (0) target = $region37
    $region36: #{aotn_forward.25} parent=1 // pred_region
      _
    $region37: #{aotn_forward.25} parent=1 // pred_fallthru
      _
    %167 = vsyncpa [#allocation3], 1
    %168 = vsyncpa [#allocation5], 1

// kernel: aotn_forward.24
$region0: #{aotn_forward.24}
  #allocation0 [shape = 'u32[]', space=smem, size = 0x4, offset = 0x4, fixed_abs, tag = 'smem constant byte address 0x4 - core index']
  #allocation1 [shape = 'u32[144,128]{1,0:T(1,128)}', space=vmem, size = 0x12000, scoped, tag = 'internal scratch']
  #allocation2 [shape = 'f32[2,16]{1,0:T(2,128)}', space=vmem, size = 0x400, scoped, tag = 'scratch operand']
  #allocation3 [shape = 'f32[2,16]{1,0:T(2,128)}', space=vmem, size = 0x400, scoped, tag = 'scratch operand']
  #allocation4 [shape = 'f32[2,16]{1,0:T(2,128)}', space=vmem, size = 0x400, scoped, tag = 'scratch operand']
  #allocation5 [shape = 'f32[2,16]{1,0:T(2,128)}', space=vmem, size = 0x400, scoped, tag = 'scratch operand']
  %s0 = inlined_call_operand.vmem [shape: f32[8,2,64], index: 0, kind: input, shape index: {}]
  %s1 = inlined_call_operand.vmem [shape: f32[8,2,64], index: 1, kind: input, shape index: {}]
  %s2 = inlined_call_operand.vmem [shape: f32[8,2,1], index: 2, kind: input, shape index: {}, may-alias: {2,3}]
  %s3 = inlined_call_operand.vmem [shape: f32[8,2,1], index: 3, kind: input, shape index: {}, may-alias: {2,3}]
  %s4 = inlined_call_operand.vmem [shape: bf16[16,64], index: 4, kind: input, shape index: {}]
  %s5 = inlined_call_operand.vmem [shape: bf16[16,64], index: 5, kind: input, shape index: {}]
  %s6 = inlined_call_operand.vmem [shape: f32[8,2,16], index: 6, kind: output, shape index: {0}]
  %s7 = inlined_call_operand.vmem [shape: f32[8,2,16], index: 7, kind: output, shape index: {1}]
  %s8 = inlined_call_operand.vmem [shape: f32[2,16], index: 8, kind: output, shape index: {2}]
  %s9 = inlined_call_operand.vmem [shape: f32[2,16], index: 9, kind: output, shape index: {3}]
  %10 = xla_tuple %s6, %s7, %s8, %s9
  %s11 = sld [smem:[#allocation0]]
  $region93: #{aotn_forward.24} parent=0
    _
  %s13 = ssub.s32 1, %s11
  %s14 = scalar_select 0, %s13, %s11
  loop: start=0, step=1, limit=10
  $region2: #{aotn_forward.24} parent=0 // loop_pre_header
    _
  $region3: #{aotn_forward.24} parent=0 // loop_header
    %s16 = sphi 0, %s20
    %p17 = scmp.ge.s32.totalorder %s16, 10
    %s26 = sphi 0, %s28
    %s29 = sphi 0, %s26
    %s30 = sphi 0, %s29
    %s46 = sphi 0, %s30
    %s54 = sphi 0, %s56
    %s57 = sphi 0, %s54
    %s58 = sphi 0, %s57
    %s74 = sphi 0, %s58
    %s80 = sphi 0, %s82
    %s83 = sphi 0, %s80
    %s84 = sphi 0, %s83
    %s100 = sphi 0, %s84
    %s108 = sphi 0, %s110
    %s111 = sphi 0, %s108
    %s112 = sphi 0, %s111
    %s128 = sphi 0, %s112
    %s132 = sphi 0, %s132
    %s134 = sphi 0, %s132
    %s135 = sphi 0, %s134
    %s149 = sphi 0, %s135
    %s153 = sphi 0, %s153
    %s155 = sphi 0, %s153
    %s156 = sphi 0, %s155
    %s170 = sphi 0, %s156
    %s176 = sphi 0, %s178
    %s179 = sphi 0, %s176
    %s180 = sphi 0, %s179
    %s196 = sphi 0, %s180
    %s204 = sphi 0, %s206
    %s207 = sphi 0, %s204
    %s208 = sphi 0, %s207
    %s224 = sphi 0, %s208
    %s228 = sphi 0, %s228
    %s230 = sphi 0, %s228
    %s231 = sphi 0, %s230
    %s245 = sphi 0, %s231
    %s249 = sphi 0, %s249
    %s251 = sphi 0, %s249
    %s252 = sphi 0, %s251
    %s266 = sphi 0, %s252
  $region4: #{aotn_forward.24} parent=0 // loop_header_branch
    %19 = sbr.rel (%p17) target = $region8
  $region5: #{aotn_forward.24} parent=0 // loop_body
    %s21 = ssub.s32 %s16, 1
    %s22 = ssub.s32 %s16, 2
    %s23 = sadd.s32 %s16, 1
    %s24 = ssub.s32 %s16, %s23
    %p25 = scmp.eq.s32.totalorder %s24, 0
    %s27 = sadd.s32 %s26, 1
    %s28 = scalar_select %p25, %s26, %s27
    %p31 = pneg %p25
    %p32 = scmp.eq.s32.totalorder %s16, 7
    %p33 = por %p31, %p32
    %p34 = scmp.ne.s32.totalorder %s26, %s29
    %p35 = scmp.eq.s32.totalorder %s16, 0
    %p36 = por %p34, %p35
    %p37 = scmp.ne.s32.totalorder %s26, %s29
    %p38 = scmp.eq.s32.totalorder %s21, 7
    %p39 = por %p37, %p38
    %p40 = scmp.ne.s32.totalorder %s29, %s30
    %p41 = scmp.eq.s32.totalorder %s21, 0
    %p42 = por %p40, %p41
    %p43 = scmp.ne.s32.totalorder %s29, %s30
    %p44 = scmp.eq.s32.totalorder %s22, 7
    %p45 = por %p43, %p44
    %p47 = scmp.ne.s32.totalorder %s30, %s46
    %p48 = scmp.eq.s32.totalorder %s22, 0
    %p49 = por %p47, %p48
    %s50 = ssub.s32 7, %s16
    %s51 = ssub.s32 7, %s23
    %s52 = ssub.s32 %s50, %s51
    %p53 = scmp.eq.s32.totalorder %s52, 0
    %s55 = sadd.s32 %s54, 1
    %s56 = scalar_select %p53, %s54, %s55
    %p59 = pneg %p53
    %p60 = scmp.eq.s32.totalorder %s16, 7
    %p61 = por %p59, %p60
    %p62 = scmp.ne.s32.totalorder %s54, %s57
    %p63 = scmp.eq.s32.totalorder %s16, 0
    %p64 = por %p62, %p63
    %p65 = scmp.ne.s32.totalorder %s54, %s57
    %p66 = scmp.eq.s32.totalorder %s21, 7
    %p67 = por %p65, %p66
    %p68 = scmp.ne.s32.totalorder %s57, %s58
    %p69 = scmp.eq.s32.totalorder %s21, 0
    %p70 = por %p68, %p69
    %p71 = scmp.ne.s32.totalorder %s57, %s58
    %p72 = scmp.eq.s32.totalorder %s22, 7
    %p73 = por %p71, %p72
    %p75 = scmp.ne.s32.totalorder %s58, %s74
    %p76 = scmp.eq.s32.totalorder %s22, 0
    %p77 = por %p75, %p76
    %s78 = ssub.s32 %s16, %s23
    %p79 = scmp.eq.s32.totalorder %s78, 0
    %s81 = sadd.s32 %s80, 1
    %s82 = scalar_select %p79, %s80, %s81
    %p85 = pneg %p79
    %p86 = scmp.eq.s32.totalorder %s16, 7
    %p87 = por %p85, %p86
    %p88 = scmp.ne.s32.totalorder %s80, %s83
    %p89 = scmp.eq.s32.totalorder %s16, 0
    %p90 = por %p88, %p89
    %p91 = scmp.ne.s32.totalorder %s80, %s83
    %p92 = scmp.eq.s32.totalorder %s21, 7
    %p93 = por %p91, %p92
    %p94 = scmp.ne.s32.totalorder %s83, %s84
    %p95 = scmp.eq.s32.totalorder %s21, 0
    %p96 = por %p94, %p95
    %p97 = scmp.ne.s32.totalorder %s83, %s84
    %p98 = scmp.eq.s32.totalorder %s22, 7
    %p99 = por %p97, %p98
    %p101 = scmp.ne.s32.totalorder %s84, %s100
    %p102 = scmp.eq.s32.totalorder %s22, 0
    %p103 = por %p101, %p102
    %s104 = ssub.s32 7, %s16
    %s105 = ssub.s32 7, %s23
    %s106 = ssub.s32 %s104, %s105
    %p107 = scmp.eq.s32.totalorder %s106, 0
    %s109 = sadd.s32 %s108, 1
    %s110 = scalar_select %p107, %s108, %s109
    %p113 = pneg %p107
    %p114 = scmp.eq.s32.totalorder %s16, 7
    %p115 = por %p113, %p114
    %p116 = scmp.ne.s32.totalorder %s108, %s111
    %p117 = scmp.eq.s32.totalorder %s16, 0
    %p118 = por %p116, %p117
    %p119 = scmp.ne.s32.totalorder %s108, %s111
    %p120 = scmp.eq.s32.totalorder %s21, 7
    %p121 = por %p119, %p120
    %p122 = scmp.ne.s32.totalorder %s111, %s112
    %p123 = scmp.eq.s32.totalorder %s21, 0
    %p124 = por %p122, %p123
    %p125 = scmp.ne.s32.totalorder %s111, %s112
    %p126 = scmp.eq.s32.totalorder %s22, 7
    %p127 = por %p125, %p126
    %p129 = scmp.ne.s32.totalorder %s112, %s128
    %p130 = scmp.eq.s32.totalorder %s22, 0
    %p131 = por %p129, %p130
    %s133 = sadd.s32 %s132, 1
    %p136 = scmp.eq.s32.totalorder %s16, 7
    %p137 = scmp.ne.s32.totalorder %s132, %s134
    %p138 = scmp.eq.s32.totalorder %s16, 0
    %p139 = por %p137, %p138
    %p140 = scmp.ne.s32.totalorder %s132, %s134
    %p141 = scmp.eq.s32.totalorder %s21, 7
    %p142 = por %p140, %p141
    %p143 = scmp.ne.s32.totalorder %s134, %s135
    %p144 = scmp.eq.s32.totalorder %s21, 0
    %p145 = por %p143, %p144
    %p146 = scmp.ne.s32.totalorder %s134, %s135
    %p147 = scmp.eq.s32.totalorder %s22, 7
    %p148 = por %p146, %p147
    %p150 = scmp.ne.s32.totalorder %s135, %s149
    %p151 = scmp.eq.s32.totalorder %s22, 0
    %p152 = por %p150, %p151
    %s154 = sadd.s32 %s153, 1
    %p157 = scmp.eq.s32.totalorder %s16, 7
    %p158 = scmp.ne.s32.totalorder %s153, %s155
    %p159 = scmp.eq.s32.totalorder %s16, 0
    %p160 = por %p158, %p159
    %p161 = scmp.ne.s32.totalorder %s153, %s155
    %p162 = scmp.eq.s32.totalorder %s21, 7
    %p163 = por %p161, %p162
    %p164 = scmp.ne.s32.totalorder %s155, %s156
    %p165 = scmp.eq.s32.totalorder %s21, 0
    %p166 = por %p164, %p165
    %p167 = scmp.ne.s32.totalorder %s155, %s156
    %p168 = scmp.eq.s32.totalorder %s22, 7
    %p169 = por %p167, %p168
    %p171 = scmp.ne.s32.totalorder %s156, %s170
    %p172 = scmp.eq.s32.totalorder %s22, 0
    %p173 = por %p171, %p172
    %s174 = ssub.s32 %s16, %s23
    %p175 = scmp.eq.s32.totalorder %s174, 0
    %s177 = sadd.s32 %s176, 1
    %s178 = scalar_select %p175, %s176, %s177
    %p181 = pneg %p175
    %p182 = scmp.eq.s32.totalorder %s16, 7
    %p183 = por %p181, %p182
    %p184 = scmp.ne.s32.totalorder %s176, %s179
    %p185 = scmp.eq.s32.totalorder %s16, 0
    %p186 = por %p184, %p185
    %p187 = scmp.ne.s32.totalorder %s176, %s179
    %p188 = scmp.eq.s32.totalorder %s21, 7
    %p189 = por %p187, %p188
    %p190 = scmp.ne.s32.totalorder %s179, %s180
    %p191 = scmp.eq.s32.totalorder %s21, 0
    %p192 = por %p190, %p191
    %p193 = scmp.ne.s32.totalorder %s179, %s180
    %p194 = scmp.eq.s32.totalorder %s22, 7
    %p195 = por %p193, %p194
    %p197 = scmp.ne.s32.totalorder %s180, %s196
    %p198 = scmp.eq.s32.totalorder %s22, 0
    %p199 = por %p197, %p198
    %s200 = ssub.s32 7, %s16
    %s201 = ssub.s32 7, %s23
    %s202 = ssub.s32 %s200, %s201
    %p203 = scmp.eq.s32.totalorder %s202, 0
    %s205 = sadd.s32 %s204, 1
    %s206 = scalar_select %p203, %s204, %s205
    %p209 = pneg %p203
    %p210 = scmp.eq.s32.totalorder %s16, 7
    %p211 = por %p209, %p210
    %p212 = scmp.ne.s32.totalorder %s204, %s207
    %p213 = scmp.eq.s32.totalorder %s16, 0
    %p214 = por %p212, %p213
    %p215 = scmp.ne.s32.totalorder %s204, %s207
    %p216 = scmp.eq.s32.totalorder %s21, 7
    %p217 = por %p215, %p216
    %p218 = scmp.ne.s32.totalorder %s207, %s208
    %p219 = scmp.eq.s32.totalorder %s21, 0
    %p220 = por %p218, %p219
    %p221 = scmp.ne.s32.totalorder %s207, %s208
    %p222 = scmp.eq.s32.totalorder %s22, 7
    %p223 = por %p221, %p222
    %p225 = scmp.ne.s32.totalorder %s208, %s224
    %p226 = scmp.eq.s32.totalorder %s22, 0
    %p227 = por %p225, %p226
    %s229 = sadd.s32 %s228, 1
    %p232 = scmp.eq.s32.totalorder %s16, 7
    %p233 = scmp.ne.s32.totalorder %s228, %s230
    %p234 = scmp.eq.s32.totalorder %s16, 0
    %p235 = por %p233, %p234
    %p236 = scmp.ne.s32.totalorder %s228, %s230
    %p237 = scmp.eq.s32.totalorder %s21, 7
    %p238 = por %p236, %p237
    %p239 = scmp.ne.s32.totalorder %s230, %s231
    %p240 = scmp.eq.s32.totalorder %s21, 0
    %p241 = por %p239, %p240
    %p242 = scmp.ne.s32.totalorder %s230, %s231
    %p243 = scmp.eq.s32.totalorder %s22, 7
    %p244 = por %p242, %p243
    %p246 = scmp.ne.s32.totalorder %s231, %s245
    %p247 = scmp.eq.s32.totalorder %s22, 0
    %p248 = por %p246, %p247
    %s250 = sadd.s32 %s249, 1
    %p253 = scmp.eq.s32.totalorder %s16, 7
    %p254 = scmp.ne.s32.totalorder %s249, %s251
    %p255 = scmp.eq.s32.totalorder %s16, 0
    %p256 = por %p254, %p255
    %p257 = scmp.ne.s32.totalorder %s249, %s251
    %p258 = scmp.eq.s32.totalorder %s21, 7
    %p259 = por %p257, %p258
    %p260 = scmp.ne.s32.totalorder %s251, %s252
    %p261 = scmp.eq.s32.totalorder %s21, 0
    %p262 = por %p260, %p261
    %p263 = scmp.ne.s32.totalorder %s251, %s252
    %p264 = scmp.eq.s32.totalorder %s22, 7
    %p265 = por %p263, %p264
    %p267 = scmp.ne.s32.totalorder %s252, %s266
    %p268 = scmp.eq.s32.totalorder %s22, 0
    %p269 = por %p267, %p268
    %p270 = scmp.le.s32.totalorder 1, %s16
    %p271 = scmp.lt.s32.totalorder %s16, 9
    %p272 = pnand %p270, %p271
    %p273 = pneg %p272
    // Predicated region
    $region9: #{aotn_forward.24} parent=5 // pred_check
      _
    $region10: #{aotn_forward.24} parent=5 // pred_check_branch
      %275 = sbr.rel (%p272) target = $region12
    $region11: #{aotn_forward.24} parent=5 // pred_region
      %s276 = ssub.s32 %s16, 1
      // Predicated region
      $region13: #{aotn_forward.24} parent=11 // pred_check
        %p277 = pneg %p145
      $region14: #{aotn_forward.24} parent=11 // pred_check_branch
        %279 = sbr.rel (%p277) target = $region16
      $region15: #{aotn_forward.24} parent=11 // pred_region
        _
      $region16: #{aotn_forward.24} parent=11 // pred_fallthru
        _
      // Predicated region
      $region17: #{aotn_forward.24} parent=11 // pred_check
        %p280 = pneg %p166
      $region18: #{aotn_forward.24} parent=11 // pred_check_branch
        %282 = sbr.rel (%p280) target = $region20
      $region19: #{aotn_forward.24} parent=11 // pred_region
        _
      $region20: #{aotn_forward.24} parent=11 // pred_fallthru
        _
    $region12: #{aotn_forward.24} parent=5 // pred_fallthru
      _
    %p283 = scmp.lt.s32.totalorder %s16, 8
    // Predicated region
    $region21: #{aotn_forward.24} parent=5 // pred_check
      %p284 = pneg %p283
    $region22: #{aotn_forward.24} parent=5 // pred_check_branch
      %286 = sbr.rel (%p284) target = $region24
    $region23: #{aotn_forward.24} parent=5 // pred_region
      // Predicated region
      $region25: #{aotn_forward.24} parent=23 // pred_check
        %p287 = pneg %p36
      $region26: #{aotn_forward.24} parent=23 // pred_check_branch
        %289 = sbr.rel (%p287) target = $region28
      $region27: #{aotn_forward.24} parent=23 // pred_region
        %p290 = scmp.lt.s32.totalorder %s16, 7
        %s291 = scalar_select %p290, %s16, 7
        %s292 = smul.addr %s291, 2
        %s293 = scalar_lea.vmem %s0, %s292
      $region28: #{aotn_forward.24} parent=23 // pred_fallthru
        _
      // Predicated region
      $region29: #{aotn_forward.24} parent=23 // pred_check
        %p294 = pneg %p64
      $region30: #{aotn_forward.24} parent=23 // pred_check_branch
        %296 = sbr.rel (%p294) target = $region32
      $region31: #{aotn_forward.24} parent=23 // pred_region
        %s297 = ssub.s32 7, %s16
        %p298 = scmp.lt.s32.totalorder %s297, 7
        %s299 = scalar_select %p298, %s297, 7
        %s300 = smul.addr %s299, 2
        %s301 = scalar_lea.vmem %s1, %s300
        %s302 = ssub.s32 7, %s16
      $region32: #{aotn_forward.24} parent=23 // pred_fallthru
        _
      // Predicated region
      $region33: #{aotn_forward.24} parent=23 // pred_check
        %p303 = pneg %p90
      $region34: #{aotn_forward.24} parent=23 // pred_check_branch
        %305 = sbr.rel (%p303) target = $region36
      $region35: #{aotn_forward.24} parent=23 // pred_region
        %p306 = scmp.lt.s32.totalorder %s16, 7
        %s307 = scalar_select %p306, %s16, 7
        %s308 = smul.addr %s307, 2
        %s309 = scalar_lea.vmem %s2, %s308
      $region36: #{aotn_forward.24} parent=23 // pred_fallthru
        _
      // Predicated region
      $region37: #{aotn_forward.24} parent=23 // pred_check
        %p310 = pneg %p118
      $region38: #{aotn_forward.24} parent=23 // pred_check_branch
        %312 = sbr.rel (%p310) target = $region40
      $region39: #{aotn_forward.24} parent=23 // pred_region
        %s313 = ssub.s32 7, %s16
        %p314 = scmp.lt.s32.totalorder %s313, 7
        %s315 = scalar_select %p314, %s313, 7
        %s316 = smul.addr %s315, 2
        %s317 = scalar_lea.vmem %s3, %s316
        %s318 = ssub.s32 7, %s16
      $region40: #{aotn_forward.24} parent=23 // pred_fallthru
        _
    $region24: #{aotn_forward.24} parent=5 // pred_fallthru
      _
    %p319 = scmp.le.s32.totalorder 1, %s16
    %p320 = scmp.lt.s32.totalorder %s16, 9
    %p321 = pnand %p319, %p320
    %p322 = pneg %p321
    // Predicated region
    $region41: #{aotn_forward.24} parent=5 // pred_check
      _
    $region42: #{aotn_forward.24} parent=5 // pred_check_branch
      %324 = sbr.rel (%p321) target = $region44
    $region43: #{aotn_forward.24} parent=5 // pred_region
      %s325 = ssub.s32 %s16, 1
      %p326 = scmp.lt.s32.totalorder %s21, 7
      %s327 = scalar_select %p326, %s21, 7
      %s328 = smul.addr %s327, 2
      %s329 = scalar_lea.vmem %s0, %s328
      %p330 = pneg %p42
      %p331 = pneg %p39
      %s332 = ssub.s32 7, %s21
      %p333 = scmp.lt.s32.totalorder %s332, 7
      %s334 = scalar_select %p333, %s332, 7
      %s335 = smul.addr %s334, 2
      %s336 = scalar_lea.vmem %s1, %s335
      %p337 = pneg %p70
      %p338 = pneg %p67
      %p339 = scmp.lt.s32.totalorder %s21, 7
      %s340 = scalar_select %p339, %s21, 7
      %s341 = smul.addr %s340, 2
      %s342 = scalar_lea.vmem %s2, %s341
      %p343 = pneg %p96
      %p344 = pneg %p93
      %s345 = ssub.s32 7, %s21
      %p346 = scmp.lt.s32.totalorder %s345, 7
      %s347 = scalar_select %p346, %s345, 7
      %s348 = smul.addr %s347, 2
      %s349 = scalar_lea.vmem %s3, %s348
      %p350 = pneg %p124
      %p351 = pneg %p121
      %p352 = pneg %p145
      %p353 = pneg %p142
      %p354 = pneg %p166
      %p355 = pneg %p163
      %p356 = pneg %p192
      %p357 = pneg %p189
      %p358 = scmp.lt.s32.totalorder %s21, 7
      %s359 = scalar_select %p358, %s21, 7
      %s360 = smul.addr %s359, 2
      %s361 = scalar_lea.vmem %s6, %s360
      %p362 = pneg %p220
      %p363 = pneg %p217
      %s364 = ssub.s32 7, %s21
      %p365 = scmp.lt.s32.totalorder %s364, 7
      %s366 = scalar_select %p365, %s364, 7
      %s367 = smul.addr %s366, 2
      %s368 = scalar_lea.vmem %s7, %s367
      %p369 = pneg %p241
      %p370 = pneg %p238
      %p371 = pneg %p262
      %p372 = pneg %p259
      %p373 = scmp.lt.s32.totalorder %s21, 7
      %s374 = scalar_select %p373, %s21, 7
      %s375 = smul.addr %s374, 2
      %s376 = scalar_lea.vmem %s0, %s375
      %s377 = ssub.s32 7, %s21
      %p378 = scmp.lt.s32.totalorder %s377, 7
      %s379 = scalar_select %p378, %s377, 7
      %s380 = smul.addr %s379, 2
      %s381 = scalar_lea.vmem %s1, %s380
      %s382 = ssub.s32 7, %s21
      %p383 = scmp.lt.s32.totalorder %s21, 7
      %s384 = scalar_select %p383, %s21, 7
      %s385 = smul.addr %s384, 2
      %s386 = scalar_lea.vmem %s2, %s385
      %s387 = ssub.s32 7, %s21
      %p388 = scmp.lt.s32.totalorder %s387, 7
      %s389 = scalar_select %p388, %s387, 7
      %s390 = smul.addr %s389, 2
      %s391 = scalar_lea.vmem %s3, %s390
      %s392 = ssub.s32 7, %s21
      %p393 = scmp.lt.s32.totalorder %s21, 7
      %s394 = scalar_select %p393, %s21, 7
      %s395 = smul.addr %s394, 2
      %s396 = scalar_lea.vmem %s6, %s395
      %s397 = ssub.s32 7, %s21
      %p398 = scmp.lt.s32.totalorder %s397, 7
      %s399 = scalar_select %p398, %s397, 7
      %s400 = smul.addr %s399, 2
      %s401 = scalar_lea.vmem %s7, %s400
      %s402 = ssub.s32 7, %s21
      %p404 = scmp.eq.s32.totalorder %s21, 0
      // Predicated region
      $region45: #{aotn_forward.24} parent=43 // pred_check
        %p405 = pneg %p404
      $region46: #{aotn_forward.24} parent=43 // pred_check_branch
        %407 = sbr.rel (%p405) target = $region48
      $region47: #{aotn_forward.24} parent=43 // pred_region
        %vm408 = vcmask 123904
        %409 = vst.msk [vmem:[#allocation2] sm:$0x3] %vm408, 0.0
        %410 = vst.msk [vmem:[#allocation3] sm:$0x3] %vm408, 0.0
        %411 = vst.msk [vmem:[#allocation4] sm:$0x3] %vm408, 0.0
        %412 = vst.msk [vmem:[#allocation5] sm:$0x3] %vm408, 0.0
      $region48: #{aotn_forward.24} parent=43 // pred_fallthru
        _
      %v413 = vld [vmem:[%s376] sm:$0x3]
      %v414 = vld [vmem:[%s386] sm:$0x3]
      %v415 = vld [vmem:[%s4] sm:$0xf]
      %v416 = vld [vmem:[%s4 + $0x4] sm:$0xf]
      %v417 = vld [vmem:[#allocation2] sm:$0x3]
      %v418 = vld [vmem:[#allocation3] sm:$0x3]
      %v419 = vpack.c.bf16 %v417, %v417
      %v422 = vunpack.c.l.b16 %v415
      %v423 = vunpack.c.l.b16 %v416
      %v424 = vpack.c.b16 %v423, %v422
      %vm426 = vcmask 130048
      %v428 = vsel %vm426, %v419, 0
      %430 = vmatprep.subr.bf16.mxu0 0
      %431 = vmatpush1.bf16.msra.mxu0 %v424
      %432 = vmatprep.subr.bf16.mxu0 0
      %433 = vmatpush1.bf16.msra.mxu0 0
      %434 = vmatprep.subr.bf16.mxu0 0
      %435 = vmatpush1.bf16.msra.mxu0 0
      %436 = vmatprep.subr.bf16.mxu0 0
      %437 = vmatpush1.bf16.msra.mxu0 0
      %438 = vmatprep.subr.bf16.mxu0 0
      %439 = vmatpush1.bf16.msra.mxu0 0
      %440 = vmatprep.subr.bf16.mxu0 0
      %441 = vmatpush1.bf16.msra.mxu0 0
      %442 = vmatprep.subr.bf16.mxu0 0
      %443 = vmatpush1.bf16.msra.mxu0 0
      %444 = vmatprep.subr.bf16.mxu0 0
      %445 = vmatpush1.bf16.msra.mxu0 0
      %446 = vmatprep.subr.bf16.mxu0 0
      %447 = vmatpush1.bf16.msra.mxu0 0
      %448 = vmatprep.subr.bf16.mxu0 0
      %449 = vmatpush1.bf16.msra.mxu0 0
      %450 = vmatprep.subr.bf16.mxu0 0
      %451 = vmatpush1.bf16.msra.mxu0 0
      %452 = vmatprep.subr.bf16.mxu0 0
      %453 = vmatpush1.bf16.msra.mxu0 0
      %454 = vmatprep.subr.bf16.mxu0 0
      %455 = vmatpush1.bf16.msra.mxu0 0
      %456 = vmatprep.subr.bf16.mxu0 0
      %457 = vmatpush1.bf16.msra.mxu0 0
      %458 = vmatprep.subr.bf16.mxu0 0
      %459 = vmatpush1.bf16.msra.mxu0 0
      %460 = vmatprep.subr.bf16.mxu0 0
      %461 = vmatpush1.bf16.msra.mxu0 0
      %462 = vmatprep.mubr.bf16.mxu0 0
      %463 = vmatmul.mubr.bf16.gmra.mrb[0].mxu0 %v428
      %v464 = vpop.f32.mrb[0].mxu0
      %v465 = vadd.f32 0.0, %v464
      %v466 = vpop.f32.mrb[0].mxu0
      %v467 = vpop.f32.mrb[0].mxu0
      %v468 = vpop.f32.mrb[0].mxu0
      %469 = vdwg.mxu0
      %v470 = vadd.f32 %v413, %v465
      %v471 = vsub.f32 0.0, %v470
      %v472 = vmul.f32 %v471, 1.442695
      %v473 = vpow.pop %v472
      %v474 = vadd.f32 %v473, 1.0
      %v475 = vrcp.pop %v474
      %v476 = vmul.f32 1.0, %v475
      %v477 = vtanh.pop %v470
      %479 = vrot.lane.b32.xlu0 %v418, 16
      %v480 = vpop.permute.xlu0 %479
      %v482 = vmul.f32 %v476, %v480
      %484 = vrot.lane.b32.xlu0 %v477, 96
      %v485 = vpop.permute.xlu0 %484
      %v487 = vmul.f32 %v476, %v485
      %489 = vrot.lane.b32.xlu0 %v487, 16
      %v490 = vpop.permute.xlu0 %489
      %v492 = vadd.f32 %v482, %v490
      %v493 = vtanh.pop %v492
      %495 = vrot.lane.b32.xlu0 %v493, 32
      %v496 = vpop.permute.xlu0 %495
      %v498 = vmul.f32 %v476, %v496
      %500 = vset.pattern.permute.xlu0 0
      %501 = vperm.xlu0 %500, %v414
      %v502 = vpop.permute.xlu0 %501
      %v504 = vmul.f32 %v502, %v498
      %506 = vrot.lane.b32.xlu0 %v504, 80
      %v507 = vpop.permute.xlu0 %506
      %vm509 = vcmask 123904
      %510 = vst.msk [vmem:[%s396] sm:$0x3] %vm509, %v507
      %v511 = vsub.f32 1.0, %v414
      %513 = vset.pattern.permute.xlu0 0
      %514 = vperm.xlu0 %513, %v511
      %v515 = vpop.permute.xlu0 %514
      %v517 = vmul.f32 %v515, %v417
      %519 = vrot.lane.b32.xlu0 %v517, 48
      %v520 = vpop.permute.xlu0 %519
      %v522 = vadd.f32 %v504, %v520
      %v523 = vmul.f32 %v502, %v492
      %v524 = vmul.f32 %v515, %v418
      %526 = vrot.lane.b32.xlu0 %v524, 16
      %v527 = vpop.permute.xlu0 %526
      %v529 = vadd.f32 %v523, %v527
      %531 = vrot.lane.b32.xlu0 %v522, 80
      %v532 = vpop.permute.xlu0 %531
      %534 = vst.msk [vmem:[#allocation2] sm:$0x3] %vm509, %v532
      %536 = vrot.lane.b32.xlu0 %v529, 112
      %v537 = vpop.permute.xlu0 %536
      %539 = vst.msk [vmem:[#allocation3] sm:$0x3] %vm509, %v537
      %p540 = scmp.eq.s32.totalorder %s21, 7
      // Predicated region
      $region49: #{aotn_forward.24} parent=43 // pred_check
        %p541 = pneg %p540
      $region50: #{aotn_forward.24} parent=43 // pred_check_branch
        %543 = sbr.rel (%p541) target = $region52
      $region51: #{aotn_forward.24} parent=43 // pred_region
        %544 = vst.msk [vmem:[%s8] sm:$0x3] %vm509, %v532
      $region52: #{aotn_forward.24} parent=43 // pred_fallthru
        _
      %v545 = vld [vmem:[%s381] sm:$0x3]
      %v546 = vld [vmem:[%s391] sm:$0x3]
      %v547 = vld [vmem:[%s5] sm:$0xf]
      %v548 = vld [vmem:[%s5 + $0x4] sm:$0xf]
      %v549 = vld [vmem:[#allocation4] sm:$0x3]
      %v550 = vld [vmem:[#allocation5] sm:$0x3]
      %v551 = vpack.c.bf16 %v549, %v549
      %v554 = vunpack.c.l.b16 %v547
      %v555 = vunpack.c.l.b16 %v548
      %v556 = vpack.c.b16 %v555, %v554
      %v559 = vsel %vm426, %v551, 0
      %561 = vmatprep.subr.bf16.mxu0 0
      %562 = vmatpush1.bf16.msra.mxu0 %v556
      %563 = vmatprep.subr.bf16.mxu0 0
      %564 = vmatpush1.bf16.msra.mxu0 0
      %565 = vmatprep.subr.bf16.mxu0 0
      %566 = vmatpush1.bf16.msra.mxu0 0
      %567 = vmatprep.subr.bf16.mxu0 0
      %568 = vmatpush1.bf16.msra.mxu0 0
      %569 = vmatprep.subr.bf16.mxu0 0
      %570 = vmatpush1.bf16.msra.mxu0 0
      %571 = vmatprep.subr.bf16.mxu0 0
      %572 = vmatpush1.bf16.msra.mxu0 0
      %573 = vmatprep.subr.bf16.mxu0 0
      %574 = vmatpush1.bf16.msra.mxu0 0
      %575 = vmatprep.subr.bf16.mxu0 0
      %576 = vmatpush1.bf16.msra.mxu0 0
      %577 = vmatprep.subr.bf16.mxu0 0
      %578 = vmatpush1.bf16.msra.mxu0 0
      %579 = vmatprep.subr.bf16.mxu0 0
      %580 = vmatpush1.bf16.msra.mxu0 0
      %581 = vmatprep.subr.bf16.mxu0 0
      %582 = vmatpush1.bf16.msra.mxu0 0
      %583 = vmatprep.subr.bf16.mxu0 0
      %584 = vmatpush1.bf16.msra.mxu0 0
      %585 = vmatprep.subr.bf16.mxu0 0
      %586 = vmatpush1.bf16.msra.mxu0 0
      %587 = vmatprep.subr.bf16.mxu0 0
      %588 = vmatpush1.bf16.msra.mxu0 0
      %589 = vmatprep.subr.bf16.mxu0 0
      %590 = vmatpush1.bf16.msra.mxu0 0
      %591 = vmatprep.subr.bf16.mxu0 0
      %592 = vmatpush1.bf16.msra.mxu0 0
      %593 = vmatprep.mubr.bf16.mxu0 0
      %594 = vmatmul.mubr.bf16.gmra.mrb[0].mxu0 %v559
      %v595 = vpop.f32.mrb[0].mxu0
      %v596 = vadd.f32 0.0, %v595
      %v597 = vpop.f32.mrb[0].mxu0
      %v598 = vpop.f32.mrb[0].mxu0
      %v599 = vpop.f32.mrb[0].mxu0
      %600 = vdwg.mxu0
      %v601 = vadd.f32 %v545, %v596
      %v602 = vsub.f32 0.0, %v601
      %v603 = vmul.f32 %v602, 1.442695
      %v604 = vpow.pop %v603
      %v605 = vadd.f32 %v604, 1.0
      %v606 = vrcp.pop %v605
      %v607 = vmul.f32 1.0, %v606
      %v608 = vtanh.pop %v601
      %610 = vrot.lane.b32.xlu0 %v550, 16
      %v611 = vpop.permute.xlu0 %610
      %v613 = vmul.f32 %v607, %v611
      %615 = vrot.lane.b32.xlu0 %v608, 96
      %v616 = vpop.permute.xlu0 %615
      %v618 = vmul.f32 %v607, %v616
      %620 = vrot.lane.b32.xlu0 %v618, 16
      %v621 = vpop.permute.xlu0 %620
      %v623 = vadd.f32 %v613, %v621
      %v624 = vtanh.pop %v623
      %626 = vrot.lane.b32.xlu0 %v624, 32
      %v627 = vpop.permute.xlu0 %626
      %v629 = vmul.f32 %v607, %v627
      %631 = vset.pattern.permute.xlu0 0
      %632 = vperm.xlu0 %631, %v546
      %v633 = vpop.permute.xlu0 %632
      %v635 = vmul.f32 %v633, %v629
      %637 = vrot.lane.b32.xlu0 %v635, 80
      %v638 = vpop.permute.xlu0 %637
      %640 = vst.msk [vmem:[%s401] sm:$0x3] %vm509, %v638
      %v641 = vsub.f32 1.0, %v546
      %643 = vset.pattern.permute.xlu0 0
      %644 = vperm.xlu0 %643, %v641
      %v645 = vpop.permute.xlu0 %644
      %v647 = vmul.f32 %v645, %v549
      %649 = vrot.lane.b32.xlu0 %v647, 48
      %v650 = vpop.permute.xlu0 %649
      %v652 = vadd.f32 %v635, %v650
      %v653 = vmul.f32 %v633, %v623
      %v654 = vmul.f32 %v645, %v550
      %656 = vrot.lane.b32.xlu0 %v654, 16
      %v657 = vpop.permute.xlu0 %656
      %v659 = vadd.f32 %v653, %v657
      %661 = vrot.lane.b32.xlu0 %v652, 80
      %v662 = vpop.permute.xlu0 %661
      %664 = vst.msk [vmem:[#allocation4] sm:$0x3] %vm509, %v662
      %666 = vrot.lane.b32.xlu0 %v659, 112
      %v667 = vpop.permute.xlu0 %666
      %669 = vst.msk [vmem:[#allocation5] sm:$0x3] %vm509, %v667
      // Predicated region
      $region53: #{aotn_forward.24} parent=43 // pred_check
        %p670 = pneg %p540
      $region54: #{aotn_forward.24} parent=43 // pred_check_branch
        %672 = sbr.rel (%p670) target = $region56
      $region55: #{aotn_forward.24} parent=43 // pred_region
        %673 = vst.msk [vmem:[%s9] sm:$0x3] %vm509, %v662
      $region56: #{aotn_forward.24} parent=43 // pred_fallthru
        _
      %p674 = scmp.lt.s32.totalorder %s21, 7
      %s675 = scalar_select %p674, %s21, 7
      %s676 = smul.addr %s675, 2
      %s677 = scalar_lea.vmem %s6, %s676
      %s678 = ssub.s32 7, %s21
      %p679 = scmp.lt.s32.totalorder %s678, 7
      %s680 = scalar_select %p679, %s678, 7
      %s681 = smul.addr %s680, 2
      %s682 = scalar_lea.vmem %s7, %s681
      // Predicated region
      $region57: #{aotn_forward.24} parent=43 // pred_check
        %p683 = pneg %p189
      $region58: #{aotn_forward.24} parent=43 // pred_check_branch
        %685 = sbr.rel (%p683) target = $region60
      $region59: #{aotn_forward.24} parent=43 // pred_region
        _
      $region60: #{aotn_forward.24} parent=43 // pred_fallthru
        _
      // Predicated region
      $region61: #{aotn_forward.24} parent=43 // pred_check
        %p686 = pneg %p217
      $region62: #{aotn_forward.24} parent=43 // pred_check_branch
        %688 = sbr.rel (%p686) target = $region64
      $region63: #{aotn_forward.24} parent=43 // pred_region
        %s689 = ssub.s32 7, %s21
      $region64: #{aotn_forward.24} parent=43 // pred_fallthru
        _
      // Predicated region
      $region65: #{aotn_forward.24} parent=43 // pred_check
        %p690 = pneg %p238
      $region66: #{aotn_forward.24} parent=43 // pred_check_branch
        %692 = sbr.rel (%p690) target = $region68
      $region67: #{aotn_forward.24} parent=43 // pred_region
        _
      $region68: #{aotn_forward.24} parent=43 // pred_fallthru
        _
      // Predicated region
      $region69: #{aotn_forward.24} parent=43 // pred_check
        %p693 = pneg %p259
      $region70: #{aotn_forward.24} parent=43 // pred_check_branch
        %695 = sbr.rel (%p693) target = $region72
      $region71: #{aotn_forward.24} parent=43 // pred_region
        _
      $region72: #{aotn_forward.24} parent=43 // pred_fallthru
        _
      // Predicated region
      $region73: #{aotn_forward.24} parent=43 // pred_check
        %p696 = pneg %p238
      $region74: #{aotn_forward.24} parent=43 // pred_check_branch
        %698 = sbr.rel (%p696) target = $region76
      $region75: #{aotn_forward.24} parent=43 // pred_region
        _
      $region76: #{aotn_forward.24} parent=43 // pred_fallthru
        _
      // Predicated region
      $region77: #{aotn_forward.24} parent=43 // pred_check
        %p699 = pneg %p259
      $region78: #{aotn_forward.24} parent=43 // pred_check_branch
        %701 = sbr.rel (%p699) target = $region80
      $region79: #{aotn_forward.24} parent=43 // pred_region
        _
      $region80: #{aotn_forward.24} parent=43 // pred_fallthru
        _
    $region44: #{aotn_forward.24} parent=5 // pred_fallthru
      _
    %p702 = scmp.le.s32.totalorder 2, %s16
    // Predicated region
    $region81: #{aotn_forward.24} parent=5 // pred_check
      %p703 = pneg %p702
    $region82: #{aotn_forward.24} parent=5 // pred_check_branch
      %705 = sbr.rel (%p703) target = $region84
    $region83: #{aotn_forward.24} parent=5 // pred_region
      %s706 = ssub.s32 %s16, 2
      // Predicated region
      $region85: #{aotn_forward.24} parent=83 // pred_check
        %p707 = pneg %p195
      $region86: #{aotn_forward.24} parent=83 // pred_check_branch
        %709 = sbr.rel (%p707) target = $region88
      $region87: #{aotn_forward.24} parent=83 // pred_region
        %p710 = scmp.lt.s32.totalorder %s22, 7
        %s711 = scalar_select %p710, %s22, 7
        %s712 = smul.addr %s711, 2
        %s713 = scalar_lea.vmem %s6, %s712
      $region88: #{aotn_forward.24} parent=83 // pred_fallthru
        _
      // Predicated region
      $region89: #{aotn_forward.24} parent=83 // pred_check
        %p714 = pneg %p223
      $region90: #{aotn_forward.24} parent=83 // pred_check_branch
        %716 = sbr.rel (%p714) target = $region92
      $region91: #{aotn_forward.24} parent=83 // pred_region
        %s717 = ssub.s32 7, %s22
        %p718 = scmp.lt.s32.totalorder %s717, 7
        %s719 = scalar_select %p718, %s717, 7
        %s720 = smul.addr %s719, 2
        %s721 = scalar_lea.vmem %s7, %s720
      $region92: #{aotn_forward.24} parent=83 // pred_fallthru
        _
    $region84: #{aotn_forward.24} parent=5 // pred_fallthru
      _
  $region6: #{aotn_forward.24} parent=0 // loop_footer
    %s20 = sadd.s32 1, %s16
  $region7: #{aotn_forward.24} parent=0 // loop_footer_branch
    %15 = sbr.rel target = $region3
  $region8: #{aotn_forward.24} parent=0 // loop_exit
    _

// kernel: aotn_forward.26
$region0: #{aotn_forward.26}
  #allocation0 [shape = 'u32[]', space=smem, size = 0x4, offset = 0x4, fixed_abs, tag = 'smem constant byte address 0x4 - core index']
  #allocation1 [shape = 'u32[144,128]{1,0:T(1,128)}', space=vmem, size = 0x12000, scoped, tag = 'internal scratch']
  #allocation2 [shape = 'f32[2,16]{1,0:T(2,128)}', space=vmem, size = 0x400, scoped, tag = 'scratch operand']
  #allocation3 [shape = 'f32[2,16]{1,0:T(2,128)}', space=vmem, size = 0x400, scoped, tag = 'scratch operand']
  #allocation4 [shape = 'f32[2,16]{1,0:T(2,128)}', space=vmem, size = 0x400, scoped, tag = 'scratch operand']
  #allocation5 [shape = 'f32[2,16]{1,0:T(2,128)}', space=vmem, size = 0x400, scoped, tag = 'scratch operand']
  %s0 = inlined_call_operand.vmem [shape: f32[8,2,64], index: 0, kind: input, shape index: {}]
  %s1 = inlined_call_operand.vmem [shape: f32[8,2,64], index: 1, kind: input, shape index: {}]
  %s2 = inlined_call_operand.vmem [shape: f32[8,2,1], index: 2, kind: input, shape index: {}, may-alias: {2,3}]
  %s3 = inlined_call_operand.vmem [shape: f32[8,2,1], index: 3, kind: input, shape index: {}, may-alias: {2,3}]
  %s4 = inlined_call_operand.vmem [shape: bf16[16,64], index: 4, kind: input, shape index: {}]
  %s5 = inlined_call_operand.vmem [shape: bf16[16,64], index: 5, kind: input, shape index: {}]
  %s6 = inlined_call_operand.hbm [shape: f32[8,2,16], index: 6, kind: output, shape index: {0}]
  %s7 = inlined_call_operand.hbm [shape: f32[8,2,16], index: 7, kind: output, shape index: {1}]
  %s8 = inlined_call_operand.vmem [shape: f32[2,16], index: 8, kind: output, shape index: {2}]
  %s9 = inlined_call_operand.vmem [shape: f32[2,16], index: 9, kind: output, shape index: {3}]
  %10 = xla_tuple %s6, %s7, %s8, %s9
  %s11 = sld [smem:[#allocation0]]
  $region93: #{aotn_forward.26} parent=0
    _
  %s13 = ssub.s32 1, %s11
  %s14 = scalar_select 0, %s13, %s11
  $region1: #{aotn_forward.26} parent=0
    #allocation6 [shape = 'u8[2048]{0}', space=vmem, size = 0x800, scoped, tag = 'output window, operand 0']
    #allocation7 [shape = 's32[2]{0}', space=sflag, size = 0x8, scoped, tag = 'scoped memory for aotn_forward.26']
    #allocation8 [shape = 'u8[2048]{0}', space=vmem, size = 0x800, scoped, tag = 'output window, operand 1']
    #allocation9 [shape = 's32[2]{0}', space=sflag, size = 0x8, scoped, tag = 'scoped memory for aotn_forward.26']
    %15 = vsyncpa [#allocation7], 0
    %s16 = scalar_lea.sflag [#allocation7], 1
    %17 = vsyncpa %s16, 0
    %18 = vsyncpa [#allocation9], 0
    %s19 = scalar_lea.sflag [#allocation9], 1
    %20 = vsyncpa %s19, 0
    loop: start=0, step=1, limit=10
    $region2: #{aotn_forward.26} parent=1 // loop_pre_header
      _
    $region3: #{aotn_forward.26} parent=1 // loop_header
      %s22 = sphi 0, %s26
      %p23 = scmp.ge.s32.totalorder %s22, 10
      %s32 = sphi 0, %s34
      %s35 = sphi 0, %s32
      %s36 = sphi 0, %s35
      %s52 = sphi 0, %s36
      %s60 = sphi 0, %s62
      %s63 = sphi 0, %s60
      %s64 = sphi 0, %s63
      %s80 = sphi 0, %s64
      %s86 = sphi 0, %s88
      %s89 = sphi 0, %s86
      %s90 = sphi 0, %s89
      %s106 = sphi 0, %s90
      %s114 = sphi 0, %s116
      %s117 = sphi 0, %s114
      %s118 = sphi 0, %s117
      %s134 = sphi 0, %s118
      %s138 = sphi 0, %s138
      %s140 = sphi 0, %s138
      %s141 = sphi 0, %s140
      %s155 = sphi 0, %s141
      %s159 = sphi 0, %s159
      %s161 = sphi 0, %s159
      %s162 = sphi 0, %s161
      %s176 = sphi 0, %s162
      %s182 = sphi 0, %s184
      %s185 = sphi 0, %s182
      %s186 = sphi 0, %s185
      %s202 = sphi 0, %s186
      %s210 = sphi 0, %s212
      %s213 = sphi 0, %s210
      %s214 = sphi 0, %s213
      %s230 = sphi 0, %s214
      %s234 = sphi 0, %s234
      %s236 = sphi 0, %s234
      %s237 = sphi 0, %s236
      %s251 = sphi 0, %s237
      %s255 = sphi 0, %s255
      %s257 = sphi 0, %s255
      %s258 = sphi 0, %s257
      %s272 = sphi 0, %s258
    $region4: #{aotn_forward.26} parent=1 // loop_header_branch
      %25 = sbr.rel (%p23) target = $region8
    $region5: #{aotn_forward.26} parent=1 // loop_body
      %s27 = ssub.s32 %s22, 1
      %s28 = ssub.s32 %s22, 2
      %s29 = sadd.s32 %s22, 1
      %s30 = ssub.s32 %s22, %s29
      %p31 = scmp.eq.s32.totalorder %s30, 0
      %s33 = sadd.s32 %s32, 1
      %s34 = scalar_select %p31, %s32, %s33
      %p37 = pneg %p31
      %p38 = scmp.eq.s32.totalorder %s22, 7
      %p39 = por %p37, %p38
      %p40 = scmp.ne.s32.totalorder %s32, %s35
      %p41 = scmp.eq.s32.totalorder %s22, 0
      %p42 = por %p40, %p41
      %p43 = scmp.ne.s32.totalorder %s32, %s35
      %p44 = scmp.eq.s32.totalorder %s27, 7
      %p45 = por %p43, %p44
      %p46 = scmp.ne.s32.totalorder %s35, %s36
      %p47 = scmp.eq.s32.totalorder %s27, 0
      %p48 = por %p46, %p47
      %p49 = scmp.ne.s32.totalorder %s35, %s36
      %p50 = scmp.eq.s32.totalorder %s28, 7
      %p51 = por %p49, %p50
      %p53 = scmp.ne.s32.totalorder %s36, %s52
      %p54 = scmp.eq.s32.totalorder %s28, 0
      %p55 = por %p53, %p54
      %s56 = ssub.s32 7, %s22
      %s57 = ssub.s32 7, %s29
      %s58 = ssub.s32 %s56, %s57
      %p59 = scmp.eq.s32.totalorder %s58, 0
      %s61 = sadd.s32 %s60, 1
      %s62 = scalar_select %p59, %s60, %s61
      %p65 = pneg %p59
      %p66 = scmp.eq.s32.totalorder %s22, 7
      %p67 = por %p65, %p66
      %p68 = scmp.ne.s32.totalorder %s60, %s63
      %p69 = scmp.eq.s32.totalorder %s22, 0
      %p70 = por %p68, %p69
      %p71 = scmp.ne.s32.totalorder %s60, %s63
      %p72 = scmp.eq.s32.totalorder %s27, 7
      %p73 = por %p71, %p72
      %p74 = scmp.ne.s32.totalorder %s63, %s64
      %p75 = scmp.eq.s32.totalorder %s27, 0
      %p76 = por %p74, %p75
      %p77 = scmp.ne.s32.totalorder %s63, %s64
      %p78 = scmp.eq.s32.totalorder %s28, 7
      %p79 = por %p77, %p78
      %p81 = scmp.ne.s32.totalorder %s64, %s80
      %p82 = scmp.eq.s32.totalorder %s28, 0
      %p83 = por %p81, %p82
      %s84 = ssub.s32 %s22, %s29
      %p85 = scmp.eq.s32.totalorder %s84, 0
      %s87 = sadd.s32 %s86, 1
      %s88 = scalar_select %p85, %s86, %s87
      %p91 = pneg %p85
      %p92 = scmp.eq.s32.totalorder %s22, 7
      %p93 = por %p91, %p92
      %p94 = scmp.ne.s32.totalorder %s86, %s89
      %p95 = scmp.eq.s32.totalorder %s22, 0
      %p96 = por %p94, %p95
      %p97 = scmp.ne.s32.totalorder %s86, %s89
      %p98 = scmp.eq.s32.totalorder %s27, 7
      %p99 = por %p97, %p98
      %p100 = scmp.ne.s32.totalorder %s89, %s90
      %p101 = scmp.eq.s32.totalorder %s27, 0
      %p102 = por %p100, %p101
      %p103 = scmp.ne.s32.totalorder %s89, %s90
      %p104 = scmp.eq.s32.totalorder %s28, 7
      %p105 = por %p103, %p104
      %p107 = scmp.ne.s32.totalorder %s90, %s106
      %p108 = scmp.eq.s32.totalorder %s28, 0
      %p109 = por %p107, %p108
      %s110 = ssub.s32 7, %s22
      %s111 = ssub.s32 7, %s29
      %s112 = ssub.s32 %s110, %s111
      %p113 = scmp.eq.s32.totalorder %s112, 0
      %s115 = sadd.s32 %s114, 1
      %s116 = scalar_select %p113, %s114, %s115
      %p119 = pneg %p113
      %p120 = scmp.eq.s32.totalorder %s22, 7
      %p121 = por %p119, %p120
      %p122 = scmp.ne.s32.totalorder %s114, %s117
      %p123 = scmp.eq.s32.totalorder %s22, 0
      %p124 = por %p122, %p123
      %p125 = scmp.ne.s32.totalorder %s114, %s117
      %p126 = scmp.eq.s32.totalorder %s27, 7
      %p127 = por %p125, %p126
      %p128 = scmp.ne.s32.totalorder %s117, %s118
      %p129 = scmp.eq.s32.totalorder %s27, 0
      %p130 = por %p128, %p129
      %p131 = scmp.ne.s32.totalorder %s117, %s118
      %p132 = scmp.eq.s32.totalorder %s28, 7
      %p133 = por %p131, %p132
      %p135 = scmp.ne.s32.totalorder %s118, %s134
      %p136 = scmp.eq.s32.totalorder %s28, 0
      %p137 = por %p135, %p136
      %s139 = sadd.s32 %s138, 1
      %p142 = scmp.eq.s32.totalorder %s22, 7
      %p143 = scmp.ne.s32.totalorder %s138, %s140
      %p144 = scmp.eq.s32.totalorder %s22, 0
      %p145 = por %p143, %p144
      %p146 = scmp.ne.s32.totalorder %s138, %s140
      %p147 = scmp.eq.s32.totalorder %s27, 7
      %p148 = por %p146, %p147
      %p149 = scmp.ne.s32.totalorder %s140, %s141
      %p150 = scmp.eq.s32.totalorder %s27, 0
      %p151 = por %p149, %p150
      %p152 = scmp.ne.s32.totalorder %s140, %s141
      %p153 = scmp.eq.s32.totalorder %s28, 7
      %p154 = por %p152, %p153
      %p156 = scmp.ne.s32.totalorder %s141, %s155
      %p157 = scmp.eq.s32.totalorder %s28, 0
      %p158 = por %p156, %p157
      %s160 = sadd.s32 %s159, 1
      %p163 = scmp.eq.s32.totalorder %s22, 7
      %p164 = scmp.ne.s32.totalorder %s159, %s161
      %p165 = scmp.eq.s32.totalorder %s22, 0
      %p166 = por %p164, %p165
      %p167 = scmp.ne.s32.totalorder %s159, %s161
      %p168 = scmp.eq.s32.totalorder %s27, 7
      %p169 = por %p167, %p168
      %p170 = scmp.ne.s32.totalorder %s161, %s162
      %p171 = scmp.eq.s32.totalorder %s27, 0
      %p172 = por %p170, %p171
      %p173 = scmp.ne.s32.totalorder %s161, %s162
      %p174 = scmp.eq.s32.totalorder %s28, 7
      %p175 = por %p173, %p174
      %p177 = scmp.ne.s32.totalorder %s162, %s176
      %p178 = scmp.eq.s32.totalorder %s28, 0
      %p179 = por %p177, %p178
      %s180 = ssub.s32 %s22, %s29
      %p181 = scmp.eq.s32.totalorder %s180, 0
      %s183 = sadd.s32 %s182, 1
      %s184 = scalar_select %p181, %s182, %s183
      %p187 = pneg %p181
      %p188 = scmp.eq.s32.totalorder %s22, 7
      %p189 = por %p187, %p188
      %p190 = scmp.ne.s32.totalorder %s182, %s185
      %p191 = scmp.eq.s32.totalorder %s22, 0
      %p192 = por %p190, %p191
      %p193 = scmp.ne.s32.totalorder %s182, %s185
      %p194 = scmp.eq.s32.totalorder %s27, 7
      %p195 = por %p193, %p194
      %p196 = scmp.ne.s32.totalorder %s185, %s186
      %p197 = scmp.eq.s32.totalorder %s27, 0
      %p198 = por %p196, %p197
      %p199 = scmp.ne.s32.totalorder %s185, %s186
      %p200 = scmp.eq.s32.totalorder %s28, 7
      %p201 = por %p199, %p200
      %p203 = scmp.ne.s32.totalorder %s186, %s202
      %p204 = scmp.eq.s32.totalorder %s28, 0
      %p205 = por %p203, %p204
      %s206 = ssub.s32 7, %s22
      %s207 = ssub.s32 7, %s29
      %s208 = ssub.s32 %s206, %s207
      %p209 = scmp.eq.s32.totalorder %s208, 0
      %s211 = sadd.s32 %s210, 1
      %s212 = scalar_select %p209, %s210, %s211
      %p215 = pneg %p209
      %p216 = scmp.eq.s32.totalorder %s22, 7
      %p217 = por %p215, %p216
      %p218 = scmp.ne.s32.totalorder %s210, %s213
      %p219 = scmp.eq.s32.totalorder %s22, 0
      %p220 = por %p218, %p219
      %p221 = scmp.ne.s32.totalorder %s210, %s213
      %p222 = scmp.eq.s32.totalorder %s27, 7
      %p223 = por %p221, %p222
      %p224 = scmp.ne.s32.totalorder %s213, %s214
      %p225 = scmp.eq.s32.totalorder %s27, 0
      %p226 = por %p224, %p225
      %p227 = scmp.ne.s32.totalorder %s213, %s214
      %p228 = scmp.eq.s32.totalorder %s28, 7
      %p229 = por %p227, %p228
      %p231 = scmp.ne.s32.totalorder %s214, %s230
      %p232 = scmp.eq.s32.totalorder %s28, 0
      %p233 = por %p231, %p232
      %s235 = sadd.s32 %s234, 1
      %p238 = scmp.eq.s32.totalorder %s22, 7
      %p239 = scmp.ne.s32.totalorder %s234, %s236
      %p240 = scmp.eq.s32.totalorder %s22, 0
      %p241 = por %p239, %p240
      %p242 = scmp.ne.s32.totalorder %s234, %s236
      %p243 = scmp.eq.s32.totalorder %s27, 7
      %p244 = por %p242, %p243
      %p245 = scmp.ne.s32.totalorder %s236, %s237
      %p246 = scmp.eq.s32.totalorder %s27, 0
      %p247 = por %p245, %p246
      %p248 = scmp.ne.s32.totalorder %s236, %s237
      %p249 = scmp.eq.s32.totalorder %s28, 7
      %p250 = por %p248, %p249
      %p252 = scmp.ne.s32.totalorder %s237, %s251
      %p253 = scmp.eq.s32.totalorder %s28, 0
      %p254 = por %p252, %p253
      %s256 = sadd.s32 %s255, 1
      %p259 = scmp.eq.s32.totalorder %s22, 7
      %p260 = scmp.ne.s32.totalorder %s255, %s257
      %p261 = scmp.eq.s32.totalorder %s22, 0
      %p262 = por %p260, %p261
      %p263 = scmp.ne.s32.totalorder %s255, %s257
      %p264 = scmp.eq.s32.totalorder %s27, 7
      %p265 = por %p263, %p264
      %p266 = scmp.ne.s32.totalorder %s257, %s258
      %p267 = scmp.eq.s32.totalorder %s27, 0
      %p268 = por %p266, %p267
      %p269 = scmp.ne.s32.totalorder %s257, %s258
      %p270 = scmp.eq.s32.totalorder %s28, 7
      %p271 = por %p269, %p270
      %p273 = scmp.ne.s32.totalorder %s258, %s272
      %p274 = scmp.eq.s32.totalorder %s28, 0
      %p275 = por %p273, %p274
      %p276 = scmp.le.s32.totalorder 1, %s22
      %p277 = scmp.lt.s32.totalorder %s22, 9
      %p278 = pnand %p276, %p277
      %p279 = pneg %p278
      // Predicated region
      $region9: #{aotn_forward.26} parent=5 // pred_check
        _
      $region10: #{aotn_forward.26} parent=5 // pred_check_branch
        %281 = sbr.rel (%p278) target = $region12
      $region11: #{aotn_forward.26} parent=5 // pred_region
        %s282 = ssub.s32 %s22, 1
        // Predicated region
        $region13: #{aotn_forward.26} parent=11 // pred_check
          %p283 = pneg %p151
        $region14: #{aotn_forward.26} parent=11 // pred_check_branch
          %285 = sbr.rel (%p283) target = $region16
        $region15: #{aotn_forward.26} parent=11 // pred_region
          _
        $region16: #{aotn_forward.26} parent=11 // pred_fallthru
          _
        // Predicated region
        $region17: #{aotn_forward.26} parent=11 // pred_check
          %p286 = pneg %p172
        $region18: #{aotn_forward.26} parent=11 // pred_check_branch
          %288 = sbr.rel (%p286) target = $region20
        $region19: #{aotn_forward.26} parent=11 // pred_region
          _
        $region20: #{aotn_forward.26} parent=11 // pred_fallthru
          _
      $region12: #{aotn_forward.26} parent=5 // pred_fallthru
        _
      %p289 = scmp.lt.s32.totalorder %s22, 8
      // Predicated region
      $region21: #{aotn_forward.26} parent=5 // pred_check
        %p290 = pneg %p289
      $region22: #{aotn_forward.26} parent=5 // pred_check_branch
        %292 = sbr.rel (%p290) target = $region24
      $region23: #{aotn_forward.26} parent=5 // pred_region
        // Predicated region
        $region25: #{aotn_forward.26} parent=23 // pred_check
          %p293 = pneg %p42
        $region26: #{aotn_forward.26} parent=23 // pred_check_branch
          %295 = sbr.rel (%p293) target = $region28
        $region27: #{aotn_forward.26} parent=23 // pred_region
          %p296 = scmp.lt.s32.totalorder %s22, 7
          %s297 = scalar_select %p296, %s22, 7
          %s298 = smul.addr %s297, 2
          %s299 = scalar_lea.vmem %s0, %s298
        $region28: #{aotn_forward.26} parent=23 // pred_fallthru
          _
        // Predicated region
        $region29: #{aotn_forward.26} parent=23 // pred_check
          %p300 = pneg %p70
        $region30: #{aotn_forward.26} parent=23 // pred_check_branch
          %302 = sbr.rel (%p300) target = $region32
        $region31: #{aotn_forward.26} parent=23 // pred_region
          %s303 = ssub.s32 7, %s22
          %p304 = scmp.lt.s32.totalorder %s303, 7
          %s305 = scalar_select %p304, %s303, 7
          %s306 = smul.addr %s305, 2
          %s307 = scalar_lea.vmem %s1, %s306
          %s308 = ssub.s32 7, %s22
        $region32: #{aotn_forward.26} parent=23 // pred_fallthru
          _
        // Predicated region
        $region33: #{aotn_forward.26} parent=23 // pred_check
          %p309 = pneg %p96
        $region34: #{aotn_forward.26} parent=23 // pred_check_branch
          %311 = sbr.rel (%p309) target = $region36
        $region35: #{aotn_forward.26} parent=23 // pred_region
          %p312 = scmp.lt.s32.totalorder %s22, 7
          %s313 = scalar_select %p312, %s22, 7
          %s314 = smul.addr %s313, 2
          %s315 = scalar_lea.vmem %s2, %s314
        $region36: #{aotn_forward.26} parent=23 // pred_fallthru
          _
        // Predicated region
        $region37: #{aotn_forward.26} parent=23 // pred_check
          %p316 = pneg %p124
        $region38: #{aotn_forward.26} parent=23 // pred_check_branch
          %318 = sbr.rel (%p316) target = $region40
        $region39: #{aotn_forward.26} parent=23 // pred_region
          %s319 = ssub.s32 7, %s22
          %p320 = scmp.lt.s32.totalorder %s319, 7
          %s321 = scalar_select %p320, %s319, 7
          %s322 = smul.addr %s321, 2
          %s323 = scalar_lea.vmem %s3, %s322
          %s324 = ssub.s32 7, %s22
        $region40: #{aotn_forward.26} parent=23 // pred_fallthru
          _
      $region24: #{aotn_forward.26} parent=5 // pred_fallthru
        _
      %p325 = scmp.le.s32.totalorder 1, %s22
      %p326 = scmp.lt.s32.totalorder %s22, 9
      %p327 = pnand %p325, %p326
      %p328 = pneg %p327
      // Predicated region
      $region41: #{aotn_forward.26} parent=5 // pred_check
        _
      $region42: #{aotn_forward.26} parent=5 // pred_check_branch
        %330 = sbr.rel (%p327) target = $region44
      $region43: #{aotn_forward.26} parent=5 // pred_region
        %s331 = ssub.s32 %s22, 1
        %p332 = scmp.lt.s32.totalorder %s27, 7
        %s333 = scalar_select %p332, %s27, 7
        %s334 = smul.addr %s333, 2
        %s335 = scalar_lea.vmem %s0, %s334
        %p336 = pneg %p48
        %p337 = pneg %p45
        %s338 = ssub.s32 7, %s27
        %p339 = scmp.lt.s32.totalorder %s338, 7
        %s340 = scalar_select %p339, %s338, 7
        %s341 = smul.addr %s340, 2
        %s342 = scalar_lea.vmem %s1, %s341
        %p343 = pneg %p76
        %p344 = pneg %p73
        %p345 = scmp.lt.s32.totalorder %s27, 7
        %s346 = scalar_select %p345, %s27, 7
        %s347 = smul.addr %s346, 2
        %s348 = scalar_lea.vmem %s2, %s347
        %p349 = pneg %p102
        %p350 = pneg %p99
        %s351 = ssub.s32 7, %s27
        %p352 = scmp.lt.s32.totalorder %s351, 7
        %s353 = scalar_select %p352, %s351, 7
        %s354 = smul.addr %s353, 2
        %s355 = scalar_lea.vmem %s3, %s354
        %p356 = pneg %p130
        %p357 = pneg %p127
        %p358 = pneg %p151
        %p359 = pneg %p148
        %p360 = pneg %p172
        %p361 = pneg %p169
        %p362 = pneg %p198
        %p363 = pneg %p195
        %s364 = sand.u32 %s185, 1
        %s365 = scalar_lea.sflag [#allocation7], %s364
        %s366 = sand.u32 %s185, 1
        %s367 = smul.addr %s366, 2
        %s368 = scalar_lea.vmem [#allocation6], %s367
        %p369 = pneg %p226
        %p370 = pneg %p223
        %s371 = sand.u32 %s213, 1
        %s372 = scalar_lea.sflag [#allocation9], %s371
        %s373 = sand.u32 %s213, 1
        %s374 = smul.addr %s373, 2
        %s375 = scalar_lea.vmem [#allocation8], %s374
        %p376 = pneg %p247
        %p377 = pneg %p244
        %p378 = pneg %p268
        %p379 = pneg %p265
        %p380 = scmp.lt.s32.totalorder %s27, 7
        %s381 = scalar_select %p380, %s27, 7
        %s382 = smul.addr %s381, 2
        %s383 = scalar_lea.vmem %s0, %s382
        %s384 = ssub.s32 7, %s27
        %p385 = scmp.lt.s32.totalorder %s384, 7
        %s386 = scalar_select %p385, %s384, 7
        %s387 = smul.addr %s386, 2
        %s388 = scalar_lea.vmem %s1, %s387
        %s389 = ssub.s32 7, %s27
        %p390 = scmp.lt.s32.totalorder %s27, 7
        %s391 = scalar_select %p390, %s27, 7
        %s392 = smul.addr %s391, 2
        %s393 = scalar_lea.vmem %s2, %s392
        %s394 = ssub.s32 7, %s27
        %p395 = scmp.lt.s32.totalorder %s394, 7
        %s396 = scalar_select %p395, %s394, 7
        %s397 = smul.addr %s396, 2
        %s398 = scalar_lea.vmem %s3, %s397
        %s399 = ssub.s32 7, %s27
        %s400 = ssub.s32 7, %s27
        %p402 = scmp.eq.s32.totalorder %s27, 0
        // Predicated region
        $region45: #{aotn_forward.26} parent=43 // pred_check
          %p403 = pneg %p402
        $region46: #{aotn_forward.26} parent=43 // pred_check_branch
          %405 = sbr.rel (%p403) target = $region48
        $region47: #{aotn_forward.26} parent=43 // pred_region
          %vm406 = vcmask 123904
          %407 = vst.msk [vmem:[#allocation2] sm:$0x3] %vm406, 0.0
          %408 = vst.msk [vmem:[#allocation3] sm:$0x3] %vm406, 0.0
          %409 = vst.msk [vmem:[#allocation4] sm:$0x3] %vm406, 0.0
          %410 = vst.msk [vmem:[#allocation5] sm:$0x3] %vm406, 0.0
        $region48: #{aotn_forward.26} parent=43 // pred_fallthru
          _
        %v411 = vld [vmem:[%s383] sm:$0x3]
        %v412 = vld [vmem:[%s393] sm:$0x3]
        %v413 = vld [vmem:[%s4] sm:$0xf]
        %v414 = vld [vmem:[%s4 + $0x4] sm:$0xf]
        %v415 = vld [vmem:[#allocation2] sm:$0x3]
        %v416 = vld [vmem:[#allocation3] sm:$0x3]
        %v417 = vpack.c.bf16 %v415, %v415
        %v420 = vunpack.c.l.b16 %v413
        %v421 = vunpack.c.l.b16 %v414
        %v422 = vpack.c.b16 %v421, %v420
        %vm424 = vcmask 130048
        %v426 = vsel %vm424, %v417, 0
        %428 = vmatprep.subr.bf16.mxu0 0
        %429 = vmatpush1.bf16.msra.mxu0 %v422
        %430 = vmatprep.subr.bf16.mxu0 0
        %431 = vmatpush1.bf16.msra.mxu0 0
        %432 = vmatprep.subr.bf16.mxu0 0
        %433 = vmatpush1.bf16.msra.mxu0 0
        %434 = vmatprep.subr.bf16.mxu0 0
        %435 = vmatpush1.bf16.msra.mxu0 0
        %436 = vmatprep.subr.bf16.mxu0 0
        %437 = vmatpush1.bf16.msra.mxu0 0
        %438 = vmatprep.subr.bf16.mxu0 0
        %439 = vmatpush1.bf16.msra.mxu0 0
        %440 = vmatprep.subr.bf16.mxu0 0
        %441 = vmatpush1.bf16.msra.mxu0 0
        %442 = vmatprep.subr.bf16.mxu0 0
        %443 = vmatpush1.bf16.msra.mxu0 0
        %444 = vmatprep.subr.bf16.mxu0 0
        %445 = vmatpush1.bf16.msra.mxu0 0
        %446 = vmatprep.subr.bf16.mxu0 0
        %447 = vmatpush1.bf16.msra.mxu0 0
        %448 = vmatprep.subr.bf16.mxu0 0
        %449 = vmatpush1.bf16.msra.mxu0 0
        %450 = vmatprep.subr.bf16.mxu0 0
        %451 = vmatpush1.bf16.msra.mxu0 0
        %452 = vmatprep.subr.bf16.mxu0 0
        %453 = vmatpush1.bf16.msra.mxu0 0
        %454 = vmatprep.subr.bf16.mxu0 0
        %455 = vmatpush1.bf16.msra.mxu0 0
        %456 = vmatprep.subr.bf16.mxu0 0
        %457 = vmatpush1.bf16.msra.mxu0 0
        %458 = vmatprep.subr.bf16.mxu0 0
        %459 = vmatpush1.bf16.msra.mxu0 0
        %460 = vmatprep.mubr.bf16.mxu0 0
        %461 = vmatmul.mubr.bf16.gmra.mrb[0].mxu0 %v426
        %v462 = vpop.f32.mrb[0].mxu0
        %v463 = vadd.f32 0.0, %v462
        %v464 = vpop.f32.mrb[0].mxu0
        %v465 = vpop.f32.mrb[0].mxu0
        %v466 = vpop.f32.mrb[0].mxu0
        %467 = vdwg.mxu0
        %v468 = vadd.f32 %v411, %v463
        %v469 = vsub.f32 0.0, %v468
        %v470 = vmul.f32 %v469, 1.442695
        %v471 = vpow.pop %v470
        %v472 = vadd.f32 %v471, 1.0
        %v473 = vrcp.pop %v472
        %v474 = vmul.f32 1.0, %v473
        %v475 = vtanh.pop %v468
        %477 = vrot.lane.b32.xlu0 %v416, 16
        %v478 = vpop.permute.xlu0 %477
        %v480 = vmul.f32 %v474, %v478
        %482 = vrot.lane.b32.xlu0 %v475, 96
        %v483 = vpop.permute.xlu0 %482
        %v485 = vmul.f32 %v474, %v483
        %487 = vrot.lane.b32.xlu0 %v485, 16
        %v488 = vpop.permute.xlu0 %487
        %v490 = vadd.f32 %v480, %v488
        %v491 = vtanh.pop %v490
        %493 = vrot.lane.b32.xlu0 %v491, 32
        %v494 = vpop.permute.xlu0 %493
        %v496 = vmul.f32 %v474, %v494
        %498 = vset.pattern.permute.xlu0 0
        %499 = vperm.xlu0 %498, %v412
        %v500 = vpop.permute.xlu0 %499
        %v502 = vmul.f32 %v500, %v496
        %504 = vrot.lane.b32.xlu0 %v502, 80
        %v505 = vpop.permute.xlu0 %504
        %vm507 = vcmask 123904
        %508 = vst.msk [vmem:[%s368] sm:$0x3] %vm507, %v505
        %v509 = vsub.f32 1.0, %v412
        %511 = vset.pattern.permute.xlu0 0
        %512 = vperm.xlu0 %511, %v509
        %v513 = vpop.permute.xlu0 %512
        %v515 = vmul.f32 %v513, %v415
        %517 = vrot.lane.b32.xlu0 %v515, 48
        %v518 = vpop.permute.xlu0 %517
        %v520 = vadd.f32 %v502, %v518
        %v521 = vmul.f32 %v500, %v490
        %v522 = vmul.f32 %v513, %v416
        %524 = vrot.lane.b32.xlu0 %v522, 16
        %v525 = vpop.permute.xlu0 %524
        %v527 = vadd.f32 %v521, %v525
        %529 = vrot.lane.b32.xlu0 %v520, 80
        %v530 = vpop.permute.xlu0 %529
        %532 = vst.msk [vmem:[#allocation2] sm:$0x3] %vm507, %v530
        %534 = vrot.lane.b32.xlu0 %v527, 112
        %v535 = vpop.permute.xlu0 %534
        %537 = vst.msk [vmem:[#allocation3] sm:$0x3] %vm507, %v535
        %p538 = scmp.eq.s32.totalorder %s27, 7
        // Predicated region
        $region49: #{aotn_forward.26} parent=43 // pred_check
          %p539 = pneg %p538
        $region50: #{aotn_forward.26} parent=43 // pred_check_branch
          %541 = sbr.rel (%p539) target = $region52
        $region51: #{aotn_forward.26} parent=43 // pred_region
          %542 = vst.msk [vmem:[%s8] sm:$0x3] %vm507, %v530
        $region52: #{aotn_forward.26} parent=43 // pred_fallthru
          _
        %v543 = vld [vmem:[%s388] sm:$0x3]
        %v544 = vld [vmem:[%s398] sm:$0x3]
        %v545 = vld [vmem:[%s5] sm:$0xf]
        %v546 = vld [vmem:[%s5 + $0x4] sm:$0xf]
        %v547 = vld [vmem:[#allocation4] sm:$0x3]
        %v548 = vld [vmem:[#allocation5] sm:$0x3]
        %v549 = vpack.c.bf16 %v547, %v547
        %v552 = vunpack.c.l.b16 %v545
        %v553 = vunpack.c.l.b16 %v546
        %v554 = vpack.c.b16 %v553, %v552
        %v557 = vsel %vm424, %v549, 0
        %559 = vmatprep.subr.bf16.mxu0 0
        %560 = vmatpush1.bf16.msra.mxu0 %v554
        %561 = vmatprep.subr.bf16.mxu0 0
        %562 = vmatpush1.bf16.msra.mxu0 0
        %563 = vmatprep.subr.bf16.mxu0 0
        %564 = vmatpush1.bf16.msra.mxu0 0
        %565 = vmatprep.subr.bf16.mxu0 0
        %566 = vmatpush1.bf16.msra.mxu0 0
        %567 = vmatprep.subr.bf16.mxu0 0
        %568 = vmatpush1.bf16.msra.mxu0 0
        %569 = vmatprep.subr.bf16.mxu0 0
        %570 = vmatpush1.bf16.msra.mxu0 0
        %571 = vmatprep.subr.bf16.mxu0 0
        %572 = vmatpush1.bf16.msra.mxu0 0
        %573 = vmatprep.subr.bf16.mxu0 0
        %574 = vmatpush1.bf16.msra.mxu0 0
        %575 = vmatprep.subr.bf16.mxu0 0
        %576 = vmatpush1.bf16.msra.mxu0 0
        %577 = vmatprep.subr.bf16.mxu0 0
        %578 = vmatpush1.bf16.msra.mxu0 0
        %579 = vmatprep.subr.bf16.mxu0 0
        %580 = vmatpush1.bf16.msra.mxu0 0
        %581 = vmatprep.subr.bf16.mxu0 0
        %582 = vmatpush1.bf16.msra.mxu0 0
        %583 = vmatprep.subr.bf16.mxu0 0
        %584 = vmatpush1.bf16.msra.mxu0 0
        %585 = vmatprep.subr.bf16.mxu0 0
        %586 = vmatpush1.bf16.msra.mxu0 0
        %587 = vmatprep.subr.bf16.mxu0 0
        %588 = vmatpush1.bf16.msra.mxu0 0
        %589 = vmatprep.subr.bf16.mxu0 0
        %590 = vmatpush1.bf16.msra.mxu0 0
        %591 = vmatprep.mubr.bf16.mxu0 0
        %592 = vmatmul.mubr.bf16.gmra.mrb[0].mxu0 %v557
        %v593 = vpop.f32.mrb[0].mxu0
        %v594 = vadd.f32 0.0, %v593
        %v595 = vpop.f32.mrb[0].mxu0
        %v596 = vpop.f32.mrb[0].mxu0
        %v597 = vpop.f32.mrb[0].mxu0
        %598 = vdwg.mxu0
        %v599 = vadd.f32 %v543, %v594
        %v600 = vsub.f32 0.0, %v599
        %v601 = vmul.f32 %v600, 1.442695
        %v602 = vpow.pop %v601
        %v603 = vadd.f32 %v602, 1.0
        %v604 = vrcp.pop %v603
        %v605 = vmul.f32 1.0, %v604
        %v606 = vtanh.pop %v599
        %608 = vrot.lane.b32.xlu0 %v548, 16
        %v609 = vpop.permute.xlu0 %608
        %v611 = vmul.f32 %v605, %v609
        %613 = vrot.lane.b32.xlu0 %v606, 96
        %v614 = vpop.permute.xlu0 %613
        %v616 = vmul.f32 %v605, %v614
        %618 = vrot.lane.b32.xlu0 %v616, 16
        %v619 = vpop.permute.xlu0 %618
        %v621 = vadd.f32 %v611, %v619
        %v622 = vtanh.pop %v621
        %624 = vrot.lane.b32.xlu0 %v622, 32
        %v625 = vpop.permute.xlu0 %624
        %v627 = vmul.f32 %v605, %v625
        %629 = vset.pattern.permute.xlu0 0
        %630 = vperm.xlu0 %629, %v544
        %v631 = vpop.permute.xlu0 %630
        %v633 = vmul.f32 %v631, %v627
        %635 = vrot.lane.b32.xlu0 %v633, 80
        %v636 = vpop.permute.xlu0 %635
        %638 = vst.msk [vmem:[%s375] sm:$0x3] %vm507, %v636
        %v639 = vsub.f32 1.0, %v544
        %641 = vset.pattern.permute.xlu0 0
        %642 = vperm.xlu0 %641, %v639
        %v643 = vpop.permute.xlu0 %642
        %v645 = vmul.f32 %v643, %v547
        %647 = vrot.lane.b32.xlu0 %v645, 48
        %v648 = vpop.permute.xlu0 %647
        %v650 = vadd.f32 %v633, %v648
        %v651 = vmul.f32 %v631, %v621
        %v652 = vmul.f32 %v643, %v548
        %654 = vrot.lane.b32.xlu0 %v652, 16
        %v655 = vpop.permute.xlu0 %654
        %v657 = vadd.f32 %v651, %v655
        %659 = vrot.lane.b32.xlu0 %v650, 80
        %v660 = vpop.permute.xlu0 %659
        %662 = vst.msk [vmem:[#allocation4] sm:$0x3] %vm507, %v660
        %664 = vrot.lane.b32.xlu0 %v657, 112
        %v665 = vpop.permute.xlu0 %664
        %667 = vst.msk [vmem:[#allocation5] sm:$0x3] %vm507, %v665
        // Predicated region
        $region53: #{aotn_forward.26} parent=43 // pred_check
          %p668 = pneg %p538
        $region54: #{aotn_forward.26} parent=43 // pred_check_branch
          %670 = sbr.rel (%p668) target = $region56
        $region55: #{aotn_forward.26} parent=43 // pred_region
          %671 = vst.msk [vmem:[%s9] sm:$0x3] %vm507, %v660
        $region56: #{aotn_forward.26} parent=43 // pred_fallthru
          _
        %s672 = sand.u32 %s185, 1
        %s673 = scalar_lea.sflag [#allocation7], %s672
        %s674 = sand.u32 %s185, 1
        %s675 = smul.addr %s674, 2
        %s676 = scalar_lea.vmem [#allocation6], %s675
        %s677 = sand.u32 %s213, 1
        %s678 = scalar_lea.sflag [#allocation9], %s677
        %s679 = sand.u32 %s213, 1
        %s680 = smul.addr %s679, 2
        %s681 = scalar_lea.vmem [#allocation8], %s680
        // Predicated region
        $region57: #{aotn_forward.26} parent=43 // pred_check
          %p682 = pneg %p195
        $region58: #{aotn_forward.26} parent=43 // pred_check_branch
          %684 = sbr.rel (%p682) target = $region60
        $region59: #{aotn_forward.26} parent=43 // pred_region
          %s686 = ssub.s32 32, 32
          %687 = vsyncadd %s673, %s686
          %s688 = smul.addr %s27, 32
          %s689 = scalar_lea.hbm %s6, %s688
          %s691 = sshll.u32 %s676, 4
          %s692 = int_to_ptr.vmem [resolvable:$true] %s691
          %694 = dma.vmem_to_hbm [thread:$0]  %s692, 32, %s689, %s673
        $region60: #{aotn_forward.26} parent=43 // pred_fallthru
          _
        // Predicated region
        $region61: #{aotn_forward.26} parent=43 // pred_check
          %p695 = pneg %p223
        $region62: #{aotn_forward.26} parent=43 // pred_check_branch
          %697 = sbr.rel (%p695) target = $region64
        $region63: #{aotn_forward.26} parent=43 // pred_region
          %s698 = ssub.s32 7, %s27
          %s700 = ssub.s32 32, 32
          %701 = vsyncadd %s678, %s700
          %s702 = smul.addr %s698, 32
          %s703 = scalar_lea.hbm %s7, %s702
          %s705 = sshll.u32 %s681, 4
          %s706 = int_to_ptr.vmem [resolvable:$true] %s705
          %708 = dma.vmem_to_hbm [thread:$0]  %s706, 32, %s703, %s678
        $region64: #{aotn_forward.26} parent=43 // pred_fallthru
          _
        // Predicated region
        $region65: #{aotn_forward.26} parent=43 // pred_check
          %p709 = pneg %p244
        $region66: #{aotn_forward.26} parent=43 // pred_check_branch
          %711 = sbr.rel (%p709) target = $region68
        $region67: #{aotn_forward.26} parent=43 // pred_region
          _
        $region68: #{aotn_forward.26} parent=43 // pred_fallthru
          _
        // Predicated region
        $region69: #{aotn_forward.26} parent=43 // pred_check
          %p712 = pneg %p265
        $region70: #{aotn_forward.26} parent=43 // pred_check_branch
          %714 = sbr.rel (%p712) target = $region72
        $region71: #{aotn_forward.26} parent=43 // pred_region
          _
        $region72: #{aotn_forward.26} parent=43 // pred_fallthru
          _
        // Predicated region
        $region73: #{aotn_forward.26} parent=43 // pred_check
          %p715 = pneg %p244
        $region74: #{aotn_forward.26} parent=43 // pred_check_branch
          %717 = sbr.rel (%p715) target = $region76
        $region75: #{aotn_forward.26} parent=43 // pred_region
          _
        $region76: #{aotn_forward.26} parent=43 // pred_fallthru
          _
        // Predicated region
        $region77: #{aotn_forward.26} parent=43 // pred_check
          %p718 = pneg %p265
        $region78: #{aotn_forward.26} parent=43 // pred_check_branch
          %720 = sbr.rel (%p718) target = $region80
        $region79: #{aotn_forward.26} parent=43 // pred_region
          _
        $region80: #{aotn_forward.26} parent=43 // pred_fallthru
          _
      $region44: #{aotn_forward.26} parent=5 // pred_fallthru
        _
      %p721 = scmp.le.s32.totalorder 2, %s22
      // Predicated region
      $region81: #{aotn_forward.26} parent=5 // pred_check
        %p722 = pneg %p721
      $region82: #{aotn_forward.26} parent=5 // pred_check_branch
        %724 = sbr.rel (%p722) target = $region84
      $region83: #{aotn_forward.26} parent=5 // pred_region
        %s725 = ssub.s32 %s22, 2
        // Predicated region
        $region85: #{aotn_forward.26} parent=83 // pred_check
          %p726 = pneg %p201
        $region86: #{aotn_forward.26} parent=83 // pred_check_branch
          %728 = sbr.rel (%p726) target = $region88
        $region87: #{aotn_forward.26} parent=83 // pred_region
          %s729 = sand.u32 %s186, 1
          %s730 = scalar_lea.sflag [#allocation7], %s729
          %s731 = sand.u32 %s186, 1
          %s732 = smul.addr %s731, 2
          %s733 = scalar_lea.vmem [#allocation6], %s732
          %734 = dma.done %s730, 32
        $region88: #{aotn_forward.26} parent=83 // pred_fallthru
          _
        // Predicated region
        $region89: #{aotn_forward.26} parent=83 // pred_check
          %p735 = pneg %p229
        $region90: #{aotn_forward.26} parent=83 // pred_check_branch
          %737 = sbr.rel (%p735) target = $region92
        $region91: #{aotn_forward.26} parent=83 // pred_region
          %s738 = sand.u32 %s214, 1
          %s739 = scalar_lea.sflag [#allocation9], %s738
          %s740 = sand.u32 %s214, 1
          %s741 = smul.addr %s740, 2
          %s742 = scalar_lea.vmem [#allocation8], %s741
          %743 = dma.done %s739, 32
        $region92: #{aotn_forward.26} parent=83 // pred_fallthru
          _
      $region84: #{aotn_forward.26} parent=5 // pred_fallthru
        _
    $region6: #{aotn_forward.26} parent=1 // loop_footer
      %s26 = sadd.s32 1, %s22
    $region7: #{aotn_forward.26} parent=1 // loop_footer_branch
      %21 = sbr.rel target = $region3
    $region8: #{aotn_forward.26} parent=1 // loop_exit
      _
    %744 = vsyncpa [#allocation7], 1
    %s745 = scalar_lea.sflag [#allocation7], 1
    %746 = vsyncpa %s745, 1
    %747 = vsyncpa [#allocation9], 1
    %s748 = scalar_lea.sflag [#allocation9], 1
    %749 = vsyncpa %s748, 1

// kernel: aotn_forward.31
$region0: #{aotn_forward.31}
  #allocation0 [shape = 'u32[]', space=smem, size = 0x4, offset = 0x4, fixed_abs, tag = 'smem constant byte address 0x4 - core index']
  #allocation1 [shape = 'u32[144,128]{1,0:T(1,128)}', space=vmem, size = 0x12000, scoped, tag = 'internal scratch']
  %s0 = inlined_call_operand.vmem [shape: bf16[2,2,64], index: 0, kind: input, shape index: {}]
  %s1 = inlined_call_operand.vmem [shape: bf16[2,64,32], index: 1, kind: input, shape index: {}]
  %s2 = inlined_call_operand.vmem [shape: f32[2,1,32], index: 2, kind: input, shape index: {}]
  %s3 = inlined_call_operand.vmem [shape: f32[2,1,32], index: 3, kind: input, shape index: {}]
  %s4 = inlined_call_operand.vmem [shape: f32[2,1,32], index: 4, kind: input, shape index: {}]
  %s5 = inlined_call_operand.vmem [shape: f32[2,2,32], index: 5, kind: output, shape index: {}]
  %s6 = sld [smem:[#allocation0]]
  $region53: #{aotn_forward.31} parent=0
    _
  %s8 = ssub.s32 1, %s6
  %s9 = scalar_select 0, %s8, %s6
  loop: start=0, step=1, limit=4
  $region2: #{aotn_forward.31} parent=0 // loop_pre_header
    _
  $region3: #{aotn_forward.31} parent=0 // loop_header
    %s11 = sphi 0, %s15
    %p12 = scmp.ge.s32.totalorder %s11, 4
    %s21 = sphi 0, %s23
    %s24 = sphi 0, %s21
    %s25 = sphi 0, %s24
    %s41 = sphi 0, %s25
    %s47 = sphi 0, %s49
    %s50 = sphi 0, %s47
    %s51 = sphi 0, %s50
    %s67 = sphi 0, %s51
    %s73 = sphi 0, %s75
    %s76 = sphi 0, %s73
    %s77 = sphi 0, %s76
    %s93 = sphi 0, %s77
    %s99 = sphi 0, %s101
    %s102 = sphi 0, %s99
    %s103 = sphi 0, %s102
    %s119 = sphi 0, %s103
    %s125 = sphi 0, %s127
    %s128 = sphi 0, %s125
    %s129 = sphi 0, %s128
    %s145 = sphi 0, %s129
    %s151 = sphi 0, %s153
    %s154 = sphi 0, %s151
    %s155 = sphi 0, %s154
    %s171 = sphi 0, %s155
  $region4: #{aotn_forward.31} parent=0 // loop_header_branch
    %14 = sbr.rel (%p12) target = $region8
  $region5: #{aotn_forward.31} parent=0 // loop_body
    %s16 = ssub.s32 %s11, 1
    %s17 = ssub.s32 %s11, 2
    %s18 = sadd.s32 %s11, 1
    %s19 = ssub.s32 %s11, %s18
    %p20 = scmp.eq.s32.totalorder %s19, 0
    %s22 = sadd.s32 %s21, 1
    %s23 = scalar_select %p20, %s21, %s22
    %p26 = pneg %p20
    %p27 = scmp.eq.s32.totalorder %s11, 1
    %p28 = por %p26, %p27
    %p29 = scmp.ne.s32.totalorder %s21, %s24
    %p30 = scmp.eq.s32.totalorder %s11, 0
    %p31 = por %p29, %p30
    %p32 = scmp.ne.s32.totalorder %s21, %s24
    %p33 = scmp.eq.s32.totalorder %s16, 1
    %p34 = por %p32, %p33
    %p35 = scmp.ne.s32.totalorder %s24, %s25
    %p36 = scmp.eq.s32.totalorder %s16, 0
    %p37 = por %p35, %p36
    %p38 = scmp.ne.s32.totalorder %s24, %s25
    %p39 = scmp.eq.s32.totalorder %s17, 1
    %p40 = por %p38, %p39
    %p42 = scmp.ne.s32.totalorder %s25, %s41
    %p43 = scmp.eq.s32.totalorder %s17, 0
    %p44 = por %p42, %p43
    %s45 = ssub.s32 %s11, %s18
    %p46 = scmp.eq.s32.totalorder %s45, 0
    %s48 = sadd.s32 %s47, 1
    %s49 = scalar_select %p46, %s47, %s48
    %p52 = pneg %p46
    %p53 = scmp.eq.s32.totalorder %s11, 1
    %p54 = por %p52, %p53
    %p55 = scmp.ne.s32.totalorder %s47, %s50
    %p56 = scmp.eq.s32.totalorder %s11, 0
    %p57 = por %p55, %p56
    %p58 = scmp.ne.s32.totalorder %s47, %s50
    %p59 = scmp.eq.s32.totalorder %s16, 1
    %p60 = por %p58, %p59
    %p61 = scmp.ne.s32.totalorder %s50, %s51
    %p62 = scmp.eq.s32.totalorder %s16, 0
    %p63 = por %p61, %p62
    %p64 = scmp.ne.s32.totalorder %s50, %s51
    %p65 = scmp.eq.s32.totalorder %s17, 1
    %p66 = por %p64, %p65
    %p68 = scmp.ne.s32.totalorder %s51, %s67
    %p69 = scmp.eq.s32.totalorder %s17, 0
    %p70 = por %p68, %p69
    %s71 = ssub.s32 %s11, %s18
    %p72 = scmp.eq.s32.totalorder %s71, 0
    %s74 = sadd.s32 %s73, 1
    %s75 = scalar_select %p72, %s73, %s74
    %p78 = pneg %p72
    %p79 = scmp.eq.s32.totalorder %s11, 1
    %p80 = por %p78, %p79
    %p81 = scmp.ne.s32.totalorder %s73, %s76
    %p82 = scmp.eq.s32.totalorder %s11, 0
    %p83 = por %p81, %p82
    %p84 = scmp.ne.s32.totalorder %s73, %s76
    %p85 = scmp.eq.s32.totalorder %s16, 1
    %p86 = por %p84, %p85
    %p87 = scmp.ne.s32.totalorder %s76, %s77
    %p88 = scmp.eq.s32.totalorder %s16, 0
    %p89 = por %p87, %p88
    %p90 = scmp.ne.s32.totalorder %s76, %s77
    %p91 = scmp.eq.s32.totalorder %s17, 1
    %p92 = por %p90, %p91
    %p94 = scmp.ne.s32.totalorder %s77, %s93
    %p95 = scmp.eq.s32.totalorder %s17, 0
    %p96 = por %p94, %p95
    %s97 = ssub.s32 %s11, %s18
    %p98 = scmp.eq.s32.totalorder %s97, 0
    %s100 = sadd.s32 %s99, 1
    %s101 = scalar_select %p98, %s99, %s100
    %p104 = pneg %p98
    %p105 = scmp.eq.s32.totalorder %s11, 1
    %p106 = por %p104, %p105
    %p107 = scmp.ne.s32.totalorder %s99, %s102
    %p108 = scmp.eq.s32.totalorder %s11, 0
    %p109 = por %p107, %p108
    %p110 = scmp.ne.s32.totalorder %s99, %s102
    %p111 = scmp.eq.s32.totalorder %s16, 1
    %p112 = por %p110, %p111
    %p113 = scmp.ne.s32.totalorder %s102, %s103
    %p114 = scmp.eq.s32.totalorder %s16, 0
    %p115 = por %p113, %p114
    %p116 = scmp.ne.s32.totalorder %s102, %s103
    %p117 = scmp.eq.s32.totalorder %s17, 1
    %p118 = por %p116, %p117
    %p120 = scmp.ne.s32.totalorder %s103, %s119
    %p121 = scmp.eq.s32.totalorder %s17, 0
    %p122 = por %p120, %p121
    %s123 = ssub.s32 %s11, %s18
    %p124 = scmp.eq.s32.totalorder %s123, 0
    %s126 = sadd.s32 %s125, 1
    %s127 = scalar_select %p124, %s125, %s126
    %p130 = pneg %p124
    %p131 = scmp.eq.s32.totalorder %s11, 1
    %p132 = por %p130, %p131
    %p133 = scmp.ne.s32.totalorder %s125, %s128
    %p134 = scmp.eq.s32.totalorder %s11, 0
    %p135 = por %p133, %p134
    %p136 = scmp.ne.s32.totalorder %s125, %s128
    %p137 = scmp.eq.s32.totalorder %s16, 1
    %p138 = por %p136, %p137
    %p139 = scmp.ne.s32.totalorder %s128, %s129
    %p140 = scmp.eq.s32.totalorder %s16, 0
    %p141 = por %p139, %p140
    %p142 = scmp.ne.s32.totalorder %s128, %s129
    %p143 = scmp.eq.s32.totalorder %s17, 1
    %p144 = por %p142, %p143
    %p146 = scmp.ne.s32.totalorder %s129, %s145
    %p147 = scmp.eq.s32.totalorder %s17, 0
    %p148 = por %p146, %p147
    %s149 = ssub.s32 %s11, %s18
    %p150 = scmp.eq.s32.totalorder %s149, 0
    %s152 = sadd.s32 %s151, 1
    %s153 = scalar_select %p150, %s151, %s152
    %p156 = pneg %p150
    %p157 = scmp.eq.s32.totalorder %s11, 1
    %p158 = por %p156, %p157
    %p159 = scmp.ne.s32.totalorder %s151, %s154
    %p160 = scmp.eq.s32.totalorder %s11, 0
    %p161 = por %p159, %p160
    %p162 = scmp.ne.s32.totalorder %s151, %s154
    %p163 = scmp.eq.s32.totalorder %s16, 1
    %p164 = por %p162, %p163
    %p165 = scmp.ne.s32.totalorder %s154, %s155
    %p166 = scmp.eq.s32.totalorder %s16, 0
    %p167 = por %p165, %p166
    %p168 = scmp.ne.s32.totalorder %s154, %s155
    %p169 = scmp.eq.s32.totalorder %s17, 1
    %p170 = por %p168, %p169
    %p172 = scmp.ne.s32.totalorder %s155, %s171
    %p173 = scmp.eq.s32.totalorder %s17, 0
    %p174 = por %p172, %p173
    %p175 = scmp.le.s32.totalorder 1, %s11
    %p176 = scmp.lt.s32.totalorder %s11, 3
    %p177 = pnand %p175, %p176
    %p178 = pneg %p177
    // Predicated region
    $region9: #{aotn_forward.31} parent=5 // pred_check
      _
    $region10: #{aotn_forward.31} parent=5 // pred_check_branch
      %180 = sbr.rel (%p177) target = $region12
    $region11: #{aotn_forward.31} parent=5 // pred_region
      %s181 = ssub.s32 %s11, 1
    $region12: #{aotn_forward.31} parent=5 // pred_fallthru
      _
    %p182 = scmp.lt.s32.totalorder %s11, 2
    // Predicated region
    $region13: #{aotn_forward.31} parent=5 // pred_check
      %p183 = pneg %p182
    $region14: #{aotn_forward.31} parent=5 // pred_check_branch
      %185 = sbr.rel (%p183) target = $region16
    $region15: #{aotn_forward.31} parent=5 // pred_region
      // Predicated region
      $region17: #{aotn_forward.31} parent=15 // pred_check
        %p186 = pneg %p31
      $region18: #{aotn_forward.31} parent=15 // pred_check_branch
        %188 = sbr.rel (%p186) target = $region20
      $region19: #{aotn_forward.31} parent=15 // pred_region
        %p189 = scmp.lt.s32.totalorder %s11, 1
        %s190 = scalar_select %p189, %s11, 1
        %s191 = scalar_lea.vmem %s0, %s190
      $region20: #{aotn_forward.31} parent=15 // pred_fallthru
        _
      // Predicated region
      $region21: #{aotn_forward.31} parent=15 // pred_check
        %p192 = pneg %p57
      $region22: #{aotn_forward.31} parent=15 // pred_check_branch
        %194 = sbr.rel (%p192) target = $region24
      $region23: #{aotn_forward.31} parent=15 // pred_region
        %p195 = scmp.lt.s32.totalorder %s11, 1
        %s196 = scalar_select %p195, %s11, 1
        %s197 = smul.addr %s196, 8
        %s198 = smul.addr %s197, 4
        %s199 = scalar_lea.vmem %s1, %s198
      $region24: #{aotn_forward.31} parent=15 // pred_fallthru
        _
      // Predicated region
      $region25: #{aotn_forward.31} parent=15 // pred_check
        %p200 = pneg %p83
      $region26: #{aotn_forward.31} parent=15 // pred_check_branch
        %202 = sbr.rel (%p200) target = $region28
      $region27: #{aotn_forward.31} parent=15 // pred_region
        %p203 = scmp.lt.s32.totalorder %s11, 1
        %s204 = scalar_select %p203, %s11, 1
        %s205 = scalar_lea.vmem %s2, %s204
      $region28: #{aotn_forward.31} parent=15 // pred_fallthru
        _
      // Predicated region
      $region29: #{aotn_forward.31} parent=15 // pred_check
        %p206 = pneg %p109
      $region30: #{aotn_forward.31} parent=15 // pred_check_branch
        %208 = sbr.rel (%p206) target = $region32
      $region31: #{aotn_forward.31} parent=15 // pred_region
        %p209 = scmp.lt.s32.totalorder %s11, 1
        %s210 = scalar_select %p209, %s11, 1
        %s211 = scalar_lea.vmem %s3, %s210
      $region32: #{aotn_forward.31} parent=15 // pred_fallthru
        _
      // Predicated region
      $region33: #{aotn_forward.31} parent=15 // pred_check
        %p212 = pneg %p135
      $region34: #{aotn_forward.31} parent=15 // pred_check_branch
        %214 = sbr.rel (%p212) target = $region36
      $region35: #{aotn_forward.31} parent=15 // pred_region
        %p215 = scmp.lt.s32.totalorder %s11, 1
        %s216 = scalar_select %p215, %s11, 1
        %s217 = scalar_lea.vmem %s4, %s216
      $region36: #{aotn_forward.31} parent=15 // pred_fallthru
        _
    $region16: #{aotn_forward.31} parent=5 // pred_fallthru
      _
    %p218 = scmp.le.s32.totalorder 1, %s11
    %p219 = scmp.lt.s32.totalorder %s11, 3
    %p220 = pnand %p218, %p219
    %p221 = pneg %p220
    // Predicated region
    $region37: #{aotn_forward.31} parent=5 // pred_check
      _
    $region38: #{aotn_forward.31} parent=5 // pred_check_branch
      %223 = sbr.rel (%p220) target = $region40
    $region39: #{aotn_forward.31} parent=5 // pred_region
      %s224 = ssub.s32 %s11, 1
      %p225 = scmp.lt.s32.totalorder %s16, 1
      %s226 = scalar_select %p225, %s16, 1
      %s227 = scalar_lea.vmem %s0, %s226
      %p228 = pneg %p37
      %p229 = pneg %p34
      %p230 = scmp.lt.s32.totalorder %s16, 1
      %s231 = scalar_select %p230, %s16, 1
      %s232 = smul.addr %s231, 8
      %s233 = smul.addr %s232, 4
      %s234 = scalar_lea.vmem %s1, %s233
      %p235 = pneg %p63
      %p236 = pneg %p60
      %p237 = scmp.lt.s32.totalorder %s16, 1
      %s238 = scalar_select %p237, %s16, 1
      %s239 = scalar_lea.vmem %s2, %s238
      %p240 = pneg %p89
      %p241 = pneg %p86
      %p242 = scmp.lt.s32.totalorder %s16, 1
      %s243 = scalar_select %p242, %s16, 1
      %s244 = scalar_lea.vmem %s3, %s243
      %p245 = pneg %p115
      %p246 = pneg %p112
      %p247 = scmp.lt.s32.totalorder %s16, 1
      %s248 = scalar_select %p247, %s16, 1
      %s249 = scalar_lea.vmem %s4, %s248
      %p250 = pneg %p141
      %p251 = pneg %p138
      %p252 = pneg %p167
      %p253 = pneg %p164
      %p254 = scmp.lt.s32.totalorder %s16, 1
      %s255 = scalar_select %p254, %s16, 1
      %s256 = smul.addr %s255, 2
      %s257 = scalar_lea.vmem %s5, %s256
      %p258 = scmp.lt.s32.totalorder %s16, 1
      %s259 = scalar_select %p258, %s16, 1
      %s260 = scalar_lea.vmem %s0, %s259
      %p261 = scmp.lt.s32.totalorder %s16, 1
      %s262 = scalar_select %p261, %s16, 1
      %s263 = smul.addr %s262, 8
      %s264 = smul.addr %s263, 4
      %s265 = scalar_lea.vmem %s1, %s264
      %p266 = scmp.lt.s32.totalorder %s16, 1
      %s267 = scalar_select %p266, %s16, 1
      %s268 = scalar_lea.vmem %s2, %s267
      %p269 = scmp.lt.s32.totalorder %s16, 1
      %s270 = scalar_select %p269, %s16, 1
      %s271 = scalar_lea.vmem %s3, %s270
      %p272 = scmp.lt.s32.totalorder %s16, 1
      %s273 = scalar_select %p272, %s16, 1
      %s274 = scalar_lea.vmem %s4, %s273
      %p275 = scmp.lt.s32.totalorder %s16, 1
      %s276 = scalar_select %p275, %s16, 1
      %s277 = smul.addr %s276, 2
      %s278 = scalar_lea.vmem %s5, %s277
      %v280 = vld [vmem:[%s260] sm:$0x1]
      %v281 = vld [vmem:[%s265] sm:$0xf]
      %v282 = vld [vmem:[%s265 + $0x4] sm:$0xf]
      %v283 = vld [vmem:[%s265 + $0x8] sm:$0xf]
      %v284 = vld [vmem:[%s265 + $0xc] sm:$0xf]
      %v285 = vld [vmem:[%s265 + $0x10] sm:$0xf]
      %v286 = vld [vmem:[%s265 + $0x14] sm:$0xf]
      %v287 = vld [vmem:[%s265 + $0x18] sm:$0xf]
      %v288 = vld [vmem:[%s265 + $0x1c] sm:$0xf]
      %v289 = vld [vmem:[%s268] sm:$0x1]
      %v291 = vlaneseq
      %v292 = vshrl.u32 %v291, 7
      %v293 = vsub.s32 0, %v292
      %v294 = vrot.slane %v289, %v293
      %v304 = vunpack.c.l.b16 %v281
      %v305 = vunpack.c.l.b16 %v282
      %v306 = vunpack.c.l.b16 %v283
      %v307 = vunpack.c.l.b16 %v284
      %v308 = vunpack.c.l.b16 %v285
      %v309 = vunpack.c.l.b16 %v286
      %v310 = vunpack.c.l.b16 %v287
      %v311 = vunpack.c.l.b16 %v288
      %v312 = vpack.c.b16 %v305, %v304
      %v313 = vpack.c.b16 %v307, %v306
      %v314 = vpack.c.b16 %v309, %v308
      %v315 = vpack.c.b16 %v311, %v310
      %vm320 = vcmask 523264
      %v322 = vsel %vm320, %v280, 0
      %324 = vmatprep.subr.bf16.mxu0 0
      %325 = vmatpush1.bf16.msra.mxu0 %v312
      %326 = vmatprep.subr.bf16.mxu0 0
      %327 = vmatpush1.bf16.msra.mxu0 %v313
      %328 = vmatprep.subr.bf16.mxu0 0
      %329 = vmatpush1.bf16.msra.mxu0 %v314
      %330 = vmatprep.subr.bf16.mxu0 0
      %331 = vmatpush1.bf16.msra.mxu0 %v315
      %332 = vmatprep.subr.bf16.mxu0 0
      %333 = vmatpush1.bf16.msra.mxu0 0
      %334 = vmatprep.subr.bf16.mxu0 0
      %335 = vmatpush1.bf16.msra.mxu0 0
      %336 = vmatprep.subr.bf16.mxu0 0
      %337 = vmatpush1.bf16.msra.mxu0 0
      %338 = vmatprep.subr.bf16.mxu0 0
      %339 = vmatpush1.bf16.msra.mxu0 0
      %340 = vmatprep.subr.bf16.mxu0 0
      %341 = vmatpush1.bf16.msra.mxu0 0
      %342 = vmatprep.subr.bf16.mxu0 0
      %343 = vmatpush1.bf16.msra.mxu0 0
      %344 = vmatprep.subr.bf16.mxu0 0
      %345 = vmatpush1.bf16.msra.mxu0 0
      %346 = vmatprep.subr.bf16.mxu0 0
      %347 = vmatpush1.bf16.msra.mxu0 0
      %348 = vmatprep.subr.bf16.mxu0 0
      %349 = vmatpush1.bf16.msra.mxu0 0
      %350 = vmatprep.subr.bf16.mxu0 0
      %351 = vmatpush1.bf16.msra.mxu0 0
      %352 = vmatprep.subr.bf16.mxu0 0
      %353 = vmatpush1.bf16.msra.mxu0 0
      %354 = vmatprep.subr.bf16.mxu0 0
      %355 = vmatpush1.bf16.msra.mxu0 0
      %356 = vmatprep.mubr.bf16.mxu0 0
      %357 = vmatmul.mubr.bf16.gmra.mrb[0].mxu0 %v322
      %v358 = vpop.f32.mrb[0].mxu0
      %v359 = vadd.f32 %v294, %v358
      %v360 = vpop.f32.mrb[0].mxu0
      %v361 = vpop.f32.mrb[0].mxu0
      %v362 = vpop.f32.mrb[0].mxu0
      %363 = vdwg.mxu0
      %v364 = vmax.f32 %v359, 0.0
      %v365 = vld [vmem:[%s271] sm:$0x1]
      %v366 = vld [vmem:[%s274] sm:$0x1]
      %vm367 = vcmask 254976
      %v368 = vsel %vm367, %v364, 0.0
      %369 = vadd.xlane.f32.xlu0 %v368
      %v370 = vpop.xlane.xlu0 %369
      %v371 = vrcp.pop 32.0
      %v372 = vmul.f32 %v370, %v371
      %v373 = vsub.f32 %v364, %v372
      %v374 = vmul.f32 %v373, %v373
      %v375 = vsel %vm367, %v374, 0.0
      %376 = vadd.xlane.f32.xlu0 %v375
      %v377 = vpop.xlane.xlu0 %376
      %v378 = vmul.f32 %v377, %v371
      %v379 = vadd.f32 %v378, 1e-05
      %v380 = vrsqrt.pop %v379
      %v381 = vmul.f32 %v373, %v380
      %v383 = vlaneseq
      %v384 = vshrl.u32 %v383, 7
      %v385 = vsub.s32 0, %v384
      %v386 = vrot.slane %v365, %v385
      %v388 = vmul.f32 %v381, %v386
      %v390 = vlaneseq
      %v391 = vshrl.u32 %v390, 7
      %v392 = vsub.s32 0, %v391
      %v393 = vrot.slane %v366, %v392
      %v395 = vadd.f32 %v388, %v393
      %396 = vst.msk [vmem:[%s278] sm:$0x3] %vm367, %v395
      %p397 = scmp.lt.s32.totalorder %s16, 1
      %s398 = scalar_select %p397, %s16, 1
      %s399 = smul.addr %s398, 2
      %s400 = scalar_lea.vmem %s5, %s399
      // Predicated region
      $region41: #{aotn_forward.31} parent=39 // pred_check
        %p401 = pneg %p164
      $region42: #{aotn_forward.31} parent=39 // pred_check_branch
        %403 = sbr.rel (%p401) target = $region44
      $region43: #{aotn_forward.31} parent=39 // pred_region
        _
      $region44: #{aotn_forward.31} parent=39 // pred_fallthru
        _
    $region40: #{aotn_forward.31} parent=5 // pred_fallthru
      _
    %p404 = scmp.le.s32.totalorder 2, %s11
    // Predicated region
    $region45: #{aotn_forward.31} parent=5 // pred_check
      %p405 = pneg %p404
    $region46: #{aotn_forward.31} parent=5 // pred_check_branch
      %407 = sbr.rel (%p405) target = $region48
    $region47: #{aotn_forward.31} parent=5 // pred_region
      %s408 = ssub.s32 %s11, 2
      // Predicated region
      $region49: #{aotn_forward.31} parent=47 // pred_check
        %p409 = pneg %p170
      $region50: #{aotn_forward.31} parent=47 // pred_check_branch
        %411 = sbr.rel (%p409) target = $region52
      $region51: #{aotn_forward.31} parent=47 // pred_region
        %p412 = scmp.lt.s32.totalorder %s17, 1
        %s413 = scalar_select %p412, %s17, 1
        %s414 = smul.addr %s413, 2
        %s415 = scalar_lea.vmem %s5, %s414
      $region52: #{aotn_forward.31} parent=47 // pred_fallthru
        _
    $region48: #{aotn_forward.31} parent=5 // pred_fallthru
      _
  $region6: #{aotn_forward.31} parent=0 // loop_footer
    %s15 = sadd.s32 1, %s11
  $region7: #{aotn_forward.31} parent=0 // loop_footer_branch
    %10 = sbr.rel target = $region3
  $region8: #{aotn_forward.31} parent=0 // loop_exit
    _

// kernel: aotn_forward.18
$region0: #{aotn_forward.18}
  #allocation0 [shape = 'u32[]', space=smem, size = 0x4, offset = 0x4, fixed_abs, tag = 'smem constant byte address 0x4 - core index']
  #allocation1 [shape = 'u32[144,128]{1,0:T(1,128)}', space=vmem, size = 0x12000, scoped, tag = 'internal scratch']
  %s0 = inlined_call_operand.vmem [shape: f32[2,8,768], index: 0, kind: input, shape index: {}]
  %s1 = inlined_call_operand.vmem [shape: f32[2,8,1], index: 1, kind: input, shape index: {}]
  %s2 = inlined_call_operand.vmem [shape: f32[2,768], index: 2, kind: output, shape index: {}]
  %s3 = sld [smem:[#allocation0]]
  $region18: #{aotn_forward.18} parent=0
    _
  %s5 = ssub.s32 1, %s3
  %s6 = scalar_select 0, %s5, %s3
  // Predicated region
  $region2: #{aotn_forward.18} parent=0 // pred_check
    _
  $region3: #{aotn_forward.18} parent=0 // pred_check_branch
    %8 = sbr.rel (0) target = $region5
  $region4: #{aotn_forward.18} parent=0 // pred_region
    _
  $region5: #{aotn_forward.18} parent=0 // pred_fallthru
    _
  // Predicated region
  $region6: #{aotn_forward.18} parent=0 // pred_check
    _
  $region7: #{aotn_forward.18} parent=0 // pred_check_branch
    %10 = sbr.rel (0) target = $region9
  $region8: #{aotn_forward.18} parent=0 // pred_region
    _
  $region9: #{aotn_forward.18} parent=0 // pred_fallthru
    _
  %v11 = vld [vmem:[%s0] sm:$0xff]
  %v12 = vld [vmem:[%s0 + $0x8] sm:$0xff]
  %v13 = vld [vmem:[%s0 + $0x10] sm:$0xff]
  %v14 = vld [vmem:[%s0 + $0x18] sm:$0xff]
  %v15 = vld [vmem:[%s0 + $0x20] sm:$0xff]
  %v16 = vld [vmem:[%s0 + $0x28] sm:$0xff]
  %v17 = vld [vmem:[%s0 + $0x30] sm:$0xff]
  %v18 = vld [vmem:[%s0 + $0x38] sm:$0xff]
  %v19 = vld [vmem:[%s0 + $0x40] sm:$0xff]
  %v20 = vld [vmem:[%s0 + $0x48] sm:$0xff]
  %v21 = vld [vmem:[%s0 + $0x50] sm:$0xff]
  %v22 = vld [vmem:[%s0 + $0x58] sm:$0xff]
  %v23 = vld [vmem:[%s1] sm:$0xff]
  %v24 = vld [vmem:[%s1 + $0x8] sm:$0xff]
  %26 = vset.pattern.permute.xlu0 0
  %27 = vperm.xlu0 %26, %v23
  %v28 = vpop.permute.xlu0 %27
  %31 = vset.pattern.permute.xlu0 0
  %32 = vperm.xlu0 %31, %v24
  %v33 = vpop.permute.xlu0 %32
  %v35 = vmul.f32 %v11, %v28
  %v36 = vmul.f32 %v12, %v28
  %v37 = vmul.f32 %v13, %v28
  %v38 = vmul.f32 %v14, %v28
  %v39 = vmul.f32 %v15, %v28
  %v40 = vmul.f32 %v16, %v28
  %v41 = vmul.f32 %v17, %v33
  %v42 = vmul.f32 %v18, %v33
  %v43 = vmul.f32 %v19, %v33
  %v44 = vmul.f32 %v20, %v33
  %v45 = vmul.f32 %v21, %v33
  %v46 = vmul.f32 %v22, %v33
  %v47 = vrot.slane %v35, 4
  %v48 = vadd.f32 %v35, %v47
  %v49 = vrot.slane %v48, 2
  %v50 = vadd.f32 %v48, %v49
  %v51 = vrot.slane %v50, 1
  %v52 = vadd.f32 %v50, %v51
  %v53 = vrot.slane %v36, 4
  %v54 = vadd.f32 %v36, %v53
  %v55 = vrot.slane %v54, 2
  %v56 = vadd.f32 %v54, %v55
  %v57 = vrot.slane %v56, 1
  %v58 = vadd.f32 %v56, %v57
  %v59 = vrot.slane %v37, 4
  %v60 = vadd.f32 %v37, %v59
  %v61 = vrot.slane %v60, 2
  %v62 = vadd.f32 %v60, %v61
  %v63 = vrot.slane %v62, 1
  %v64 = vadd.f32 %v62, %v63
  %v65 = vrot.slane %v38, 4
  %v66 = vadd.f32 %v38, %v65
  %v67 = vrot.slane %v66, 2
  %v68 = vadd.f32 %v66, %v67
  %v69 = vrot.slane %v68, 1
  %v70 = vadd.f32 %v68, %v69
  %v71 = vrot.slane %v39, 4
  %v72 = vadd.f32 %v39, %v71
  %v73 = vrot.slane %v72, 2
  %v74 = vadd.f32 %v72, %v73
  %v75 = vrot.slane %v74, 1
  %v76 = vadd.f32 %v74, %v75
  %v77 = vrot.slane %v40, 4
  %v78 = vadd.f32 %v40, %v77
  %v79 = vrot.slane %v78, 2
  %v80 = vadd.f32 %v78, %v79
  %v81 = vrot.slane %v80, 1
  %v82 = vadd.f32 %v80, %v81
  %v83 = vrot.slane %v41, 4
  %v84 = vadd.f32 %v41, %v83
  %v85 = vrot.slane %v84, 2
  %v86 = vadd.f32 %v84, %v85
  %v87 = vrot.slane %v86, 1
  %v88 = vadd.f32 %v86, %v87
  %v89 = vrot.slane %v42, 4
  %v90 = vadd.f32 %v42, %v89
  %v91 = vrot.slane %v90, 2
  %v92 = vadd.f32 %v90, %v91
  %v93 = vrot.slane %v92, 1
  %v94 = vadd.f32 %v92, %v93
  %v95 = vrot.slane %v43, 4
  %v96 = vadd.f32 %v43, %v95
  %v97 = vrot.slane %v96, 2
  %v98 = vadd.f32 %v96, %v97
  %v99 = vrot.slane %v98, 1
  %v100 = vadd.f32 %v98, %v99
  %v101 = vrot.slane %v44, 4
  %v102 = vadd.f32 %v44, %v101
  %v103 = vrot.slane %v102, 2
  %v104 = vadd.f32 %v102, %v103
  %v105 = vrot.slane %v104, 1
  %v106 = vadd.f32 %v104, %v105
  %v107 = vrot.slane %v45, 4
  %v108 = vadd.f32 %v45, %v107
  %v109 = vrot.slane %v108, 2
  %v110 = vadd.f32 %v108, %v109
  %v111 = vrot.slane %v110, 1
  %v112 = vadd.f32 %v110, %v111
  %v113 = vrot.slane %v46, 4
  %v114 = vadd.f32 %v46, %v113
  %v115 = vrot.slane %v114, 2
  %v116 = vadd.f32 %v114, %v115
  %v117 = vrot.slane %v116, 1
  %v118 = vadd.f32 %v116, %v117
  %vm119 = vcmask 7168
  %v120 = vsel %vm119, %v23, 0.0
  %v121 = vrot.slane %v120, 4
  %v122 = vadd.f32 %v120, %v121
  %v123 = vrot.slane %v122, 2
  %v124 = vadd.f32 %v122, %v123
  %v125 = vrot.slane %v124, 1
  %v126 = vadd.f32 %v124, %v125
  %v127 = vsel %vm119, %v24, 0.0
  %v128 = vrot.slane %v127, 4
  %v129 = vadd.f32 %v127, %v128
  %v130 = vrot.slane %v129, 2
  %v131 = vadd.f32 %v129, %v130
  %v132 = vrot.slane %v131, 1
  %v133 = vadd.f32 %v131, %v132
  %v134 = vmax.f32 %v126, 1.0
  %v135 = vmax.f32 %v133, 1.0
  %137 = vset.pattern.permute.xlu0 0
  %138 = vperm.xlu0 %137, %v134
  %v139 = vpop.permute.xlu0 %138
  %142 = vset.pattern.permute.xlu0 0
  %143 = vperm.xlu0 %142, %v135
  %v144 = vpop.permute.xlu0 %143
  %v146 = vrcp.pop %v139
  %v147 = vmul.f32 %v52, %v146
  %v148 = vmul.f32 %v58, %v146
  %v149 = vmul.f32 %v64, %v146
  %v150 = vmul.f32 %v70, %v146
  %v151 = vmul.f32 %v76, %v146
  %v152 = vmul.f32 %v82, %v146
  %v153 = vrcp.pop %v144
  %v154 = vmul.f32 %v88, %v153
  %v155 = vmul.f32 %v94, %v153
  %v156 = vmul.f32 %v100, %v153
  %v157 = vmul.f32 %v106, %v153
  %v158 = vmul.f32 %v112, %v153
  %v159 = vmul.f32 %v118, %v153
  %v172 = vcombine.low %v147, %v148
  %v173 = vcombine.low %v149, %v150
  %v175 = vunpack.c.l.s4 1983009808
  %v176 = vunpack.c.0.s8 %v175
  %v177 = vlaneseq
  %v178 = vshrl.u32 %v177, 7
  %v179 = vsub.s32 %v176, %v178
  %v180 = vrot.slane %v172, %v179
  %v182 = vunpack.c.l.s4 1983009808
  %v183 = vunpack.c.0.s8 %v182
  %v184 = vlaneseq
  %v185 = vshrl.u32 %v184, 7
  %v186 = vsub.s32 %v183, %v185
  %v187 = vrot.slane %v173, %v186
  %v188 = vcombine.low %v180, %v187
  %v189 = vcombine.low %v151, %v152
  %v191 = vunpack.c.l.s4 1983009808
  %v192 = vunpack.c.0.s8 %v191
  %v193 = vlaneseq
  %v194 = vshrl.u32 %v193, 7
  %v195 = vsub.s32 %v192, %v194
  %v196 = vrot.slane %v189, %v195
  %v197 = vcombine.low %v154, %v155
  %v198 = vcombine.low %v156, %v157
  %v200 = vunpack.c.l.s4 1983009808
  %v201 = vunpack.c.0.s8 %v200
  %v202 = vlaneseq
  %v203 = vshrl.u32 %v202, 7
  %v204 = vsub.s32 %v201, %v203
  %v205 = vrot.slane %v197, %v204
  %v207 = vunpack.c.l.s4 1983009808
  %v208 = vunpack.c.0.s8 %v207
  %v209 = vlaneseq
  %v210 = vshrl.u32 %v209, 7
  %v211 = vsub.s32 %v208, %v210
  %v212 = vrot.slane %v198, %v211
  %v213 = vcombine.low %v205, %v212
  %v214 = vcombine.low %v158, %v159
  %v216 = vunpack.c.l.s4 1983009808
  %v217 = vunpack.c.0.s8 %v216
  %v218 = vlaneseq
  %v219 = vshrl.u32 %v218, 7
  %v220 = vsub.s32 %v217, %v219
  %v221 = vrot.slane %v214, %v220
  %vm222 = vcmask 1044484
  %v223 = vsel %vm222, %v188, %v188
  %vm224 = vcmask 1046534
  %v225 = vsel %vm224, %v188, %v223
  %v226 = vrot.slane %v213, 7
  %vm227 = vcmask 1041409
  %v228 = vsel %vm227, %v226, %v225
  %vm229 = vcmask 1043459
  %v230 = vsel %vm229, %v226, %v228
  %vm231 = vcmask 1045509
  %v232 = vsel %vm231, %v226, %v230
  %vm233 = vcmask 1047559
  %v234 = vsel %vm233, %v226, %v232
  %v235 = vsel %vm222, %v196, %v196
  %v236 = vsel %vm224, %v196, %v235
  %v237 = vrot.slane %v221, 7
  %v238 = vsel %vm227, %v237, %v236
  %v239 = vsel %vm229, %v237, %v238
  %v240 = vsel %vm231, %v237, %v239
  %v241 = vsel %vm233, %v237, %v240
  %244 = vst [vmem:[%s2] sm:$0xff] %v234
  %245 = vst [vmem:[%s2 + $0x8] sm:$0xf] %v241
  // Predicated region
  $region10: #{aotn_forward.18} parent=0 // pred_check
    _
  $region11: #{aotn_forward.18} parent=0 // pred_check_branch
    %247 = sbr.rel (0) target = $region13
  $region12: #{aotn_forward.18} parent=0 // pred_region
    _
  $region13: #{aotn_forward.18} parent=0 // pred_fallthru
    _
  // Predicated region
  $region14: #{aotn_forward.18} parent=0 // pred_check
    _
  $region15: #{aotn_forward.18} parent=0 // pred_check_branch
    %249 = sbr.rel (0) target = $region17
  $region16: #{aotn_forward.18} parent=0 // pred_region
    _
  $region17: #{aotn_forward.18} parent=0 // pred_fallthru
    _

// kernel: aotn_forward.30
$region0: #{aotn_forward.30}
  #allocation0 [shape = 'u32[]', space=smem, size = 0x4, offset = 0x4, fixed_abs, tag = 'smem constant byte address 0x4 - core index']
  #allocation1 [shape = 'u32[144,128]{1,0:T(1,128)}', space=vmem, size = 0x12000, scoped, tag = 'internal scratch']
  %s0 = inlined_call_operand.vmem [shape: bf16[2,768], index: 0, kind: input, shape index: {}]
  %s1 = inlined_call_operand.vmem [shape: bf16[768,32], index: 1, kind: input, shape index: {}]
  %s2 = inlined_call_operand.hbm [shape: f32[1,32], index: 2, kind: input, shape index: {}]
  %s3 = inlined_call_operand.hbm [shape: f32[1,32], index: 3, kind: input, shape index: {}]
  %s4 = inlined_call_operand.hbm [shape: f32[1,32], index: 4, kind: input, shape index: {}]
  %s5 = inlined_call_operand.vmem [shape: f32[2,32], index: 5, kind: output, shape index: {}]
  %s6 = sld [smem:[#allocation0]]
  $region42: #{aotn_forward.30} parent=0
    _
  %s8 = ssub.s32 1, %s6
  %s9 = scalar_select 0, %s8, %s6
  $region1: #{aotn_forward.30} parent=0
    #allocation2 [shape = 'u8[512]{0}', space=vmem, size = 0x400, scoped, tag = 'input window, operand 2, single buffered']
    #allocation3 [shape = 's32[1]{0}', space=sflag, size = 0x4, scoped, tag = 'scoped memory for aotn_forward.30']
    #allocation4 [shape = 'u8[512]{0}', space=vmem, size = 0x400, scoped, tag = 'input window, operand 3, single buffered']
    #allocation5 [shape = 's32[1]{0}', space=sflag, size = 0x4, scoped, tag = 'scoped memory for aotn_forward.30']
    #allocation6 [shape = 'u8[512]{0}', space=vmem, size = 0x400, scoped, tag = 'input window, operand 4, single buffered']
    %10 = vsyncpa [#allocation3], 0
    %11 = vsyncpa [#allocation5], 0
    // Predicated region
    $region2: #{aotn_forward.30} parent=1 // pred_check
      _
    $region3: #{aotn_forward.30} parent=1 // pred_check_branch
      %13 = sbr.rel (0) target = $region5
    $region4: #{aotn_forward.30} parent=1 // pred_region
      _
    $region5: #{aotn_forward.30} parent=1 // pred_fallthru
      _
    // Predicated region
    $region6: #{aotn_forward.30} parent=1 // pred_check
      _
    $region7: #{aotn_forward.30} parent=1 // pred_check_branch
      %15 = sbr.rel (0) target = $region9
    $region8: #{aotn_forward.30} parent=1 // pred_region
      _
    $region9: #{aotn_forward.30} parent=1 // pred_fallthru
      _
    // Predicated region
    $region10: #{aotn_forward.30} parent=1 // pred_check
      _
    $region11: #{aotn_forward.30} parent=1 // pred_check_branch
      %17 = sbr.rel (0) target = $region13
    $region12: #{aotn_forward.30} parent=1 // pred_region
      %s19 = ssub.s32 16, 16
      %20 = vsyncadd [#allocation3], %s19
      %s22 = sshll.u32 [#allocation2], 4
      %s23 = int_to_ptr.vmem [resolvable:$true] %s22
      %25 = dma.hbm_to_vmem [thread:$0]  %s2, 16, %s23, [#allocation3]
    $region13: #{aotn_forward.30} parent=1 // pred_fallthru
      _
    // Predicated region
    $region14: #{aotn_forward.30} parent=1 // pred_check
      _
    $region15: #{aotn_forward.30} parent=1 // pred_check_branch
      %27 = sbr.rel (0) target = $region17
    $region16: #{aotn_forward.30} parent=1 // pred_region
      %s29 = ssub.s32 16, 16
      %30 = vsyncadd [#allocation5], %s29
      %s32 = sshll.u32 [#allocation4], 4
      %s33 = int_to_ptr.vmem [resolvable:$true] %s32
      %35 = dma.hbm_to_vmem [thread:$0]  %s3, 16, %s33, [#allocation5]
    $region17: #{aotn_forward.30} parent=1 // pred_fallthru
      _
    // Predicated region
    $region18: #{aotn_forward.30} parent=1 // pred_check
      _
    $region19: #{aotn_forward.30} parent=1 // pred_check_branch
      %37 = sbr.rel (0) target = $region21
    $region20: #{aotn_forward.30} parent=1 // pred_region
      %s39 = ssub.s32 16, 16
      %40 = vsyncadd [#allocation5], %s39
      %s42 = sshll.u32 [#allocation6], 4
      %s43 = int_to_ptr.vmem [resolvable:$true] %s42
      %45 = dma.hbm_to_vmem [thread:$0]  %s4, 16, %s43, [#allocation5]
    $region21: #{aotn_forward.30} parent=1 // pred_fallthru
      _
    // Predicated region
    $region22: #{aotn_forward.30} parent=1 // pred_check
      _
    $region23: #{aotn_forward.30} parent=1 // pred_check_branch
      %47 = sbr.rel (0) target = $region25
    $region24: #{aotn_forward.30} parent=1 // pred_region
      %48 = dma.done [#allocation3], 16
    $region25: #{aotn_forward.30} parent=1 // pred_fallthru
      _
    // Predicated region
    $region26: #{aotn_forward.30} parent=1 // pred_check
      _
    $region27: #{aotn_forward.30} parent=1 // pred_check_branch
      %50 = sbr.rel (0) target = $region29
    $region28: #{aotn_forward.30} parent=1 // pred_region
      %51 = dma.done [#allocation5], 16
    $region29: #{aotn_forward.30} parent=1 // pred_fallthru
      _
    // Predicated region
    $region30: #{aotn_forward.30} parent=1 // pred_check
      _
    $region31: #{aotn_forward.30} parent=1 // pred_check_branch
      %53 = sbr.rel (0) target = $region33
    $region32: #{aotn_forward.30} parent=1 // pred_region
      %54 = dma.done [#allocation5], 16
    $region33: #{aotn_forward.30} parent=1 // pred_fallthru
      _
    %v56 = vld [vmem:[%s0] sm:$0x3f]
    %v57 = vld [vmem:[%s1] sm:$0xf]
    %v58 = vld [vmem:[%s1 + $0x4] sm:$0xf]
    %v59 = vld [vmem:[%s1 + $0x8] sm:$0xf]
    %v60 = vld [vmem:[%s1 + $0xc] sm:$0xf]
    %v61 = vld [vmem:[%s1 + $0x10] sm:$0xf]
    %v62 = vld [vmem:[%s1 + $0x14] sm:$0xf]
    %v63 = vld [vmem:[%s1 + $0x18] sm:$0xf]
    %v64 = vld [vmem:[%s1 + $0x1c] sm:$0xf]
    %v65 = vld [vmem:[%s1 + $0x20] sm:$0xf]
    %v66 = vld [vmem:[%s1 + $0x24] sm:$0xf]
    %v67 = vld [vmem:[%s1 + $0x28] sm:$0xf]
    %v68 = vld [vmem:[%s1 + $0x2c] sm:$0xf]
    %v69 = vld [vmem:[%s1 + $0x30] sm:$0xf]
    %v70 = vld [vmem:[%s1 + $0x34] sm:$0xf]
    %v71 = vld [vmem:[%s1 + $0x38] sm:$0xf]
    %v72 = vld [vmem:[%s1 + $0x3c] sm:$0xf]
    %v73 = vld [vmem:[%s1 + $0x40] sm:$0xf]
    %v74 = vld [vmem:[%s1 + $0x44] sm:$0xf]
    %v75 = vld [vmem:[%s1 + $0x48] sm:$0xf]
    %v76 = vld [vmem:[%s1 + $0x4c] sm:$0xf]
    %v77 = vld [vmem:[%s1 + $0x50] sm:$0xf]
    %v78 = vld [vmem:[%s1 + $0x54] sm:$0xf]
    %v79 = vld [vmem:[%s1 + $0x58] sm:$0xf]
    %v80 = vld [vmem:[%s1 + $0x5c] sm:$0xf]
    %v81 = vld [vmem:[%s1 + $0x60] sm:$0xf]
    %v82 = vld [vmem:[%s1 + $0x64] sm:$0xf]
    %v83 = vld [vmem:[%s1 + $0x68] sm:$0xf]
    %v84 = vld [vmem:[%s1 + $0x6c] sm:$0xf]
    %v85 = vld [vmem:[%s1 + $0x70] sm:$0xf]
    %v86 = vld [vmem:[%s1 + $0x74] sm:$0xf]
    %v87 = vld [vmem:[%s1 + $0x78] sm:$0xf]
    %v88 = vld [vmem:[%s1 + $0x7c] sm:$0xf]
    %v89 = vld [vmem:[%s1 + $0x80] sm:$0xf]
    %v90 = vld [vmem:[%s1 + $0x84] sm:$0xf]
    %v91 = vld [vmem:[%s1 + $0x88] sm:$0xf]
    %v92 = vld [vmem:[%s1 + $0x8c] sm:$0xf]
    %v93 = vld [vmem:[%s1 + $0x90] sm:$0xf]
    %v94 = vld [vmem:[%s1 + $0x94] sm:$0xf]
    %v95 = vld [vmem:[%s1 + $0x98] sm:$0xf]
    %v96 = vld [vmem:[%s1 + $0x9c] sm:$0xf]
    %v97 = vld [vmem:[%s1 + $0xa0] sm:$0xf]
    %v98 = vld [vmem:[%s1 + $0xa4] sm:$0xf]
    %v99 = vld [vmem:[%s1 + $0xa8] sm:$0xf]
    %v100 = vld [vmem:[%s1 + $0xac] sm:$0xf]
    %v101 = vld [vmem:[%s1 + $0xb0] sm:$0xf]
    %v102 = vld [vmem:[%s1 + $0xb4] sm:$0xf]
    %v103 = vld [vmem:[%s1 + $0xb8] sm:$0xf]
    %v104 = vld [vmem:[%s1 + $0xbc] sm:$0xf]
    %v105 = vld [vmem:[%s1 + $0xc0] sm:$0xf]
    %v106 = vld [vmem:[%s1 + $0xc4] sm:$0xf]
    %v107 = vld [vmem:[%s1 + $0xc8] sm:$0xf]
    %v108 = vld [vmem:[%s1 + $0xcc] sm:$0xf]
    %v109 = vld [vmem:[%s1 + $0xd0] sm:$0xf]
    %v110 = vld [vmem:[%s1 + $0xd4] sm:$0xf]
    %v111 = vld [vmem:[%s1 + $0xd8] sm:$0xf]
    %v112 = vld [vmem:[%s1 + $0xdc] sm:$0xf]
    %v113 = vld [vmem:[%s1 + $0xe0] sm:$0xf]
    %v114 = vld [vmem:[%s1 + $0xe4] sm:$0xf]
    %v115 = vld [vmem:[%s1 + $0xe8] sm:$0xf]
    %v116 = vld [vmem:[%s1 + $0xec] sm:$0xf]
    %v117 = vld [vmem:[%s1 + $0xf0] sm:$0xf]
    %v118 = vld [vmem:[%s1 + $0xf4] sm:$0xf]
    %v119 = vld [vmem:[%s1 + $0xf8] sm:$0xf]
    %v120 = vld [vmem:[%s1 + $0xfc] sm:$0xf]
    %v121 = vld [vmem:[%s1 + $0x100] sm:$0xf]
    %v122 = vld [vmem:[%s1 + $0x104] sm:$0xf]
    %v123 = vld [vmem:[%s1 + $0x108] sm:$0xf]
    %v124 = vld [vmem:[%s1 + $0x10c] sm:$0xf]
    %v125 = vld [vmem:[%s1 + $0x110] sm:$0xf]
    %v126 = vld [vmem:[%s1 + $0x114] sm:$0xf]
    %v127 = vld [vmem:[%s1 + $0x118] sm:$0xf]
    %v128 = vld [vmem:[%s1 + $0x11c] sm:$0xf]
    %v129 = vld [vmem:[%s1 + $0x120] sm:$0xf]
    %v130 = vld [vmem:[%s1 + $0x124] sm:$0xf]
    %v131 = vld [vmem:[%s1 + $0x128] sm:$0xf]
    %v132 = vld [vmem:[%s1 + $0x12c] sm:$0xf]
    %v133 = vld [vmem:[%s1 + $0x130] sm:$0xf]
    %v134 = vld [vmem:[%s1 + $0x134] sm:$0xf]
    %v135 = vld [vmem:[%s1 + $0x138] sm:$0xf]
    %v136 = vld [vmem:[%s1 + $0x13c] sm:$0xf]
    %v137 = vld [vmem:[%s1 + $0x140] sm:$0xf]
    %v138 = vld [vmem:[%s1 + $0x144] sm:$0xf]
    %v139 = vld [vmem:[%s1 + $0x148] sm:$0xf]
    %v140 = vld [vmem:[%s1 + $0x14c] sm:$0xf]
    %v141 = vld [vmem:[%s1 + $0x150] sm:$0xf]
    %v142 = vld [vmem:[%s1 + $0x154] sm:$0xf]
    %v143 = vld [vmem:[%s1 + $0x158] sm:$0xf]
    %v144 = vld [vmem:[%s1 + $0x15c] sm:$0xf]
    %v145 = vld [vmem:[%s1 + $0x160] sm:$0xf]
    %v146 = vld [vmem:[%s1 + $0x164] sm:$0xf]
    %v147 = vld [vmem:[%s1 + $0x168] sm:$0xf]
    %v148 = vld [vmem:[%s1 + $0x16c] sm:$0xf]
    %v149 = vld [vmem:[%s1 + $0x170] sm:$0xf]
    %v150 = vld [vmem:[%s1 + $0x174] sm:$0xf]
    %v151 = vld [vmem:[%s1 + $0x178] sm:$0xf]
    %v152 = vld [vmem:[%s1 + $0x17c] sm:$0xf]
    %v153 = vld [vmem:[#allocation2] sm:$0x1]
    %v155 = vlaneseq
    %v156 = vshrl.u32 %v155, 7
    %v157 = vsub.s32 0, %v156
    %v158 = vrot.slane %v153, %v157
    %v161 = vcombine.high %v56, %v56
    %v163 = vunpack.c.l.s4 1966171168
    %v164 = vunpack.c.0.s8 %v163
    %v165 = vlaneseq
    %v166 = vshrl.u32 %v165, 7
    %v167 = vsub.s32 %v164, %v166
    %v168 = vrot.slane %v56, %v167
    %v170 = vunpack.c.l.s4 1966171168
    %v171 = vunpack.c.0.s8 %v170
    %v172 = vlaneseq
    %v173 = vshrl.u32 %v172, 7
    %v174 = vsub.s32 %v171, %v173
    %v175 = vrot.slane %v161, %v174
    %v176 = vcombine.high %v168, %v168
    %v177 = vcombine.high %v175, %v175
    %v179 = vunpack.c.l.s4 1966171168
    %v180 = vunpack.c.0.s8 %v179
    %v181 = vlaneseq
    %v182 = vshrl.u32 %v181, 7
    %v183 = vsub.s32 %v180, %v182
    %v184 = vrot.slane %v168, %v183
    %v186 = vunpack.c.l.s4 1966171168
    %v187 = vunpack.c.0.s8 %v186
    %v188 = vlaneseq
    %v189 = vshrl.u32 %v188, 7
    %v190 = vsub.s32 %v187, %v189
    %v191 = vrot.slane %v175, %v190
    %v193 = vunpack.c.l.s4 1966171168
    %v194 = vunpack.c.0.s8 %v193
    %v195 = vlaneseq
    %v196 = vshrl.u32 %v195, 7
    %v197 = vsub.s32 %v194, %v196
    %v198 = vrot.slane %v176, %v197
    %v200 = vunpack.c.l.s4 1966171168
    %v201 = vunpack.c.0.s8 %v200
    %v202 = vlaneseq
    %v203 = vshrl.u32 %v202, 7
    %v204 = vsub.s32 %v201, %v203
    %v205 = vrot.slane %v177, %v204
    %v206 = vcombine.high %v184, %v184
    %v207 = vcombine.high %v198, %v198
    %v310 = vunpack.c.l.b16 %v57
    %v311 = vunpack.c.l.b16 %v58
    %v312 = vunpack.c.l.b16 %v59
    %v313 = vunpack.c.l.b16 %v60
    %v314 = vunpack.c.l.b16 %v61
    %v315 = vunpack.c.l.b16 %v62
    %v316 = vunpack.c.l.b16 %v63
    %v317 = vunpack.c.l.b16 %v64
    %v318 = vunpack.c.l.b16 %v65
    %v319 = vunpack.c.l.b16 %v66
    %v320 = vunpack.c.l.b16 %v67
    %v321 = vunpack.c.l.b16 %v68
    %v322 = vunpack.c.l.b16 %v69
    %v323 = vunpack.c.l.b16 %v70
    %v324 = vunpack.c.l.b16 %v71
    %v325 = vunpack.c.l.b16 %v72
    %v326 = vunpack.c.l.b16 %v73
    %v327 = vunpack.c.l.b16 %v74
    %v328 = vunpack.c.l.b16 %v75
    %v329 = vunpack.c.l.b16 %v76
    %v330 = vunpack.c.l.b16 %v77
    %v331 = vunpack.c.l.b16 %v78
    %v332 = vunpack.c.l.b16 %v79
    %v333 = vunpack.c.l.b16 %v80
    %v334 = vunpack.c.l.b16 %v81
    %v335 = vunpack.c.l.b16 %v82
    %v336 = vunpack.c.l.b16 %v83
    %v337 = vunpack.c.l.b16 %v84
    %v338 = vunpack.c.l.b16 %v85
    %v339 = vunpack.c.l.b16 %v86
    %v340 = vunpack.c.l.b16 %v87
    %v341 = vunpack.c.l.b16 %v88
    %v342 = vunpack.c.l.b16 %v89
    %v343 = vunpack.c.l.b16 %v90
    %v344 = vunpack.c.l.b16 %v91
    %v345 = vunpack.c.l.b16 %v92
    %v346 = vunpack.c.l.b16 %v93
    %v347 = vunpack.c.l.b16 %v94
    %v348 = vunpack.c.l.b16 %v95
    %v349 = vunpack.c.l.b16 %v96
    %v350 = vunpack.c.l.b16 %v97
    %v351 = vunpack.c.l.b16 %v98
    %v352 = vunpack.c.l.b16 %v99
    %v353 = vunpack.c.l.b16 %v100
    %v354 = vunpack.c.l.b16 %v101
    %v355 = vunpack.c.l.b16 %v102
    %v356 = vunpack.c.l.b16 %v103
    %v357 = vunpack.c.l.b16 %v104
    %v358 = vunpack.c.l.b16 %v105
    %v359 = vunpack.c.l.b16 %v106
    %v360 = vunpack.c.l.b16 %v107
    %v361 = vunpack.c.l.b16 %v108
    %v362 = vunpack.c.l.b16 %v109
    %v363 = vunpack.c.l.b16 %v110
    %v364 = vunpack.c.l.b16 %v111
    %v365 = vunpack.c.l.b16 %v112
    %v366 = vunpack.c.l.b16 %v113
    %v367 = vunpack.c.l.b16 %v114
    %v368 = vunpack.c.l.b16 %v115
    %v369 = vunpack.c.l.b16 %v116
    %v370 = vunpack.c.l.b16 %v117
    %v371 = vunpack.c.l.b16 %v118
    %v372 = vunpack.c.l.b16 %v119
    %v373 = vunpack.c.l.b16 %v120
    %v374 = vunpack.c.l.b16 %v121
    %v375 = vunpack.c.l.b16 %v122
    %v376 = vunpack.c.l.b16 %v123
    %v377 = vunpack.c.l.b16 %v124
    %v378 = vunpack.c.l.b16 %v125
    %v379 = vunpack.c.l.b16 %v126
    %v380 = vunpack.c.l.b16 %v127
    %v381 = vunpack.c.l.b16 %v128
    %v382 = vunpack.c.l.b16 %v129
    %v383 = vunpack.c.l.b16 %v130
    %v384 = vunpack.c.l.b16 %v131
    %v385 = vunpack.c.l.b16 %v132
    %v386 = vunpack.c.l.b16 %v133
    %v387 = vunpack.c.l.b16 %v134
    %v388 = vunpack.c.l.b16 %v135
    %v389 = vunpack.c.l.b16 %v136
    %v390 = vunpack.c.l.b16 %v137
    %v391 = vunpack.c.l.b16 %v138
    %v392 = vunpack.c.l.b16 %v139
    %v393 = vunpack.c.l.b16 %v140
    %v394 = vunpack.c.l.b16 %v141
    %v395 = vunpack.c.l.b16 %v142
    %v396 = vunpack.c.l.b16 %v143
    %v397 = vunpack.c.l.b16 %v144
    %v398 = vunpack.c.l.b16 %v145
    %v399 = vunpack.c.l.b16 %v146
    %v400 = vunpack.c.l.b16 %v147
    %v401 = vunpack.c.l.b16 %v148
    %v402 = vunpack.c.l.b16 %v149
    %v403 = vunpack.c.l.b16 %v150
    %v404 = vunpack.c.l.b16 %v151
    %v405 = vunpack.c.l.b16 %v152
    %v406 = vpack.c.b16 %v311, %v310
    %v407 = vpack.c.b16 %v313, %v312
    %v408 = vpack.c.b16 %v315, %v314
    %v409 = vpack.c.b16 %v317, %v316
    %v410 = vpack.c.b16 %v319, %v318
    %v411 = vpack.c.b16 %v321, %v320
    %v412 = vpack.c.b16 %v323, %v322
    %v413 = vpack.c.b16 %v325, %v324
    %v414 = vpack.c.b16 %v327, %v326
    %v415 = vpack.c.b16 %v329, %v328
    %v416 = vpack.c.b16 %v331, %v330
    %v417 = vpack.c.b16 %v333, %v332
    %v418 = vpack.c.b16 %v335, %v334
    %v419 = vpack.c.b16 %v337, %v336
    %v420 = vpack.c.b16 %v339, %v338
    %v421 = vpack.c.b16 %v341, %v340
    %v422 = vpack.c.b16 %v343, %v342
    %v423 = vpack.c.b16 %v345, %v344
    %v424 = vpack.c.b16 %v347, %v346
    %v425 = vpack.c.b16 %v349, %v348
    %v426 = vpack.c.b16 %v351, %v350
    %v427 = vpack.c.b16 %v353, %v352
    %v428 = vpack.c.b16 %v355, %v354
    %v429 = vpack.c.b16 %v357, %v356
    %v430 = vpack.c.b16 %v359, %v358
    %v431 = vpack.c.b16 %v361, %v360
    %v432 = vpack.c.b16 %v363, %v362
    %v433 = vpack.c.b16 %v365, %v364
    %v434 = vpack.c.b16 %v367, %v366
    %v435 = vpack.c.b16 %v369, %v368
    %v436 = vpack.c.b16 %v371, %v370
    %v437 = vpack.c.b16 %v373, %v372
    %v438 = vpack.c.b16 %v375, %v374
    %v439 = vpack.c.b16 %v377, %v376
    %v440 = vpack.c.b16 %v379, %v378
    %v441 = vpack.c.b16 %v381, %v380
    %v442 = vpack.c.b16 %v383, %v382
    %v443 = vpack.c.b16 %v385, %v384
    %v444 = vpack.c.b16 %v387, %v386
    %v445 = vpack.c.b16 %v389, %v388
    %v446 = vpack.c.b16 %v391, %v390
    %v447 = vpack.c.b16 %v393, %v392
    %v448 = vpack.c.b16 %v395, %v394
    %v449 = vpack.c.b16 %v397, %v396
    %v450 = vpack.c.b16 %v399, %v398
    %v451 = vpack.c.b16 %v401, %v400
    %v452 = vpack.c.b16 %v403, %v402
    %v453 = vpack.c.b16 %v405, %v404
    %502 = vmatprep.subr.bf16.mxu0 0
    %503 = vmatpush1.bf16.msra.mxu0 %v406
    %504 = vmatprep.subr.bf16.mxu0 0
    %505 = vmatpush1.bf16.msra.mxu0 %v407
    %506 = vmatprep.subr.bf16.mxu0 0
    %507 = vmatpush1.bf16.msra.mxu0 %v408
    %508 = vmatprep.subr.bf16.mxu0 0
    %509 = vmatpush1.bf16.msra.mxu0 %v409
    %510 = vmatprep.subr.bf16.mxu0 0
    %511 = vmatpush1.bf16.msra.mxu0 %v410
    %512 = vmatprep.subr.bf16.mxu0 0
    %513 = vmatpush1.bf16.msra.mxu0 %v411
    %514 = vmatprep.subr.bf16.mxu0 0
    %515 = vmatpush1.bf16.msra.mxu0 %v412
    %516 = vmatprep.subr.bf16.mxu0 0
    %517 = vmatpush1.bf16.msra.mxu0 %v413
    %518 = vmatprep.subr.bf16.mxu0 0
    %519 = vmatpush1.bf16.msra.mxu0 %v414
    %520 = vmatprep.subr.bf16.mxu0 0
    %521 = vmatpush1.bf16.msra.mxu0 %v415
    %522 = vmatprep.subr.bf16.mxu0 0
    %523 = vmatpush1.bf16.msra.mxu0 %v416
    %524 = vmatprep.subr.bf16.mxu0 0
    %525 = vmatpush1.bf16.msra.mxu0 %v417
    %526 = vmatprep.subr.bf16.mxu0 0
    %527 = vmatpush1.bf16.msra.mxu0 %v418
    %528 = vmatprep.subr.bf16.mxu0 0
    %529 = vmatpush1.bf16.msra.mxu0 %v419
    %530 = vmatprep.subr.bf16.mxu0 0
    %531 = vmatpush1.bf16.msra.mxu0 %v420
    %532 = vmatprep.subr.bf16.mxu0 0
    %533 = vmatpush1.bf16.msra.mxu0 %v421
    %534 = vmatprep.mubr.bf16.mxu0 %v198
    %535 = vmatmul.mubr.bf16.gmra.mrb[0].mxu0 %v184
    %v536 = vpop.f32.mrb[0].mxu0
    %v537 = vadd.f32 %v158, %v536
    %v538 = vpop.f32.mrb[0].mxu0
    %v539 = vpop.f32.mrb[0].mxu0
    %v540 = vpop.f32.mrb[0].mxu0
    %541 = vdwg.mxu0
    %542 = vmatprep.subr.bf16.mxu0 0
    %543 = vmatpush1.bf16.msra.mxu0 %v422
    %544 = vmatprep.subr.bf16.mxu0 0
    %545 = vmatpush1.bf16.msra.mxu0 %v423
    %546 = vmatprep.subr.bf16.mxu0 0
    %547 = vmatpush1.bf16.msra.mxu0 %v424
    %548 = vmatprep.subr.bf16.mxu0 0
    %549 = vmatpush1.bf16.msra.mxu0 %v425
    %550 = vmatprep.subr.bf16.mxu0 0
    %551 = vmatpush1.bf16.msra.mxu0 %v426
    %552 = vmatprep.subr.bf16.mxu0 0
    %553 = vmatpush1.bf16.msra.mxu0 %v427
    %554 = vmatprep.subr.bf16.mxu0 0
    %555 = vmatpush1.bf16.msra.mxu0 %v428
    %556 = vmatprep.subr.bf16.mxu0 0
    %557 = vmatpush1.bf16.msra.mxu0 %v429
    %558 = vmatprep.subr.bf16.mxu0 0
    %559 = vmatpush1.bf16.msra.mxu0 %v430
    %560 = vmatprep.subr.bf16.mxu0 0
    %561 = vmatpush1.bf16.msra.mxu0 %v431
    %562 = vmatprep.subr.bf16.mxu0 0
    %563 = vmatpush1.bf16.msra.mxu0 %v432
    %564 = vmatprep.subr.bf16.mxu0 0
    %565 = vmatpush1.bf16.msra.mxu0 %v433
    %566 = vmatprep.subr.bf16.mxu0 0
    %567 = vmatpush1.bf16.msra.mxu0 %v434
    %568 = vmatprep.subr.bf16.mxu0 0
    %569 = vmatpush1.bf16.msra.mxu0 %v435
    %570 = vmatprep.subr.bf16.mxu0 0
    %571 = vmatpush1.bf16.msra.mxu0 %v436
    %572 = vmatprep.subr.bf16.mxu0 0
    %573 = vmatpush1.bf16.msra.mxu0 %v437
    %574 = vmatprep.mubr.bf16.mxu0 %v207
    %575 = vmatmul.mubr.bf16.gmra.mrb[0].mxu0 %v206
    %v576 = vpop.f32.mrb[0].mxu0
    %v577 = vadd.f32 %v537, %v576
    %v578 = vpop.f32.mrb[0].mxu0
    %v579 = vpop.f32.mrb[0].mxu0
    %v580 = vpop.f32.mrb[0].mxu0
    %581 = vdwg.mxu0
    %582 = vmatprep.subr.bf16.mxu0 0
    %583 = vmatpush1.bf16.msra.mxu0 %v438
    %584 = vmatprep.subr.bf16.mxu0 0
    %585 = vmatpush1.bf16.msra.mxu0 %v439
    %586 = vmatprep.subr.bf16.mxu0 0
    %587 = vmatpush1.bf16.msra.mxu0 %v440
    %588 = vmatprep.subr.bf16.mxu0 0
    %589 = vmatpush1.bf16.msra.mxu0 %v441
    %590 = vmatprep.subr.bf16.mxu0 0
    %591 = vmatpush1.bf16.msra.mxu0 %v442
    %592 = vmatprep.subr.bf16.mxu0 0
    %593 = vmatpush1.bf16.msra.mxu0 %v443
    %594 = vmatprep.subr.bf16.mxu0 0
    %595 = vmatpush1.bf16.msra.mxu0 %v444
    %596 = vmatprep.subr.bf16.mxu0 0
    %597 = vmatpush1.bf16.msra.mxu0 %v445
    %598 = vmatprep.subr.bf16.mxu0 0
    %599 = vmatpush1.bf16.msra.mxu0 %v446
    %600 = vmatprep.subr.bf16.mxu0 0
    %601 = vmatpush1.bf16.msra.mxu0 %v447
    %602 = vmatprep.subr.bf16.mxu0 0
    %603 = vmatpush1.bf16.msra.mxu0 %v448
    %604 = vmatprep.subr.bf16.mxu0 0
    %605 = vmatpush1.bf16.msra.mxu0 %v449
    %606 = vmatprep.subr.bf16.mxu0 0
    %607 = vmatpush1.bf16.msra.mxu0 %v450
    %608 = vmatprep.subr.bf16.mxu0 0
    %609 = vmatpush1.bf16.msra.mxu0 %v451
    %610 = vmatprep.subr.bf16.mxu0 0
    %611 = vmatpush1.bf16.msra.mxu0 %v452
    %612 = vmatprep.subr.bf16.mxu0 0
    %613 = vmatpush1.bf16.msra.mxu0 %v453
    %614 = vmatprep.mubr.bf16.mxu0 %v205
    %615 = vmatmul.mubr.bf16.gmra.mrb[0].mxu0 %v191
    %v616 = vpop.f32.mrb[0].mxu0
    %v617 = vadd.f32 %v577, %v616
    %v618 = vpop.f32.mrb[0].mxu0
    %v619 = vpop.f32.mrb[0].mxu0
    %v620 = vpop.f32.mrb[0].mxu0
    %621 = vdwg.mxu0
    %v622 = vmax.f32 %v617, 0.0
    %v623 = vld [vmem:[#allocation4] sm:$0x1]
    %v624 = vld [vmem:[#allocation6] sm:$0x1]
    %vm625 = vcmask 254976
    %v626 = vsel %vm625, %v622, 0.0
    %627 = vadd.xlane.f32.xlu0 %v626
    %v628 = vpop.xlane.xlu0 %627
    %v629 = vrcp.pop 32.0
    %v630 = vmul.f32 %v628, %v629
    %v631 = vsub.f32 %v622, %v630
    %v632 = vmul.f32 %v631, %v631
    %v633 = vsel %vm625, %v632, 0.0
    %634 = vadd.xlane.f32.xlu0 %v633
    %v635 = vpop.xlane.xlu0 %634
    %v636 = vmul.f32 %v635, %v629
    %v637 = vadd.f32 %v636, 1e-05
    %v638 = vrsqrt.pop %v637
    %v639 = vmul.f32 %v631, %v638
    %v641 = vlaneseq
    %v642 = vshrl.u32 %v641, 7
    %v643 = vsub.s32 0, %v642
    %v644 = vrot.slane %v623, %v643
    %v646 = vmul.f32 %v639, %v644
    %v648 = vlaneseq
    %v649 = vshrl.u32 %v648, 7
    %v650 = vsub.s32 0, %v649
    %v651 = vrot.slane %v624, %v650
    %v653 = vadd.f32 %v646, %v651
    %654 = vst.msk [vmem:[%s5] sm:$0x3] %vm625, %v653
    // Predicated region
    $region34: #{aotn_forward.30} parent=1 // pred_check
      _
    $region35: #{aotn_forward.30} parent=1 // pred_check_branch
      %656 = sbr.rel (0) target = $region37
    $region36: #{aotn_forward.30} parent=1 // pred_region
      _
    $region37: #{aotn_forward.30} parent=1 // pred_fallthru
      _
    // Predicated region
    $region38: #{aotn_forward.30} parent=1 // pred_check
      _
    $region39: #{aotn_forward.30} parent=1 // pred_check_branch
      %658 = sbr.rel (0) target = $region41
    $region40: #{aotn_forward.30} parent=1 // pred_region
      _
    $region41: #{aotn_forward.30} parent=1 // pred_fallthru
      _
    %659 = vsyncpa [#allocation3], 1
    %660 = vsyncpa [#allocation5], 1

// kernel: aotn_forward.32
$region0: #{aotn_forward.32}
  #allocation0 [shape = 'u32[]', space=smem, size = 0x4, offset = 0x4, fixed_abs, tag = 'smem constant byte address 0x4 - core index']
  #allocation1 [shape = 'u32[144,128]{1,0:T(1,128)}', space=vmem, size = 0x12000, scoped, tag = 'internal scratch']
  %s0 = inlined_call_operand.vmem [shape: bf16[3,4,32], index: 0, kind: input, shape index: {}]
  %s1 = inlined_call_operand.vmem [shape: bf16[3,32,32], index: 1, kind: input, shape index: {}]
  %s2 = inlined_call_operand.vmem [shape: f32[3,1,32], index: 2, kind: input, shape index: {}]
  %s3 = inlined_call_operand.vmem [shape: f32[3,1,32], index: 3, kind: input, shape index: {}]
  %s4 = inlined_call_operand.vmem [shape: f32[3,1,32], index: 4, kind: input, shape index: {}]
  %s5 = inlined_call_operand.vmem [shape: f32[3,4,32], index: 5, kind: output, shape index: {}]
  %s6 = sld [smem:[#allocation0]]
  $region53: #{aotn_forward.32} parent=0
    _
  %s8 = ssub.s32 1, %s6
  %s9 = scalar_select 0, %s8, %s6
  loop: start=0, step=1, limit=5
  $region2: #{aotn_forward.32} parent=0 // loop_pre_header
    _
  $region3: #{aotn_forward.32} parent=0 // loop_header
    %s11 = sphi 0, %s15
    %p12 = scmp.ge.s32.totalorder %s11, 5
    %s21 = sphi 0, %s23
    %s24 = sphi 0, %s21
    %s25 = sphi 0, %s24
    %s41 = sphi 0, %s25
    %s47 = sphi 0, %s49
    %s50 = sphi 0, %s47
    %s51 = sphi 0, %s50
    %s67 = sphi 0, %s51
    %s73 = sphi 0, %s75
    %s76 = sphi 0, %s73
    %s77 = sphi 0, %s76
    %s93 = sphi 0, %s77
    %s99 = sphi 0, %s101
    %s102 = sphi 0, %s99
    %s103 = sphi 0, %s102
    %s119 = sphi 0, %s103
    %s125 = sphi 0, %s127
    %s128 = sphi 0, %s125
    %s129 = sphi 0, %s128
    %s145 = sphi 0, %s129
    %s151 = sphi 0, %s153
    %s154 = sphi 0, %s151
    %s155 = sphi 0, %s154
    %s171 = sphi 0, %s155
  $region4: #{aotn_forward.32} parent=0 // loop_header_branch
    %14 = sbr.rel (%p12) target = $region8
  $region5: #{aotn_forward.32} parent=0 // loop_body
    %s16 = ssub.s32 %s11, 1
    %s17 = ssub.s32 %s11, 2
    %s18 = sadd.s32 %s11, 1
    %s19 = ssub.s32 %s11, %s18
    %p20 = scmp.eq.s32.totalorder %s19, 0
    %s22 = sadd.s32 %s21, 1
    %s23 = scalar_select %p20, %s21, %s22
    %p26 = pneg %p20
    %p27 = scmp.eq.s32.totalorder %s11, 2
    %p28 = por %p26, %p27
    %p29 = scmp.ne.s32.totalorder %s21, %s24
    %p30 = scmp.eq.s32.totalorder %s11, 0
    %p31 = por %p29, %p30
    %p32 = scmp.ne.s32.totalorder %s21, %s24
    %p33 = scmp.eq.s32.totalorder %s16, 2
    %p34 = por %p32, %p33
    %p35 = scmp.ne.s32.totalorder %s24, %s25
    %p36 = scmp.eq.s32.totalorder %s16, 0
    %p37 = por %p35, %p36
    %p38 = scmp.ne.s32.totalorder %s24, %s25
    %p39 = scmp.eq.s32.totalorder %s17, 2
    %p40 = por %p38, %p39
    %p42 = scmp.ne.s32.totalorder %s25, %s41
    %p43 = scmp.eq.s32.totalorder %s17, 0
    %p44 = por %p42, %p43
    %s45 = ssub.s32 %s11, %s18
    %p46 = scmp.eq.s32.totalorder %s45, 0
    %s48 = sadd.s32 %s47, 1
    %s49 = scalar_select %p46, %s47, %s48
    %p52 = pneg %p46
    %p53 = scmp.eq.s32.totalorder %s11, 2
    %p54 = por %p52, %p53
    %p55 = scmp.ne.s32.totalorder %s47, %s50
    %p56 = scmp.eq.s32.totalorder %s11, 0
    %p57 = por %p55, %p56
    %p58 = scmp.ne.s32.totalorder %s47, %s50
    %p59 = scmp.eq.s32.totalorder %s16, 2
    %p60 = por %p58, %p59
    %p61 = scmp.ne.s32.totalorder %s50, %s51
    %p62 = scmp.eq.s32.totalorder %s16, 0
    %p63 = por %p61, %p62
    %p64 = scmp.ne.s32.totalorder %s50, %s51
    %p65 = scmp.eq.s32.totalorder %s17, 2
    %p66 = por %p64, %p65
    %p68 = scmp.ne.s32.totalorder %s51, %s67
    %p69 = scmp.eq.s32.totalorder %s17, 0
    %p70 = por %p68, %p69
    %s71 = ssub.s32 %s11, %s18
    %p72 = scmp.eq.s32.totalorder %s71, 0
    %s74 = sadd.s32 %s73, 1
    %s75 = scalar_select %p72, %s73, %s74
    %p78 = pneg %p72
    %p79 = scmp.eq.s32.totalorder %s11, 2
    %p80 = por %p78, %p79
    %p81 = scmp.ne.s32.totalorder %s73, %s76
    %p82 = scmp.eq.s32.totalorder %s11, 0
    %p83 = por %p81, %p82
    %p84 = scmp.ne.s32.totalorder %s73, %s76
    %p85 = scmp.eq.s32.totalorder %s16, 2
    %p86 = por %p84, %p85
    %p87 = scmp.ne.s32.totalorder %s76, %s77
    %p88 = scmp.eq.s32.totalorder %s16, 0
    %p89 = por %p87, %p88
    %p90 = scmp.ne.s32.totalorder %s76, %s77
    %p91 = scmp.eq.s32.totalorder %s17, 2
    %p92 = por %p90, %p91
    %p94 = scmp.ne.s32.totalorder %s77, %s93
    %p95 = scmp.eq.s32.totalorder %s17, 0
    %p96 = por %p94, %p95
    %s97 = ssub.s32 %s11, %s18
    %p98 = scmp.eq.s32.totalorder %s97, 0
    %s100 = sadd.s32 %s99, 1
    %s101 = scalar_select %p98, %s99, %s100
    %p104 = pneg %p98
    %p105 = scmp.eq.s32.totalorder %s11, 2
    %p106 = por %p104, %p105
    %p107 = scmp.ne.s32.totalorder %s99, %s102
    %p108 = scmp.eq.s32.totalorder %s11, 0
    %p109 = por %p107, %p108
    %p110 = scmp.ne.s32.totalorder %s99, %s102
    %p111 = scmp.eq.s32.totalorder %s16, 2
    %p112 = por %p110, %p111
    %p113 = scmp.ne.s32.totalorder %s102, %s103
    %p114 = scmp.eq.s32.totalorder %s16, 0
    %p115 = por %p113, %p114
    %p116 = scmp.ne.s32.totalorder %s102, %s103
    %p117 = scmp.eq.s32.totalorder %s17, 2
    %p118 = por %p116, %p117
    %p120 = scmp.ne.s32.totalorder %s103, %s119
    %p121 = scmp.eq.s32.totalorder %s17, 0
    %p122 = por %p120, %p121
    %s123 = ssub.s32 %s11, %s18
    %p124 = scmp.eq.s32.totalorder %s123, 0
    %s126 = sadd.s32 %s125, 1
    %s127 = scalar_select %p124, %s125, %s126
    %p130 = pneg %p124
    %p131 = scmp.eq.s32.totalorder %s11, 2
    %p132 = por %p130, %p131
    %p133 = scmp.ne.s32.totalorder %s125, %s128
    %p134 = scmp.eq.s32.totalorder %s11, 0
    %p135 = por %p133, %p134
    %p136 = scmp.ne.s32.totalorder %s125, %s128
    %p137 = scmp.eq.s32.totalorder %s16, 2
    %p138 = por %p136, %p137
    %p139 = scmp.ne.s32.totalorder %s128, %s129
    %p140 = scmp.eq.s32.totalorder %s16, 0
    %p141 = por %p139, %p140
    %p142 = scmp.ne.s32.totalorder %s128, %s129
    %p143 = scmp.eq.s32.totalorder %s17, 2
    %p144 = por %p142, %p143
    %p146 = scmp.ne.s32.totalorder %s129, %s145
    %p147 = scmp.eq.s32.totalorder %s17, 0
    %p148 = por %p146, %p147
    %s149 = ssub.s32 %s11, %s18
    %p150 = scmp.eq.s32.totalorder %s149, 0
    %s152 = sadd.s32 %s151, 1
    %s153 = scalar_select %p150, %s151, %s152
    %p156 = pneg %p150
    %p157 = scmp.eq.s32.totalorder %s11, 2
    %p158 = por %p156, %p157
    %p159 = scmp.ne.s32.totalorder %s151, %s154
    %p160 = scmp.eq.s32.totalorder %s11, 0
    %p161 = por %p159, %p160
    %p162 = scmp.ne.s32.totalorder %s151, %s154
    %p163 = scmp.eq.s32.totalorder %s16, 2
    %p164 = por %p162, %p163
    %p165 = scmp.ne.s32.totalorder %s154, %s155
    %p166 = scmp.eq.s32.totalorder %s16, 0
    %p167 = por %p165, %p166
    %p168 = scmp.ne.s32.totalorder %s154, %s155
    %p169 = scmp.eq.s32.totalorder %s17, 2
    %p170 = por %p168, %p169
    %p172 = scmp.ne.s32.totalorder %s155, %s171
    %p173 = scmp.eq.s32.totalorder %s17, 0
    %p174 = por %p172, %p173
    %p175 = scmp.le.s32.totalorder 1, %s11
    %p176 = scmp.lt.s32.totalorder %s11, 4
    %p177 = pnand %p175, %p176
    %p178 = pneg %p177
    // Predicated region
    $region9: #{aotn_forward.32} parent=5 // pred_check
      _
    $region10: #{aotn_forward.32} parent=5 // pred_check_branch
      %180 = sbr.rel (%p177) target = $region12
    $region11: #{aotn_forward.32} parent=5 // pred_region
      %s181 = ssub.s32 %s11, 1
    $region12: #{aotn_forward.32} parent=5 // pred_fallthru
      _
    %p182 = scmp.lt.s32.totalorder %s11, 3
    // Predicated region
    $region13: #{aotn_forward.32} parent=5 // pred_check
      %p183 = pneg %p182
    $region14: #{aotn_forward.32} parent=5 // pred_check_branch
      %185 = sbr.rel (%p183) target = $region16
    $region15: #{aotn_forward.32} parent=5 // pred_region
      // Predicated region
      $region17: #{aotn_forward.32} parent=15 // pred_check
        %p186 = pneg %p31
      $region18: #{aotn_forward.32} parent=15 // pred_check_branch
        %188 = sbr.rel (%p186) target = $region20
      $region19: #{aotn_forward.32} parent=15 // pred_region
        %p189 = scmp.lt.s32.totalorder %s11, 2
        %s190 = scalar_select %p189, %s11, 2
        %s191 = smul.addr %s190, 2
        %s192 = scalar_lea.vmem %s0, %s191
      $region20: #{aotn_forward.32} parent=15 // pred_fallthru
        _
      // Predicated region
      $region21: #{aotn_forward.32} parent=15 // pred_check
        %p193 = pneg %p57
      $region22: #{aotn_forward.32} parent=15 // pred_check_branch
        %195 = sbr.rel (%p193) target = $region24
      $region23: #{aotn_forward.32} parent=15 // pred_region
        %p196 = scmp.lt.s32.totalorder %s11, 2
        %s197 = scalar_select %p196, %s11, 2
        %s198 = smul.addr %s197, 4
        %s199 = smul.addr %s198, 4
        %s200 = scalar_lea.vmem %s1, %s199
      $region24: #{aotn_forward.32} parent=15 // pred_fallthru
        _
      // Predicated region
      $region25: #{aotn_forward.32} parent=15 // pred_check
        %p201 = pneg %p83
      $region26: #{aotn_forward.32} parent=15 // pred_check_branch
        %203 = sbr.rel (%p201) target = $region28
      $region27: #{aotn_forward.32} parent=15 // pred_region
        %p204 = scmp.lt.s32.totalorder %s11, 2
        %s205 = scalar_select %p204, %s11, 2
        %s206 = scalar_lea.vmem %s2, %s205
      $region28: #{aotn_forward.32} parent=15 // pred_fallthru
        _
      // Predicated region
      $region29: #{aotn_forward.32} parent=15 // pred_check
        %p207 = pneg %p109
      $region30: #{aotn_forward.32} parent=15 // pred_check_branch
        %209 = sbr.rel (%p207) target = $region32
      $region31: #{aotn_forward.32} parent=15 // pred_region
        %p210 = scmp.lt.s32.totalorder %s11, 2
        %s211 = scalar_select %p210, %s11, 2
        %s212 = scalar_lea.vmem %s3, %s211
      $region32: #{aotn_forward.32} parent=15 // pred_fallthru
        _
      // Predicated region
      $region33: #{aotn_forward.32} parent=15 // pred_check
        %p213 = pneg %p135
      $region34: #{aotn_forward.32} parent=15 // pred_check_branch
        %215 = sbr.rel (%p213) target = $region36
      $region35: #{aotn_forward.32} parent=15 // pred_region
        %p216 = scmp.lt.s32.totalorder %s11, 2
        %s217 = scalar_select %p216, %s11, 2
        %s218 = scalar_lea.vmem %s4, %s217
      $region36: #{aotn_forward.32} parent=15 // pred_fallthru
        _
    $region16: #{aotn_forward.32} parent=5 // pred_fallthru
      _
    %p219 = scmp.le.s32.totalorder 1, %s11
    %p220 = scmp.lt.s32.totalorder %s11, 4
    %p221 = pnand %p219, %p220
    %p222 = pneg %p221
    // Predicated region
    $region37: #{aotn_forward.32} parent=5 // pred_check
      _
    $region38: #{aotn_forward.32} parent=5 // pred_check_branch
      %224 = sbr.rel (%p221) target = $region40
    $region39: #{aotn_forward.32} parent=5 // pred_region
      %s225 = ssub.s32 %s11, 1
      %p226 = scmp.lt.s32.totalorder %s16, 2
      %s227 = scalar_select %p226, %s16, 2
      %s228 = smul.addr %s227, 2
      %s229 = scalar_lea.vmem %s0, %s228
      %p230 = pneg %p37
      %p231 = pneg %p34
      %p232 = scmp.lt.s32.totalorder %s16, 2
      %s233 = scalar_select %p232, %s16, 2
      %s234 = smul.addr %s233, 4
      %s235 = smul.addr %s234, 4
      %s236 = scalar_lea.vmem %s1, %s235
      %p237 = pneg %p63
      %p238 = pneg %p60
      %p239 = scmp.lt.s32.totalorder %s16, 2
      %s240 = scalar_select %p239, %s16, 2
      %s241 = scalar_lea.vmem %s2, %s240
      %p242 = pneg %p89
      %p243 = pneg %p86
      %p244 = scmp.lt.s32.totalorder %s16, 2
      %s245 = scalar_select %p244, %s16, 2
      %s246 = scalar_lea.vmem %s3, %s245
      %p247 = pneg %p115
      %p248 = pneg %p112
      %p249 = scmp.lt.s32.totalorder %s16, 2
      %s250 = scalar_select %p249, %s16, 2
      %s251 = scalar_lea.vmem %s4, %s250
      %p252 = pneg %p141
      %p253 = pneg %p138
      %p254 = pneg %p167
      %p255 = pneg %p164
      %p256 = scmp.lt.s32.totalorder %s16, 2
      %s257 = scalar_select %p256, %s16, 2
      %s258 = smul.addr %s257, 4
      %s259 = scalar_lea.vmem %s5, %s258
      %p260 = scmp.lt.s32.totalorder %s16, 2
      %s261 = scalar_select %p260, %s16, 2
      %s262 = smul.addr %s261, 2
      %s263 = scalar_lea.vmem %s0, %s262
      %p264 = scmp.lt.s32.totalorder %s16, 2
      %s265 = scalar_select %p264, %s16, 2
      %s266 = smul.addr %s265, 4
      %s267 = smul.addr %s266, 4
      %s268 = scalar_lea.vmem %s1, %s267
      %p269 = scmp.lt.s32.totalorder %s16, 2
      %s270 = scalar_select %p269, %s16, 2
      %s271 = scalar_lea.vmem %s2, %s270
      %p272 = scmp.lt.s32.totalorder %s16, 2
      %s273 = scalar_select %p272, %s16, 2
      %s274 = scalar_lea.vmem %s3, %s273
      %p275 = scmp.lt.s32.totalorder %s16, 2
      %s276 = scalar_select %p275, %s16, 2
      %s277 = scalar_lea.vmem %s4, %s276
      %p278 = scmp.lt.s32.totalorder %s16, 2
      %s279 = scalar_select %p278, %s16, 2
      %s280 = smul.addr %s279, 4
      %s281 = scalar_lea.vmem %s5, %s280
      %v283 = vld [vmem:[%s263] sm:$0x3]
      %v284 = vld [vmem:[%s268] sm:$0xf]
      %v285 = vld [vmem:[%s268 + $0x4] sm:$0xf]
      %v286 = vld [vmem:[%s268 + $0x8] sm:$0xf]
      %v287 = vld [vmem:[%s268 + $0xc] sm:$0xf]
      %v288 = vld [vmem:[%s271] sm:$0x1]
      %v290 = vlaneseq
      %v291 = vshrl.u32 %v290, 7
      %v292 = vsub.s32 0, %v291
      %v293 = vrot.slane %v288, %v292
      %v299 = vunpack.c.l.b16 %v284
      %v300 = vunpack.c.l.b16 %v285
      %v301 = vunpack.c.l.b16 %v286
      %v302 = vunpack.c.l.b16 %v287
      %v303 = vpack.c.b16 %v300, %v299
      %v304 = vpack.c.b16 %v302, %v301
      %vm307 = vcmask 261120
      %v309 = vsel %vm307, %v283, 0
      %311 = vmatprep.subr.bf16.mxu0 0
      %312 = vmatpush1.bf16.msra.mxu0 %v303
      %313 = vmatprep.subr.bf16.mxu0 0
      %314 = vmatpush1.bf16.msra.mxu0 %v304
      %315 = vmatprep.subr.bf16.mxu0 0
      %316 = vmatpush1.bf16.msra.mxu0 0
      %317 = vmatprep.subr.bf16.mxu0 0
      %318 = vmatpush1.bf16.msra.mxu0 0
      %319 = vmatprep.subr.bf16.mxu0 0
      %320 = vmatpush1.bf16.msra.mxu0 0
      %321 = vmatprep.subr.bf16.mxu0 0
      %322 = vmatpush1.bf16.msra.mxu0 0
      %323 = vmatprep.subr.bf16.mxu0 0
      %324 = vmatpush1.bf16.msra.mxu0 0
      %325 = vmatprep.subr.bf16.mxu0 0
      %326 = vmatpush1.bf16.msra.mxu0 0
      %327 = vmatprep.subr.bf16.mxu0 0
      %328 = vmatpush1.bf16.msra.mxu0 0
      %329 = vmatprep.subr.bf16.mxu0 0
      %330 = vmatpush1.bf16.msra.mxu0 0
      %331 = vmatprep.subr.bf16.mxu0 0
      %332 = vmatpush1.bf16.msra.mxu0 0
      %333 = vmatprep.subr.bf16.mxu0 0
      %334 = vmatpush1.bf16.msra.mxu0 0
      %335 = vmatprep.subr.bf16.mxu0 0
      %336 = vmatpush1.bf16.msra.mxu0 0
      %337 = vmatprep.subr.bf16.mxu0 0
      %338 = vmatpush1.bf16.msra.mxu0 0
      %339 = vmatprep.subr.bf16.mxu0 0
      %340 = vmatpush1.bf16.msra.mxu0 0
      %341 = vmatprep.subr.bf16.mxu0 0
      %342 = vmatpush1.bf16.msra.mxu0 0
      %343 = vmatprep.mubr.bf16.mxu0 0
      %344 = vmatmul.mubr.bf16.gmra.mrb[0].mxu0 %v309
      %v345 = vpop.f32.mrb[0].mxu0
      %v346 = vadd.f32 %v293, %v345
      %v347 = vpop.f32.mrb[0].mxu0
      %v348 = vpop.f32.mrb[0].mxu0
      %v349 = vpop.f32.mrb[0].mxu0
      %350 = vdwg.mxu0
      %v351 = vmax.f32 %v346, 0.0
      %v352 = vld [vmem:[%s274] sm:$0x1]
      %v353 = vld [vmem:[%s277] sm:$0x1]
      %vm354 = vcmask 257024
      %v355 = vsel %vm354, %v351, 0.0
      %356 = vadd.xlane.f32.xlu0 %v355
      %v357 = vpop.xlane.xlu0 %356
      %v358 = vrcp.pop 32.0
      %v359 = vmul.f32 %v357, %v358
      %v360 = vsub.f32 %v351, %v359
      %v361 = vmul.f32 %v360, %v360
      %v362 = vsel %vm354, %v361, 0.0
      %363 = vadd.xlane.f32.xlu0 %v362
      %v364 = vpop.xlane.xlu0 %363
      %v365 = vmul.f32 %v364, %v358
      %v366 = vadd.f32 %v365, 1e-05
      %v367 = vrsqrt.pop %v366
      %v368 = vmul.f32 %v360, %v367
      %v370 = vlaneseq
      %v371 = vshrl.u32 %v370, 7
      %v372 = vsub.s32 0, %v371
      %v373 = vrot.slane %v352, %v372
      %v375 = vmul.f32 %v368, %v373
      %v377 = vlaneseq
      %v378 = vshrl.u32 %v377, 7
      %v379 = vsub.s32 0, %v378
      %v380 = vrot.slane %v353, %v379
      %v382 = vadd.f32 %v375, %v380
      %383 = vst.msk [vmem:[%s281] sm:$0xf] %vm354, %v382
      %p384 = scmp.lt.s32.totalorder %s16, 2
      %s385 = scalar_select %p384, %s16, 2
      %s386 = smul.addr %s385, 4
      %s387 = scalar_lea.vmem %s5, %s386
      // Predicated region
      $region41: #{aotn_forward.32} parent=39 // pred_check
        %p388 = pneg %p164
      $region42: #{aotn_forward.32} parent=39 // pred_check_branch
        %390 = sbr.rel (%p388) target = $region44
      $region43: #{aotn_forward.32} parent=39 // pred_region
        _
      $region44: #{aotn_forward.32} parent=39 // pred_fallthru
        _
    $region40: #{aotn_forward.32} parent=5 // pred_fallthru
      _
    %p391 = scmp.le.s32.totalorder 2, %s11
    // Predicated region
    $region45: #{aotn_forward.32} parent=5 // pred_check
      %p392 = pneg %p391
    $region46: #{aotn_forward.32} parent=5 // pred_check_branch
      %394 = sbr.rel (%p392) target = $region48
    $region47: #{aotn_forward.32} parent=5 // pred_region
      %s395 = ssub.s32 %s11, 2
      // Predicated region
      $region49: #{aotn_forward.32} parent=47 // pred_check
        %p396 = pneg %p170
      $region50: #{aotn_forward.32} parent=47 // pred_check_branch
        %398 = sbr.rel (%p396) target = $region52
      $region51: #{aotn_forward.32} parent=47 // pred_region
        %p399 = scmp.lt.s32.totalorder %s17, 2
        %s400 = scalar_select %p399, %s17, 2
        %s401 = smul.addr %s400, 4
        %s402 = scalar_lea.vmem %s5, %s401
      $region52: #{aotn_forward.32} parent=47 // pred_fallthru
        _
    $region48: #{aotn_forward.32} parent=5 // pred_fallthru
      _
  $region6: #{aotn_forward.32} parent=0 // loop_footer
    %s15 = sadd.s32 1, %s11
  $region7: #{aotn_forward.32} parent=0 // loop_footer_branch
    %10 = sbr.rel target = $region3
  $region8: #{aotn_forward.32} parent=0 // loop_exit
    _

// kernel: aotn_forward.27
$region0: #{aotn_forward.27}
  #allocation0 [shape = 'u32[]', space=smem, size = 0x4, offset = 0x4, fixed_abs, tag = 'smem constant byte address 0x4 - core index']
  #allocation1 [shape = 'u32[144,128]{1,0:T(1,128)}', space=vmem, size = 0x12000, scoped, tag = 'internal scratch']
  %s0 = inlined_call_operand.vmem [shape: bf16[2,4,64], index: 0, kind: input, shape index: {}]
  %s1 = inlined_call_operand.vmem [shape: bf16[2,64,64], index: 1, kind: input, shape index: {}]
  %s2 = inlined_call_operand.vmem [shape: f32[2,1,64], index: 2, kind: input, shape index: {}]
  %s3 = inlined_call_operand.vmem [shape: f32[2,1,64], index: 3, kind: input, shape index: {}]
  %s4 = inlined_call_operand.vmem [shape: f32[2,1,64], index: 4, kind: input, shape index: {}]
  %s5 = inlined_call_operand.vmem [shape: f32[2,4,64], index: 5, kind: output, shape index: {}]
  %s6 = sld [smem:[#allocation0]]
  $region53: #{aotn_forward.27} parent=0
    _
  %s8 = ssub.s32 1, %s6
  %s9 = scalar_select 0, %s8, %s6
  loop: start=0, step=1, limit=4
  $region2: #{aotn_forward.27} parent=0 // loop_pre_header
    _
  $region3: #{aotn_forward.27} parent=0 // loop_header
    %s11 = sphi 0, %s15
    %p12 = scmp.ge.s32.totalorder %s11, 4
    %s21 = sphi 0, %s23
    %s24 = sphi 0, %s21
    %s25 = sphi 0, %s24
    %s41 = sphi 0, %s25
    %s47 = sphi 0, %s49
    %s50 = sphi 0, %s47
    %s51 = sphi 0, %s50
    %s67 = sphi 0, %s51
    %s73 = sphi 0, %s75
    %s76 = sphi 0, %s73
    %s77 = sphi 0, %s76
    %s93 = sphi 0, %s77
    %s99 = sphi 0, %s101
    %s102 = sphi 0, %s99
    %s103 = sphi 0, %s102
    %s119 = sphi 0, %s103
    %s125 = sphi 0, %s127
    %s128 = sphi 0, %s125
    %s129 = sphi 0, %s128
    %s145 = sphi 0, %s129
    %s151 = sphi 0, %s153
    %s154 = sphi 0, %s151
    %s155 = sphi 0, %s154
    %s171 = sphi 0, %s155
  $region4: #{aotn_forward.27} parent=0 // loop_header_branch
    %14 = sbr.rel (%p12) target = $region8
  $region5: #{aotn_forward.27} parent=0 // loop_body
    %s16 = ssub.s32 %s11, 1
    %s17 = ssub.s32 %s11, 2
    %s18 = sadd.s32 %s11, 1
    %s19 = ssub.s32 %s11, %s18
    %p20 = scmp.eq.s32.totalorder %s19, 0
    %s22 = sadd.s32 %s21, 1
    %s23 = scalar_select %p20, %s21, %s22
    %p26 = pneg %p20
    %p27 = scmp.eq.s32.totalorder %s11, 1
    %p28 = por %p26, %p27
    %p29 = scmp.ne.s32.totalorder %s21, %s24
    %p30 = scmp.eq.s32.totalorder %s11, 0
    %p31 = por %p29, %p30
    %p32 = scmp.ne.s32.totalorder %s21, %s24
    %p33 = scmp.eq.s32.totalorder %s16, 1
    %p34 = por %p32, %p33
    %p35 = scmp.ne.s32.totalorder %s24, %s25
    %p36 = scmp.eq.s32.totalorder %s16, 0
    %p37 = por %p35, %p36
    %p38 = scmp.ne.s32.totalorder %s24, %s25
    %p39 = scmp.eq.s32.totalorder %s17, 1
    %p40 = por %p38, %p39
    %p42 = scmp.ne.s32.totalorder %s25, %s41
    %p43 = scmp.eq.s32.totalorder %s17, 0
    %p44 = por %p42, %p43
    %s45 = ssub.s32 %s11, %s18
    %p46 = scmp.eq.s32.totalorder %s45, 0
    %s48 = sadd.s32 %s47, 1
    %s49 = scalar_select %p46, %s47, %s48
    %p52 = pneg %p46
    %p53 = scmp.eq.s32.totalorder %s11, 1
    %p54 = por %p52, %p53
    %p55 = scmp.ne.s32.totalorder %s47, %s50
    %p56 = scmp.eq.s32.totalorder %s11, 0
    %p57 = por %p55, %p56
    %p58 = scmp.ne.s32.totalorder %s47, %s50
    %p59 = scmp.eq.s32.totalorder %s16, 1
    %p60 = por %p58, %p59
    %p61 = scmp.ne.s32.totalorder %s50, %s51
    %p62 = scmp.eq.s32.totalorder %s16, 0
    %p63 = por %p61, %p62
    %p64 = scmp.ne.s32.totalorder %s50, %s51
    %p65 = scmp.eq.s32.totalorder %s17, 1
    %p66 = por %p64, %p65
    %p68 = scmp.ne.s32.totalorder %s51, %s67
    %p69 = scmp.eq.s32.totalorder %s17, 0
    %p70 = por %p68, %p69
    %s71 = ssub.s32 %s11, %s18
    %p72 = scmp.eq.s32.totalorder %s71, 0
    %s74 = sadd.s32 %s73, 1
    %s75 = scalar_select %p72, %s73, %s74
    %p78 = pneg %p72
    %p79 = scmp.eq.s32.totalorder %s11, 1
    %p80 = por %p78, %p79
    %p81 = scmp.ne.s32.totalorder %s73, %s76
    %p82 = scmp.eq.s32.totalorder %s11, 0
    %p83 = por %p81, %p82
    %p84 = scmp.ne.s32.totalorder %s73, %s76
    %p85 = scmp.eq.s32.totalorder %s16, 1
    %p86 = por %p84, %p85
    %p87 = scmp.ne.s32.totalorder %s76, %s77
    %p88 = scmp.eq.s32.totalorder %s16, 0
    %p89 = por %p87, %p88
    %p90 = scmp.ne.s32.totalorder %s76, %s77
    %p91 = scmp.eq.s32.totalorder %s17, 1
    %p92 = por %p90, %p91
    %p94 = scmp.ne.s32.totalorder %s77, %s93
    %p95 = scmp.eq.s32.totalorder %s17, 0
    %p96 = por %p94, %p95
    %s97 = ssub.s32 %s11, %s18
    %p98 = scmp.eq.s32.totalorder %s97, 0
    %s100 = sadd.s32 %s99, 1
    %s101 = scalar_select %p98, %s99, %s100
    %p104 = pneg %p98
    %p105 = scmp.eq.s32.totalorder %s11, 1
    %p106 = por %p104, %p105
    %p107 = scmp.ne.s32.totalorder %s99, %s102
    %p108 = scmp.eq.s32.totalorder %s11, 0
    %p109 = por %p107, %p108
    %p110 = scmp.ne.s32.totalorder %s99, %s102
    %p111 = scmp.eq.s32.totalorder %s16, 1
    %p112 = por %p110, %p111
    %p113 = scmp.ne.s32.totalorder %s102, %s103
    %p114 = scmp.eq.s32.totalorder %s16, 0
    %p115 = por %p113, %p114
    %p116 = scmp.ne.s32.totalorder %s102, %s103
    %p117 = scmp.eq.s32.totalorder %s17, 1
    %p118 = por %p116, %p117
    %p120 = scmp.ne.s32.totalorder %s103, %s119
    %p121 = scmp.eq.s32.totalorder %s17, 0
    %p122 = por %p120, %p121
    %s123 = ssub.s32 %s11, %s18
    %p124 = scmp.eq.s32.totalorder %s123, 0
    %s126 = sadd.s32 %s125, 1
    %s127 = scalar_select %p124, %s125, %s126
    %p130 = pneg %p124
    %p131 = scmp.eq.s32.totalorder %s11, 1
    %p132 = por %p130, %p131
    %p133 = scmp.ne.s32.totalorder %s125, %s128
    %p134 = scmp.eq.s32.totalorder %s11, 0
    %p135 = por %p133, %p134
    %p136 = scmp.ne.s32.totalorder %s125, %s128
    %p137 = scmp.eq.s32.totalorder %s16, 1
    %p138 = por %p136, %p137
    %p139 = scmp.ne.s32.totalorder %s128, %s129
    %p140 = scmp.eq.s32.totalorder %s16, 0
    %p141 = por %p139, %p140
    %p142 = scmp.ne.s32.totalorder %s128, %s129
    %p143 = scmp.eq.s32.totalorder %s17, 1
    %p144 = por %p142, %p143
    %p146 = scmp.ne.s32.totalorder %s129, %s145
    %p147 = scmp.eq.s32.totalorder %s17, 0
    %p148 = por %p146, %p147
    %s149 = ssub.s32 %s11, %s18
    %p150 = scmp.eq.s32.totalorder %s149, 0
    %s152 = sadd.s32 %s151, 1
    %s153 = scalar_select %p150, %s151, %s152
    %p156 = pneg %p150
    %p157 = scmp.eq.s32.totalorder %s11, 1
    %p158 = por %p156, %p157
    %p159 = scmp.ne.s32.totalorder %s151, %s154
    %p160 = scmp.eq.s32.totalorder %s11, 0
    %p161 = por %p159, %p160
    %p162 = scmp.ne.s32.totalorder %s151, %s154
    %p163 = scmp.eq.s32.totalorder %s16, 1
    %p164 = por %p162, %p163
    %p165 = scmp.ne.s32.totalorder %s154, %s155
    %p166 = scmp.eq.s32.totalorder %s16, 0
    %p167 = por %p165, %p166
    %p168 = scmp.ne.s32.totalorder %s154, %s155
    %p169 = scmp.eq.s32.totalorder %s17, 1
    %p170 = por %p168, %p169
    %p172 = scmp.ne.s32.totalorder %s155, %s171
    %p173 = scmp.eq.s32.totalorder %s17, 0
    %p174 = por %p172, %p173
    %p175 = scmp.le.s32.totalorder 1, %s11
    %p176 = scmp.lt.s32.totalorder %s11, 3
    %p177 = pnand %p175, %p176
    %p178 = pneg %p177
    // Predicated region
    $region9: #{aotn_forward.27} parent=5 // pred_check
      _
    $region10: #{aotn_forward.27} parent=5 // pred_check_branch
      %180 = sbr.rel (%p177) target = $region12
    $region11: #{aotn_forward.27} parent=5 // pred_region
      %s181 = ssub.s32 %s11, 1
    $region12: #{aotn_forward.27} parent=5 // pred_fallthru
      _
    %p182 = scmp.lt.s32.totalorder %s11, 2
    // Predicated region
    $region13: #{aotn_forward.27} parent=5 // pred_check
      %p183 = pneg %p182
    $region14: #{aotn_forward.27} parent=5 // pred_check_branch
      %185 = sbr.rel (%p183) target = $region16
    $region15: #{aotn_forward.27} parent=5 // pred_region
      // Predicated region
      $region17: #{aotn_forward.27} parent=15 // pred_check
        %p186 = pneg %p31
      $region18: #{aotn_forward.27} parent=15 // pred_check_branch
        %188 = sbr.rel (%p186) target = $region20
      $region19: #{aotn_forward.27} parent=15 // pred_region
        %p189 = scmp.lt.s32.totalorder %s11, 1
        %s190 = scalar_select %p189, %s11, 1
        %s191 = smul.addr %s190, 2
        %s192 = scalar_lea.vmem %s0, %s191
      $region20: #{aotn_forward.27} parent=15 // pred_fallthru
        _
      // Predicated region
      $region21: #{aotn_forward.27} parent=15 // pred_check
        %p193 = pneg %p57
      $region22: #{aotn_forward.27} parent=15 // pred_check_branch
        %195 = sbr.rel (%p193) target = $region24
      $region23: #{aotn_forward.27} parent=15 // pred_region
        %p196 = scmp.lt.s32.totalorder %s11, 1
        %s197 = scalar_select %p196, %s11, 1
        %s198 = smul.addr %s197, 8
        %s199 = smul.addr %s198, 4
        %s200 = scalar_lea.vmem %s1, %s199
      $region24: #{aotn_forward.27} parent=15 // pred_fallthru
        _
      // Predicated region
      $region25: #{aotn_forward.27} parent=15 // pred_check
        %p201 = pneg %p83
      $region26: #{aotn_forward.27} parent=15 // pred_check_branch
        %203 = sbr.rel (%p201) target = $region28
      $region27: #{aotn_forward.27} parent=15 // pred_region
        %p204 = scmp.lt.s32.totalorder %s11, 1
        %s205 = scalar_select %p204, %s11, 1
        %s206 = scalar_lea.vmem %s2, %s205
      $region28: #{aotn_forward.27} parent=15 // pred_fallthru
        _
      // Predicated region
      $region29: #{aotn_forward.27} parent=15 // pred_check
        %p207 = pneg %p109
      $region30: #{aotn_forward.27} parent=15 // pred_check_branch
        %209 = sbr.rel (%p207) target = $region32
      $region31: #{aotn_forward.27} parent=15 // pred_region
        %p210 = scmp.lt.s32.totalorder %s11, 1
        %s211 = scalar_select %p210, %s11, 1
        %s212 = scalar_lea.vmem %s3, %s211
      $region32: #{aotn_forward.27} parent=15 // pred_fallthru
        _
      // Predicated region
      $region33: #{aotn_forward.27} parent=15 // pred_check
        %p213 = pneg %p135
      $region34: #{aotn_forward.27} parent=15 // pred_check_branch
        %215 = sbr.rel (%p213) target = $region36
      $region35: #{aotn_forward.27} parent=15 // pred_region
        %p216 = scmp.lt.s32.totalorder %s11, 1
        %s217 = scalar_select %p216, %s11, 1
        %s218 = scalar_lea.vmem %s4, %s217
      $region36: #{aotn_forward.27} parent=15 // pred_fallthru
        _
    $region16: #{aotn_forward.27} parent=5 // pred_fallthru
      _
    %p219 = scmp.le.s32.totalorder 1, %s11
    %p220 = scmp.lt.s32.totalorder %s11, 3
    %p221 = pnand %p219, %p220
    %p222 = pneg %p221
    // Predicated region
    $region37: #{aotn_forward.27} parent=5 // pred_check
      _
    $region38: #{aotn_forward.27} parent=5 // pred_check_branch
      %224 = sbr.rel (%p221) target = $region40
    $region39: #{aotn_forward.27} parent=5 // pred_region
      %s225 = ssub.s32 %s11, 1
      %p226 = scmp.lt.s32.totalorder %s16, 1
      %s227 = scalar_select %p226, %s16, 1
      %s228 = smul.addr %s227, 2
      %s229 = scalar_lea.vmem %s0, %s228
      %p230 = pneg %p37
      %p231 = pneg %p34
      %p232 = scmp.lt.s32.totalorder %s16, 1
      %s233 = scalar_select %p232, %s16, 1
      %s234 = smul.addr %s233, 8
      %s235 = smul.addr %s234, 4
      %s236 = scalar_lea.vmem %s1, %s235
      %p237 = pneg %p63
      %p238 = pneg %p60
      %p239 = scmp.lt.s32.totalorder %s16, 1
      %s240 = scalar_select %p239, %s16, 1
      %s241 = scalar_lea.vmem %s2, %s240
      %p242 = pneg %p89
      %p243 = pneg %p86
      %p244 = scmp.lt.s32.totalorder %s16, 1
      %s245 = scalar_select %p244, %s16, 1
      %s246 = scalar_lea.vmem %s3, %s245
      %p247 = pneg %p115
      %p248 = pneg %p112
      %p249 = scmp.lt.s32.totalorder %s16, 1
      %s250 = scalar_select %p249, %s16, 1
      %s251 = scalar_lea.vmem %s4, %s250
      %p252 = pneg %p141
      %p253 = pneg %p138
      %p254 = pneg %p167
      %p255 = pneg %p164
      %p256 = scmp.lt.s32.totalorder %s16, 1
      %s257 = scalar_select %p256, %s16, 1
      %s258 = smul.addr %s257, 4
      %s259 = scalar_lea.vmem %s5, %s258
      %p260 = scmp.lt.s32.totalorder %s16, 1
      %s261 = scalar_select %p260, %s16, 1
      %s262 = smul.addr %s261, 2
      %s263 = scalar_lea.vmem %s0, %s262
      %p264 = scmp.lt.s32.totalorder %s16, 1
      %s265 = scalar_select %p264, %s16, 1
      %s266 = smul.addr %s265, 8
      %s267 = smul.addr %s266, 4
      %s268 = scalar_lea.vmem %s1, %s267
      %p269 = scmp.lt.s32.totalorder %s16, 1
      %s270 = scalar_select %p269, %s16, 1
      %s271 = scalar_lea.vmem %s2, %s270
      %p272 = scmp.lt.s32.totalorder %s16, 1
      %s273 = scalar_select %p272, %s16, 1
      %s274 = scalar_lea.vmem %s3, %s273
      %p275 = scmp.lt.s32.totalorder %s16, 1
      %s276 = scalar_select %p275, %s16, 1
      %s277 = scalar_lea.vmem %s4, %s276
      %p278 = scmp.lt.s32.totalorder %s16, 1
      %s279 = scalar_select %p278, %s16, 1
      %s280 = smul.addr %s279, 4
      %s281 = scalar_lea.vmem %s5, %s280
      %v283 = vld [vmem:[%s263] sm:$0x3]
      %v284 = vld [vmem:[%s268] sm:$0xf]
      %v285 = vld [vmem:[%s268 + $0x4] sm:$0xf]
      %v286 = vld [vmem:[%s268 + $0x8] sm:$0xf]
      %v287 = vld [vmem:[%s268 + $0xc] sm:$0xf]
      %v288 = vld [vmem:[%s268 + $0x10] sm:$0xf]
      %v289 = vld [vmem:[%s268 + $0x14] sm:$0xf]
      %v290 = vld [vmem:[%s268 + $0x18] sm:$0xf]
      %v291 = vld [vmem:[%s268 + $0x1c] sm:$0xf]
      %v292 = vld [vmem:[%s271] sm:$0x1]
      %v294 = vlaneseq
      %v295 = vshrl.u32 %v294, 7
      %v296 = vsub.s32 0, %v295
      %v297 = vrot.slane %v292, %v296
      %v307 = vunpack.c.l.b16 %v284
      %v308 = vunpack.c.l.b16 %v285
      %v309 = vunpack.c.l.b16 %v286
      %v310 = vunpack.c.l.b16 %v287
      %v311 = vunpack.c.l.b16 %v288
      %v312 = vunpack.c.l.b16 %v289
      %v313 = vunpack.c.l.b16 %v290
      %v314 = vunpack.c.l.b16 %v291
      %v315 = vpack.c.b16 %v308, %v307
      %v316 = vpack.c.b16 %v310, %v309
      %v317 = vpack.c.b16 %v312, %v311
      %v318 = vpack.c.b16 %v314, %v313
      %vm323 = vcmask 523264
      %v325 = vsel %vm323, %v283, 0
      %327 = vmatprep.subr.bf16.mxu0 0
      %328 = vmatpush1.bf16.msra.mxu0 %v315
      %329 = vmatprep.subr.bf16.mxu0 0
      %330 = vmatpush1.bf16.msra.mxu0 %v316
      %331 = vmatprep.subr.bf16.mxu0 0
      %332 = vmatpush1.bf16.msra.mxu0 %v317
      %333 = vmatprep.subr.bf16.mxu0 0
      %334 = vmatpush1.bf16.msra.mxu0 %v318
      %335 = vmatprep.subr.bf16.mxu0 0
      %336 = vmatpush1.bf16.msra.mxu0 0
      %337 = vmatprep.subr.bf16.mxu0 0
      %338 = vmatpush1.bf16.msra.mxu0 0
      %339 = vmatprep.subr.bf16.mxu0 0
      %340 = vmatpush1.bf16.msra.mxu0 0
      %341 = vmatprep.subr.bf16.mxu0 0
      %342 = vmatpush1.bf16.msra.mxu0 0
      %343 = vmatprep.subr.bf16.mxu0 0
      %344 = vmatpush1.bf16.msra.mxu0 0
      %345 = vmatprep.subr.bf16.mxu0 0
      %346 = vmatpush1.bf16.msra.mxu0 0
      %347 = vmatprep.subr.bf16.mxu0 0
      %348 = vmatpush1.bf16.msra.mxu0 0
      %349 = vmatprep.subr.bf16.mxu0 0
      %350 = vmatpush1.bf16.msra.mxu0 0
      %351 = vmatprep.subr.bf16.mxu0 0
      %352 = vmatpush1.bf16.msra.mxu0 0
      %353 = vmatprep.subr.bf16.mxu0 0
      %354 = vmatpush1.bf16.msra.mxu0 0
      %355 = vmatprep.subr.bf16.mxu0 0
      %356 = vmatpush1.bf16.msra.mxu0 0
      %357 = vmatprep.subr.bf16.mxu0 0
      %358 = vmatpush1.bf16.msra.mxu0 0
      %359 = vmatprep.mubr.bf16.mxu0 0
      %360 = vmatmul.mubr.bf16.gmra.mrb[0].mxu0 %v325
      %v361 = vpop.f32.mrb[0].mxu0
      %v362 = vadd.f32 %v297, %v361
      %v363 = vpop.f32.mrb[0].mxu0
      %v364 = vpop.f32.mrb[0].mxu0
      %v365 = vpop.f32.mrb[0].mxu0
      %366 = vdwg.mxu0
      %v367 = vmax.f32 %v362, 0.0
      %v368 = vld [vmem:[%s274] sm:$0x1]
      %v369 = vld [vmem:[%s277] sm:$0x1]
      %vm370 = vcmask 519168
      %v371 = vsel %vm370, %v367, 0.0
      %372 = vadd.xlane.f32.xlu0 %v371
      %v373 = vpop.xlane.xlu0 %372
      %v374 = vrcp.pop 64.0
      %v375 = vmul.f32 %v373, %v374
      %v376 = vsub.f32 %v367, %v375
      %v377 = vmul.f32 %v376, %v376
      %v378 = vsel %vm370, %v377, 0.0
      %379 = vadd.xlane.f32.xlu0 %v378
      %v380 = vpop.xlane.xlu0 %379
      %v381 = vmul.f32 %v380, %v374
      %v382 = vadd.f32 %v381, 1e-05
      %v383 = vrsqrt.pop %v382
      %v384 = vmul.f32 %v376, %v383
      %v386 = vlaneseq
      %v387 = vshrl.u32 %v386, 7
      %v388 = vsub.s32 0, %v387
      %v389 = vrot.slane %v368, %v388
      %v391 = vmul.f32 %v384, %v389
      %v393 = vlaneseq
      %v394 = vshrl.u32 %v393, 7
      %v395 = vsub.s32 0, %v394
      %v396 = vrot.slane %v369, %v395
      %v398 = vadd.f32 %v391, %v396
      %399 = vst.msk [vmem:[%s281] sm:$0xf] %vm370, %v398
      %p400 = scmp.lt.s32.totalorder %s16, 1
      %s401 = scalar_select %p400, %s16, 1
      %s402 = smul.addr %s401, 4
      %s403 = scalar_lea.vmem %s5, %s402
      // Predicated region
      $region41: #{aotn_forward.27} parent=39 // pred_check
        %p404 = pneg %p164
      $region42: #{aotn_forward.27} parent=39 // pred_check_branch
        %406 = sbr.rel (%p404) target = $region44
      $region43: #{aotn_forward.27} parent=39 // pred_region
        _
      $region44: #{aotn_forward.27} parent=39 // pred_fallthru
        _
    $region40: #{aotn_forward.27} parent=5 // pred_fallthru
      _
    %p407 = scmp.le.s32.totalorder 2, %s11
    // Predicated region
    $region45: #{aotn_forward.27} parent=5 // pred_check
      %p408 = pneg %p407
    $region46: #{aotn_forward.27} parent=5 // pred_check_branch
      %410 = sbr.rel (%p408) target = $region48
    $region47: #{aotn_forward.27} parent=5 // pred_region
      %s411 = ssub.s32 %s11, 2
      // Predicated region
      $region49: #{aotn_forward.27} parent=47 // pred_check
        %p412 = pneg %p170
      $region50: #{aotn_forward.27} parent=47 // pred_check_branch
        %414 = sbr.rel (%p412) target = $region52
      $region51: #{aotn_forward.27} parent=47 // pred_region
        %p415 = scmp.lt.s32.totalorder %s17, 1
        %s416 = scalar_select %p415, %s17, 1
        %s417 = smul.addr %s416, 4
        %s418 = scalar_lea.vmem %s5, %s417
      $region52: #{aotn_forward.27} parent=47 // pred_fallthru
        _
    $region48: #{aotn_forward.27} parent=5 // pred_fallthru
      _
  $region6: #{aotn_forward.27} parent=0 // loop_footer
    %s15 = sadd.s32 1, %s11
  $region7: #{aotn_forward.27} parent=0 // loop_footer_branch
    %10 = sbr.rel target = $region3
  $region8: #{aotn_forward.27} parent=0 // loop_exit
    _

// kernel: aotn_forward.33
$region0: #{aotn_forward.33}
  #allocation0 [shape = 'u32[]', space=smem, size = 0x4, offset = 0x4, fixed_abs, tag = 'smem constant byte address 0x4 - core index']
  #allocation1 [shape = 'u32[144,128]{1,0:T(1,128)}', space=vmem, size = 0x12000, scoped, tag = 'internal scratch']
  %s0 = inlined_call_operand.vmem [shape: bf16[2,4,64], index: 0, kind: input, shape index: {}]
  %s1 = inlined_call_operand.vmem [shape: bf16[2,64,32], index: 1, kind: input, shape index: {}]
  %s2 = inlined_call_operand.vmem [shape: f32[2,1,32], index: 2, kind: input, shape index: {}]
  %s3 = inlined_call_operand.vmem [shape: f32[2,4,32], index: 3, kind: output, shape index: {}]
  %s4 = sld [smem:[#allocation0]]
  $region45: #{aotn_forward.33} parent=0
    _
  %s6 = ssub.s32 1, %s4
  %s7 = scalar_select 0, %s6, %s4
  loop: start=0, step=1, limit=4
  $region2: #{aotn_forward.33} parent=0 // loop_pre_header
    _
  $region3: #{aotn_forward.33} parent=0 // loop_header
    %s9 = sphi 0, %s13
    %p10 = scmp.ge.s32.totalorder %s9, 4
    %s19 = sphi 0, %s21
    %s22 = sphi 0, %s19
    %s23 = sphi 0, %s22
    %s39 = sphi 0, %s23
    %s45 = sphi 0, %s47
    %s48 = sphi 0, %s45
    %s49 = sphi 0, %s48
    %s65 = sphi 0, %s49
    %s71 = sphi 0, %s73
    %s74 = sphi 0, %s71
    %s75 = sphi 0, %s74
    %s91 = sphi 0, %s75
    %s97 = sphi 0, %s99
    %s100 = sphi 0, %s97
    %s101 = sphi 0, %s100
    %s117 = sphi 0, %s101
  $region4: #{aotn_forward.33} parent=0 // loop_header_branch
    %12 = sbr.rel (%p10) target = $region8
  $region5: #{aotn_forward.33} parent=0 // loop_body
    %s14 = ssub.s32 %s9, 1
    %s15 = ssub.s32 %s9, 2
    %s16 = sadd.s32 %s9, 1
    %s17 = ssub.s32 %s9, %s16
    %p18 = scmp.eq.s32.totalorder %s17, 0
    %s20 = sadd.s32 %s19, 1
    %s21 = scalar_select %p18, %s19, %s20
    %p24 = pneg %p18
    %p25 = scmp.eq.s32.totalorder %s9, 1
    %p26 = por %p24, %p25
    %p27 = scmp.ne.s32.totalorder %s19, %s22
    %p28 = scmp.eq.s32.totalorder %s9, 0
    %p29 = por %p27, %p28
    %p30 = scmp.ne.s32.totalorder %s19, %s22
    %p31 = scmp.eq.s32.totalorder %s14, 1
    %p32 = por %p30, %p31
    %p33 = scmp.ne.s32.totalorder %s22, %s23
    %p34 = scmp.eq.s32.totalorder %s14, 0
    %p35 = por %p33, %p34
    %p36 = scmp.ne.s32.totalorder %s22, %s23
    %p37 = scmp.eq.s32.totalorder %s15, 1
    %p38 = por %p36, %p37
    %p40 = scmp.ne.s32.totalorder %s23, %s39
    %p41 = scmp.eq.s32.totalorder %s15, 0
    %p42 = por %p40, %p41
    %s43 = ssub.s32 %s9, %s16
    %p44 = scmp.eq.s32.totalorder %s43, 0
    %s46 = sadd.s32 %s45, 1
    %s47 = scalar_select %p44, %s45, %s46
    %p50 = pneg %p44
    %p51 = scmp.eq.s32.totalorder %s9, 1
    %p52 = por %p50, %p51
    %p53 = scmp.ne.s32.totalorder %s45, %s48
    %p54 = scmp.eq.s32.totalorder %s9, 0
    %p55 = por %p53, %p54
    %p56 = scmp.ne.s32.totalorder %s45, %s48
    %p57 = scmp.eq.s32.totalorder %s14, 1
    %p58 = por %p56, %p57
    %p59 = scmp.ne.s32.totalorder %s48, %s49
    %p60 = scmp.eq.s32.totalorder %s14, 0
    %p61 = por %p59, %p60
    %p62 = scmp.ne.s32.totalorder %s48, %s49
    %p63 = scmp.eq.s32.totalorder %s15, 1
    %p64 = por %p62, %p63
    %p66 = scmp.ne.s32.totalorder %s49, %s65
    %p67 = scmp.eq.s32.totalorder %s15, 0
    %p68 = por %p66, %p67
    %s69 = ssub.s32 %s9, %s16
    %p70 = scmp.eq.s32.totalorder %s69, 0
    %s72 = sadd.s32 %s71, 1
    %s73 = scalar_select %p70, %s71, %s72
    %p76 = pneg %p70
    %p77 = scmp.eq.s32.totalorder %s9, 1
    %p78 = por %p76, %p77
    %p79 = scmp.ne.s32.totalorder %s71, %s74
    %p80 = scmp.eq.s32.totalorder %s9, 0
    %p81 = por %p79, %p80
    %p82 = scmp.ne.s32.totalorder %s71, %s74
    %p83 = scmp.eq.s32.totalorder %s14, 1
    %p84 = por %p82, %p83
    %p85 = scmp.ne.s32.totalorder %s74, %s75
    %p86 = scmp.eq.s32.totalorder %s14, 0
    %p87 = por %p85, %p86
    %p88 = scmp.ne.s32.totalorder %s74, %s75
    %p89 = scmp.eq.s32.totalorder %s15, 1
    %p90 = por %p88, %p89
    %p92 = scmp.ne.s32.totalorder %s75, %s91
    %p93 = scmp.eq.s32.totalorder %s15, 0
    %p94 = por %p92, %p93
    %s95 = ssub.s32 %s9, %s16
    %p96 = scmp.eq.s32.totalorder %s95, 0
    %s98 = sadd.s32 %s97, 1
    %s99 = scalar_select %p96, %s97, %s98
    %p102 = pneg %p96
    %p103 = scmp.eq.s32.totalorder %s9, 1
    %p104 = por %p102, %p103
    %p105 = scmp.ne.s32.totalorder %s97, %s100
    %p106 = scmp.eq.s32.totalorder %s9, 0
    %p107 = por %p105, %p106
    %p108 = scmp.ne.s32.totalorder %s97, %s100
    %p109 = scmp.eq.s32.totalorder %s14, 1
    %p110 = por %p108, %p109
    %p111 = scmp.ne.s32.totalorder %s100, %s101
    %p112 = scmp.eq.s32.totalorder %s14, 0
    %p113 = por %p111, %p112
    %p114 = scmp.ne.s32.totalorder %s100, %s101
    %p115 = scmp.eq.s32.totalorder %s15, 1
    %p116 = por %p114, %p115
    %p118 = scmp.ne.s32.totalorder %s101, %s117
    %p119 = scmp.eq.s32.totalorder %s15, 0
    %p120 = por %p118, %p119
    %p121 = scmp.le.s32.totalorder 1, %s9
    %p122 = scmp.lt.s32.totalorder %s9, 3
    %p123 = pnand %p121, %p122
    %p124 = pneg %p123
    // Predicated region
    $region9: #{aotn_forward.33} parent=5 // pred_check
      _
    $region10: #{aotn_forward.33} parent=5 // pred_check_branch
      %126 = sbr.rel (%p123) target = $region12
    $region11: #{aotn_forward.33} parent=5 // pred_region
      %s127 = ssub.s32 %s9, 1
    $region12: #{aotn_forward.33} parent=5 // pred_fallthru
      _
    %p128 = scmp.lt.s32.totalorder %s9, 2
    // Predicated region
    $region13: #{aotn_forward.33} parent=5 // pred_check
      %p129 = pneg %p128
    $region14: #{aotn_forward.33} parent=5 // pred_check_branch
      %131 = sbr.rel (%p129) target = $region16
    $region15: #{aotn_forward.33} parent=5 // pred_region
      // Predicated region
      $region17: #{aotn_forward.33} parent=15 // pred_check
        %p132 = pneg %p29
      $region18: #{aotn_forward.33} parent=15 // pred_check_branch
        %134 = sbr.rel (%p132) target = $region20
      $region19: #{aotn_forward.33} parent=15 // pred_region
        %p135 = scmp.lt.s32.totalorder %s9, 1
        %s136 = scalar_select %p135, %s9, 1
        %s137 = smul.addr %s136, 2
        %s138 = scalar_lea.vmem %s0, %s137
      $region20: #{aotn_forward.33} parent=15 // pred_fallthru
        _
      // Predicated region
      $region21: #{aotn_forward.33} parent=15 // pred_check
        %p139 = pneg %p55
      $region22: #{aotn_forward.33} parent=15 // pred_check_branch
        %141 = sbr.rel (%p139) target = $region24
      $region23: #{aotn_forward.33} parent=15 // pred_region
        %p142 = scmp.lt.s32.totalorder %s9, 1
        %s143 = scalar_select %p142, %s9, 1
        %s144 = smul.addr %s143, 8
        %s145 = smul.addr %s144, 4
        %s146 = scalar_lea.vmem %s1, %s145
      $region24: #{aotn_forward.33} parent=15 // pred_fallthru
        _
      // Predicated region
      $region25: #{aotn_forward.33} parent=15 // pred_check
        %p147 = pneg %p81
      $region26: #{aotn_forward.33} parent=15 // pred_check_branch
        %149 = sbr.rel (%p147) target = $region28
      $region27: #{aotn_forward.33} parent=15 // pred_region
        %p150 = scmp.lt.s32.totalorder %s9, 1
        %s151 = scalar_select %p150, %s9, 1
        %s152 = scalar_lea.vmem %s2, %s151
      $region28: #{aotn_forward.33} parent=15 // pred_fallthru
        _
    $region16: #{aotn_forward.33} parent=5 // pred_fallthru
      _
    %p153 = scmp.le.s32.totalorder 1, %s9
    %p154 = scmp.lt.s32.totalorder %s9, 3
    %p155 = pnand %p153, %p154
    %p156 = pneg %p155
    // Predicated region
    $region29: #{aotn_forward.33} parent=5 // pred_check
      _
    $region30: #{aotn_forward.33} parent=5 // pred_check_branch
      %158 = sbr.rel (%p155) target = $region32
    $region31: #{aotn_forward.33} parent=5 // pred_region
      %s159 = ssub.s32 %s9, 1
      %p160 = scmp.lt.s32.totalorder %s14, 1
      %s161 = scalar_select %p160, %s14, 1
      %s162 = smul.addr %s161, 2
      %s163 = scalar_lea.vmem %s0, %s162
      %p164 = pneg %p35
      %p165 = pneg %p32
      %p166 = scmp.lt.s32.totalorder %s14, 1
      %s167 = scalar_select %p166, %s14, 1
      %s168 = smul.addr %s167, 8
      %s169 = smul.addr %s168, 4
      %s170 = scalar_lea.vmem %s1, %s169
      %p171 = pneg %p61
      %p172 = pneg %p58
      %p173 = scmp.lt.s32.totalorder %s14, 1
      %s174 = scalar_select %p173, %s14, 1
      %s175 = scalar_lea.vmem %s2, %s174
      %p176 = pneg %p87
      %p177 = pneg %p84
      %p178 = pneg %p113
      %p179 = pneg %p110
      %p180 = scmp.lt.s32.totalorder %s14, 1
      %s181 = scalar_select %p180, %s14, 1
      %s182 = smul.addr %s181, 4
      %s183 = scalar_lea.vmem %s3, %s182
      %p184 = scmp.lt.s32.totalorder %s14, 1
      %s185 = scalar_select %p184, %s14, 1
      %s186 = smul.addr %s185, 2
      %s187 = scalar_lea.vmem %s0, %s186
      %p188 = scmp.lt.s32.totalorder %s14, 1
      %s189 = scalar_select %p188, %s14, 1
      %s190 = smul.addr %s189, 8
      %s191 = smul.addr %s190, 4
      %s192 = scalar_lea.vmem %s1, %s191
      %p193 = scmp.lt.s32.totalorder %s14, 1
      %s194 = scalar_select %p193, %s14, 1
      %s195 = scalar_lea.vmem %s2, %s194
      %p196 = scmp.lt.s32.totalorder %s14, 1
      %s197 = scalar_select %p196, %s14, 1
      %s198 = smul.addr %s197, 4
      %s199 = scalar_lea.vmem %s3, %s198
      %v201 = vld [vmem:[%s187] sm:$0x3]
      %v202 = vld [vmem:[%s192] sm:$0xf]
      %v203 = vld [vmem:[%s192 + $0x4] sm:$0xf]
      %v204 = vld [vmem:[%s192 + $0x8] sm:$0xf]
      %v205 = vld [vmem:[%s192 + $0xc] sm:$0xf]
      %v206 = vld [vmem:[%s192 + $0x10] sm:$0xf]
      %v207 = vld [vmem:[%s192 + $0x14] sm:$0xf]
      %v208 = vld [vmem:[%s192 + $0x18] sm:$0xf]
      %v209 = vld [vmem:[%s192 + $0x1c] sm:$0xf]
      %v210 = vld [vmem:[%s195] sm:$0x1]
      %v212 = vlaneseq
      %v213 = vshrl.u32 %v212, 7
      %v214 = vsub.s32 0, %v213
      %v215 = vrot.slane %v210, %v214
      %v225 = vunpack.c.l.b16 %v202
      %v226 = vunpack.c.l.b16 %v203
      %v227 = vunpack.c.l.b16 %v204
      %v228 = vunpack.c.l.b16 %v205
      %v229 = vunpack.c.l.b16 %v206
      %v230 = vunpack.c.l.b16 %v207
      %v231 = vunpack.c.l.b16 %v208
      %v232 = vunpack.c.l.b16 %v209
      %v233 = vpack.c.b16 %v226, %v225
      %v234 = vpack.c.b16 %v228, %v227
      %v235 = vpack.c.b16 %v230, %v229
      %v236 = vpack.c.b16 %v232, %v231
      %vm241 = vcmask 523264
      %v243 = vsel %vm241, %v201, 0
      %245 = vmatprep.subr.bf16.mxu0 0
      %246 = vmatpush1.bf16.msra.mxu0 %v233
      %247 = vmatprep.subr.bf16.mxu0 0
      %248 = vmatpush1.bf16.msra.mxu0 %v234
      %249 = vmatprep.subr.bf16.mxu0 0
      %250 = vmatpush1.bf16.msra.mxu0 %v235
      %251 = vmatprep.subr.bf16.mxu0 0
      %252 = vmatpush1.bf16.msra.mxu0 %v236
      %253 = vmatprep.subr.bf16.mxu0 0
      %254 = vmatpush1.bf16.msra.mxu0 0
      %255 = vmatprep.subr.bf16.mxu0 0
      %256 = vmatpush1.bf16.msra.mxu0 0
      %257 = vmatprep.subr.bf16.mxu0 0
      %258 = vmatpush1.bf16.msra.mxu0 0
      %259 = vmatprep.subr.bf16.mxu0 0
      %260 = vmatpush1.bf16.msra.mxu0 0
      %261 = vmatprep.subr.bf16.mxu0 0
      %262 = vmatpush1.bf16.msra.mxu0 0
      %263 = vmatprep.subr.bf16.mxu0 0
      %264 = vmatpush1.bf16.msra.mxu0 0
      %265 = vmatprep.subr.bf16.mxu0 0
      %266 = vmatpush1.bf16.msra.mxu0 0
      %267 = vmatprep.subr.bf16.mxu0 0
      %268 = vmatpush1.bf16.msra.mxu0 0
      %269 = vmatprep.subr.bf16.mxu0 0
      %270 = vmatpush1.bf16.msra.mxu0 0
      %271 = vmatprep.subr.bf16.mxu0 0
      %272 = vmatpush1.bf16.msra.mxu0 0
      %273 = vmatprep.subr.bf16.mxu0 0
      %274 = vmatpush1.bf16.msra.mxu0 0
      %275 = vmatprep.subr.bf16.mxu0 0
      %276 = vmatpush1.bf16.msra.mxu0 0
      %277 = vmatprep.mubr.bf16.mxu0 0
      %278 = vmatmul.mubr.bf16.gmra.mrb[0].mxu0 %v243
      %v279 = vpop.f32.mrb[0].mxu0
      %v280 = vadd.f32 %v215, %v279
      %v281 = vpop.f32.mrb[0].mxu0
      %v282 = vpop.f32.mrb[0].mxu0
      %v283 = vpop.f32.mrb[0].mxu0
      %284 = vdwg.mxu0
      %vm285 = vcmask 257024
      %286 = vst.msk [vmem:[%s199] sm:$0xf] %vm285, %v280
      %p287 = scmp.lt.s32.totalorder %s14, 1
      %s288 = scalar_select %p287, %s14, 1
      %s289 = smul.addr %s288, 4
      %s290 = scalar_lea.vmem %s3, %s289
      // Predicated region
      $region33: #{aotn_forward.33} parent=31 // pred_check
        %p291 = pneg %p110
      $region34: #{aotn_forward.33} parent=31 // pred_check_branch
        %293 = sbr.rel (%p291) target = $region36
      $region35: #{aotn_forward.33} parent=31 // pred_region
        _
      $region36: #{aotn_forward.33} parent=31 // pred_fallthru
        _
    $region32: #{aotn_forward.33} parent=5 // pred_fallthru
      _
    %p294 = scmp.le.s32.totalorder 2, %s9
    // Predicated region
    $region37: #{aotn_forward.33} parent=5 // pred_check
      %p295 = pneg %p294
    $region38: #{aotn_forward.33} parent=5 // pred_check_branch
      %297 = sbr.rel (%p295) target = $region40
    $region39: #{aotn_forward.33} parent=5 // pred_region
      %s298 = ssub.s32 %s9, 2
      // Predicated region
      $region41: #{aotn_forward.33} parent=39 // pred_check
        %p299 = pneg %p116
      $region42: #{aotn_forward.33} parent=39 // pred_check_branch
        %301 = sbr.rel (%p299) target = $region44
      $region43: #{aotn_forward.33} parent=39 // pred_region
        %p302 = scmp.lt.s32.totalorder %s15, 1
        %s303 = scalar_select %p302, %s15, 1
        %s304 = smul.addr %s303, 4
        %s305 = scalar_lea.vmem %s3, %s304
      $region44: #{aotn_forward.33} parent=39 // pred_fallthru
        _
    $region40: #{aotn_forward.33} parent=5 // pred_fallthru
      _
  $region6: #{aotn_forward.33} parent=0 // loop_footer
    %s13 = sadd.s32 1, %s9
  $region7: #{aotn_forward.33} parent=0 // loop_footer_branch
    %8 = sbr.rel target = $region3
  $region8: #{aotn_forward.33} parent=0 // loop_exit
    _

// kernel: aotn_forward.34
$region0: #{aotn_forward.34}
  #allocation0 [shape = 'u32[]', space=smem, size = 0x4, offset = 0x4, fixed_abs, tag = 'smem constant byte address 0x4 - core index']
  #allocation1 [shape = 'u32[144,128]{1,0:T(1,128)}', space=vmem, size = 0x12000, scoped, tag = 'internal scratch']
  %s0 = inlined_call_operand.vmem [shape: bf16[4,768], index: 0, kind: input, shape index: {}]
  %s1 = inlined_call_operand.vmem [shape: bf16[768,32], index: 1, kind: input, shape index: {}]
  %s2 = inlined_call_operand.vmem [shape: f32[1,32], index: 2, kind: input, shape index: {}]
  %s3 = inlined_call_operand.vmem [shape: f32[4,32], index: 3, kind: output, shape index: {}]
  %s4 = sld [smem:[#allocation0]]
  $region22: #{aotn_forward.34} parent=0
    _
  %s6 = ssub.s32 1, %s4
  %s7 = scalar_select 0, %s6, %s4
  // Predicated region
  $region2: #{aotn_forward.34} parent=0 // pred_check
    _
  $region3: #{aotn_forward.34} parent=0 // pred_check_branch
    %9 = sbr.rel (0) target = $region5
  $region4: #{aotn_forward.34} parent=0 // pred_region
    _
  $region5: #{aotn_forward.34} parent=0 // pred_fallthru
    _
  // Predicated region
  $region6: #{aotn_forward.34} parent=0 // pred_check
    _
  $region7: #{aotn_forward.34} parent=0 // pred_check_branch
    %11 = sbr.rel (0) target = $region9
  $region8: #{aotn_forward.34} parent=0 // pred_region
    _
  $region9: #{aotn_forward.34} parent=0 // pred_fallthru
    _
  // Predicated region
  $region10: #{aotn_forward.34} parent=0 // pred_check
    _
  $region11: #{aotn_forward.34} parent=0 // pred_check_branch
    %13 = sbr.rel (0) target = $region13
  $region12: #{aotn_forward.34} parent=0 // pred_region
    _
  $region13: #{aotn_forward.34} parent=0 // pred_fallthru
    _
  %v15 = vld [vmem:[%s0] sm:$0xff]
  %v16 = vld [vmem:[%s0 + $0x8] sm:$0xf]
  %v17 = vld [vmem:[%s1] sm:$0xf]
  %v18 = vld [vmem:[%s1 + $0x4] sm:$0xf]
  %v19 = vld [vmem:[%s1 + $0x8] sm:$0xf]
  %v20 = vld [vmem:[%s1 + $0xc] sm:$0xf]
  %v21 = vld [vmem:[%s1 + $0x10] sm:$0xf]
  %v22 = vld [vmem:[%s1 + $0x14] sm:$0xf]
  %v23 = vld [vmem:[%s1 + $0x18] sm:$0xf]
  %v24 = vld [vmem:[%s1 + $0x1c] sm:$0xf]
  %v25 = vld [vmem:[%s1 + $0x20] sm:$0xf]
  %v26 = vld [vmem:[%s1 + $0x24] sm:$0xf]
  %v27 = vld [vmem:[%s1 + $0x28] sm:$0xf]
  %v28 = vld [vmem:[%s1 + $0x2c] sm:$0xf]
  %v29 = vld [vmem:[%s1 + $0x30] sm:$0xf]
  %v30 = vld [vmem:[%s1 + $0x34] sm:$0xf]
  %v31 = vld [vmem:[%s1 + $0x38] sm:$0xf]
  %v32 = vld [vmem:[%s1 + $0x3c] sm:$0xf]
  %v33 = vld [vmem:[%s1 + $0x40] sm:$0xf]
  %v34 = vld [vmem:[%s1 + $0x44] sm:$0xf]
  %v35 = vld [vmem:[%s1 + $0x48] sm:$0xf]
  %v36 = vld [vmem:[%s1 + $0x4c] sm:$0xf]
  %v37 = vld [vmem:[%s1 + $0x50] sm:$0xf]
  %v38 = vld [vmem:[%s1 + $0x54] sm:$0xf]
  %v39 = vld [vmem:[%s1 + $0x58] sm:$0xf]
  %v40 = vld [vmem:[%s1 + $0x5c] sm:$0xf]
  %v41 = vld [vmem:[%s1 + $0x60] sm:$0xf]
  %v42 = vld [vmem:[%s1 + $0x64] sm:$0xf]
  %v43 = vld [vmem:[%s1 + $0x68] sm:$0xf]
  %v44 = vld [vmem:[%s1 + $0x6c] sm:$0xf]
  %v45 = vld [vmem:[%s1 + $0x70] sm:$0xf]
  %v46 = vld [vmem:[%s1 + $0x74] sm:$0xf]
  %v47 = vld [vmem:[%s1 + $0x78] sm:$0xf]
  %v48 = vld [vmem:[%s1 + $0x7c] sm:$0xf]
  %v49 = vld [vmem:[%s1 + $0x80] sm:$0xf]
  %v50 = vld [vmem:[%s1 + $0x84] sm:$0xf]
  %v51 = vld [vmem:[%s1 + $0x88] sm:$0xf]
  %v52 = vld [vmem:[%s1 + $0x8c] sm:$0xf]
  %v53 = vld [vmem:[%s1 + $0x90] sm:$0xf]
  %v54 = vld [vmem:[%s1 + $0x94] sm:$0xf]
  %v55 = vld [vmem:[%s1 + $0x98] sm:$0xf]
  %v56 = vld [vmem:[%s1 + $0x9c] sm:$0xf]
  %v57 = vld [vmem:[%s1 + $0xa0] sm:$0xf]
  %v58 = vld [vmem:[%s1 + $0xa4] sm:$0xf]
  %v59 = vld [vmem:[%s1 + $0xa8] sm:$0xf]
  %v60 = vld [vmem:[%s1 + $0xac] sm:$0xf]
  %v61 = vld [vmem:[%s1 + $0xb0] sm:$0xf]
  %v62 = vld [vmem:[%s1 + $0xb4] sm:$0xf]
  %v63 = vld [vmem:[%s1 + $0xb8] sm:$0xf]
  %v64 = vld [vmem:[%s1 + $0xbc] sm:$0xf]
  %v65 = vld [vmem:[%s1 + $0xc0] sm:$0xf]
  %v66 = vld [vmem:[%s1 + $0xc4] sm:$0xf]
  %v67 = vld [vmem:[%s1 + $0xc8] sm:$0xf]
  %v68 = vld [vmem:[%s1 + $0xcc] sm:$0xf]
  %v69 = vld [vmem:[%s1 + $0xd0] sm:$0xf]
  %v70 = vld [vmem:[%s1 + $0xd4] sm:$0xf]
  %v71 = vld [vmem:[%s1 + $0xd8] sm:$0xf]
  %v72 = vld [vmem:[%s1 + $0xdc] sm:$0xf]
  %v73 = vld [vmem:[%s1 + $0xe0] sm:$0xf]
  %v74 = vld [vmem:[%s1 + $0xe4] sm:$0xf]
  %v75 = vld [vmem:[%s1 + $0xe8] sm:$0xf]
  %v76 = vld [vmem:[%s1 + $0xec] sm:$0xf]
  %v77 = vld [vmem:[%s1 + $0xf0] sm:$0xf]
  %v78 = vld [vmem:[%s1 + $0xf4] sm:$0xf]
  %v79 = vld [vmem:[%s1 + $0xf8] sm:$0xf]
  %v80 = vld [vmem:[%s1 + $0xfc] sm:$0xf]
  %v81 = vld [vmem:[%s1 + $0x100] sm:$0xf]
  %v82 = vld [vmem:[%s1 + $0x104] sm:$0xf]
  %v83 = vld [vmem:[%s1 + $0x108] sm:$0xf]
  %v84 = vld [vmem:[%s1 + $0x10c] sm:$0xf]
  %v85 = vld [vmem:[%s1 + $0x110] sm:$0xf]
  %v86 = vld [vmem:[%s1 + $0x114] sm:$0xf]
  %v87 = vld [vmem:[%s1 + $0x118] sm:$0xf]
  %v88 = vld [vmem:[%s1 + $0x11c] sm:$0xf]
  %v89 = vld [vmem:[%s1 + $0x120] sm:$0xf]
  %v90 = vld [vmem:[%s1 + $0x124] sm:$0xf]
  %v91 = vld [vmem:[%s1 + $0x128] sm:$0xf]
  %v92 = vld [vmem:[%s1 + $0x12c] sm:$0xf]
  %v93 = vld [vmem:[%s1 + $0x130] sm:$0xf]
  %v94 = vld [vmem:[%s1 + $0x134] sm:$0xf]
  %v95 = vld [vmem:[%s1 + $0x138] sm:$0xf]
  %v96 = vld [vmem:[%s1 + $0x13c] sm:$0xf]
  %v97 = vld [vmem:[%s1 + $0x140] sm:$0xf]
  %v98 = vld [vmem:[%s1 + $0x144] sm:$0xf]
  %v99 = vld [vmem:[%s1 + $0x148] sm:$0xf]
  %v100 = vld [vmem:[%s1 + $0x14c] sm:$0xf]
  %v101 = vld [vmem:[%s1 + $0x150] sm:$0xf]
  %v102 = vld [vmem:[%s1 + $0x154] sm:$0xf]
  %v103 = vld [vmem:[%s1 + $0x158] sm:$0xf]
  %v104 = vld [vmem:[%s1 + $0x15c] sm:$0xf]
  %v105 = vld [vmem:[%s1 + $0x160] sm:$0xf]
  %v106 = vld [vmem:[%s1 + $0x164] sm:$0xf]
  %v107 = vld [vmem:[%s1 + $0x168] sm:$0xf]
  %v108 = vld [vmem:[%s1 + $0x16c] sm:$0xf]
  %v109 = vld [vmem:[%s1 + $0x170] sm:$0xf]
  %v110 = vld [vmem:[%s1 + $0x174] sm:$0xf]
  %v111 = vld [vmem:[%s1 + $0x178] sm:$0xf]
  %v112 = vld [vmem:[%s1 + $0x17c] sm:$0xf]
  %v113 = vld [vmem:[%s2] sm:$0x1]
  %v115 = vlaneseq
  %v116 = vshrl.u32 %v115, 7
  %v117 = vsub.s32 0, %v116
  %v118 = vrot.slane %v113, %v117
  %v122 = vcombine.high %v15, %v15
  %v124 = vunpack.c.l.s4 1983009808
  %v125 = vunpack.c.0.s8 %v124
  %v126 = vlaneseq
  %v127 = vshrl.u32 %v126, 7
  %v128 = vsub.s32 %v125, %v127
  %v129 = vrot.slane %v15, %v128
  %v131 = vunpack.c.l.s4 1983009808
  %v132 = vunpack.c.0.s8 %v131
  %v133 = vlaneseq
  %v134 = vshrl.u32 %v133, 7
  %v135 = vsub.s32 %v132, %v134
  %v136 = vrot.slane %v122, %v135
  %v137 = vcombine.high %v129, %v129
  %v138 = vcombine.high %v136, %v136
  %v140 = vunpack.c.l.s4 1983009808
  %v141 = vunpack.c.0.s8 %v140
  %v142 = vlaneseq
  %v143 = vshrl.u32 %v142, 7
  %v144 = vsub.s32 %v141, %v143
  %v145 = vrot.slane %v16, %v144
  %v146 = vcombine.high %v145, %v145
  %v249 = vunpack.c.l.b16 %v17
  %v250 = vunpack.c.l.b16 %v18
  %v251 = vunpack.c.l.b16 %v19
  %v252 = vunpack.c.l.b16 %v20
  %v253 = vunpack.c.l.b16 %v21
  %v254 = vunpack.c.l.b16 %v22
  %v255 = vunpack.c.l.b16 %v23
  %v256 = vunpack.c.l.b16 %v24
  %v257 = vunpack.c.l.b16 %v25
  %v258 = vunpack.c.l.b16 %v26
  %v259 = vunpack.c.l.b16 %v27
  %v260 = vunpack.c.l.b16 %v28
  %v261 = vunpack.c.l.b16 %v29
  %v262 = vunpack.c.l.b16 %v30
  %v263 = vunpack.c.l.b16 %v31
  %v264 = vunpack.c.l.b16 %v32
  %v265 = vunpack.c.l.b16 %v33
  %v266 = vunpack.c.l.b16 %v34
  %v267 = vunpack.c.l.b16 %v35
  %v268 = vunpack.c.l.b16 %v36
  %v269 = vunpack.c.l.b16 %v37
  %v270 = vunpack.c.l.b16 %v38
  %v271 = vunpack.c.l.b16 %v39
  %v272 = vunpack.c.l.b16 %v40
  %v273 = vunpack.c.l.b16 %v41
  %v274 = vunpack.c.l.b16 %v42
  %v275 = vunpack.c.l.b16 %v43
  %v276 = vunpack.c.l.b16 %v44
  %v277 = vunpack.c.l.b16 %v45
  %v278 = vunpack.c.l.b16 %v46
  %v279 = vunpack.c.l.b16 %v47
  %v280 = vunpack.c.l.b16 %v48
  %v281 = vunpack.c.l.b16 %v49
  %v282 = vunpack.c.l.b16 %v50
  %v283 = vunpack.c.l.b16 %v51
  %v284 = vunpack.c.l.b16 %v52
  %v285 = vunpack.c.l.b16 %v53
  %v286 = vunpack.c.l.b16 %v54
  %v287 = vunpack.c.l.b16 %v55
  %v288 = vunpack.c.l.b16 %v56
  %v289 = vunpack.c.l.b16 %v57
  %v290 = vunpack.c.l.b16 %v58
  %v291 = vunpack.c.l.b16 %v59
  %v292 = vunpack.c.l.b16 %v60
  %v293 = vunpack.c.l.b16 %v61
  %v294 = vunpack.c.l.b16 %v62
  %v295 = vunpack.c.l.b16 %v63
  %v296 = vunpack.c.l.b16 %v64
  %v297 = vunpack.c.l.b16 %v65
  %v298 = vunpack.c.l.b16 %v66
  %v299 = vunpack.c.l.b16 %v67
  %v300 = vunpack.c.l.b16 %v68
  %v301 = vunpack.c.l.b16 %v69
  %v302 = vunpack.c.l.b16 %v70
  %v303 = vunpack.c.l.b16 %v71
  %v304 = vunpack.c.l.b16 %v72
  %v305 = vunpack.c.l.b16 %v73
  %v306 = vunpack.c.l.b16 %v74
  %v307 = vunpack.c.l.b16 %v75
  %v308 = vunpack.c.l.b16 %v76
  %v309 = vunpack.c.l.b16 %v77
  %v310 = vunpack.c.l.b16 %v78
  %v311 = vunpack.c.l.b16 %v79
  %v312 = vunpack.c.l.b16 %v80
  %v313 = vunpack.c.l.b16 %v81
  %v314 = vunpack.c.l.b16 %v82
  %v315 = vunpack.c.l.b16 %v83
  %v316 = vunpack.c.l.b16 %v84
  %v317 = vunpack.c.l.b16 %v85
  %v318 = vunpack.c.l.b16 %v86
  %v319 = vunpack.c.l.b16 %v87
  %v320 = vunpack.c.l.b16 %v88
  %v321 = vunpack.c.l.b16 %v89
  %v322 = vunpack.c.l.b16 %v90
  %v323 = vunpack.c.l.b16 %v91
  %v324 = vunpack.c.l.b16 %v92
  %v325 = vunpack.c.l.b16 %v93
  %v326 = vunpack.c.l.b16 %v94
  %v327 = vunpack.c.l.b16 %v95
  %v328 = vunpack.c.l.b16 %v96
  %v329 = vunpack.c.l.b16 %v97
  %v330 = vunpack.c.l.b16 %v98
  %v331 = vunpack.c.l.b16 %v99
  %v332 = vunpack.c.l.b16 %v100
  %v333 = vunpack.c.l.b16 %v101
  %v334 = vunpack.c.l.b16 %v102
  %v335 = vunpack.c.l.b16 %v103
  %v336 = vunpack.c.l.b16 %v104
  %v337 = vunpack.c.l.b16 %v105
  %v338 = vunpack.c.l.b16 %v106
  %v339 = vunpack.c.l.b16 %v107
  %v340 = vunpack.c.l.b16 %v108
  %v341 = vunpack.c.l.b16 %v109
  %v342 = vunpack.c.l.b16 %v110
  %v343 = vunpack.c.l.b16 %v111
  %v344 = vunpack.c.l.b16 %v112
  %v345 = vpack.c.b16 %v250, %v249
  %v346 = vpack.c.b16 %v252, %v251
  %v347 = vpack.c.b16 %v254, %v253
  %v348 = vpack.c.b16 %v256, %v255
  %v349 = vpack.c.b16 %v258, %v257
  %v350 = vpack.c.b16 %v260, %v259
  %v351 = vpack.c.b16 %v262, %v261
  %v352 = vpack.c.b16 %v264, %v263
  %v353 = vpack.c.b16 %v266, %v265
  %v354 = vpack.c.b16 %v268, %v267
  %v355 = vpack.c.b16 %v270, %v269
  %v356 = vpack.c.b16 %v272, %v271
  %v357 = vpack.c.b16 %v274, %v273
  %v358 = vpack.c.b16 %v276, %v275
  %v359 = vpack.c.b16 %v278, %v277
  %v360 = vpack.c.b16 %v280, %v279
  %v361 = vpack.c.b16 %v282, %v281
  %v362 = vpack.c.b16 %v284, %v283
  %v363 = vpack.c.b16 %v286, %v285
  %v364 = vpack.c.b16 %v288, %v287
  %v365 = vpack.c.b16 %v290, %v289
  %v366 = vpack.c.b16 %v292, %v291
  %v367 = vpack.c.b16 %v294, %v293
  %v368 = vpack.c.b16 %v296, %v295
  %v369 = vpack.c.b16 %v298, %v297
  %v370 = vpack.c.b16 %v300, %v299
  %v371 = vpack.c.b16 %v302, %v301
  %v372 = vpack.c.b16 %v304, %v303
  %v373 = vpack.c.b16 %v306, %v305
  %v374 = vpack.c.b16 %v308, %v307
  %v375 = vpack.c.b16 %v310, %v309
  %v376 = vpack.c.b16 %v312, %v311
  %v377 = vpack.c.b16 %v314, %v313
  %v378 = vpack.c.b16 %v316, %v315
  %v379 = vpack.c.b16 %v318, %v317
  %v380 = vpack.c.b16 %v320, %v319
  %v381 = vpack.c.b16 %v322, %v321
  %v382 = vpack.c.b16 %v324, %v323
  %v383 = vpack.c.b16 %v326, %v325
  %v384 = vpack.c.b16 %v328, %v327
  %v385 = vpack.c.b16 %v330, %v329
  %v386 = vpack.c.b16 %v332, %v331
  %v387 = vpack.c.b16 %v334, %v333
  %v388 = vpack.c.b16 %v336, %v335
  %v389 = vpack.c.b16 %v338, %v337
  %v390 = vpack.c.b16 %v340, %v339
  %v391 = vpack.c.b16 %v342, %v341
  %v392 = vpack.c.b16 %v344, %v343
  %441 = vmatprep.subr.bf16.mxu0 0
  %442 = vmatpush1.bf16.msra.mxu0 %v345
  %443 = vmatprep.subr.bf16.mxu0 0
  %444 = vmatpush1.bf16.msra.mxu0 %v346
  %445 = vmatprep.subr.bf16.mxu0 0
  %446 = vmatpush1.bf16.msra.mxu0 %v347
  %447 = vmatprep.subr.bf16.mxu0 0
  %448 = vmatpush1.bf16.msra.mxu0 %v348
  %449 = vmatprep.subr.bf16.mxu0 0
  %450 = vmatpush1.bf16.msra.mxu0 %v349
  %451 = vmatprep.subr.bf16.mxu0 0
  %452 = vmatpush1.bf16.msra.mxu0 %v350
  %453 = vmatprep.subr.bf16.mxu0 0
  %454 = vmatpush1.bf16.msra.mxu0 %v351
  %455 = vmatprep.subr.bf16.mxu0 0
  %456 = vmatpush1.bf16.msra.mxu0 %v352
  %457 = vmatprep.subr.bf16.mxu0 0
  %458 = vmatpush1.bf16.msra.mxu0 %v353
  %459 = vmatprep.subr.bf16.mxu0 0
  %460 = vmatpush1.bf16.msra.mxu0 %v354
  %461 = vmatprep.subr.bf16.mxu0 0
  %462 = vmatpush1.bf16.msra.mxu0 %v355
  %463 = vmatprep.subr.bf16.mxu0 0
  %464 = vmatpush1.bf16.msra.mxu0 %v356
  %465 = vmatprep.subr.bf16.mxu0 0
  %466 = vmatpush1.bf16.msra.mxu0 %v357
  %467 = vmatprep.subr.bf16.mxu0 0
  %468 = vmatpush1.bf16.msra.mxu0 %v358
  %469 = vmatprep.subr.bf16.mxu0 0
  %470 = vmatpush1.bf16.msra.mxu0 %v359
  %471 = vmatprep.subr.bf16.mxu0 0
  %472 = vmatpush1.bf16.msra.mxu0 %v360
  %473 = vmatprep.mubr.bf16.mxu0 %v137
  %474 = vmatmul.mubr.bf16.gmra.mrb[0].mxu0 %v129
  %v475 = vpop.f32.mrb[0].mxu0
  %v476 = vadd.f32 %v118, %v475
  %v477 = vpop.f32.mrb[0].mxu0
  %v478 = vpop.f32.mrb[0].mxu0
  %v479 = vpop.f32.mrb[0].mxu0
  %480 = vdwg.mxu0
  %481 = vmatprep.subr.bf16.mxu0 0
  %482 = vmatpush1.bf16.msra.mxu0 %v361
  %483 = vmatprep.subr.bf16.mxu0 0
  %484 = vmatpush1.bf16.msra.mxu0 %v362
  %485 = vmatprep.subr.bf16.mxu0 0
  %486 = vmatpush1.bf16.msra.mxu0 %v363
  %487 = vmatprep.subr.bf16.mxu0 0
  %488 = vmatpush1.bf16.msra.mxu0 %v364
  %489 = vmatprep.subr.bf16.mxu0 0
  %490 = vmatpush1.bf16.msra.mxu0 %v365
  %491 = vmatprep.subr.bf16.mxu0 0
  %492 = vmatpush1.bf16.msra.mxu0 %v366
  %493 = vmatprep.subr.bf16.mxu0 0
  %494 = vmatpush1.bf16.msra.mxu0 %v367
  %495 = vmatprep.subr.bf16.mxu0 0
  %496 = vmatpush1.bf16.msra.mxu0 %v368
  %497 = vmatprep.subr.bf16.mxu0 0
  %498 = vmatpush1.bf16.msra.mxu0 %v369
  %499 = vmatprep.subr.bf16.mxu0 0
  %500 = vmatpush1.bf16.msra.mxu0 %v370
  %501 = vmatprep.subr.bf16.mxu0 0
  %502 = vmatpush1.bf16.msra.mxu0 %v371
  %503 = vmatprep.subr.bf16.mxu0 0
  %504 = vmatpush1.bf16.msra.mxu0 %v372
  %505 = vmatprep.subr.bf16.mxu0 0
  %506 = vmatpush1.bf16.msra.mxu0 %v373
  %507 = vmatprep.subr.bf16.mxu0 0
  %508 = vmatpush1.bf16.msra.mxu0 %v374
  %509 = vmatprep.subr.bf16.mxu0 0
  %510 = vmatpush1.bf16.msra.mxu0 %v375
  %511 = vmatprep.subr.bf16.mxu0 0
  %512 = vmatpush1.bf16.msra.mxu0 %v376
  %513 = vmatprep.mubr.bf16.mxu0 %v138
  %514 = vmatmul.mubr.bf16.gmra.mrb[0].mxu0 %v136
  %v515 = vpop.f32.mrb[0].mxu0
  %v516 = vadd.f32 %v476, %v515
  %v517 = vpop.f32.mrb[0].mxu0
  %v518 = vpop.f32.mrb[0].mxu0
  %v519 = vpop.f32.mrb[0].mxu0
  %520 = vdwg.mxu0
  %521 = vmatprep.subr.bf16.mxu0 0
  %522 = vmatpush1.bf16.msra.mxu0 %v377
  %523 = vmatprep.subr.bf16.mxu0 0
  %524 = vmatpush1.bf16.msra.mxu0 %v378
  %525 = vmatprep.subr.bf16.mxu0 0
  %526 = vmatpush1.bf16.msra.mxu0 %v379
  %527 = vmatprep.subr.bf16.mxu0 0
  %528 = vmatpush1.bf16.msra.mxu0 %v380
  %529 = vmatprep.subr.bf16.mxu0 0
  %530 = vmatpush1.bf16.msra.mxu0 %v381
  %531 = vmatprep.subr.bf16.mxu0 0
  %532 = vmatpush1.bf16.msra.mxu0 %v382
  %533 = vmatprep.subr.bf16.mxu0 0
  %534 = vmatpush1.bf16.msra.mxu0 %v383
  %535 = vmatprep.subr.bf16.mxu0 0
  %536 = vmatpush1.bf16.msra.mxu0 %v384
  %537 = vmatprep.subr.bf16.mxu0 0
  %538 = vmatpush1.bf16.msra.mxu0 %v385
  %539 = vmatprep.subr.bf16.mxu0 0
  %540 = vmatpush1.bf16.msra.mxu0 %v386
  %541 = vmatprep.subr.bf16.mxu0 0
  %542 = vmatpush1.bf16.msra.mxu0 %v387
  %543 = vmatprep.subr.bf16.mxu0 0
  %544 = vmatpush1.bf16.msra.mxu0 %v388
  %545 = vmatprep.subr.bf16.mxu0 0
  %546 = vmatpush1.bf16.msra.mxu0 %v389
  %547 = vmatprep.subr.bf16.mxu0 0
  %548 = vmatpush1.bf16.msra.mxu0 %v390
  %549 = vmatprep.subr.bf16.mxu0 0
  %550 = vmatpush1.bf16.msra.mxu0 %v391
  %551 = vmatprep.subr.bf16.mxu0 0
  %552 = vmatpush1.bf16.msra.mxu0 %v392
  %553 = vmatprep.mubr.bf16.mxu0 %v146
  %554 = vmatmul.mubr.bf16.gmra.mrb[0].mxu0 %v145
  %v555 = vpop.f32.mrb[0].mxu0
  %v556 = vadd.f32 %v516, %v555
  %v557 = vpop.f32.mrb[0].mxu0
  %v558 = vpop.f32.mrb[0].mxu0
  %v559 = vpop.f32.mrb[0].mxu0
  %560 = vdwg.mxu0
  %vm561 = vcmask 257024
  %562 = vst.msk [vmem:[%s3] sm:$0xf] %vm561, %v556
  // Predicated region
  $region14: #{aotn_forward.34} parent=0 // pred_check
    _
  $region15: #{aotn_forward.34} parent=0 // pred_check_branch
    %564 = sbr.rel (0) target = $region17
  $region16: #{aotn_forward.34} parent=0 // pred_region
    _
  $region17: #{aotn_forward.34} parent=0 // pred_fallthru
    _
  // Predicated region
  $region18: #{aotn_forward.34} parent=0 // pred_check
    _
  $region19: #{aotn_forward.34} parent=0 // pred_check_branch
    %566 = sbr.rel (0) target = $region21
  $region20: #{aotn_forward.34} parent=0 // pred_region
    _
  $region21: #{aotn_forward.34} parent=0 // pred_fallthru
    _

// kernel: aotn_forward.29
$region0: #{aotn_forward.29}
  #allocation0 [shape = 'u32[]', space=smem, size = 0x4, offset = 0x4, fixed_abs, tag = 'smem constant byte address 0x4 - core index']
  #allocation1 [shape = 'u32[144,128]{1,0:T(1,128)}', space=vmem, size = 0x12000, scoped, tag = 'internal scratch']
  %s0 = inlined_call_operand.vmem [shape: bf16[2,4,768], index: 0, kind: input, shape index: {}]
  %s1 = inlined_call_operand.vmem [shape: bf16[2,768,768], index: 1, kind: input, shape index: {}]
  %s2 = inlined_call_operand.vmem [shape: f32[2,1,768], index: 2, kind: input, shape index: {}]
  %s3 = inlined_call_operand.vmem [shape: f32[2,1,768], index: 3, kind: input, shape index: {}]
  %s4 = inlined_call_operand.vmem [shape: f32[2,1,768], index: 4, kind: input, shape index: {}]
  %s5 = inlined_call_operand.vmem [shape: f32[2,4,768], index: 5, kind: output, shape index: {}]
  %s6 = sld [smem:[#allocation0]]
  $region53: #{aotn_forward.29} parent=0
    _
  %s8 = ssub.s32 1, %s6
  %s9 = scalar_select 0, %s8, %s6
  loop: start=0, step=1, limit=4
  $region2: #{aotn_forward.29} parent=0 // loop_pre_header
    _
  $region3: #{aotn_forward.29} parent=0 // loop_header
    %s11 = sphi 0, %s15
    %p12 = scmp.ge.s32.totalorder %s11, 4
    %s21 = sphi 0, %s23
    %s24 = sphi 0, %s21
    %s25 = sphi 0, %s24
    %s41 = sphi 0, %s25
    %s47 = sphi 0, %s49
    %s50 = sphi 0, %s47
    %s51 = sphi 0, %s50
    %s67 = sphi 0, %s51
    %s73 = sphi 0, %s75
    %s76 = sphi 0, %s73
    %s77 = sphi 0, %s76
    %s93 = sphi 0, %s77
    %s99 = sphi 0, %s101
    %s102 = sphi 0, %s99
    %s103 = sphi 0, %s102
    %s119 = sphi 0, %s103
    %s125 = sphi 0, %s127
    %s128 = sphi 0, %s125
    %s129 = sphi 0, %s128
    %s145 = sphi 0, %s129
    %s151 = sphi 0, %s153
    %s154 = sphi 0, %s151
    %s155 = sphi 0, %s154
    %s171 = sphi 0, %s155
  $region4: #{aotn_forward.29} parent=0 // loop_header_branch
    %14 = sbr.rel (%p12) target = $region8
  $region5: #{aotn_forward.29} parent=0 // loop_body
    %s16 = ssub.s32 %s11, 1
    %s17 = ssub.s32 %s11, 2
    %s18 = sadd.s32 %s11, 1
    %s19 = ssub.s32 %s11, %s18
    %p20 = scmp.eq.s32.totalorder %s19, 0
    %s22 = sadd.s32 %s21, 1
    %s23 = scalar_select %p20, %s21, %s22
    %p26 = pneg %p20
    %p27 = scmp.eq.s32.totalorder %s11, 1
    %p28 = por %p26, %p27
    %p29 = scmp.ne.s32.totalorder %s21, %s24
    %p30 = scmp.eq.s32.totalorder %s11, 0
    %p31 = por %p29, %p30
    %p32 = scmp.ne.s32.totalorder %s21, %s24
    %p33 = scmp.eq.s32.totalorder %s16, 1
    %p34 = por %p32, %p33
    %p35 = scmp.ne.s32.totalorder %s24, %s25
    %p36 = scmp.eq.s32.totalorder %s16, 0
    %p37 = por %p35, %p36
    %p38 = scmp.ne.s32.totalorder %s24, %s25
    %p39 = scmp.eq.s32.totalorder %s17, 1
    %p40 = por %p38, %p39
    %p42 = scmp.ne.s32.totalorder %s25, %s41
    %p43 = scmp.eq.s32.totalorder %s17, 0
    %p44 = por %p42, %p43
    %s45 = ssub.s32 %s11, %s18
    %p46 = scmp.eq.s32.totalorder %s45, 0
    %s48 = sadd.s32 %s47, 1
    %s49 = scalar_select %p46, %s47, %s48
    %p52 = pneg %p46
    %p53 = scmp.eq.s32.totalorder %s11, 1
    %p54 = por %p52, %p53
    %p55 = scmp.ne.s32.totalorder %s47, %s50
    %p56 = scmp.eq.s32.totalorder %s11, 0
    %p57 = por %p55, %p56
    %p58 = scmp.ne.s32.totalorder %s47, %s50
    %p59 = scmp.eq.s32.totalorder %s16, 1
    %p60 = por %p58, %p59
    %p61 = scmp.ne.s32.totalorder %s50, %s51
    %p62 = scmp.eq.s32.totalorder %s16, 0
    %p63 = por %p61, %p62
    %p64 = scmp.ne.s32.totalorder %s50, %s51
    %p65 = scmp.eq.s32.totalorder %s17, 1
    %p66 = por %p64, %p65
    %p68 = scmp.ne.s32.totalorder %s51, %s67
    %p69 = scmp.eq.s32.totalorder %s17, 0
    %p70 = por %p68, %p69
    %s71 = ssub.s32 %s11, %s18
    %p72 = scmp.eq.s32.totalorder %s71, 0
    %s74 = sadd.s32 %s73, 1
    %s75 = scalar_select %p72, %s73, %s74
    %p78 = pneg %p72
    %p79 = scmp.eq.s32.totalorder %s11, 1
    %p80 = por %p78, %p79
    %p81 = scmp.ne.s32.totalorder %s73, %s76
    %p82 = scmp.eq.s32.totalorder %s11, 0
    %p83 = por %p81, %p82
    %p84 = scmp.ne.s32.totalorder %s73, %s76
    %p85 = scmp.eq.s32.totalorder %s16, 1
    %p86 = por %p84, %p85
    %p87 = scmp.ne.s32.totalorder %s76, %s77
    %p88 = scmp.eq.s32.totalorder %s16, 0
    %p89 = por %p87, %p88
    %p90 = scmp.ne.s32.totalorder %s76, %s77
    %p91 = scmp.eq.s32.totalorder %s17, 1
    %p92 = por %p90, %p91
    %p94 = scmp.ne.s32.totalorder %s77, %s93
    %p95 = scmp.eq.s32.totalorder %s17, 0
    %p96 = por %p94, %p95
    %s97 = ssub.s32 %s11, %s18
    %p98 = scmp.eq.s32.totalorder %s97, 0
    %s100 = sadd.s32 %s99, 1
    %s101 = scalar_select %p98, %s99, %s100
    %p104 = pneg %p98
    %p105 = scmp.eq.s32.totalorder %s11, 1
    %p106 = por %p104, %p105
    %p107 = scmp.ne.s32.totalorder %s99, %s102
    %p108 = scmp.eq.s32.totalorder %s11, 0
    %p109 = por %p107, %p108
    %p110 = scmp.ne.s32.totalorder %s99, %s102
    %p111 = scmp.eq.s32.totalorder %s16, 1
    %p112 = por %p110, %p111
    %p113 = scmp.ne.s32.totalorder %s102, %s103
    %p114 = scmp.eq.s32.totalorder %s16, 0
    %p115 = por %p113, %p114
    %p116 = scmp.ne.s32.totalorder %s102, %s103
    %p117 = scmp.eq.s32.totalorder %s17, 1
    %p118 = por %p116, %p117
    %p120 = scmp.ne.s32.totalorder %s103, %s119
    %p121 = scmp.eq.s32.totalorder %s17, 0
    %p122 = por %p120, %p121
    %s123 = ssub.s32 %s11, %s18
    %p124 = scmp.eq.s32.totalorder %s123, 0
    %s126 = sadd.s32 %s125, 1
    %s127 = scalar_select %p124, %s125, %s126
    %p130 = pneg %p124
    %p131 = scmp.eq.s32.totalorder %s11, 1
    %p132 = por %p130, %p131
    %p133 = scmp.ne.s32.totalorder %s125, %s128
    %p134 = scmp.eq.s32.totalorder %s11, 0
    %p135 = por %p133, %p134
    %p136 = scmp.ne.s32.totalorder %s125, %s128
    %p137 = scmp.eq.s32.totalorder %s16, 1
    %p138 = por %p136, %p137
    %p139 = scmp.ne.s32.totalorder %s128, %s129
    %p140 = scmp.eq.s32.totalorder %s16, 0
    %p141 = por %p139, %p140
    %p142 = scmp.ne.s32.totalorder %s128, %s129
    %p143 = scmp.eq.s32.totalorder %s17, 1
    %p144 = por %p142, %p143
    %p146 = scmp.ne.s32.totalorder %s129, %s145
    %p147 = scmp.eq.s32.totalorder %s17, 0
    %p148 = por %p146, %p147
    %s149 = ssub.s32 %s11, %s18
    %p150 = scmp.eq.s32.totalorder %s149, 0
    %s152 = sadd.s32 %s151, 1
    %s153 = scalar_select %p150, %s151, %s152
    %p156 = pneg %p150
    %p157 = scmp.eq.s32.totalorder %s11, 1
    %p158 = por %p156, %p157
    %p159 = scmp.ne.s32.totalorder %s151, %s154
    %p160 = scmp.eq.s32.totalorder %s11, 0
    %p161 = por %p159, %p160
    %p162 = scmp.ne.s32.totalorder %s151, %s154
    %p163 = scmp.eq.s32.totalorder %s16, 1
    %p164 = por %p162, %p163
    %p165 = scmp.ne.s32.totalorder %s154, %s155
    %p166 = scmp.eq.s32.totalorder %s16, 0
    %p167 = por %p165, %p166
    %p168 = scmp.ne.s32.totalorder %s154, %s155
    %p169 = scmp.eq.s32.totalorder %s17, 1
    %p170 = por %p168, %p169
    %p172 = scmp.ne.s32.totalorder %s155, %s171
    %p173 = scmp.eq.s32.totalorder %s17, 0
    %p174 = por %p172, %p173
    %p175 = scmp.le.s32.totalorder 1, %s11
    %p176 = scmp.lt.s32.totalorder %s11, 3
    %p177 = pnand %p175, %p176
    %p178 = pneg %p177
    // Predicated region
    $region9: #{aotn_forward.29} parent=5 // pred_check
      _
    $region10: #{aotn_forward.29} parent=5 // pred_check_branch
      %180 = sbr.rel (%p177) target = $region12
    $region11: #{aotn_forward.29} parent=5 // pred_region
      %s181 = ssub.s32 %s11, 1
    $region12: #{aotn_forward.29} parent=5 // pred_fallthru
      _
    %p182 = scmp.lt.s32.totalorder %s11, 2
    // Predicated region
    $region13: #{aotn_forward.29} parent=5 // pred_check
      %p183 = pneg %p182
    $region14: #{aotn_forward.29} parent=5 // pred_check_branch
      %185 = sbr.rel (%p183) target = $region16
    $region15: #{aotn_forward.29} parent=5 // pred_region
      // Predicated region
      $region17: #{aotn_forward.29} parent=15 // pred_check
        %p186 = pneg %p31
      $region18: #{aotn_forward.29} parent=15 // pred_check_branch
        %188 = sbr.rel (%p186) target = $region20
      $region19: #{aotn_forward.29} parent=15 // pred_region
        %p189 = scmp.lt.s32.totalorder %s11, 1
        %s190 = scalar_select %p189, %s11, 1
        %s191 = smul.addr %s190, 6
        %s192 = smul.addr %s191, 2
        %s193 = scalar_lea.vmem %s0, %s192
      $region20: #{aotn_forward.29} parent=15 // pred_fallthru
        _
      // Predicated region
      $region21: #{aotn_forward.29} parent=15 // pred_check
        %p194 = pneg %p57
      $region22: #{aotn_forward.29} parent=15 // pred_check_branch
        %196 = sbr.rel (%p194) target = $region24
      $region23: #{aotn_forward.29} parent=15 // pred_region
        %p197 = scmp.lt.s32.totalorder %s11, 1
        %s198 = scalar_select %p197, %s11, 1
        %s199 = smul.addr %s198, 576
        %s200 = smul.addr %s199, 4
        %s201 = scalar_lea.vmem %s1, %s200
      $region24: #{aotn_forward.29} parent=15 // pred_fallthru
        _
      // Predicated region
      $region25: #{aotn_forward.29} parent=15 // pred_check
        %p202 = pneg %p83
      $region26: #{aotn_forward.29} parent=15 // pred_check_branch
        %204 = sbr.rel (%p202) target = $region28
      $region27: #{aotn_forward.29} parent=15 // pred_region
        %p205 = scmp.lt.s32.totalorder %s11, 1
        %s206 = scalar_select %p205, %s11, 1
        %s207 = smul.addr %s206, 6
        %s208 = scalar_lea.vmem %s2, %s207
      $region28: #{aotn_forward.29} parent=15 // pred_fallthru
        _
      // Predicated region
      $region29: #{aotn_forward.29} parent=15 // pred_check
        %p209 = pneg %p109
      $region30: #{aotn_forward.29} parent=15 // pred_check_branch
        %211 = sbr.rel (%p209) target = $region32
      $region31: #{aotn_forward.29} parent=15 // pred_region
        %p212 = scmp.lt.s32.totalorder %s11, 1
        %s213 = scalar_select %p212, %s11, 1
        %s214 = smul.addr %s213, 6
        %s215 = scalar_lea.vmem %s3, %s214
      $region32: #{aotn_forward.29} parent=15 // pred_fallthru
        _
      // Predicated region
      $region33: #{aotn_forward.29} parent=15 // pred_check
        %p216 = pneg %p135
      $region34: #{aotn_forward.29} parent=15 // pred_check_branch
        %218 = sbr.rel (%p216) target = $region36
      $region35: #{aotn_forward.29} parent=15 // pred_region
        %p219 = scmp.lt.s32.totalorder %s11, 1
        %s220 = scalar_select %p219, %s11, 1
        %s221 = smul.addr %s220, 6
        %s222 = scalar_lea.vmem %s4, %s221
      $region36: #{aotn_forward.29} parent=15 // pred_fallthru
        _
    $region16: #{aotn_forward.29} parent=5 // pred_fallthru
      _
    %p223 = scmp.le.s32.totalorder 1, %s11
    %p224 = scmp.lt.s32.totalorder %s11, 3
    %p225 = pnand %p223, %p224
    %p226 = pneg %p225
    // Predicated region
    $region37: #{aotn_forward.29} parent=5 // pred_check
      _
    $region38: #{aotn_forward.29} parent=5 // pred_check_branch
      %228 = sbr.rel (%p225) target = $region40
    $region39: #{aotn_forward.29} parent=5 // pred_region
      %s229 = ssub.s32 %s11, 1
      %p230 = scmp.lt.s32.totalorder %s16, 1
      %s231 = scalar_select %p230, %s16, 1
      %s232 = smul.addr %s231, 6
      %s233 = smul.addr %s232, 2
      %s234 = scalar_lea.vmem %s0, %s233
      %p235 = pneg %p37
      %p236 = pneg %p34
      %p237 = scmp.lt.s32.totalorder %s16, 1
      %s238 = scalar_select %p237, %s16, 1
      %s239 = smul.addr %s238, 576
      %s240 = smul.addr %s239, 4
      %s241 = scalar_lea.vmem %s1, %s240
      %p242 = pneg %p63
      %p243 = pneg %p60
      %p244 = scmp.lt.s32.totalorder %s16, 1
      %s245 = scalar_select %p244, %s16, 1
      %s246 = smul.addr %s245, 6
      %s247 = scalar_lea.vmem %s2, %s246
      %p248 = pneg %p89
      %p249 = pneg %p86
      %p250 = scmp.lt.s32.totalorder %s16, 1
      %s251 = scalar_select %p250, %s16, 1
      %s252 = smul.addr %s251, 6
      %s253 = scalar_lea.vmem %s3, %s252
      %p254 = pneg %p115
      %p255 = pneg %p112
      %p256 = scmp.lt.s32.totalorder %s16, 1
      %s257 = scalar_select %p256, %s16, 1
      %s258 = smul.addr %s257, 6
      %s259 = scalar_lea.vmem %s4, %s258
      %p260 = pneg %p141
      %p261 = pneg %p138
      %p262 = pneg %p167
      %p263 = pneg %p164
      %p264 = scmp.lt.s32.totalorder %s16, 1
      %s265 = scalar_select %p264, %s16, 1
      %s266 = smul.addr %s265, 6
      %s267 = smul.addr %s266, 4
      %s268 = scalar_lea.vmem %s5, %s267
      %p269 = scmp.lt.s32.totalorder %s16, 1
      %s270 = scalar_select %p269, %s16, 1
      %s271 = smul.addr %s270, 6
      %s272 = smul.addr %s271, 2
      %s273 = scalar_lea.vmem %s0, %s272
      %p274 = scmp.lt.s32.totalorder %s16, 1
      %s275 = scalar_select %p274, %s16, 1
      %s276 = smul.addr %s275, 576
      %s277 = smul.addr %s276, 4
      %s278 = scalar_lea.vmem %s1, %s277
      %p279 = scmp.lt.s32.totalorder %s16, 1
      %s280 = scalar_select %p279, %s16, 1
      %s281 = smul.addr %s280, 6
      %s282 = scalar_lea.vmem %s2, %s281
      %p283 = scmp.lt.s32.totalorder %s16, 1
      %s284 = scalar_select %p283, %s16, 1
      %s285 = smul.addr %s284, 6
      %s286 = scalar_lea.vmem %s3, %s285
      %p287 = scmp.lt.s32.totalorder %s16, 1
      %s288 = scalar_select %p287, %s16, 1
      %s289 = smul.addr %s288, 6
      %s290 = scalar_lea.vmem %s4, %s289
      %p291 = scmp.lt.s32.totalorder %s16, 1
      %s292 = scalar_select %p291, %s16, 1
      %s293 = smul.addr %s292, 6
      %s294 = smul.addr %s293, 4
      %s295 = scalar_lea.vmem %s5, %s294
      %v296 = vld [vmem:[%s273] sm:$0xff]
      %v297 = vld [vmem:[%s273 + $0x8] sm:$0xf]
      %v298 = vld [vmem:[%s278] sm:$0xff]
      %v299 = vld [vmem:[%s278 + $0x8] sm:$0xff]
      %v300 = vld [vmem:[%s278 + $0x10] sm:$0xff]
      %v301 = vld [vmem:[%s278 + $0x18] sm:$0xff]
      %v302 = vld [vmem:[%s278 + $0x20] sm:$0xff]
      %v303 = vld [vmem:[%s278 + $0x28] sm:$0xff]
      %v304 = vld [vmem:[%s278 + $0x30] sm:$0xff]
      %v305 = vld [vmem:[%s278 + $0x38] sm:$0xff]
      %v306 = vld [vmem:[%s278 + $0x40] sm:$0xff]
      %v307 = vld [vmem:[%s278 + $0x48] sm:$0xff]
      %v308 = vld [vmem:[%s278 + $0x50] sm:$0xff]
      %v309 = vld [vmem:[%s278 + $0x58] sm:$0xff]
      %v310 = vld [vmem:[%s278 + $0x60] sm:$0xff]
      %v311 = vld [vmem:[%s278 + $0x68] sm:$0xff]
      %v312 = vld [vmem:[%s278 + $0x70] sm:$0xff]
      %v313 = vld [vmem:[%s278 + $0x78] sm:$0xff]
      %v314 = vld [vmem:[%s278 + $0x80] sm:$0xff]
      %v315 = vld [vmem:[%s278 + $0x88] sm:$0xff]
      %v316 = vld [vmem:[%s278 + $0x90] sm:$0xff]
      %v317 = vld [vmem:[%s278 + $0x98] sm:$0xff]
      %v318 = vld [vmem:[%s278 + $0xa0] sm:$0xff]
      %v319 = vld [vmem:[%s278 + $0xa8] sm:$0xff]
      %v320 = vld [vmem:[%s278 + $0xb0] sm:$0xff]
      %v321 = vld [vmem:[%s278 + $0xb8] sm:$0xff]
      %v322 = vld [vmem:[%s278 + $0xc0] sm:$0xff]
      %v323 = vld [vmem:[%s278 + $0xc8] sm:$0xff]
      %v324 = vld [vmem:[%s278 + $0xd0] sm:$0xff]
      %v325 = vld [vmem:[%s278 + $0xd8] sm:$0xff]
      %v326 = vld [vmem:[%s278 + $0xe0] sm:$0xff]
      %v327 = vld [vmem:[%s278 + $0xe8] sm:$0xff]
      %v328 = vld [vmem:[%s278 + $0xf0] sm:$0xff]
      %v329 = vld [vmem:[%s278 + $0xf8] sm:$0xff]
      %v330 = vld [vmem:[%s278 + $0x100] sm:$0xff]
      %v331 = vld [vmem:[%s278 + $0x108] sm:$0xff]
      %v332 = vld [vmem:[%s278 + $0x110] sm:$0xff]
      %v333 = vld [vmem:[%s278 + $0x118] sm:$0xff]
      %v334 = vld [vmem:[%s278 + $0x120] sm:$0xff]
      %v335 = vld [vmem:[%s278 + $0x128] sm:$0xff]
      %v336 = vld [vmem:[%s278 + $0x130] sm:$0xff]
      %v337 = vld [vmem:[%s278 + $0x138] sm:$0xff]
      %v338 = vld [vmem:[%s278 + $0x140] sm:$0xff]
      %v339 = vld [vmem:[%s278 + $0x148] sm:$0xff]
      %v340 = vld [vmem:[%s278 + $0x150] sm:$0xff]
      %v341 = vld [vmem:[%s278 + $0x158] sm:$0xff]
      %v342 = vld [vmem:[%s278 + $0x160] sm:$0xff]
      %v343 = vld [vmem:[%s278 + $0x168] sm:$0xff]
      %v344 = vld [vmem:[%s278 + $0x170] sm:$0xff]
      %v345 = vld [vmem:[%s278 + $0x178] sm:$0xff]
      %v346 = vld [vmem:[%s278 + $0x180] sm:$0xff]
      %v347 = vld [vmem:[%s278 + $0x188] sm:$0xff]
      %v348 = vld [vmem:[%s278 + $0x190] sm:$0xff]
      %v349 = vld [vmem:[%s278 + $0x198] sm:$0xff]
      %v350 = vld [vmem:[%s278 + $0x1a0] sm:$0xff]
      %v351 = vld [vmem:[%s278 + $0x1a8] sm:$0xff]
      %v352 = vld [vmem:[%s278 + $0x1b0] sm:$0xff]
      %v353 = vld [vmem:[%s278 + $0x1b8] sm:$0xff]
      %v354 = vld [vmem:[%s278 + $0x1c0] sm:$0xff]
      %v355 = vld [vmem:[%s278 + $0x1c8] sm:$0xff]
      %v356 = vld [vmem:[%s278 + $0x1d0] sm:$0xff]
      %v357 = vld [vmem:[%s278 + $0x1d8] sm:$0xff]
      %v358 = vld [vmem:[%s278 + $0x1e0] sm:$0xff]
      %v359 = vld [vmem:[%s278 + $0x1e8] sm:$0xff]
      %v360 = vld [vmem:[%s278 + $0x1f0] sm:$0xff]
      %v361 = vld [vmem:[%s278 + $0x1f8] sm:$0xff]
      %v362 = vld [vmem:[%s278 + $0x200] sm:$0xff]
      %v363 = vld [vmem:[%s278 + $0x208] sm:$0xff]
      %v364 = vld [vmem:[%s278 + $0x210] sm:$0xff]
      %v365 = vld [vmem:[%s278 + $0x218] sm:$0xff]
      %v366 = vld [vmem:[%s278 + $0x220] sm:$0xff]
      %v367 = vld [vmem:[%s278 + $0x228] sm:$0xff]
      %v368 = vld [vmem:[%s278 + $0x230] sm:$0xff]
      %v369 = vld [vmem:[%s278 + $0x238] sm:$0xff]
      %v370 = vld [vmem:[%s278 + $0x240] sm:$0xff]
      %v371 = vld [vmem:[%s278 + $0x248] sm:$0xff]
      %v372 = vld [vmem:[%s278 + $0x250] sm:$0xff]
      %v373 = vld [vmem:[%s278 + $0x258] sm:$0xff]
      %v374 = vld [vmem:[%s278 + $0x260] sm:$0xff]
      %v375 = vld [vmem:[%s278 + $0x268] sm:$0xff]
      %v376 = vld [vmem:[%s278 + $0x270] sm:$0xff]
      %v377 = vld [vmem:[%s278 + $0x278] sm:$0xff]
      %v378 = vld [vmem:[%s278 + $0x280] sm:$0xff]
      %v379 = vld [vmem:[%s278 + $0x288] sm:$0xff]
      %v380 = vld [vmem:[%s278 + $0x290] sm:$0xff]
      %v381 = vld [vmem:[%s278 + $0x298] sm:$0xff]
      %v382 = vld [vmem:[%s278 + $0x2a0] sm:$0xff]
      %v383 = vld [vmem:[%s278 + $0x2a8] sm:$0xff]
      %v384 = vld [vmem:[%s278 + $0x2b0] sm:$0xff]
      %v385 = vld [vmem:[%s278 + $0x2b8] sm:$0xff]
      %v386 = vld [vmem:[%s278 + $0x2c0] sm:$0xff]
      %v387 = vld [vmem:[%s278 + $0x2c8] sm:$0xff]
      %v388 = vld [vmem:[%s278 + $0x2d0] sm:$0xff]
      %v389 = vld [vmem:[%s278 + $0x2d8] sm:$0xff]
      %v390 = vld [vmem:[%s278 + $0x2e0] sm:$0xff]
      %v391 = vld [vmem:[%s278 + $0x2e8] sm:$0xff]
      %v392 = vld [vmem:[%s278 + $0x2f0] sm:$0xff]
      %v393 = vld [vmem:[%s278 + $0x2f8] sm:$0xff]
      %v394 = vld [vmem:[%s278 + $0x300] sm:$0xff]
      %v395 = vld [vmem:[%s278 + $0x308] sm:$0xff]
      %v396 = vld [vmem:[%s278 + $0x310] sm:$0xff]
      %v397 = vld [vmem:[%s278 + $0x318] sm:$0xff]
      %v398 = vld [vmem:[%s278 + $0x320] sm:$0xff]
      %v399 = vld [vmem:[%s278 + $0x328] sm:$0xff]
      %v400 = vld [vmem:[%s278 + $0x330] sm:$0xff]
      %v401 = vld [vmem:[%s278 + $0x338] sm:$0xff]
      %v402 = vld [vmem:[%s278 + $0x340] sm:$0xff]
      %v403 = vld [vmem:[%s278 + $0x348] sm:$0xff]
      %v404 = vld [vmem:[%s278 + $0x350] sm:$0xff]
      %v405 = vld [vmem:[%s278 + $0x358] sm:$0xff]
      %v406 = vld [vmem:[%s278 + $0x360] sm:$0xff]
      %v407 = vld [vmem:[%s278 + $0x368] sm:$0xff]
      %v408 = vld [vmem:[%s278 + $0x370] sm:$0xff]
      %v409 = vld [vmem:[%s278 + $0x378] sm:$0xff]
      %v410 = vld [vmem:[%s278 + $0x380] sm:$0xff]
      %v411 = vld [vmem:[%s278 + $0x388] sm:$0xff]
      %v412 = vld [vmem:[%s278 + $0x390] sm:$0xff]
      %v413 = vld [vmem:[%s278 + $0x398] sm:$0xff]
      %v414 = vld [vmem:[%s278 + $0x3a0] sm:$0xff]
      %v415 = vld [vmem:[%s278 + $0x3a8] sm:$0xff]
      %v416 = vld [vmem:[%s278 + $0x3b0] sm:$0xff]
      %v417 = vld [vmem:[%s278 + $0x3b8] sm:$0xff]
      %v418 = vld [vmem:[%s278 + $0x3c0] sm:$0xff]
      %v419 = vld [vmem:[%s278 + $0x3c8] sm:$0xff]
      %v420 = vld [vmem:[%s278 + $0x3d0] sm:$0xff]
      %v421 = vld [vmem:[%s278 + $0x3d8] sm:$0xff]
      %v422 = vld [vmem:[%s278 + $0x3e0] sm:$0xff]
      %v423 = vld [vmem:[%s278 + $0x3e8] sm:$0xff]
      %v424 = vld [vmem:[%s278 + $0x3f0] sm:$0xff]
      %v425 = vld [vmem:[%s278 + $0x3f8] sm:$0xff]
      %v426 = vld [vmem:[%s278 + $0x400] sm:$0xff]
      %v427 = vld [vmem:[%s278 + $0x408] sm:$0xff]
      %v428 = vld [vmem:[%s278 + $0x410] sm:$0xff]
      %v429 = vld [vmem:[%s278 + $0x418] sm:$0xff]
      %v430 = vld [vmem:[%s278 + $0x420] sm:$0xff]
      %v431 = vld [vmem:[%s278 + $0x428] sm:$0xff]
      %v432 = vld [vmem:[%s278 + $0x430] sm:$0xff]
      %v433 = vld [vmem:[%s278 + $0x438] sm:$0xff]
      %v434 = vld [vmem:[%s278 + $0x440] sm:$0xff]
      %v435 = vld [vmem:[%s278 + $0x448] sm:$0xff]
      %v436 = vld [vmem:[%s278 + $0x450] sm:$0xff]
      %v437 = vld [vmem:[%s278 + $0x458] sm:$0xff]
      %v438 = vld [vmem:[%s278 + $0x460] sm:$0xff]
      %v439 = vld [vmem:[%s278 + $0x468] sm:$0xff]
      %v440 = vld [vmem:[%s278 + $0x470] sm:$0xff]
      %v441 = vld [vmem:[%s278 + $0x478] sm:$0xff]
      %v442 = vld [vmem:[%s278 + $0x480] sm:$0xff]
      %v443 = vld [vmem:[%s278 + $0x488] sm:$0xff]
      %v444 = vld [vmem:[%s278 + $0x490] sm:$0xff]
      %v445 = vld [vmem:[%s278 + $0x498] sm:$0xff]
      %v446 = vld [vmem:[%s278 + $0x4a0] sm:$0xff]
      %v447 = vld [vmem:[%s278 + $0x4a8] sm:$0xff]
      %v448 = vld [vmem:[%s278 + $0x4b0] sm:$0xff]
      %v449 = vld [vmem:[%s278 + $0x4b8] sm:$0xff]
      %v450 = vld [vmem:[%s278 + $0x4c0] sm:$0xff]
      %v451 = vld [vmem:[%s278 + $0x4c8] sm:$0xff]
      %v452 = vld [vmem:[%s278 + $0x4d0] sm:$0xff]
      %v453 = vld [vmem:[%s278 + $0x4d8] sm:$0xff]
      %v454 = vld [vmem:[%s278 + $0x4e0] sm:$0xff]
      %v455 = vld [vmem:[%s278 + $0x4e8] sm:$0xff]
      %v456 = vld [vmem:[%s278 + $0x4f0] sm:$0xff]
      %v457 = vld [vmem:[%s278 + $0x4f8] sm:$0xff]
      %v458 = vld [vmem:[%s278 + $0x500] sm:$0xff]
      %v459 = vld [vmem:[%s278 + $0x508] sm:$0xff]
      %v460 = vld [vmem:[%s278 + $0x510] sm:$0xff]
      %v461 = vld [vmem:[%s278 + $0x518] sm:$0xff]
      %v462 = vld [vmem:[%s278 + $0x520] sm:$0xff]
      %v463 = vld [vmem:[%s278 + $0x528] sm:$0xff]
      %v464 = vld [vmem:[%s278 + $0x530] sm:$0xff]
      %v465 = vld [vmem:[%s278 + $0x538] sm:$0xff]
      %v466 = vld [vmem:[%s278 + $0x540] sm:$0xff]
      %v467 = vld [vmem:[%s278 + $0x548] sm:$0xff]
      %v468 = vld [vmem:[%s278 + $0x550] sm:$0xff]
      %v469 = vld [vmem:[%s278 + $0x558] sm:$0xff]
      %v470 = vld [vmem:[%s278 + $0x560] sm:$0xff]
      %v471 = vld [vmem:[%s278 + $0x568] sm:$0xff]
      %v472 = vld [vmem:[%s278 + $0x570] sm:$0xff]
      %v473 = vld [vmem:[%s278 + $0x578] sm:$0xff]
      %v474 = vld [vmem:[%s278 + $0x580] sm:$0xff]
      %v475 = vld [vmem:[%s278 + $0x588] sm:$0xff]
      %v476 = vld [vmem:[%s278 + $0x590] sm:$0xff]
      %v477 = vld [vmem:[%s278 + $0x598] sm:$0xff]
      %v478 = vld [vmem:[%s278 + $0x5a0] sm:$0xff]
      %v479 = vld [vmem:[%s278 + $0x5a8] sm:$0xff]
      %v480 = vld [vmem:[%s278 + $0x5b0] sm:$0xff]
      %v481 = vld [vmem:[%s278 + $0x5b8] sm:$0xff]
      %v482 = vld [vmem:[%s278 + $0x5c0] sm:$0xff]
      %v483 = vld [vmem:[%s278 + $0x5c8] sm:$0xff]
      %v484 = vld [vmem:[%s278 + $0x5d0] sm:$0xff]
      %v485 = vld [vmem:[%s278 + $0x5d8] sm:$0xff]
      %v486 = vld [vmem:[%s278 + $0x5e0] sm:$0xff]
      %v487 = vld [vmem:[%s278 + $0x5e8] sm:$0xff]
      %v488 = vld [vmem:[%s278 + $0x5f0] sm:$0xff]
      %v489 = vld [vmem:[%s278 + $0x5f8] sm:$0xff]
      %v490 = vld [vmem:[%s278 + $0x600] sm:$0xff]
      %v491 = vld [vmem:[%s278 + $0x608] sm:$0xff]
      %v492 = vld [vmem:[%s278 + $0x610] sm:$0xff]
      %v493 = vld [vmem:[%s278 + $0x618] sm:$0xff]
      %v494 = vld [vmem:[%s278 + $0x620] sm:$0xff]
      %v495 = vld [vmem:[%s278 + $0x628] sm:$0xff]
      %v496 = vld [vmem:[%s278 + $0x630] sm:$0xff]
      %v497 = vld [vmem:[%s278 + $0x638] sm:$0xff]
      %v498 = vld [vmem:[%s278 + $0x640] sm:$0xff]
      %v499 = vld [vmem:[%s278 + $0x648] sm:$0xff]
      %v500 = vld [vmem:[%s278 + $0x650] sm:$0xff]
      %v501 = vld [vmem:[%s278 + $0x658] sm:$0xff]
      %v502 = vld [vmem:[%s278 + $0x660] sm:$0xff]
      %v503 = vld [vmem:[%s278 + $0x668] sm:$0xff]
      %v504 = vld [vmem:[%s278 + $0x670] sm:$0xff]
      %v505 = vld [vmem:[%s278 + $0x678] sm:$0xff]
      %v506 = vld [vmem:[%s278 + $0x680] sm:$0xff]
      %v507 = vld [vmem:[%s278 + $0x688] sm:$0xff]
      %v508 = vld [vmem:[%s278 + $0x690] sm:$0xff]
      %v509 = vld [vmem:[%s278 + $0x698] sm:$0xff]
      %v510 = vld [vmem:[%s278 + $0x6a0] sm:$0xff]
      %v511 = vld [vmem:[%s278 + $0x6a8] sm:$0xff]
      %v512 = vld [vmem:[%s278 + $0x6b0] sm:$0xff]
      %v513 = vld [vmem:[%s278 + $0x6b8] sm:$0xff]
      %v514 = vld [vmem:[%s278 + $0x6c0] sm:$0xff]
      %v515 = vld [vmem:[%s278 + $0x6c8] sm:$0xff]
      %v516 = vld [vmem:[%s278 + $0x6d0] sm:$0xff]
      %v517 = vld [vmem:[%s278 + $0x6d8] sm:$0xff]
      %v518 = vld [vmem:[%s278 + $0x6e0] sm:$0xff]
      %v519 = vld [vmem:[%s278 + $0x6e8] sm:$0xff]
      %v520 = vld [vmem:[%s278 + $0x6f0] sm:$0xff]
      %v521 = vld [vmem:[%s278 + $0x6f8] sm:$0xff]
      %v522 = vld [vmem:[%s278 + $0x700] sm:$0xff]
      %v523 = vld [vmem:[%s278 + $0x708] sm:$0xff]
      %v524 = vld [vmem:[%s278 + $0x710] sm:$0xff]
      %v525 = vld [vmem:[%s278 + $0x718] sm:$0xff]
      %v526 = vld [vmem:[%s278 + $0x720] sm:$0xff]
      %v527 = vld [vmem:[%s278 + $0x728] sm:$0xff]
      %v528 = vld [vmem:[%s278 + $0x730] sm:$0xff]
      %v529 = vld [vmem:[%s278 + $0x738] sm:$0xff]
      %v530 = vld [vmem:[%s278 + $0x740] sm:$0xff]
      %v531 = vld [vmem:[%s278 + $0x748] sm:$0xff]
      %v532 = vld [vmem:[%s278 + $0x750] sm:$0xff]
      %v533 = vld [vmem:[%s278 + $0x758] sm:$0xff]
      %v534 = vld [vmem:[%s278 + $0x760] sm:$0xff]
      %v535 = vld [vmem:[%s278 + $0x768] sm:$0xff]
      %v536 = vld [vmem:[%s278 + $0x770] sm:$0xff]
      %v537 = vld [vmem:[%s278 + $0x778] sm:$0xff]
      %v538 = vld [vmem:[%s278 + $0x780] sm:$0xff]
      %v539 = vld [vmem:[%s278 + $0x788] sm:$0xff]
      %v540 = vld [vmem:[%s278 + $0x790] sm:$0xff]
      %v541 = vld [vmem:[%s278 + $0x798] sm:$0xff]
      %v542 = vld [vmem:[%s278 + $0x7a0] sm:$0xff]
      %v543 = vld [vmem:[%s278 + $0x7a8] sm:$0xff]
      %v544 = vld [vmem:[%s278 + $0x7b0] sm:$0xff]
      %v545 = vld [vmem:[%s278 + $0x7b8] sm:$0xff]
      %v546 = vld [vmem:[%s278 + $0x7c0] sm:$0xff]
      %v547 = vld [vmem:[%s278 + $0x7c8] sm:$0xff]
      %v548 = vld [vmem:[%s278 + $0x7d0] sm:$0xff]
      %v549 = vld [vmem:[%s278 + $0x7d8] sm:$0xff]
      %v550 = vld [vmem:[%s278 + $0x7e0] sm:$0xff]
      %v551 = vld [vmem:[%s278 + $0x7e8] sm:$0xff]
      %v552 = vld [vmem:[%s278 + $0x7f0] sm:$0xff]
      %v553 = vld [vmem:[%s278 + $0x7f8] sm:$0xff]
      %v554 = vld [vmem:[%s278 + $0x800] sm:$0xff]
      %v555 = vld [vmem:[%s278 + $0x808] sm:$0xff]
      %v556 = vld [vmem:[%s278 + $0x810] sm:$0xff]
      %v557 = vld [vmem:[%s278 + $0x818] sm:$0xff]
      %v558 = vld [vmem:[%s278 + $0x820] sm:$0xff]
      %v559 = vld [vmem:[%s278 + $0x828] sm:$0xff]
      %v560 = vld [vmem:[%s278 + $0x830] sm:$0xff]
      %v561 = vld [vmem:[%s278 + $0x838] sm:$0xff]
      %v562 = vld [vmem:[%s278 + $0x840] sm:$0xff]
      %v563 = vld [vmem:[%s278 + $0x848] sm:$0xff]
      %v564 = vld [vmem:[%s278 + $0x850] sm:$0xff]
      %v565 = vld [vmem:[%s278 + $0x858] sm:$0xff]
      %v566 = vld [vmem:[%s278 + $0x860] sm:$0xff]
      %v567 = vld [vmem:[%s278 + $0x868] sm:$0xff]
      %v568 = vld [vmem:[%s278 + $0x870] sm:$0xff]
      %v569 = vld [vmem:[%s278 + $0x878] sm:$0xff]
      %v570 = vld [vmem:[%s278 + $0x880] sm:$0xff]
      %v571 = vld [vmem:[%s278 + $0x888] sm:$0xff]
      %v572 = vld [vmem:[%s278 + $0x890] sm:$0xff]
      %v573 = vld [vmem:[%s278 + $0x898] sm:$0xff]
      %v574 = vld [vmem:[%s278 + $0x8a0] sm:$0xff]
      %v575 = vld [vmem:[%s278 + $0x8a8] sm:$0xff]
      %v576 = vld [vmem:[%s278 + $0x8b0] sm:$0xff]
      %v577 = vld [vmem:[%s278 + $0x8b8] sm:$0xff]
      %v578 = vld [vmem:[%s278 + $0x8c0] sm:$0xff]
      %v579 = vld [vmem:[%s278 + $0x8c8] sm:$0xff]
      %v580 = vld [vmem:[%s278 + $0x8d0] sm:$0xff]
      %v581 = vld [vmem:[%s278 + $0x8d8] sm:$0xff]
      %v582 = vld [vmem:[%s278 + $0x8e0] sm:$0xff]
      %v583 = vld [vmem:[%s278 + $0x8e8] sm:$0xff]
      %v584 = vld [vmem:[%s278 + $0x8f0] sm:$0xff]
      %v585 = vld [vmem:[%s278 + $0x8f8] sm:$0xff]
      %v586 = vld [vmem:[%s282] sm:$0x3f]
      %v588 = vlaneseq
      %v589 = vshrl.u32 %v588, 7
      %v590 = vsub.s32 0, %v589
      %v591 = vrot.slane %v586, %v590
      %v592 = vlaneseq
      %v593 = vshrl.u32 %v592, 7
      %v594 = vsub.s32 1, %v593
      %v595 = vrot.slane %v586, %v594
      %v596 = vlaneseq
      %v597 = vshrl.u32 %v596, 7
      %v598 = vsub.s32 2, %v597
      %v599 = vrot.slane %v586, %v598
      %v600 = vlaneseq
      %v601 = vshrl.u32 %v600, 7
      %v602 = vsub.s32 3, %v601
      %v603 = vrot.slane %v586, %v602
      %v604 = vlaneseq
      %v605 = vshrl.u32 %v604, 7
      %v606 = vsub.s32 4, %v605
      %v607 = vrot.slane %v586, %v606
      %v608 = vlaneseq
      %v609 = vshrl.u32 %v608, 7
      %v610 = vsub.s32 5, %v609
      %v611 = vrot.slane %v586, %v610
      %v620 = vcombine.high %v296, %v296
      %v622 = vunpack.c.l.s4 1983009808
      %v623 = vunpack.c.0.s8 %v622
      %v624 = vlaneseq
      %v625 = vshrl.u32 %v624, 7
      %v626 = vsub.s32 %v623, %v625
      %v627 = vrot.slane %v296, %v626
      %v629 = vunpack.c.l.s4 1983009808
      %v630 = vunpack.c.0.s8 %v629
      %v631 = vlaneseq
      %v632 = vshrl.u32 %v631, 7
      %v633 = vsub.s32 %v630, %v632
      %v634 = vrot.slane %v620, %v633
      %v635 = vcombine.high %v627, %v627
      %v636 = vcombine.high %v634, %v634
      %v638 = vunpack.c.l.s4 1983009808
      %v639 = vunpack.c.0.s8 %v638
      %v640 = vlaneseq
      %v641 = vshrl.u32 %v640, 7
      %v642 = vsub.s32 %v639, %v641
      %v643 = vrot.slane %v297, %v642
      %v644 = vcombine.high %v643, %v643
      %v939 = vunpack.c.l.b16 %v298
      %v940 = vunpack.c.h.b16 %v298
      %v941 = vunpack.c.l.b16 %v299
      %v942 = vunpack.c.h.b16 %v299
      %v943 = vunpack.c.l.b16 %v300
      %v944 = vunpack.c.h.b16 %v300
      %v945 = vunpack.c.l.b16 %v301
      %v946 = vunpack.c.h.b16 %v301
      %v947 = vunpack.c.l.b16 %v302
      %v948 = vunpack.c.h.b16 %v302
      %v949 = vunpack.c.l.b16 %v303
      %v950 = vunpack.c.h.b16 %v303
      %v951 = vunpack.c.l.b16 %v304
      %v952 = vunpack.c.h.b16 %v304
      %v953 = vunpack.c.l.b16 %v305
      %v954 = vunpack.c.h.b16 %v305
      %v955 = vunpack.c.l.b16 %v306
      %v956 = vunpack.c.h.b16 %v306
      %v957 = vunpack.c.l.b16 %v307
      %v958 = vunpack.c.h.b16 %v307
      %v959 = vunpack.c.l.b16 %v308
      %v960 = vunpack.c.h.b16 %v308
      %v961 = vunpack.c.l.b16 %v309
      %v962 = vunpack.c.h.b16 %v309
      %v963 = vunpack.c.l.b16 %v310
      %v964 = vunpack.c.h.b16 %v310
      %v965 = vunpack.c.l.b16 %v311
      %v966 = vunpack.c.h.b16 %v311
      %v967 = vunpack.c.l.b16 %v312
      %v968 = vunpack.c.h.b16 %v312
      %v969 = vunpack.c.l.b16 %v313
      %v970 = vunpack.c.h.b16 %v313
      %v971 = vunpack.c.l.b16 %v314
      %v972 = vunpack.c.h.b16 %v314
      %v973 = vunpack.c.l.b16 %v315
      %v974 = vunpack.c.h.b16 %v315
      %v975 = vunpack.c.l.b16 %v316
      %v976 = vunpack.c.h.b16 %v316
      %v977 = vunpack.c.l.b16 %v317
      %v978 = vunpack.c.h.b16 %v317
      %v979 = vunpack.c.l.b16 %v318
      %v980 = vunpack.c.h.b16 %v318
      %v981 = vunpack.c.l.b16 %v319
      %v982 = vunpack.c.h.b16 %v319
      %v983 = vunpack.c.l.b16 %v320
      %v984 = vunpack.c.h.b16 %v320
      %v985 = vunpack.c.l.b16 %v321
      %v986 = vunpack.c.h.b16 %v321
      %v987 = vunpack.c.l.b16 %v322
      %v988 = vunpack.c.h.b16 %v322
      %v989 = vunpack.c.l.b16 %v323
      %v990 = vunpack.c.h.b16 %v323
      %v991 = vunpack.c.l.b16 %v324
      %v992 = vunpack.c.h.b16 %v324
      %v993 = vunpack.c.l.b16 %v325
      %v994 = vunpack.c.h.b16 %v325
      %v995 = vunpack.c.l.b16 %v326
      %v996 = vunpack.c.h.b16 %v326
      %v997 = vunpack.c.l.b16 %v327
      %v998 = vunpack.c.h.b16 %v327
      %v999 = vunpack.c.l.b16 %v328
      %v1000 = vunpack.c.h.b16 %v328
      %v1001 = vunpack.c.l.b16 %v329
      %v1002 = vunpack.c.h.b16 %v329
      %v1003 = vunpack.c.l.b16 %v330
      %v1004 = vunpack.c.h.b16 %v330
      %v1005 = vunpack.c.l.b16 %v331
      %v1006 = vunpack.c.h.b16 %v331
      %v1007 = vunpack.c.l.b16 %v332
      %v1008 = vunpack.c.h.b16 %v332
      %v1009 = vunpack.c.l.b16 %v333
      %v1010 = vunpack.c.h.b16 %v333
      %v1011 = vunpack.c.l.b16 %v334
      %v1012 = vunpack.c.h.b16 %v334
      %v1013 = vunpack.c.l.b16 %v335
      %v1014 = vunpack.c.h.b16 %v335
      %v1015 = vunpack.c.l.b16 %v336
      %v1016 = vunpack.c.h.b16 %v336
      %v1017 = vunpack.c.l.b16 %v337
      %v1018 = vunpack.c.h.b16 %v337
      %v1019 = vunpack.c.l.b16 %v338
      %v1020 = vunpack.c.h.b16 %v338
      %v1021 = vunpack.c.l.b16 %v339
      %v1022 = vunpack.c.h.b16 %v339
      %v1023 = vunpack.c.l.b16 %v340
      %v1024 = vunpack.c.h.b16 %v340
      %v1025 = vunpack.c.l.b16 %v341
      %v1026 = vunpack.c.h.b16 %v341
      %v1027 = vunpack.c.l.b16 %v342
      %v1028 = vunpack.c.h.b16 %v342
      %v1029 = vunpack.c.l.b16 %v343
      %v1030 = vunpack.c.h.b16 %v343
      %v1031 = vunpack.c.l.b16 %v344
      %v1032 = vunpack.c.h.b16 %v344
      %v1033 = vunpack.c.l.b16 %v345
      %v1034 = vunpack.c.h.b16 %v345
      %v1035 = vunpack.c.l.b16 %v346
      %v1036 = vunpack.c.h.b16 %v346
      %v1037 = vunpack.c.l.b16 %v347
      %v1038 = vunpack.c.h.b16 %v347
      %v1039 = vunpack.c.l.b16 %v348
      %v1040 = vunpack.c.h.b16 %v348
      %v1041 = vunpack.c.l.b16 %v349
      %v1042 = vunpack.c.h.b16 %v349
      %v1043 = vunpack.c.l.b16 %v350
      %v1044 = vunpack.c.h.b16 %v350
      %v1045 = vunpack.c.l.b16 %v351
      %v1046 = vunpack.c.h.b16 %v351
      %v1047 = vunpack.c.l.b16 %v352
      %v1048 = vunpack.c.h.b16 %v352
      %v1049 = vunpack.c.l.b16 %v353
      %v1050 = vunpack.c.h.b16 %v353
      %v1051 = vunpack.c.l.b16 %v354
      %v1052 = vunpack.c.h.b16 %v354
      %v1053 = vunpack.c.l.b16 %v355
      %v1054 = vunpack.c.h.b16 %v355
      %v1055 = vunpack.c.l.b16 %v356
      %v1056 = vunpack.c.h.b16 %v356
      %v1057 = vunpack.c.l.b16 %v357
      %v1058 = vunpack.c.h.b16 %v357
      %v1059 = vunpack.c.l.b16 %v358
      %v1060 = vunpack.c.h.b16 %v358
      %v1061 = vunpack.c.l.b16 %v359
      %v1062 = vunpack.c.h.b16 %v359
      %v1063 = vunpack.c.l.b16 %v360
      %v1064 = vunpack.c.h.b16 %v360
      %v1065 = vunpack.c.l.b16 %v361
      %v1066 = vunpack.c.h.b16 %v361
      %v1067 = vunpack.c.l.b16 %v362
      %v1068 = vunpack.c.h.b16 %v362
      %v1069 = vunpack.c.l.b16 %v363
      %v1070 = vunpack.c.h.b16 %v363
      %v1071 = vunpack.c.l.b16 %v364
      %v1072 = vunpack.c.h.b16 %v364
      %v1073 = vunpack.c.l.b16 %v365
      %v1074 = vunpack.c.h.b16 %v365
      %v1075 = vunpack.c.l.b16 %v366
      %v1076 = vunpack.c.h.b16 %v366
      %v1077 = vunpack.c.l.b16 %v367
      %v1078 = vunpack.c.h.b16 %v367
      %v1079 = vunpack.c.l.b16 %v368
      %v1080 = vunpack.c.h.b16 %v368
      %v1081 = vunpack.c.l.b16 %v369
      %v1082 = vunpack.c.h.b16 %v369
      %v1083 = vunpack.c.l.b16 %v370
      %v1084 = vunpack.c.h.b16 %v370
      %v1085 = vunpack.c.l.b16 %v371
      %v1086 = vunpack.c.h.b16 %v371
      %v1087 = vunpack.c.l.b16 %v372
      %v1088 = vunpack.c.h.b16 %v372
      %v1089 = vunpack.c.l.b16 %v373
      %v1090 = vunpack.c.h.b16 %v373
      %v1091 = vunpack.c.l.b16 %v374
      %v1092 = vunpack.c.h.b16 %v374
      %v1093 = vunpack.c.l.b16 %v375
      %v1094 = vunpack.c.h.b16 %v375
      %v1095 = vunpack.c.l.b16 %v376
      %v1096 = vunpack.c.h.b16 %v376
      %v1097 = vunpack.c.l.b16 %v377
      %v1098 = vunpack.c.h.b16 %v377
      %v1099 = vunpack.c.l.b16 %v378
      %v1100 = vunpack.c.h.b16 %v378
      %v1101 = vunpack.c.l.b16 %v379
      %v1102 = vunpack.c.h.b16 %v379
      %v1103 = vunpack.c.l.b16 %v380
      %v1104 = vunpack.c.h.b16 %v380
      %v1105 = vunpack.c.l.b16 %v381
      %v1106 = vunpack.c.h.b16 %v381
      %v1107 = vunpack.c.l.b16 %v382
      %v1108 = vunpack.c.h.b16 %v382
      %v1109 = vunpack.c.l.b16 %v383
      %v1110 = vunpack.c.h.b16 %v383
      %v1111 = vunpack.c.l.b16 %v384
      %v1112 = vunpack.c.h.b16 %v384
      %v1113 = vunpack.c.l.b16 %v385
      %v1114 = vunpack.c.h.b16 %v385
      %v1115 = vunpack.c.l.b16 %v386
      %v1116 = vunpack.c.h.b16 %v386
      %v1117 = vunpack.c.l.b16 %v387
      %v1118 = vunpack.c.h.b16 %v387
      %v1119 = vunpack.c.l.b16 %v388
      %v1120 = vunpack.c.h.b16 %v388
      %v1121 = vunpack.c.l.b16 %v389
      %v1122 = vunpack.c.h.b16 %v389
      %v1123 = vunpack.c.l.b16 %v390
      %v1124 = vunpack.c.h.b16 %v390
      %v1125 = vunpack.c.l.b16 %v391
      %v1126 = vunpack.c.h.b16 %v391
      %v1127 = vunpack.c.l.b16 %v392
      %v1128 = vunpack.c.h.b16 %v392
      %v1129 = vunpack.c.l.b16 %v393
      %v1130 = vunpack.c.h.b16 %v393
      %v1131 = vunpack.c.l.b16 %v394
      %v1132 = vunpack.c.h.b16 %v394
      %v1133 = vunpack.c.l.b16 %v395
      %v1134 = vunpack.c.h.b16 %v395
      %v1135 = vunpack.c.l.b16 %v396
      %v1136 = vunpack.c.h.b16 %v396
      %v1137 = vunpack.c.l.b16 %v397
      %v1138 = vunpack.c.h.b16 %v397
      %v1139 = vunpack.c.l.b16 %v398
      %v1140 = vunpack.c.h.b16 %v398
      %v1141 = vunpack.c.l.b16 %v399
      %v1142 = vunpack.c.h.b16 %v399
      %v1143 = vunpack.c.l.b16 %v400
      %v1144 = vunpack.c.h.b16 %v400
      %v1145 = vunpack.c.l.b16 %v401
      %v1146 = vunpack.c.h.b16 %v401
      %v1147 = vunpack.c.l.b16 %v402
      %v1148 = vunpack.c.h.b16 %v402
      %v1149 = vunpack.c.l.b16 %v403
      %v1150 = vunpack.c.h.b16 %v403
      %v1151 = vunpack.c.l.b16 %v404
      %v1152 = vunpack.c.h.b16 %v404
      %v1153 = vunpack.c.l.b16 %v405
      %v1154 = vunpack.c.h.b16 %v405
      %v1155 = vunpack.c.l.b16 %v406
      %v1156 = vunpack.c.h.b16 %v406
      %v1157 = vunpack.c.l.b16 %v407
      %v1158 = vunpack.c.h.b16 %v407
      %v1159 = vunpack.c.l.b16 %v408
      %v1160 = vunpack.c.h.b16 %v408
      %v1161 = vunpack.c.l.b16 %v409
      %v1162 = vunpack.c.h.b16 %v409
      %v1163 = vunpack.c.l.b16 %v410
      %v1164 = vunpack.c.h.b16 %v410
      %v1165 = vunpack.c.l.b16 %v411
      %v1166 = vunpack.c.h.b16 %v411
      %v1167 = vunpack.c.l.b16 %v412
      %v1168 = vunpack.c.h.b16 %v412
      %v1169 = vunpack.c.l.b16 %v413
      %v1170 = vunpack.c.h.b16 %v413
      %v1171 = vunpack.c.l.b16 %v414
      %v1172 = vunpack.c.h.b16 %v414
      %v1173 = vunpack.c.l.b16 %v415
      %v1174 = vunpack.c.h.b16 %v415
      %v1175 = vunpack.c.l.b16 %v416
      %v1176 = vunpack.c.h.b16 %v416
      %v1177 = vunpack.c.l.b16 %v417
      %v1178 = vunpack.c.h.b16 %v417
      %v1179 = vunpack.c.l.b16 %v418
      %v1180 = vunpack.c.h.b16 %v418
      %v1181 = vunpack.c.l.b16 %v419
      %v1182 = vunpack.c.h.b16 %v419
      %v1183 = vunpack.c.l.b16 %v420
      %v1184 = vunpack.c.h.b16 %v420
      %v1185 = vunpack.c.l.b16 %v421
      %v1186 = vunpack.c.h.b16 %v421
      %v1187 = vunpack.c.l.b16 %v422
      %v1188 = vunpack.c.h.b16 %v422
      %v1189 = vunpack.c.l.b16 %v423
      %v1190 = vunpack.c.h.b16 %v423
      %v1191 = vunpack.c.l.b16 %v424
      %v1192 = vunpack.c.h.b16 %v424
      %v1193 = vunpack.c.l.b16 %v425
      %v1194 = vunpack.c.h.b16 %v425
      %v1195 = vunpack.c.l.b16 %v426
      %v1196 = vunpack.c.h.b16 %v426
      %v1197 = vunpack.c.l.b16 %v427
      %v1198 = vunpack.c.h.b16 %v427
      %v1199 = vunpack.c.l.b16 %v428
      %v1200 = vunpack.c.h.b16 %v428
      %v1201 = vunpack.c.l.b16 %v429
      %v1202 = vunpack.c.h.b16 %v429
      %v1203 = vunpack.c.l.b16 %v430
      %v1204 = vunpack.c.h.b16 %v430
      %v1205 = vunpack.c.l.b16 %v431
      %v1206 = vunpack.c.h.b16 %v431
      %v1207 = vunpack.c.l.b16 %v432
      %v1208 = vunpack.c.h.b16 %v432
      %v1209 = vunpack.c.l.b16 %v433
      %v1210 = vunpack.c.h.b16 %v433
      %v1211 = vunpack.c.l.b16 %v434
      %v1212 = vunpack.c.h.b16 %v434
      %v1213 = vunpack.c.l.b16 %v435
      %v1214 = vunpack.c.h.b16 %v435
      %v1215 = vunpack.c.l.b16 %v436
      %v1216 = vunpack.c.h.b16 %v436
      %v1217 = vunpack.c.l.b16 %v437
      %v1218 = vunpack.c.h.b16 %v437
      %v1219 = vunpack.c.l.b16 %v438
      %v1220 = vunpack.c.h.b16 %v438
      %v1221 = vunpack.c.l.b16 %v439
      %v1222 = vunpack.c.h.b16 %v439
      %v1223 = vunpack.c.l.b16 %v440
      %v1224 = vunpack.c.h.b16 %v440
      %v1225 = vunpack.c.l.b16 %v441
      %v1226 = vunpack.c.h.b16 %v441
      %v1227 = vunpack.c.l.b16 %v442
      %v1228 = vunpack.c.h.b16 %v442
      %v1229 = vunpack.c.l.b16 %v443
      %v1230 = vunpack.c.h.b16 %v443
      %v1231 = vunpack.c.l.b16 %v444
      %v1232 = vunpack.c.h.b16 %v444
      %v1233 = vunpack.c.l.b16 %v445
      %v1234 = vunpack.c.h.b16 %v445
      %v1235 = vunpack.c.l.b16 %v446
      %v1236 = vunpack.c.h.b16 %v446
      %v1237 = vunpack.c.l.b16 %v447
      %v1238 = vunpack.c.h.b16 %v447
      %v1239 = vunpack.c.l.b16 %v448
      %v1240 = vunpack.c.h.b16 %v448
      %v1241 = vunpack.c.l.b16 %v449
      %v1242 = vunpack.c.h.b16 %v449
      %v1243 = vunpack.c.l.b16 %v450
      %v1244 = vunpack.c.h.b16 %v450
      %v1245 = vunpack.c.l.b16 %v451
      %v1246 = vunpack.c.h.b16 %v451
      %v1247 = vunpack.c.l.b16 %v452
      %v1248 = vunpack.c.h.b16 %v452
      %v1249 = vunpack.c.l.b16 %v453
      %v1250 = vunpack.c.h.b16 %v453
      %v1251 = vunpack.c.l.b16 %v454
      %v1252 = vunpack.c.h.b16 %v454
      %v1253 = vunpack.c.l.b16 %v455
      %v1254 = vunpack.c.h.b16 %v455
      %v1255 = vunpack.c.l.b16 %v456
      %v1256 = vunpack.c.h.b16 %v456
      %v1257 = vunpack.c.l.b16 %v457
      %v1258 = vunpack.c.h.b16 %v457
      %v1259 = vunpack.c.l.b16 %v458
      %v1260 = vunpack.c.h.b16 %v458
      %v1261 = vunpack.c.l.b16 %v459
      %v1262 = vunpack.c.h.b16 %v459
      %v1263 = vunpack.c.l.b16 %v460
      %v1264 = vunpack.c.h.b16 %v460
      %v1265 = vunpack.c.l.b16 %v461
      %v1266 = vunpack.c.h.b16 %v461
      %v1267 = vunpack.c.l.b16 %v462
      %v1268 = vunpack.c.h.b16 %v462
      %v1269 = vunpack.c.l.b16 %v463
      %v1270 = vunpack.c.h.b16 %v463
      %v1271 = vunpack.c.l.b16 %v464
      %v1272 = vunpack.c.h.b16 %v464
      %v1273 = vunpack.c.l.b16 %v465
      %v1274 = vunpack.c.h.b16 %v465
      %v1275 = vunpack.c.l.b16 %v466
      %v1276 = vunpack.c.h.b16 %v466
      %v1277 = vunpack.c.l.b16 %v467
      %v1278 = vunpack.c.h.b16 %v467
      %v1279 = vunpack.c.l.b16 %v468
      %v1280 = vunpack.c.h.b16 %v468
      %v1281 = vunpack.c.l.b16 %v469
      %v1282 = vunpack.c.h.b16 %v469
      %v1283 = vunpack.c.l.b16 %v470
      %v1284 = vunpack.c.h.b16 %v470
      %v1285 = vunpack.c.l.b16 %v471
      %v1286 = vunpack.c.h.b16 %v471
      %v1287 = vunpack.c.l.b16 %v472
      %v1288 = vunpack.c.h.b16 %v472
      %v1289 = vunpack.c.l.b16 %v473
      %v1290 = vunpack.c.h.b16 %v473
      %v1291 = vunpack.c.l.b16 %v474
      %v1292 = vunpack.c.h.b16 %v474
      %v1293 = vunpack.c.l.b16 %v475
      %v1294 = vunpack.c.h.b16 %v475
      %v1295 = vunpack.c.l.b16 %v476
      %v1296 = vunpack.c.h.b16 %v476
      %v1297 = vunpack.c.l.b16 %v477
      %v1298 = vunpack.c.h.b16 %v477
      %v1299 = vunpack.c.l.b16 %v478
      %v1300 = vunpack.c.h.b16 %v478
      %v1301 = vunpack.c.l.b16 %v479
      %v1302 = vunpack.c.h.b16 %v479
      %v1303 = vunpack.c.l.b16 %v480
      %v1304 = vunpack.c.h.b16 %v480
      %v1305 = vunpack.c.l.b16 %v481
      %v1306 = vunpack.c.h.b16 %v481
      %v1307 = vunpack.c.l.b16 %v482
      %v1308 = vunpack.c.h.b16 %v482
      %v1309 = vunpack.c.l.b16 %v483
      %v1310 = vunpack.c.h.b16 %v483
      %v1311 = vunpack.c.l.b16 %v484
      %v1312 = vunpack.c.h.b16 %v484
      %v1313 = vunpack.c.l.b16 %v485
      %v1314 = vunpack.c.h.b16 %v485
      %v1315 = vunpack.c.l.b16 %v486
      %v1316 = vunpack.c.h.b16 %v486
      %v1317 = vunpack.c.l.b16 %v487
      %v1318 = vunpack.c.h.b16 %v487
      %v1319 = vunpack.c.l.b16 %v488
      %v1320 = vunpack.c.h.b16 %v488
      %v1321 = vunpack.c.l.b16 %v489
      %v1322 = vunpack.c.h.b16 %v489
      %v1323 = vunpack.c.l.b16 %v490
      %v1324 = vunpack.c.h.b16 %v490
      %v1325 = vunpack.c.l.b16 %v491
      %v1326 = vunpack.c.h.b16 %v491
      %v1327 = vunpack.c.l.b16 %v492
      %v1328 = vunpack.c.h.b16 %v492
      %v1329 = vunpack.c.l.b16 %v493
      %v1330 = vunpack.c.h.b16 %v493
      %v1331 = vunpack.c.l.b16 %v494
      %v1332 = vunpack.c.h.b16 %v494
      %v1333 = vunpack.c.l.b16 %v495
      %v1334 = vunpack.c.h.b16 %v495
      %v1335 = vunpack.c.l.b16 %v496
      %v1336 = vunpack.c.h.b16 %v496
      %v1337 = vunpack.c.l.b16 %v497
      %v1338 = vunpack.c.h.b16 %v497
      %v1339 = vunpack.c.l.b16 %v498
      %v1340 = vunpack.c.h.b16 %v498
      %v1341 = vunpack.c.l.b16 %v499
      %v1342 = vunpack.c.h.b16 %v499
      %v1343 = vunpack.c.l.b16 %v500
      %v1344 = vunpack.c.h.b16 %v500
      %v1345 = vunpack.c.l.b16 %v501
      %v1346 = vunpack.c.h.b16 %v501
      %v1347 = vunpack.c.l.b16 %v502
      %v1348 = vunpack.c.h.b16 %v502
      %v1349 = vunpack.c.l.b16 %v503
      %v1350 = vunpack.c.h.b16 %v503
      %v1351 = vunpack.c.l.b16 %v504
      %v1352 = vunpack.c.h.b16 %v504
      %v1353 = vunpack.c.l.b16 %v505
      %v1354 = vunpack.c.h.b16 %v505
      %v1355 = vunpack.c.l.b16 %v506
      %v1356 = vunpack.c.h.b16 %v506
      %v1357 = vunpack.c.l.b16 %v507
      %v1358 = vunpack.c.h.b16 %v507
      %v1359 = vunpack.c.l.b16 %v508
      %v1360 = vunpack.c.h.b16 %v508
      %v1361 = vunpack.c.l.b16 %v509
      %v1362 = vunpack.c.h.b16 %v509
      %v1363 = vunpack.c.l.b16 %v510
      %v1364 = vunpack.c.h.b16 %v510
      %v1365 = vunpack.c.l.b16 %v511
      %v1366 = vunpack.c.h.b16 %v511
      %v1367 = vunpack.c.l.b16 %v512
      %v1368 = vunpack.c.h.b16 %v512
      %v1369 = vunpack.c.l.b16 %v513
      %v1370 = vunpack.c.h.b16 %v513
      %v1371 = vunpack.c.l.b16 %v514
      %v1372 = vunpack.c.h.b16 %v514
      %v1373 = vunpack.c.l.b16 %v515
      %v1374 = vunpack.c.h.b16 %v515
      %v1375 = vunpack.c.l.b16 %v516
      %v1376 = vunpack.c.h.b16 %v516
      %v1377 = vunpack.c.l.b16 %v517
      %v1378 = vunpack.c.h.b16 %v517
      %v1379 = vunpack.c.l.b16 %v518
      %v1380 = vunpack.c.h.b16 %v518
      %v1381 = vunpack.c.l.b16 %v519
      %v1382 = vunpack.c.h.b16 %v519
      %v1383 = vunpack.c.l.b16 %v520
      %v1384 = vunpack.c.h.b16 %v520
      %v1385 = vunpack.c.l.b16 %v521
      %v1386 = vunpack.c.h.b16 %v521
      %v1387 = vunpack.c.l.b16 %v522
      %v1388 = vunpack.c.h.b16 %v522
      %v1389 = vunpack.c.l.b16 %v523
      %v1390 = vunpack.c.h.b16 %v523
      %v1391 = vunpack.c.l.b16 %v524
      %v1392 = vunpack.c.h.b16 %v524
      %v1393 = vunpack.c.l.b16 %v525
      %v1394 = vunpack.c.h.b16 %v525
      %v1395 = vunpack.c.l.b16 %v526
      %v1396 = vunpack.c.h.b16 %v526
      %v1397 = vunpack.c.l.b16 %v527
      %v1398 = vunpack.c.h.b16 %v527
      %v1399 = vunpack.c.l.b16 %v528
      %v1400 = vunpack.c.h.b16 %v528
      %v1401 = vunpack.c.l.b16 %v529
      %v1402 = vunpack.c.h.b16 %v529
      %v1403 = vunpack.c.l.b16 %v530
      %v1404 = vunpack.c.h.b16 %v530
      %v1405 = vunpack.c.l.b16 %v531
      %v1406 = vunpack.c.h.b16 %v531
      %v1407 = vunpack.c.l.b16 %v532
      %v1408 = vunpack.c.h.b16 %v532
      %v1409 = vunpack.c.l.b16 %v533
      %v1410 = vunpack.c.h.b16 %v533
      %v1411 = vunpack.c.l.b16 %v534
      %v1412 = vunpack.c.h.b16 %v534
      %v1413 = vunpack.c.l.b16 %v535
      %v1414 = vunpack.c.h.b16 %v535
      %v1415 = vunpack.c.l.b16 %v536
      %v1416 = vunpack.c.h.b16 %v536
      %v1417 = vunpack.c.l.b16 %v537
      %v1418 = vunpack.c.h.b16 %v537
      %v1419 = vunpack.c.l.b16 %v538
      %v1420 = vunpack.c.h.b16 %v538
      %v1421 = vunpack.c.l.b16 %v539
      %v1422 = vunpack.c.h.b16 %v539
      %v1423 = vunpack.c.l.b16 %v540
      %v1424 = vunpack.c.h.b16 %v540
      %v1425 = vunpack.c.l.b16 %v541
      %v1426 = vunpack.c.h.b16 %v541
      %v1427 = vunpack.c.l.b16 %v542
      %v1428 = vunpack.c.h.b16 %v542
      %v1429 = vunpack.c.l.b16 %v543
      %v1430 = vunpack.c.h.b16 %v543
      %v1431 = vunpack.c.l.b16 %v544
      %v1432 = vunpack.c.h.b16 %v544
      %v1433 = vunpack.c.l.b16 %v545
      %v1434 = vunpack.c.h.b16 %v545
      %v1435 = vunpack.c.l.b16 %v546
      %v1436 = vunpack.c.h.b16 %v546
      %v1437 = vunpack.c.l.b16 %v547
      %v1438 = vunpack.c.h.b16 %v547
      %v1439 = vunpack.c.l.b16 %v548
      %v1440 = vunpack.c.h.b16 %v548
      %v1441 = vunpack.c.l.b16 %v549
      %v1442 = vunpack.c.h.b16 %v549
      %v1443 = vunpack.c.l.b16 %v550
      %v1444 = vunpack.c.h.b16 %v550
      %v1445 = vunpack.c.l.b16 %v551
      %v1446 = vunpack.c.h.b16 %v551
      %v1447 = vunpack.c.l.b16 %v552
      %v1448 = vunpack.c.h.b16 %v552
      %v1449 = vunpack.c.l.b16 %v553
      %v1450 = vunpack.c.h.b16 %v553
      %v1451 = vunpack.c.l.b16 %v554
      %v1452 = vunpack.c.h.b16 %v554
      %v1453 = vunpack.c.l.b16 %v555
      %v1454 = vunpack.c.h.b16 %v555
      %v1455 = vunpack.c.l.b16 %v556
      %v1456 = vunpack.c.h.b16 %v556
      %v1457 = vunpack.c.l.b16 %v557
      %v1458 = vunpack.c.h.b16 %v557
      %v1459 = vunpack.c.l.b16 %v558
      %v1460 = vunpack.c.h.b16 %v558
      %v1461 = vunpack.c.l.b16 %v559
      %v1462 = vunpack.c.h.b16 %v559
      %v1463 = vunpack.c.l.b16 %v560
      %v1464 = vunpack.c.h.b16 %v560
      %v1465 = vunpack.c.l.b16 %v561
      %v1466 = vunpack.c.h.b16 %v561
      %v1467 = vunpack.c.l.b16 %v562
      %v1468 = vunpack.c.h.b16 %v562
      %v1469 = vunpack.c.l.b16 %v563
      %v1470 = vunpack.c.h.b16 %v563
      %v1471 = vunpack.c.l.b16 %v564
      %v1472 = vunpack.c.h.b16 %v564
      %v1473 = vunpack.c.l.b16 %v565
      %v1474 = vunpack.c.h.b16 %v565
      %v1475 = vunpack.c.l.b16 %v566
      %v1476 = vunpack.c.h.b16 %v566
      %v1477 = vunpack.c.l.b16 %v567
      %v1478 = vunpack.c.h.b16 %v567
      %v1479 = vunpack.c.l.b16 %v568
      %v1480 = vunpack.c.h.b16 %v568
      %v1481 = vunpack.c.l.b16 %v569
      %v1482 = vunpack.c.h.b16 %v569
      %v1483 = vunpack.c.l.b16 %v570
      %v1484 = vunpack.c.h.b16 %v570
      %v1485 = vunpack.c.l.b16 %v571
      %v1486 = vunpack.c.h.b16 %v571
      %v1487 = vunpack.c.l.b16 %v572
      %v1488 = vunpack.c.h.b16 %v572
      %v1489 = vunpack.c.l.b16 %v573
      %v1490 = vunpack.c.h.b16 %v573
      %v1491 = vunpack.c.l.b16 %v574
      %v1492 = vunpack.c.h.b16 %v574
      %v1493 = vunpack.c.l.b16 %v575
      %v1494 = vunpack.c.h.b16 %v575
      %v1495 = vunpack.c.l.b16 %v576
      %v1496 = vunpack.c.h.b16 %v576
      %v1497 = vunpack.c.l.b16 %v577
      %v1498 = vunpack.c.h.b16 %v577
      %v1499 = vunpack.c.l.b16 %v578
      %v1500 = vunpack.c.h.b16 %v578
      %v1501 = vunpack.c.l.b16 %v579
      %v1502 = vunpack.c.h.b16 %v579
      %v1503 = vunpack.c.l.b16 %v580
      %v1504 = vunpack.c.h.b16 %v580
      %v1505 = vunpack.c.l.b16 %v581
      %v1506 = vunpack.c.h.b16 %v581
      %v1507 = vunpack.c.l.b16 %v582
      %v1508 = vunpack.c.h.b16 %v582
      %v1509 = vunpack.c.l.b16 %v583
      %v1510 = vunpack.c.h.b16 %v583
      %v1511 = vunpack.c.l.b16 %v584
      %v1512 = vunpack.c.h.b16 %v584
      %v1513 = vunpack.c.l.b16 %v585
      %v1514 = vunpack.c.h.b16 %v585
      %v1515 = vpack.c.b16 %v945, %v939
      %v1516 = vpack.c.b16 %v946, %v940
      %v1517 = vpack.c.b16 %v947, %v941
      %v1518 = vpack.c.b16 %v948, %v942
      %v1519 = vpack.c.b16 %v949, %v943
      %v1520 = vpack.c.b16 %v950, %v944
      %v1521 = vpack.c.b16 %v957, %v951
      %v1522 = vpack.c.b16 %v958, %v952
      %v1523 = vpack.c.b16 %v959, %v953
      %v1524 = vpack.c.b16 %v960, %v954
      %v1525 = vpack.c.b16 %v961, %v955
      %v1526 = vpack.c.b16 %v962, %v956
      %v1527 = vpack.c.b16 %v969, %v963
      %v1528 = vpack.c.b16 %v970, %v964
      %v1529 = vpack.c.b16 %v971, %v965
      %v1530 = vpack.c.b16 %v972, %v966
      %v1531 = vpack.c.b16 %v973, %v967
      %v1532 = vpack.c.b16 %v974, %v968
      %v1533 = vpack.c.b16 %v981, %v975
      %v1534 = vpack.c.b16 %v982, %v976
      %v1535 = vpack.c.b16 %v983, %v977
      %v1536 = vpack.c.b16 %v984, %v978
      %v1537 = vpack.c.b16 %v985, %v979
      %v1538 = vpack.c.b16 %v986, %v980
      %v1539 = vpack.c.b16 %v993, %v987
      %v1540 = vpack.c.b16 %v994, %v988
      %v1541 = vpack.c.b16 %v995, %v989
      %v1542 = vpack.c.b16 %v996, %v990
      %v1543 = vpack.c.b16 %v997, %v991
      %v1544 = vpack.c.b16 %v998, %v992
      %v1545 = vpack.c.b16 %v1005, %v999
      %v1546 = vpack.c.b16 %v1006, %v1000
      %v1547 = vpack.c.b16 %v1007, %v1001
      %v1548 = vpack.c.b16 %v1008, %v1002
      %v1549 = vpack.c.b16 %v1009, %v1003
      %v1550 = vpack.c.b16 %v1010, %v1004
      %v1551 = vpack.c.b16 %v1017, %v1011
      %v1552 = vpack.c.b16 %v1018, %v1012
      %v1553 = vpack.c.b16 %v1019, %v1013
      %v1554 = vpack.c.b16 %v1020, %v1014
      %v1555 = vpack.c.b16 %v1021, %v1015
      %v1556 = vpack.c.b16 %v1022, %v1016
      %v1557 = vpack.c.b16 %v1029, %v1023
      %v1558 = vpack.c.b16 %v1030, %v1024
      %v1559 = vpack.c.b16 %v1031, %v1025
      %v1560 = vpack.c.b16 %v1032, %v1026
      %v1561 = vpack.c.b16 %v1033, %v1027
      %v1562 = vpack.c.b16 %v1034, %v1028
      %v1563 = vpack.c.b16 %v1041, %v1035
      %v1564 = vpack.c.b16 %v1042, %v1036
      %v1565 = vpack.c.b16 %v1043, %v1037
      %v1566 = vpack.c.b16 %v1044, %v1038
      %v1567 = vpack.c.b16 %v1045, %v1039
      %v1568 = vpack.c.b16 %v1046, %v1040
      %v1569 = vpack.c.b16 %v1053, %v1047
      %v1570 = vpack.c.b16 %v1054, %v1048
      %v1571 = vpack.c.b16 %v1055, %v1049
      %v1572 = vpack.c.b16 %v1056, %v1050
      %v1573 = vpack.c.b16 %v1057, %v1051
      %v1574 = vpack.c.b16 %v1058, %v1052
      %v1575 = vpack.c.b16 %v1065, %v1059
      %v1576 = vpack.c.b16 %v1066, %v1060
      %v1577 = vpack.c.b16 %v1067, %v1061
      %v1578 = vpack.c.b16 %v1068, %v1062
      %v1579 = vpack.c.b16 %v1069, %v1063
      %v1580 = vpack.c.b16 %v1070, %v1064
      %v1581 = vpack.c.b16 %v1077, %v1071
      %v1582 = vpack.c.b16 %v1078, %v1072
      %v1583 = vpack.c.b16 %v1079, %v1073
      %v1584 = vpack.c.b16 %v1080, %v1074
      %v1585 = vpack.c.b16 %v1081, %v1075
      %v1586 = vpack.c.b16 %v1082, %v1076
      %v1587 = vpack.c.b16 %v1089, %v1083
      %v1588 = vpack.c.b16 %v1090, %v1084
      %v1589 = vpack.c.b16 %v1091, %v1085
      %v1590 = vpack.c.b16 %v1092, %v1086
      %v1591 = vpack.c.b16 %v1093, %v1087
      %v1592 = vpack.c.b16 %v1094, %v1088
      %v1593 = vpack.c.b16 %v1101, %v1095
      %v1594 = vpack.c.b16 %v1102, %v1096
      %v1595 = vpack.c.b16 %v1103, %v1097
      %v1596 = vpack.c.b16 %v1104, %v1098
      %v1597 = vpack.c.b16 %v1105, %v1099
      %v1598 = vpack.c.b16 %v1106, %v1100
      %v1599 = vpack.c.b16 %v1113, %v1107
      %v1600 = vpack.c.b16 %v1114, %v1108
      %v1601 = vpack.c.b16 %v1115, %v1109
      %v1602 = vpack.c.b16 %v1116, %v1110
      %v1603 = vpack.c.b16 %v1117, %v1111
      %v1604 = vpack.c.b16 %v1118, %v1112
      %v1605 = vpack.c.b16 %v1125, %v1119
      %v1606 = vpack.c.b16 %v1126, %v1120
      %v1607 = vpack.c.b16 %v1127, %v1121
      %v1608 = vpack.c.b16 %v1128, %v1122
      %v1609 = vpack.c.b16 %v1129, %v1123
      %v1610 = vpack.c.b16 %v1130, %v1124
      %v1611 = vpack.c.b16 %v1137, %v1131
      %v1612 = vpack.c.b16 %v1138, %v1132
      %v1613 = vpack.c.b16 %v1139, %v1133
      %v1614 = vpack.c.b16 %v1140, %v1134
      %v1615 = vpack.c.b16 %v1141, %v1135
      %v1616 = vpack.c.b16 %v1142, %v1136
      %v1617 = vpack.c.b16 %v1149, %v1143
      %v1618 = vpack.c.b16 %v1150, %v1144
      %v1619 = vpack.c.b16 %v1151, %v1145
      %v1620 = vpack.c.b16 %v1152, %v1146
      %v1621 = vpack.c.b16 %v1153, %v1147
      %v1622 = vpack.c.b16 %v1154, %v1148
      %v1623 = vpack.c.b16 %v1161, %v1155
      %v1624 = vpack.c.b16 %v1162, %v1156
      %v1625 = vpack.c.b16 %v1163, %v1157
      %v1626 = vpack.c.b16 %v1164, %v1158
      %v1627 = vpack.c.b16 %v1165, %v1159
      %v1628 = vpack.c.b16 %v1166, %v1160
      %v1629 = vpack.c.b16 %v1173, %v1167
      %v1630 = vpack.c.b16 %v1174, %v1168
      %v1631 = vpack.c.b16 %v1175, %v1169
      %v1632 = vpack.c.b16 %v1176, %v1170
      %v1633 = vpack.c.b16 %v1177, %v1171
      %v1634 = vpack.c.b16 %v1178, %v1172
      %v1635 = vpack.c.b16 %v1185, %v1179
      %v1636 = vpack.c.b16 %v1186, %v1180
      %v1637 = vpack.c.b16 %v1187, %v1181
      %v1638 = vpack.c.b16 %v1188, %v1182
      %v1639 = vpack.c.b16 %v1189, %v1183
      %v1640 = vpack.c.b16 %v1190, %v1184
      %v1641 = vpack.c.b16 %v1197, %v1191
      %v1642 = vpack.c.b16 %v1198, %v1192
      %v1643 = vpack.c.b16 %v1199, %v1193
      %v1644 = vpack.c.b16 %v1200, %v1194
      %v1645 = vpack.c.b16 %v1201, %v1195
      %v1646 = vpack.c.b16 %v1202, %v1196
      %v1647 = vpack.c.b16 %v1209, %v1203
      %v1648 = vpack.c.b16 %v1210, %v1204
      %v1649 = vpack.c.b16 %v1211, %v1205
      %v1650 = vpack.c.b16 %v1212, %v1206
      %v1651 = vpack.c.b16 %v1213, %v1207
      %v1652 = vpack.c.b16 %v1214, %v1208
      %v1653 = vpack.c.b16 %v1221, %v1215
      %v1654 = vpack.c.b16 %v1222, %v1216
      %v1655 = vpack.c.b16 %v1223, %v1217
      %v1656 = vpack.c.b16 %v1224, %v1218
      %v1657 = vpack.c.b16 %v1225, %v1219
      %v1658 = vpack.c.b16 %v1226, %v1220
      %v1659 = vpack.c.b16 %v1233, %v1227
      %v1660 = vpack.c.b16 %v1234, %v1228
      %v1661 = vpack.c.b16 %v1235, %v1229
      %v1662 = vpack.c.b16 %v1236, %v1230
      %v1663 = vpack.c.b16 %v1237, %v1231
      %v1664 = vpack.c.b16 %v1238, %v1232
      %v1665 = vpack.c.b16 %v1245, %v1239
      %v1666 = vpack.c.b16 %v1246, %v1240
      %v1667 = vpack.c.b16 %v1247, %v1241
      %v1668 = vpack.c.b16 %v1248, %v1242
      %v1669 = vpack.c.b16 %v1249, %v1243
      %v1670 = vpack.c.b16 %v1250, %v1244
      %v1671 = vpack.c.b16 %v1257, %v1251
      %v1672 = vpack.c.b16 %v1258, %v1252
      %v1673 = vpack.c.b16 %v1259, %v1253
      %v1674 = vpack.c.b16 %v1260, %v1254
      %v1675 = vpack.c.b16 %v1261, %v1255
      %v1676 = vpack.c.b16 %v1262, %v1256
      %v1677 = vpack.c.b16 %v1269, %v1263
      %v1678 = vpack.c.b16 %v1270, %v1264
      %v1679 = vpack.c.b16 %v1271, %v1265
      %v1680 = vpack.c.b16 %v1272, %v1266
      %v1681 = vpack.c.b16 %v1273, %v1267
      %v1682 = vpack.c.b16 %v1274, %v1268
      %v1683 = vpack.c.b16 %v1281, %v1275
      %v1684 = vpack.c.b16 %v1282, %v1276
      %v1685 = vpack.c.b16 %v1283, %v1277
      %v1686 = vpack.c.b16 %v1284, %v1278
      %v1687 = vpack.c.b16 %v1285, %v1279
      %v1688 = vpack.c.b16 %v1286, %v1280
      %v1689 = vpack.c.b16 %v1293, %v1287
      %v1690 = vpack.c.b16 %v1294, %v1288
      %v1691 = vpack.c.b16 %v1295, %v1289
      %v1692 = vpack.c.b16 %v1296, %v1290
      %v1693 = vpack.c.b16 %v1297, %v1291
      %v1694 = vpack.c.b16 %v1298, %v1292
      %v1695 = vpack.c.b16 %v1305, %v1299
      %v1696 = vpack.c.b16 %v1306, %v1300
      %v1697 = vpack.c.b16 %v1307, %v1301
      %v1698 = vpack.c.b16 %v1308, %v1302
      %v1699 = vpack.c.b16 %v1309, %v1303
      %v1700 = vpack.c.b16 %v1310, %v1304
      %v1701 = vpack.c.b16 %v1317, %v1311
      %v1702 = vpack.c.b16 %v1318, %v1312
      %v1703 = vpack.c.b16 %v1319, %v1313
      %v1704 = vpack.c.b16 %v1320, %v1314
      %v1705 = vpack.c.b16 %v1321, %v1315
      %v1706 = vpack.c.b16 %v1322, %v1316
      %v1707 = vpack.c.b16 %v1329, %v1323
      %v1708 = vpack.c.b16 %v1330, %v1324
      %v1709 = vpack.c.b16 %v1331, %v1325
      %v1710 = vpack.c.b16 %v1332, %v1326
      %v1711 = vpack.c.b16 %v1333, %v1327
      %v1712 = vpack.c.b16 %v1334, %v1328
      %v1713 = vpack.c.b16 %v1341, %v1335
      %v1714 = vpack.c.b16 %v1342, %v1336
      %v1715 = vpack.c.b16 %v1343, %v1337
      %v1716 = vpack.c.b16 %v1344, %v1338
      %v1717 = vpack.c.b16 %v1345, %v1339
      %v1718 = vpack.c.b16 %v1346, %v1340
      %v1719 = vpack.c.b16 %v1353, %v1347
      %v1720 = vpack.c.b16 %v1354, %v1348
      %v1721 = vpack.c.b16 %v1355, %v1349
      %v1722 = vpack.c.b16 %v1356, %v1350
      %v1723 = vpack.c.b16 %v1357, %v1351
      %v1724 = vpack.c.b16 %v1358, %v1352
      %v1725 = vpack.c.b16 %v1365, %v1359
      %v1726 = vpack.c.b16 %v1366, %v1360
      %v1727 = vpack.c.b16 %v1367, %v1361
      %v1728 = vpack.c.b16 %v1368, %v1362
      %v1729 = vpack.c.b16 %v1369, %v1363
      %v1730 = vpack.c.b16 %v1370, %v1364
      %v1731 = vpack.c.b16 %v1377, %v1371
      %v1732 = vpack.c.b16 %v1378, %v1372
      %v1733 = vpack.c.b16 %v1379, %v1373
      %v1734 = vpack.c.b16 %v1380, %v1374
      %v1735 = vpack.c.b16 %v1381, %v1375
      %v1736 = vpack.c.b16 %v1382, %v1376
      %v1737 = vpack.c.b16 %v1389, %v1383
      %v1738 = vpack.c.b16 %v1390, %v1384
      %v1739 = vpack.c.b16 %v1391, %v1385
      %v1740 = vpack.c.b16 %v1392, %v1386
      %v1741 = vpack.c.b16 %v1393, %v1387
      %v1742 = vpack.c.b16 %v1394, %v1388
      %v1743 = vpack.c.b16 %v1401, %v1395
      %v1744 = vpack.c.b16 %v1402, %v1396
      %v1745 = vpack.c.b16 %v1403, %v1397
      %v1746 = vpack.c.b16 %v1404, %v1398
      %v1747 = vpack.c.b16 %v1405, %v1399
      %v1748 = vpack.c.b16 %v1406, %v1400
      %v1749 = vpack.c.b16 %v1413, %v1407
      %v1750 = vpack.c.b16 %v1414, %v1408
      %v1751 = vpack.c.b16 %v1415, %v1409
      %v1752 = vpack.c.b16 %v1416, %v1410
      %v1753 = vpack.c.b16 %v1417, %v1411
      %v1754 = vpack.c.b16 %v1418, %v1412
      %v1755 = vpack.c.b16 %v1425, %v1419
      %v1756 = vpack.c.b16 %v1426, %v1420
      %v1757 = vpack.c.b16 %v1427, %v1421
      %v1758 = vpack.c.b16 %v1428, %v1422
      %v1759 = vpack.c.b16 %v1429, %v1423
      %v1760 = vpack.c.b16 %v1430, %v1424
      %v1761 = vpack.c.b16 %v1437, %v1431
      %v1762 = vpack.c.b16 %v1438, %v1432
      %v1763 = vpack.c.b16 %v1439, %v1433
      %v1764 = vpack.c.b16 %v1440, %v1434
      %v1765 = vpack.c.b16 %v1441, %v1435
      %v1766 = vpack.c.b16 %v1442, %v1436
      %v1767 = vpack.c.b16 %v1449, %v1443
      %v1768 = vpack.c.b16 %v1450, %v1444
      %v1769 = vpack.c.b16 %v1451, %v1445
      %v1770 = vpack.c.b16 %v1452, %v1446
      %v1771 = vpack.c.b16 %v1453, %v1447
      %v1772 = vpack.c.b16 %v1454, %v1448
      %v1773 = vpack.c.b16 %v1461, %v1455
      %v1774 = vpack.c.b16 %v1462, %v1456
      %v1775 = vpack.c.b16 %v1463, %v1457
      %v1776 = vpack.c.b16 %v1464, %v1458
      %v1777 = vpack.c.b16 %v1465, %v1459
      %v1778 = vpack.c.b16 %v1466, %v1460
      %v1779 = vpack.c.b16 %v1473, %v1467
      %v1780 = vpack.c.b16 %v1474, %v1468
      %v1781 = vpack.c.b16 %v1475, %v1469
      %v1782 = vpack.c.b16 %v1476, %v1470
      %v1783 = vpack.c.b16 %v1477, %v1471
      %v1784 = vpack.c.b16 %v1478, %v1472
      %v1785 = vpack.c.b16 %v1485, %v1479
      %v1786 = vpack.c.b16 %v1486, %v1480
      %v1787 = vpack.c.b16 %v1487, %v1481
      %v1788 = vpack.c.b16 %v1488, %v1482
      %v1789 = vpack.c.b16 %v1489, %v1483
      %v1790 = vpack.c.b16 %v1490, %v1484
      %v1791 = vpack.c.b16 %v1497, %v1491
      %v1792 = vpack.c.b16 %v1498, %v1492
      %v1793 = vpack.c.b16 %v1499, %v1493
      %v1794 = vpack.c.b16 %v1500, %v1494
      %v1795 = vpack.c.b16 %v1501, %v1495
      %v1796 = vpack.c.b16 %v1502, %v1496
      %v1797 = vpack.c.b16 %v1509, %v1503
      %v1798 = vpack.c.b16 %v1510, %v1504
      %v1799 = vpack.c.b16 %v1511, %v1505
      %v1800 = vpack.c.b16 %v1512, %v1506
      %v1801 = vpack.c.b16 %v1513, %v1507
      %v1802 = vpack.c.b16 %v1514, %v1508
      %2091 = vmatprep.subr.bf16.mxu0 %v1516
      %2092 = vmatpush1.bf16.msra.mxu0 %v1515
      %2093 = vmatprep.subr.bf16.mxu0 %v1522
      %2094 = vmatpush1.bf16.msra.mxu0 %v1521
      %2095 = vmatprep.subr.bf16.mxu0 %v1528
      %2096 = vmatpush1.bf16.msra.mxu0 %v1527
      %2097 = vmatprep.subr.bf16.mxu0 %v1534
      %2098 = vmatpush1.bf16.msra.mxu0 %v1533
      %2099 = vmatprep.subr.bf16.mxu0 %v1540
      %2100 = vmatpush1.bf16.msra.mxu0 %v1539
      %2101 = vmatprep.subr.bf16.mxu0 %v1546
      %2102 = vmatpush1.bf16.msra.mxu0 %v1545
      %2103 = vmatprep.subr.bf16.mxu0 %v1552
      %2104 = vmatpush1.bf16.msra.mxu0 %v1551
      %2105 = vmatprep.subr.bf16.mxu0 %v1558
      %2106 = vmatpush1.bf16.msra.mxu0 %v1557
      %2107 = vmatprep.subr.bf16.mxu0 %v1564
      %2108 = vmatpush1.bf16.msra.mxu0 %v1563
      %2109 = vmatprep.subr.bf16.mxu0 %v1570
      %2110 = vmatpush1.bf16.msra.mxu0 %v1569
      %2111 = vmatprep.subr.bf16.mxu0 %v1576
      %2112 = vmatpush1.bf16.msra.mxu0 %v1575
      %2113 = vmatprep.subr.bf16.mxu0 %v1582
      %2114 = vmatpush1.bf16.msra.mxu0 %v1581
      %2115 = vmatprep.subr.bf16.mxu0 %v1588
      %2116 = vmatpush1.bf16.msra.mxu0 %v1587
      %2117 = vmatprep.subr.bf16.mxu0 %v1594
      %2118 = vmatpush1.bf16.msra.mxu0 %v1593
      %2119 = vmatprep.subr.bf16.mxu0 %v1600
      %2120 = vmatpush1.bf16.msra.mxu0 %v1599
      %2121 = vmatprep.subr.bf16.mxu0 %v1606
      %2122 = vmatpush1.bf16.msra.mxu0 %v1605
      %2123 = vmatprep.mubr.bf16.mxu0 %v635
      %2124 = vmatmul.mubr.bf16.gmra.mrb[0].mxu0 %v627
      %v2125 = vpop.f32.mrb[0].mxu0
      %v2126 = vadd.f32 %v591, %v2125
      %v2127 = vpop.f32.mrb[0].mxu0
      %v2128 = vadd.f32 %v595, %v2127
      %v2129 = vpop.f32.mrb[0].mxu0
      %v2130 = vpop.f32.mrb[0].mxu0
      %2131 = vdwg.mxu0
      %2132 = vmatprep.subr.bf16.mxu0 %v1612
      %2133 = vmatpush1.bf16.msra.mxu0 %v1611
      %2134 = vmatprep.subr.bf16.mxu0 %v1618
      %2135 = vmatpush1.bf16.msra.mxu0 %v1617
      %2136 = vmatprep.subr.bf16.mxu0 %v1624
      %2137 = vmatpush1.bf16.msra.mxu0 %v1623
      %2138 = vmatprep.subr.bf16.mxu0 %v1630
      %2139 = vmatpush1.bf16.msra.mxu0 %v1629
      %2140 = vmatprep.subr.bf16.mxu0 %v1636
      %2141 = vmatpush1.bf16.msra.mxu0 %v1635
      %2142 = vmatprep.subr.bf16.mxu0 %v1642
      %2143 = vmatpush1.bf16.msra.mxu0 %v1641
      %2144 = vmatprep.subr.bf16.mxu0 %v1648
      %2145 = vmatpush1.bf16.msra.mxu0 %v1647
      %2146 = vmatprep.subr.bf16.mxu0 %v1654
      %2147 = vmatpush1.bf16.msra.mxu0 %v1653
      %2148 = vmatprep.subr.bf16.mxu0 %v1660
      %2149 = vmatpush1.bf16.msra.mxu0 %v1659
      %2150 = vmatprep.subr.bf16.mxu0 %v1666
      %2151 = vmatpush1.bf16.msra.mxu0 %v1665
      %2152 = vmatprep.subr.bf16.mxu0 %v1672
      %2153 = vmatpush1.bf16.msra.mxu0 %v1671
      %2154 = vmatprep.subr.bf16.mxu0 %v1678
      %2155 = vmatpush1.bf16.msra.mxu0 %v1677
      %2156 = vmatprep.subr.bf16.mxu0 %v1684
      %2157 = vmatpush1.bf16.msra.mxu0 %v1683
      %2158 = vmatprep.subr.bf16.mxu0 %v1690
      %2159 = vmatpush1.bf16.msra.mxu0 %v1689
      %2160 = vmatprep.subr.bf16.mxu0 %v1696
      %2161 = vmatpush1.bf16.msra.mxu0 %v1695
      %2162 = vmatprep.subr.bf16.mxu0 %v1702
      %2163 = vmatpush1.bf16.msra.mxu0 %v1701
      %2164 = vmatprep.mubr.bf16.mxu0 %v636
      %2165 = vmatmul.mubr.bf16.gmra.mrb[0].mxu0 %v634
      %v2166 = vpop.f32.mrb[0].mxu0
      %v2167 = vadd.f32 %v2126, %v2166
      %v2168 = vpop.f32.mrb[0].mxu0
      %v2169 = vadd.f32 %v2128, %v2168
      %v2170 = vpop.f32.mrb[0].mxu0
      %v2171 = vpop.f32.mrb[0].mxu0
      %2172 = vdwg.mxu0
      %2173 = vmatprep.subr.bf16.mxu0 %v1708
      %2174 = vmatpush1.bf16.msra.mxu0 %v1707
      %2175 = vmatprep.subr.bf16.mxu0 %v1714
      %2176 = vmatpush1.bf16.msra.mxu0 %v1713
      %2177 = vmatprep.subr.bf16.mxu0 %v1720
      %2178 = vmatpush1.bf16.msra.mxu0 %v1719
      %2179 = vmatprep.subr.bf16.mxu0 %v1726
      %2180 = vmatpush1.bf16.msra.mxu0 %v1725
      %2181 = vmatprep.subr.bf16.mxu0 %v1732
      %2182 = vmatpush1.bf16.msra.mxu0 %v1731
      %2183 = vmatprep.subr.bf16.mxu0 %v1738
      %2184 = vmatpush1.bf16.msra.mxu0 %v1737
      %2185 = vmatprep.subr.bf16.mxu0 %v1744
      %2186 = vmatpush1.bf16.msra.mxu0 %v1743
      %2187 = vmatprep.subr.bf16.mxu0 %v1750
      %2188 = vmatpush1.bf16.msra.mxu0 %v1749
      %2189 = vmatprep.subr.bf16.mxu0 %v1756
      %2190 = vmatpush1.bf16.msra.mxu0 %v1755
      %2191 = vmatprep.subr.bf16.mxu0 %v1762
      %2192 = vmatpush1.bf16.msra.mxu0 %v1761
      %2193 = vmatprep.subr.bf16.mxu0 %v1768
      %2194 = vmatpush1.bf16.msra.mxu0 %v1767
      %2195 = vmatprep.subr.bf16.mxu0 %v1774
      %2196 = vmatpush1.bf16.msra.mxu0 %v1773
      %2197 = vmatprep.subr.bf16.mxu0 %v1780
      %2198 = vmatpush1.bf16.msra.mxu0 %v1779
      %2199 = vmatprep.subr.bf16.mxu0 %v1786
      %2200 = vmatpush1.bf16.msra.mxu0 %v1785
      %2201 = vmatprep.subr.bf16.mxu0 %v1792
      %2202 = vmatpush1.bf16.msra.mxu0 %v1791
      %2203 = vmatprep.subr.bf16.mxu0 %v1798
      %2204 = vmatpush1.bf16.msra.mxu0 %v1797
      %2205 = vmatprep.mubr.bf16.mxu0 %v644
      %2206 = vmatmul.mubr.bf16.gmra.mrb[0].mxu0 %v643
      %v2207 = vpop.f32.mrb[0].mxu0
      %v2208 = vadd.f32 %v2167, %v2207
      %v2209 = vpop.f32.mrb[0].mxu0
      %v2210 = vadd.f32 %v2169, %v2209
      %v2211 = vpop.f32.mrb[0].mxu0
      %v2212 = vpop.f32.mrb[0].mxu0
      %2213 = vdwg.mxu0
      %2214 = vmatprep.subr.bf16.mxu0 %v1518
      %2215 = vmatpush1.bf16.msra.mxu0 %v1517
      %2216 = vmatprep.subr.bf16.mxu0 %v1524
      %2217 = vmatpush1.bf16.msra.mxu0 %v1523
      %2218 = vmatprep.subr.bf16.mxu0 %v1530
      %2219 = vmatpush1.bf16.msra.mxu0 %v1529
      %2220 = vmatprep.subr.bf16.mxu0 %v1536
      %2221 = vmatpush1.bf16.msra.mxu0 %v1535
      %2222 = vmatprep.subr.bf16.mxu0 %v1542
      %2223 = vmatpush1.bf16.msra.mxu0 %v1541
      %2224 = vmatprep.subr.bf16.mxu0 %v1548
      %2225 = vmatpush1.bf16.msra.mxu0 %v1547
      %2226 = vmatprep.subr.bf16.mxu0 %v1554
      %2227 = vmatpush1.bf16.msra.mxu0 %v1553
      %2228 = vmatprep.subr.bf16.mxu0 %v1560
      %2229 = vmatpush1.bf16.msra.mxu0 %v1559
      %2230 = vmatprep.subr.bf16.mxu0 %v1566
      %2231 = vmatpush1.bf16.msra.mxu0 %v1565
      %2232 = vmatprep.subr.bf16.mxu0 %v1572
      %2233 = vmatpush1.bf16.msra.mxu0 %v1571
      %2234 = vmatprep.subr.bf16.mxu0 %v1578
      %2235 = vmatpush1.bf16.msra.mxu0 %v1577
      %2236 = vmatprep.subr.bf16.mxu0 %v1584
      %2237 = vmatpush1.bf16.msra.mxu0 %v1583
      %2238 = vmatprep.subr.bf16.mxu0 %v1590
      %2239 = vmatpush1.bf16.msra.mxu0 %v1589
      %2240 = vmatprep.subr.bf16.mxu0 %v1596
      %2241 = vmatpush1.bf16.msra.mxu0 %v1595
      %2242 = vmatprep.subr.bf16.mxu0 %v1602
      %2243 = vmatpush1.bf16.msra.mxu0 %v1601
      %2244 = vmatprep.subr.bf16.mxu0 %v1608
      %2245 = vmatpush1.bf16.msra.mxu0 %v1607
      %2246 = vmatprep.mubr.bf16.mxu0 %v635
      %2247 = vmatmul.mubr.bf16.gmra.mrb[0].mxu0 %v627
      %v2248 = vpop.f32.mrb[0].mxu0
      %v2249 = vadd.f32 %v599, %v2248
      %v2250 = vpop.f32.mrb[0].mxu0
      %v2251 = vadd.f32 %v603, %v2250
      %v2252 = vpop.f32.mrb[0].mxu0
      %v2253 = vpop.f32.mrb[0].mxu0
      %2254 = vdwg.mxu0
      %2255 = vmatprep.subr.bf16.mxu0 %v1614
      %2256 = vmatpush1.bf16.msra.mxu0 %v1613
      %2257 = vmatprep.subr.bf16.mxu0 %v1620
      %2258 = vmatpush1.bf16.msra.mxu0 %v1619
      %2259 = vmatprep.subr.bf16.mxu0 %v1626
      %2260 = vmatpush1.bf16.msra.mxu0 %v1625
      %2261 = vmatprep.subr.bf16.mxu0 %v1632
      %2262 = vmatpush1.bf16.msra.mxu0 %v1631
      %2263 = vmatprep.subr.bf16.mxu0 %v1638
      %2264 = vmatpush1.bf16.msra.mxu0 %v1637
      %2265 = vmatprep.subr.bf16.mxu0 %v1644
      %2266 = vmatpush1.bf16.msra.mxu0 %v1643
      %2267 = vmatprep.subr.bf16.mxu0 %v1650
      %2268 = vmatpush1.bf16.msra.mxu0 %v1649
      %2269 = vmatprep.subr.bf16.mxu0 %v1656
      %2270 = vmatpush1.bf16.msra.mxu0 %v1655
      %2271 = vmatprep.subr.bf16.mxu0 %v1662
      %2272 = vmatpush1.bf16.msra.mxu0 %v1661
      %2273 = vmatprep.subr.bf16.mxu0 %v1668
      %2274 = vmatpush1.bf16.msra.mxu0 %v1667
      %2275 = vmatprep.subr.bf16.mxu0 %v1674
      %2276 = vmatpush1.bf16.msra.mxu0 %v1673
      %2277 = vmatprep.subr.bf16.mxu0 %v1680
      %2278 = vmatpush1.bf16.msra.mxu0 %v1679
      %2279 = vmatprep.subr.bf16.mxu0 %v1686
      %2280 = vmatpush1.bf16.msra.mxu0 %v1685
      %2281 = vmatprep.subr.bf16.mxu0 %v1692
      %2282 = vmatpush1.bf16.msra.mxu0 %v1691
      %2283 = vmatprep.subr.bf16.mxu0 %v1698
      %2284 = vmatpush1.bf16.msra.mxu0 %v1697
      %2285 = vmatprep.subr.bf16.mxu0 %v1704
      %2286 = vmatpush1.bf16.msra.mxu0 %v1703
      %2287 = vmatprep.mubr.bf16.mxu0 %v636
      %2288 = vmatmul.mubr.bf16.gmra.mrb[0].mxu0 %v634
      %v2289 = vpop.f32.mrb[0].mxu0
      %v2290 = vadd.f32 %v2249, %v2289
      %v2291 = vpop.f32.mrb[0].mxu0
      %v2292 = vadd.f32 %v2251, %v2291
      %v2293 = vpop.f32.mrb[0].mxu0
      %v2294 = vpop.f32.mrb[0].mxu0
      %2295 = vdwg.mxu0
      %2296 = vmatprep.subr.bf16.mxu0 %v1710
      %2297 = vmatpush1.bf16.msra.mxu0 %v1709
      %2298 = vmatprep.subr.bf16.mxu0 %v1716
      %2299 = vmatpush1.bf16.msra.mxu0 %v1715
      %2300 = vmatprep.subr.bf16.mxu0 %v1722
      %2301 = vmatpush1.bf16.msra.mxu0 %v1721
      %2302 = vmatprep.subr.bf16.mxu0 %v1728
      %2303 = vmatpush1.bf16.msra.mxu0 %v1727
      %2304 = vmatprep.subr.bf16.mxu0 %v1734
      %2305 = vmatpush1.bf16.msra.mxu0 %v1733
      %2306 = vmatprep.subr.bf16.mxu0 %v1740
      %2307 = vmatpush1.bf16.msra.mxu0 %v1739
      %2308 = vmatprep.subr.bf16.mxu0 %v1746
      %2309 = vmatpush1.bf16.msra.mxu0 %v1745
      %2310 = vmatprep.subr.bf16.mxu0 %v1752
      %2311 = vmatpush1.bf16.msra.mxu0 %v1751
      %2312 = vmatprep.subr.bf16.mxu0 %v1758
      %2313 = vmatpush1.bf16.msra.mxu0 %v1757
      %2314 = vmatprep.subr.bf16.mxu0 %v1764
      %2315 = vmatpush1.bf16.msra.mxu0 %v1763
      %2316 = vmatprep.subr.bf16.mxu0 %v1770
      %2317 = vmatpush1.bf16.msra.mxu0 %v1769
      %2318 = vmatprep.subr.bf16.mxu0 %v1776
      %2319 = vmatpush1.bf16.msra.mxu0 %v1775
      %2320 = vmatprep.subr.bf16.mxu0 %v1782
      %2321 = vmatpush1.bf16.msra.mxu0 %v1781
      %2322 = vmatprep.subr.bf16.mxu0 %v1788
      %2323 = vmatpush1.bf16.msra.mxu0 %v1787
      %2324 = vmatprep.subr.bf16.mxu0 %v1794
      %2325 = vmatpush1.bf16.msra.mxu0 %v1793
      %2326 = vmatprep.subr.bf16.mxu0 %v1800
      %2327 = vmatpush1.bf16.msra.mxu0 %v1799
      %2328 = vmatprep.mubr.bf16.mxu0 %v644
      %2329 = vmatmul.mubr.bf16.gmra.mrb[0].mxu0 %v643
      %v2330 = vpop.f32.mrb[0].mxu0
      %v2331 = vadd.f32 %v2290, %v2330
      %v2332 = vpop.f32.mrb[0].mxu0
      %v2333 = vadd.f32 %v2292, %v2332
      %v2334 = vpop.f32.mrb[0].mxu0
      %v2335 = vpop.f32.mrb[0].mxu0
      %2336 = vdwg.mxu0
      %2337 = vmatprep.subr.bf16.mxu0 %v1520
      %2338 = vmatpush1.bf16.msra.mxu0 %v1519
      %2339 = vmatprep.subr.bf16.mxu0 %v1526
      %2340 = vmatpush1.bf16.msra.mxu0 %v1525
      %2341 = vmatprep.subr.bf16.mxu0 %v1532
      %2342 = vmatpush1.bf16.msra.mxu0 %v1531
      %2343 = vmatprep.subr.bf16.mxu0 %v1538
      %2344 = vmatpush1.bf16.msra.mxu0 %v1537
      %2345 = vmatprep.subr.bf16.mxu0 %v1544
      %2346 = vmatpush1.bf16.msra.mxu0 %v1543
      %2347 = vmatprep.subr.bf16.mxu0 %v1550
      %2348 = vmatpush1.bf16.msra.mxu0 %v1549
      %2349 = vmatprep.subr.bf16.mxu0 %v1556
      %2350 = vmatpush1.bf16.msra.mxu0 %v1555
      %2351 = vmatprep.subr.bf16.mxu0 %v1562
      %2352 = vmatpush1.bf16.msra.mxu0 %v1561
      %2353 = vmatprep.subr.bf16.mxu0 %v1568
      %2354 = vmatpush1.bf16.msra.mxu0 %v1567
      %2355 = vmatprep.subr.bf16.mxu0 %v1574
      %2356 = vmatpush1.bf16.msra.mxu0 %v1573
      %2357 = vmatprep.subr.bf16.mxu0 %v1580
      %2358 = vmatpush1.bf16.msra.mxu0 %v1579
      %2359 = vmatprep.subr.bf16.mxu0 %v1586
      %2360 = vmatpush1.bf16.msra.mxu0 %v1585
      %2361 = vmatprep.subr.bf16.mxu0 %v1592
      %2362 = vmatpush1.bf16.msra.mxu0 %v1591
      %2363 = vmatprep.subr.bf16.mxu0 %v1598
      %2364 = vmatpush1.bf16.msra.mxu0 %v1597
      %2365 = vmatprep.subr.bf16.mxu0 %v1604
      %2366 = vmatpush1.bf16.msra.mxu0 %v1603
      %2367 = vmatprep.subr.bf16.mxu0 %v1610
      %2368 = vmatpush1.bf16.msra.mxu0 %v1609
      %2369 = vmatprep.mubr.bf16.mxu0 %v635
      %2370 = vmatmul.mubr.bf16.gmra.mrb[0].mxu0 %v627
      %v2371 = vpop.f32.mrb[0].mxu0
      %v2372 = vadd.f32 %v607, %v2371
      %v2373 = vpop.f32.mrb[0].mxu0
      %v2374 = vadd.f32 %v611, %v2373
      %v2375 = vpop.f32.mrb[0].mxu0
      %v2376 = vpop.f32.mrb[0].mxu0
      %2377 = vdwg.mxu0
      %2378 = vmatprep.subr.bf16.mxu0 %v1616
      %2379 = vmatpush1.bf16.msra.mxu0 %v1615
      %2380 = vmatprep.subr.bf16.mxu0 %v1622
      %2381 = vmatpush1.bf16.msra.mxu0 %v1621
      %2382 = vmatprep.subr.bf16.mxu0 %v1628
      %2383 = vmatpush1.bf16.msra.mxu0 %v1627
      %2384 = vmatprep.subr.bf16.mxu0 %v1634
      %2385 = vmatpush1.bf16.msra.mxu0 %v1633
      %2386 = vmatprep.subr.bf16.mxu0 %v1640
      %2387 = vmatpush1.bf16.msra.mxu0 %v1639
      %2388 = vmatprep.subr.bf16.mxu0 %v1646
      %2389 = vmatpush1.bf16.msra.mxu0 %v1645
      %2390 = vmatprep.subr.bf16.mxu0 %v1652
      %2391 = vmatpush1.bf16.msra.mxu0 %v1651
      %2392 = vmatprep.subr.bf16.mxu0 %v1658
      %2393 = vmatpush1.bf16.msra.mxu0 %v1657
      %2394 = vmatprep.subr.bf16.mxu0 %v1664
      %2395 = vmatpush1.bf16.msra.mxu0 %v1663
      %2396 = vmatprep.subr.bf16.mxu0 %v1670
      %2397 = vmatpush1.bf16.msra.mxu0 %v1669
      %2398 = vmatprep.subr.bf16.mxu0 %v1676
      %2399 = vmatpush1.bf16.msra.mxu0 %v1675
      %2400 = vmatprep.subr.bf16.mxu0 %v1682
      %2401 = vmatpush1.bf16.msra.mxu0 %v1681
      %2402 = vmatprep.subr.bf16.mxu0 %v1688
      %2403 = vmatpush1.bf16.msra.mxu0 %v1687
      %2404 = vmatprep.subr.bf16.mxu0 %v1694
      %2405 = vmatpush1.bf16.msra.mxu0 %v1693
      %2406 = vmatprep.subr.bf16.mxu0 %v1700
      %2407 = vmatpush1.bf16.msra.mxu0 %v1699
      %2408 = vmatprep.subr.bf16.mxu0 %v1706
      %2409 = vmatpush1.bf16.msra.mxu0 %v1705
      %2410 = vmatprep.mubr.bf16.mxu0 %v636
      %2411 = vmatmul.mubr.bf16.gmra.mrb[0].mxu0 %v634
      %v2412 = vpop.f32.mrb[0].mxu0
      %v2413 = vadd.f32 %v2372, %v2412
      %v2414 = vpop.f32.mrb[0].mxu0
      %v2415 = vadd.f32 %v2374, %v2414
      %v2416 = vpop.f32.mrb[0].mxu0
      %v2417 = vpop.f32.mrb[0].mxu0
      %2418 = vdwg.mxu0
      %2419 = vmatprep.subr.bf16.mxu0 %v1712
      %2420 = vmatpush1.bf16.msra.mxu0 %v1711
      %2421 = vmatprep.subr.bf16.mxu0 %v1718
      %2422 = vmatpush1.bf16.msra.mxu0 %v1717
      %2423 = vmatprep.subr.bf16.mxu0 %v1724
      %2424 = vmatpush1.bf16.msra.mxu0 %v1723
      %2425 = vmatprep.subr.bf16.mxu0 %v1730
      %2426 = vmatpush1.bf16.msra.mxu0 %v1729
      %2427 = vmatprep.subr.bf16.mxu0 %v1736
      %2428 = vmatpush1.bf16.msra.mxu0 %v1735
      %2429 = vmatprep.subr.bf16.mxu0 %v1742
      %2430 = vmatpush1.bf16.msra.mxu0 %v1741
      %2431 = vmatprep.subr.bf16.mxu0 %v1748
      %2432 = vmatpush1.bf16.msra.mxu0 %v1747
      %2433 = vmatprep.subr.bf16.mxu0 %v1754
      %2434 = vmatpush1.bf16.msra.mxu0 %v1753
      %2435 = vmatprep.subr.bf16.mxu0 %v1760
      %2436 = vmatpush1.bf16.msra.mxu0 %v1759
      %2437 = vmatprep.subr.bf16.mxu0 %v1766
      %2438 = vmatpush1.bf16.msra.mxu0 %v1765
      %2439 = vmatprep.subr.bf16.mxu0 %v1772
      %2440 = vmatpush1.bf16.msra.mxu0 %v1771
      %2441 = vmatprep.subr.bf16.mxu0 %v1778
      %2442 = vmatpush1.bf16.msra.mxu0 %v1777
      %2443 = vmatprep.subr.bf16.mxu0 %v1784
      %2444 = vmatpush1.bf16.msra.mxu0 %v1783
      %2445 = vmatprep.subr.bf16.mxu0 %v1790
      %2446 = vmatpush1.bf16.msra.mxu0 %v1789
      %2447 = vmatprep.subr.bf16.mxu0 %v1796
      %2448 = vmatpush1.bf16.msra.mxu0 %v1795
      %2449 = vmatprep.subr.bf16.mxu0 %v1802
      %2450 = vmatpush1.bf16.msra.mxu0 %v1801
      %2451 = vmatprep.mubr.bf16.mxu0 %v644
      %2452 = vmatmul.mubr.bf16.gmra.mrb[0].mxu0 %v643
      %v2453 = vpop.f32.mrb[0].mxu0
      %v2454 = vadd.f32 %v2413, %v2453
      %v2455 = vpop.f32.mrb[0].mxu0
      %v2456 = vadd.f32 %v2415, %v2455
      %v2457 = vpop.f32.mrb[0].mxu0
      %v2458 = vpop.f32.mrb[0].mxu0
      %2459 = vdwg.mxu0
      %v2460 = vmax.f32 %v2208, 0.0
      %v2461 = vmax.f32 %v2210, 0.0
      %v2462 = vmax.f32 %v2331, 0.0
      %v2463 = vmax.f32 %v2333, 0.0
      %v2464 = vmax.f32 %v2454, 0.0
      %v2465 = vmax.f32 %v2456, 0.0
      %v2466 = vld [vmem:[%s286] sm:$0x3f]
      %v2467 = vld [vmem:[%s290] sm:$0x3f]
      %vm2468 = vcmask 1043456
      %v2469 = vsel %vm2468, %v2460, 0.0
      %v2470 = vsel %vm2468, %v2461, 0.0
      %v2471 = vadd.f32 %v2469, %v2470
      %v2472 = vsel %vm2468, %v2462, 0.0
      %v2473 = vadd.f32 %v2471, %v2472
      %v2474 = vsel %vm2468, %v2463, 0.0
      %v2475 = vadd.f32 %v2473, %v2474
      %v2476 = vsel %vm2468, %v2464, 0.0
      %v2477 = vadd.f32 %v2475, %v2476
      %v2478 = vsel %vm2468, %v2465, 0.0
      %v2479 = vadd.f32 %v2477, %v2478
      %2480 = vadd.xlane.f32.xlu0 %v2479
      %v2481 = vpop.xlane.xlu0 %2480
      %v2482 = vrcp.pop 768.0
      %v2483 = vmul.f32 %v2481, %v2482
      %v2484 = vsub.f32 %v2460, %v2483
      %v2485 = vsub.f32 %v2461, %v2483
      %v2486 = vsub.f32 %v2462, %v2483
      %v2487 = vsub.f32 %v2463, %v2483
      %v2488 = vsub.f32 %v2464, %v2483
      %v2489 = vsub.f32 %v2465, %v2483
      %v2490 = vmul.f32 %v2484, %v2484
      %v2491 = vmul.f32 %v2485, %v2485
      %v2492 = vmul.f32 %v2486, %v2486
      %v2493 = vmul.f32 %v2487, %v2487
      %v2494 = vmul.f32 %v2488, %v2488
      %v2495 = vmul.f32 %v2489, %v2489
      %v2496 = vsel %vm2468, %v2490, 0.0
      %v2497 = vsel %vm2468, %v2491, 0.0
      %v2498 = vadd.f32 %v2496, %v2497
      %v2499 = vsel %vm2468, %v2492, 0.0
      %v2500 = vadd.f32 %v2498, %v2499
      %v2501 = vsel %vm2468, %v2493, 0.0
      %v2502 = vadd.f32 %v2500, %v2501
      %v2503 = vsel %vm2468, %v2494, 0.0
      %v2504 = vadd.f32 %v2502, %v2503
      %v2505 = vsel %vm2468, %v2495, 0.0
      %v2506 = vadd.f32 %v2504, %v2505
      %2507 = vadd.xlane.f32.xlu0 %v2506
      %v2508 = vpop.xlane.xlu0 %2507
      %v2509 = vmul.f32 %v2508, %v2482
      %v2510 = vadd.f32 %v2509, 1e-05
      %v2511 = vrsqrt.pop %v2510
      %v2512 = vmul.f32 %v2484, %v2511
      %v2513 = vmul.f32 %v2485, %v2511
      %v2514 = vmul.f32 %v2486, %v2511
      %v2515 = vmul.f32 %v2487, %v2511
      %v2516 = vmul.f32 %v2488, %v2511
      %v2517 = vmul.f32 %v2489, %v2511
      %v2519 = vlaneseq
      %v2520 = vshrl.u32 %v2519, 7
      %v2521 = vsub.s32 0, %v2520
      %v2522 = vrot.slane %v2466, %v2521
      %v2523 = vlaneseq
      %v2524 = vshrl.u32 %v2523, 7
      %v2525 = vsub.s32 1, %v2524
      %v2526 = vrot.slane %v2466, %v2525
      %v2527 = vlaneseq
      %v2528 = vshrl.u32 %v2527, 7
      %v2529 = vsub.s32 2, %v2528
      %v2530 = vrot.slane %v2466, %v2529
      %v2531 = vlaneseq
      %v2532 = vshrl.u32 %v2531, 7
      %v2533 = vsub.s32 3, %v2532
      %v2534 = vrot.slane %v2466, %v2533
      %v2535 = vlaneseq
      %v2536 = vshrl.u32 %v2535, 7
      %v2537 = vsub.s32 4, %v2536
      %v2538 = vrot.slane %v2466, %v2537
      %v2539 = vlaneseq
      %v2540 = vshrl.u32 %v2539, 7
      %v2541 = vsub.s32 5, %v2540
      %v2542 = vrot.slane %v2466, %v2541
      %v2549 = vmul.f32 %v2512, %v2522
      %v2550 = vmul.f32 %v2513, %v2526
      %v2551 = vmul.f32 %v2514, %v2530
      %v2552 = vmul.f32 %v2515, %v2534
      %v2553 = vmul.f32 %v2516, %v2538
      %v2554 = vmul.f32 %v2517, %v2542
      %v2556 = vlaneseq
      %v2557 = vshrl.u32 %v2556, 7
      %v2558 = vsub.s32 0, %v2557
      %v2559 = vrot.slane %v2467, %v2558
      %v2560 = vlaneseq
      %v2561 = vshrl.u32 %v2560, 7
      %v2562 = vsub.s32 1, %v2561
      %v2563 = vrot.slane %v2467, %v2562
      %v2564 = vlaneseq
      %v2565 = vshrl.u32 %v2564, 7
      %v2566 = vsub.s32 2, %v2565
      %v2567 = vrot.slane %v2467, %v2566
      %v2568 = vlaneseq
      %v2569 = vshrl.u32 %v2568, 7
      %v2570 = vsub.s32 3, %v2569
      %v2571 = vrot.slane %v2467, %v2570
      %v2572 = vlaneseq
      %v2573 = vshrl.u32 %v2572, 7
      %v2574 = vsub.s32 4, %v2573
      %v2575 = vrot.slane %v2467, %v2574
      %v2576 = vlaneseq
      %v2577 = vshrl.u32 %v2576, 7
      %v2578 = vsub.s32 5, %v2577
      %v2579 = vrot.slane %v2467, %v2578
      %v2586 = vadd.f32 %v2549, %v2559
      %v2587 = vadd.f32 %v2550, %v2563
      %v2588 = vadd.f32 %v2551, %v2567
      %v2589 = vadd.f32 %v2552, %v2571
      %v2590 = vadd.f32 %v2553, %v2575
      %v2591 = vadd.f32 %v2554, %v2579
      %v2598 = vcombine.low %v2586, %v2587
      %v2599 = vcombine.low %v2588, %v2589
      %v2600 = vcombine.low %v2590, %v2591
      %2604 = vst [vmem:[%s295] sm:$0xff] %v2598
      %2605 = vst [vmem:[%s295 + $0x8] sm:$0xff] %v2599
      %2606 = vst [vmem:[%s295 + $0x10] sm:$0xff] %v2600
      %p2607 = scmp.lt.s32.totalorder %s16, 1
      %s2608 = scalar_select %p2607, %s16, 1
      %s2609 = smul.addr %s2608, 6
      %s2610 = smul.addr %s2609, 4
      %s2611 = scalar_lea.vmem %s5, %s2610
      // Predicated region
      $region41: #{aotn_forward.29} parent=39 // pred_check
        %p2612 = pneg %p164
      $region42: #{aotn_forward.29} parent=39 // pred_check_branch
        %2614 = sbr.rel (%p2612) target = $region44
      $region43: #{aotn_forward.29} parent=39 // pred_region
        _
      $region44: #{aotn_forward.29} parent=39 // pred_fallthru
        _
    $region40: #{aotn_forward.29} parent=5 // pred_fallthru
      _
    %p2615 = scmp.le.s32.totalorder 2, %s11
    // Predicated region
    $region45: #{aotn_forward.29} parent=5 // pred_check
      %p2616 = pneg %p2615
    $region46: #{aotn_forward.29} parent=5 // pred_check_branch
      %2618 = sbr.rel (%p2616) target = $region48
    $region47: #{aotn_forward.29} parent=5 // pred_region
      %s2619 = ssub.s32 %s11, 2
      // Predicated region
      $region49: #{aotn_forward.29} parent=47 // pred_check
        %p2620 = pneg %p170
      $region50: #{aotn_forward.29} parent=47 // pred_check_branch
        %2622 = sbr.rel (%p2620) target = $region52
      $region51: #{aotn_forward.29} parent=47 // pred_region
        %p2623 = scmp.lt.s32.totalorder %s17, 1
        %s2624 = scalar_select %p2623, %s17, 1
        %s2625 = smul.addr %s2624, 6
        %s2626 = smul.addr %s2625, 4
        %s2627 = scalar_lea.vmem %s5, %s2626
      $region52: #{aotn_forward.29} parent=47 // pred_fallthru
        _
    $region48: #{aotn_forward.29} parent=5 // pred_fallthru
      _
  $region6: #{aotn_forward.29} parent=0 // loop_footer
    %s15 = sadd.s32 1, %s11
  $region7: #{aotn_forward.29} parent=0 // loop_footer_branch
    %10 = sbr.rel target = $region3
  $region8: #{aotn_forward.29} parent=0 // loop_exit
    _

// kernel: aotn_forward.35
$region0: #{aotn_forward.35}
  #allocation0 [shape = 'u32[]', space=smem, size = 0x4, offset = 0x4, fixed_abs, tag = 'smem constant byte address 0x4 - core index']
  #allocation1 [shape = 'u32[144,128]{1,0:T(1,128)}', space=vmem, size = 0x12000, scoped, tag = 'internal scratch']
  #allocation2 [shape = 'f32[1,1]{1,0:T(1,128)S(1)}', space=vmem, size = 0x200, scoped, tag = 'scoped memory for aotn_forward.35']
  %s0 = inlined_call_operand.vmem [shape: f32[2,16,128], index: 0, kind: input, shape index: {}]
  %s1 = inlined_call_operand.vmem [shape: bf16[3,128,128], index: 1, kind: input, shape index: {}]
  %s2 = inlined_call_operand.vmem [shape: f32[1,128], index: 2, kind: input, shape index: {}]
  %s3 = inlined_call_operand.vmem [shape: bf16[3,128,128], index: 3, kind: input, shape index: {}]
  %s4 = inlined_call_operand.vmem [shape: f32[1,128], index: 4, kind: input, shape index: {}]
  %s5 = inlined_call_operand.vmem [shape: f32[3,128,1], index: 5, kind: input, shape index: {}]
  %s6 = inlined_call_operand.<no memory space> [shape: f32[1,1], index: 6, kind: input, shape index: {}]
  %s7 = inlined_call_operand.hbm [shape: f32[1,2], index: 7, kind: output, shape index: {}]
  %s8 = sld [smem:[#allocation0]]
  $region38: #{aotn_forward.35} parent=0
    _
  %s10 = ssub.s32 1, %s8
  %s11 = scalar_select 0, %s10, %s8
  %v12 = vstv %s6
  %13 = vst [vmem:[#allocation2] sm:$0x1] %v12
  $region1: #{aotn_forward.35} parent=0
    #allocation3 [shape = 'u8[512]{0}', space=vmem, size = 0x400, scoped, tag = 'output window, operand 0, single buffered']
    #allocation4 [shape = 's32[1]{0}', space=sflag, size = 0x4, scoped, tag = 'scoped memory for aotn_forward.35']
    %14 = vsyncpa [#allocation4], 0
    // Predicated region
    $region2: #{aotn_forward.35} parent=1 // pred_check
      _
    $region3: #{aotn_forward.35} parent=1 // pred_check_branch
      %16 = sbr.rel (0) target = $region5
    $region4: #{aotn_forward.35} parent=1 // pred_region
      _
    $region5: #{aotn_forward.35} parent=1 // pred_fallthru
      _
    // Predicated region
    $region6: #{aotn_forward.35} parent=1 // pred_check
      _
    $region7: #{aotn_forward.35} parent=1 // pred_check_branch
      %18 = sbr.rel (0) target = $region9
    $region8: #{aotn_forward.35} parent=1 // pred_region
      _
    $region9: #{aotn_forward.35} parent=1 // pred_fallthru
      _
    // Predicated region
    $region10: #{aotn_forward.35} parent=1 // pred_check
      _
    $region11: #{aotn_forward.35} parent=1 // pred_check_branch
      %20 = sbr.rel (0) target = $region13
    $region12: #{aotn_forward.35} parent=1 // pred_region
      _
    $region13: #{aotn_forward.35} parent=1 // pred_fallthru
      _
    // Predicated region
    $region14: #{aotn_forward.35} parent=1 // pred_check
      _
    $region15: #{aotn_forward.35} parent=1 // pred_check_branch
      %22 = sbr.rel (0) target = $region17
    $region16: #{aotn_forward.35} parent=1 // pred_region
      _
    $region17: #{aotn_forward.35} parent=1 // pred_fallthru
      _
    // Predicated region
    $region18: #{aotn_forward.35} parent=1 // pred_check
      _
    $region19: #{aotn_forward.35} parent=1 // pred_check_branch
      %24 = sbr.rel (0) target = $region21
    $region20: #{aotn_forward.35} parent=1 // pred_region
      _
    $region21: #{aotn_forward.35} parent=1 // pred_fallthru
      _
    // Predicated region
    $region22: #{aotn_forward.35} parent=1 // pred_check
      _
    $region23: #{aotn_forward.35} parent=1 // pred_check_branch
      %26 = sbr.rel (0) target = $region25
    $region24: #{aotn_forward.35} parent=1 // pred_region
      _
    $region25: #{aotn_forward.35} parent=1 // pred_fallthru
      _
    // Predicated region
    $region26: #{aotn_forward.35} parent=1 // pred_check
      _
    $region27: #{aotn_forward.35} parent=1 // pred_check_branch
      %28 = sbr.rel (0) target = $region29
    $region28: #{aotn_forward.35} parent=1 // pred_region
      _
    $region29: #{aotn_forward.35} parent=1 // pred_fallthru
      _
    %v30 = vld [vmem:[%s0] sm:$0xff]
    %v31 = vld [vmem:[%s0 + $0x8] sm:$0xff]
    %v32 = vld [vmem:[%s0 + $0x10] sm:$0xff]
    %v33 = vld [vmem:[%s0 + $0x18] sm:$0xff]
    %v34 = vld [vmem:[%s1] sm:$0xf]
    %v35 = vld [vmem:[%s1 + $0x4] sm:$0xf]
    %v36 = vld [vmem:[%s1 + $0x8] sm:$0xf]
    %v37 = vld [vmem:[%s1 + $0xc] sm:$0xf]
    %v38 = vld [vmem:[%s1 + $0x10] sm:$0xf]
    %v39 = vld [vmem:[%s1 + $0x14] sm:$0xf]
    %v40 = vld [vmem:[%s1 + $0x18] sm:$0xf]
    %v41 = vld [vmem:[%s1 + $0x1c] sm:$0xf]
    %v42 = vld [vmem:[%s1 + $0x20] sm:$0xf]
    %v43 = vld [vmem:[%s1 + $0x24] sm:$0xf]
    %v44 = vld [vmem:[%s1 + $0x28] sm:$0xf]
    %v45 = vld [vmem:[%s1 + $0x2c] sm:$0xf]
    %v46 = vld [vmem:[%s1 + $0x30] sm:$0xf]
    %v47 = vld [vmem:[%s1 + $0x34] sm:$0xf]
    %v48 = vld [vmem:[%s1 + $0x38] sm:$0xf]
    %v49 = vld [vmem:[%s1 + $0x3c] sm:$0xf]
    %v50 = vld [vmem:[%s1 + $0x40] sm:$0xf]
    %v51 = vld [vmem:[%s1 + $0x44] sm:$0xf]
    %v52 = vld [vmem:[%s1 + $0x48] sm:$0xf]
    %v53 = vld [vmem:[%s1 + $0x4c] sm:$0xf]
    %v54 = vld [vmem:[%s1 + $0x50] sm:$0xf]
    %v55 = vld [vmem:[%s1 + $0x54] sm:$0xf]
    %v56 = vld [vmem:[%s1 + $0x58] sm:$0xf]
    %v57 = vld [vmem:[%s1 + $0x5c] sm:$0xf]
    %v58 = vld [vmem:[%s1 + $0x60] sm:$0xf]
    %v59 = vld [vmem:[%s1 + $0x64] sm:$0xf]
    %v60 = vld [vmem:[%s1 + $0x68] sm:$0xf]
    %v61 = vld [vmem:[%s1 + $0x6c] sm:$0xf]
    %v62 = vld [vmem:[%s1 + $0x70] sm:$0xf]
    %v63 = vld [vmem:[%s1 + $0x74] sm:$0xf]
    %v64 = vld [vmem:[%s1 + $0x78] sm:$0xf]
    %v65 = vld [vmem:[%s1 + $0x7c] sm:$0xf]
    %v66 = vld [vmem:[%s1 + $0x80] sm:$0xf]
    %v67 = vld [vmem:[%s1 + $0x84] sm:$0xf]
    %v68 = vld [vmem:[%s1 + $0x88] sm:$0xf]
    %v69 = vld [vmem:[%s1 + $0x8c] sm:$0xf]
    %v70 = vld [vmem:[%s1 + $0x90] sm:$0xf]
    %v71 = vld [vmem:[%s1 + $0x94] sm:$0xf]
    %v72 = vld [vmem:[%s1 + $0x98] sm:$0xf]
    %v73 = vld [vmem:[%s1 + $0x9c] sm:$0xf]
    %v74 = vld [vmem:[%s1 + $0xa0] sm:$0xf]
    %v75 = vld [vmem:[%s1 + $0xa4] sm:$0xf]
    %v76 = vld [vmem:[%s1 + $0xa8] sm:$0xf]
    %v77 = vld [vmem:[%s1 + $0xac] sm:$0xf]
    %v78 = vld [vmem:[%s1 + $0xb0] sm:$0xf]
    %v79 = vld [vmem:[%s1 + $0xb4] sm:$0xf]
    %v80 = vld [vmem:[%s1 + $0xb8] sm:$0xf]
    %v81 = vld [vmem:[%s1 + $0xbc] sm:$0xf]
    %v82 = vld [vmem:[%s2] sm:$0x1]
    %v87 = vcombine.high %v30, %v30
    %v89 = vunpack.c.l.s4 1983009808
    %v90 = vunpack.c.0.s8 %v89
    %v91 = vlaneseq
    %v92 = vshrl.u32 %v91, 7
    %v93 = vsub.s32 %v90, %v92
    %v94 = vrot.slane %v30, %v93
    %v96 = vunpack.c.l.s4 1983009808
    %v97 = vunpack.c.0.s8 %v96
    %v98 = vlaneseq
    %v99 = vshrl.u32 %v98, 7
    %v100 = vsub.s32 %v97, %v99
    %v101 = vrot.slane %v87, %v100
    %v102 = vcombine.high %v94, %v94
    %v103 = vcombine.high %v101, %v101
    %v104 = vcombine.high %v31, %v31
    %v106 = vunpack.c.l.s4 1983009808
    %v107 = vunpack.c.0.s8 %v106
    %v108 = vlaneseq
    %v109 = vshrl.u32 %v108, 7
    %v110 = vsub.s32 %v107, %v109
    %v111 = vrot.slane %v31, %v110
    %v113 = vunpack.c.l.s4 1983009808
    %v114 = vunpack.c.0.s8 %v113
    %v115 = vlaneseq
    %v116 = vshrl.u32 %v115, 7
    %v117 = vsub.s32 %v114, %v116
    %v118 = vrot.slane %v104, %v117
    %v119 = vcombine.high %v111, %v111
    %v120 = vcombine.high %v32, %v32
    %v122 = vunpack.c.l.s4 1983009808
    %v123 = vunpack.c.0.s8 %v122
    %v124 = vlaneseq
    %v125 = vshrl.u32 %v124, 7
    %v126 = vsub.s32 %v123, %v125
    %v127 = vrot.slane %v32, %v126
    %v129 = vunpack.c.l.s4 1983009808
    %v130 = vunpack.c.0.s8 %v129
    %v131 = vlaneseq
    %v132 = vshrl.u32 %v131, 7
    %v133 = vsub.s32 %v130, %v132
    %v134 = vrot.slane %v120, %v133
    %v135 = vcombine.high %v127, %v127
    %v136 = vcombine.high %v134, %v134
    %v137 = vcombine.high %v33, %v33
    %v139 = vunpack.c.l.s4 1983009808
    %v140 = vunpack.c.0.s8 %v139
    %v141 = vlaneseq
    %v142 = vshrl.u32 %v141, 7
    %v143 = vsub.s32 %v140, %v142
    %v144 = vrot.slane %v33, %v143
    %v146 = vunpack.c.l.s4 1983009808
    %v147 = vunpack.c.0.s8 %v146
    %v148 = vlaneseq
    %v149 = vshrl.u32 %v148, 7
    %v150 = vsub.s32 %v147, %v149
    %v151 = vrot.slane %v137, %v150
    %v152 = vcombine.high %v144, %v144
    %v153 = vcombine.low %v94, %v102
    %v154 = vcombine.low %v101, %v103
    %v156 = vunpack.c.l.s4 1983009808
    %v157 = vunpack.c.0.s8 %v156
    %v158 = vlaneseq
    %v159 = vshrl.u32 %v158, 7
    %v160 = vsub.s32 %v157, %v159
    %v161 = vrot.slane %v153, %v160
    %v163 = vunpack.c.l.s4 1983009808
    %v164 = vunpack.c.0.s8 %v163
    %v165 = vlaneseq
    %v166 = vshrl.u32 %v165, 7
    %v167 = vsub.s32 %v164, %v166
    %v168 = vrot.slane %v154, %v167
    %v169 = vcombine.low %v161, %v168
    %v170 = vcombine.low %v111, %v119
    %v171 = vcombine.low %v118, %v127
    %v173 = vunpack.c.l.s4 1983009808
    %v174 = vunpack.c.0.s8 %v173
    %v175 = vlaneseq
    %v176 = vshrl.u32 %v175, 7
    %v177 = vsub.s32 %v174, %v176
    %v178 = vrot.slane %v170, %v177
    %v180 = vunpack.c.l.s4 1983009808
    %v181 = vunpack.c.0.s8 %v180
    %v182 = vlaneseq
    %v183 = vshrl.u32 %v182, 7
    %v184 = vsub.s32 %v181, %v183
    %v185 = vrot.slane %v171, %v184
    %v186 = vcombine.low %v178, %v185
    %v187 = vcombine.low %v135, %v134
    %v188 = vcombine.low %v136, %v144
    %v190 = vunpack.c.l.s4 1983009808
    %v191 = vunpack.c.0.s8 %v190
    %v192 = vlaneseq
    %v193 = vshrl.u32 %v192, 7
    %v194 = vsub.s32 %v191, %v193
    %v195 = vrot.slane %v187, %v194
    %v197 = vunpack.c.l.s4 1983009808
    %v198 = vunpack.c.0.s8 %v197
    %v199 = vlaneseq
    %v200 = vshrl.u32 %v199, 7
    %v201 = vsub.s32 %v198, %v200
    %v202 = vrot.slane %v188, %v201
    %v203 = vcombine.low %v195, %v202
    %v204 = vcombine.low %v152, %v151
    %v206 = vunpack.c.l.s4 1983009808
    %v207 = vunpack.c.0.s8 %v206
    %v208 = vlaneseq
    %v209 = vshrl.u32 %v208, 7
    %v210 = vsub.s32 %v207, %v209
    %v211 = vrot.slane %v204, %v210
    %v216 = vpack.c.bf16 %v186, %v169
    %v217 = vpack.c.bf16 %v211, %v203
    %v234 = vunpack.c.l.b16 %v34
    %v235 = vunpack.c.l.b16 %v35
    %v236 = vunpack.c.l.b16 %v36
    %v237 = vunpack.c.l.b16 %v37
    %v238 = vunpack.c.l.b16 %v38
    %v239 = vunpack.c.l.b16 %v39
    %v240 = vunpack.c.l.b16 %v40
    %v241 = vunpack.c.l.b16 %v41
    %v242 = vunpack.c.l.b16 %v42
    %v243 = vunpack.c.l.b16 %v43
    %v244 = vunpack.c.l.b16 %v44
    %v245 = vunpack.c.l.b16 %v45
    %v246 = vunpack.c.l.b16 %v46
    %v247 = vunpack.c.l.b16 %v47
    %v248 = vunpack.c.l.b16 %v48
    %v249 = vunpack.c.l.b16 %v49
    %v250 = vpack.c.b16 %v235, %v234
    %v251 = vpack.c.b16 %v237, %v236
    %v252 = vpack.c.b16 %v239, %v238
    %v253 = vpack.c.b16 %v241, %v240
    %v254 = vpack.c.b16 %v243, %v242
    %v255 = vpack.c.b16 %v245, %v244
    %v256 = vpack.c.b16 %v247, %v246
    %v257 = vpack.c.b16 %v249, %v248
    %266 = vmatprep.subr.bf16.mxu0 0
    %267 = vmatpush1.bf16.msra.mxu0 %v250
    %268 = vmatprep.subr.bf16.mxu0 0
    %269 = vmatpush1.bf16.msra.mxu0 %v251
    %270 = vmatprep.subr.bf16.mxu0 0
    %271 = vmatpush1.bf16.msra.mxu0 %v252
    %272 = vmatprep.subr.bf16.mxu0 0
    %273 = vmatpush1.bf16.msra.mxu0 %v253
    %274 = vmatprep.subr.bf16.mxu0 0
    %275 = vmatpush1.bf16.msra.mxu0 %v254
    %276 = vmatprep.subr.bf16.mxu0 0
    %277 = vmatpush1.bf16.msra.mxu0 %v255
    %278 = vmatprep.subr.bf16.mxu0 0
    %279 = vmatpush1.bf16.msra.mxu0 %v256
    %280 = vmatprep.subr.bf16.mxu0 0
    %281 = vmatpush1.bf16.msra.mxu0 %v257
    %282 = vmatprep.subr.bf16.mxu0 0
    %283 = vmatpush1.bf16.msra.mxu0 0
    %284 = vmatprep.subr.bf16.mxu0 0
    %285 = vmatpush1.bf16.msra.mxu0 0
    %286 = vmatprep.subr.bf16.mxu0 0
    %287 = vmatpush1.bf16.msra.mxu0 0
    %288 = vmatprep.subr.bf16.mxu0 0
    %289 = vmatpush1.bf16.msra.mxu0 0
    %290 = vmatprep.subr.bf16.mxu0 0
    %291 = vmatpush1.bf16.msra.mxu0 0
    %292 = vmatprep.subr.bf16.mxu0 0
    %293 = vmatpush1.bf16.msra.mxu0 0
    %294 = vmatprep.subr.bf16.mxu0 0
    %295 = vmatpush1.bf16.msra.mxu0 0
    %296 = vmatprep.subr.bf16.mxu0 0
    %297 = vmatpush1.bf16.msra.mxu0 0
    %298 = vmatprep.mubr.bf16.mxu0 0
    %299 = vmatmul.mubr.bf16.gmra.mrb[0].mxu0 %v216
    %v300 = vpop.f32.mrb[0].mxu0
    %v301 = vadd.f32 0.0, %v300
    %v302 = vpop.f32.mrb[0].mxu0
    %v303 = vpop.f32.mrb[0].mxu0
    %v304 = vadd.f32 0.0, %v303
    %v305 = vpop.f32.mrb[0].mxu0
    %306 = vmatprep.mubr.bf16.mxu0 0
    %307 = vmatmul.mubr.bf16.gmra.mrb[0].mxu0 %v217
    %v308 = vpop.f32.mrb[0].mxu0
    %v309 = vadd.f32 0.0, %v308
    %v310 = vpop.f32.mrb[0].mxu0
    %v311 = vpop.f32.mrb[0].mxu0
    %v312 = vadd.f32 0.0, %v311
    %v313 = vpop.f32.mrb[0].mxu0
    %314 = vdwg.mxu0
    %v316 = vlaneseq
    %v317 = vshrl.u32 %v316, 7
    %v318 = vsub.s32 0, %v317
    %v319 = vrot.slane %v82, %v318
    %v321 = vadd.f32 %v319, %v301
    %v322 = vadd.f32 %v319, %v304
    %v323 = vadd.f32 %v319, %v309
    %v324 = vadd.f32 %v319, %v312
    %v325 = vcombine.high %v118, %v118
    %v326 = vcombine.high %v151, %v151
    %vm327 = vcmask 1040384
    %vm328 = vcmask 1042434
    %vm329 = vmor %vm327, %vm328
    %vm330 = vcmask 1044484
    %vm331 = vmor %vm329, %vm330
    %vm332 = vcmask 1046534
    %vm333 = vmor %vm331, %vm332
    %v334 = vrot.slane %v94, 7
    %v335 = vrot.slane %v334, 2
    %v336 = vrot.slane %v102, 7
    %v337 = vsel %vm333, %v335, %v336
    %v338 = vrot.slane %v336, 2
    %v339 = vrot.slane %v101, 7
    %v340 = vsel %vm333, %v338, %v339
    %v341 = vrot.slane %v339, 2
    %v342 = vrot.slane %v103, 7
    %v343 = vsel %vm333, %v341, %v342
    %v344 = vrot.slane %v342, 2
    %v345 = vrot.slane %v111, 7
    %v346 = vsel %vm333, %v344, %v345
    %v347 = vrot.slane %v345, 2
    %v348 = vrot.slane %v119, 7
    %v349 = vsel %vm333, %v347, %v348
    %v350 = vrot.slane %v348, 2
    %v351 = vrot.slane %v118, 7
    %v352 = vsel %vm333, %v350, %v351
    %v353 = vrot.slane %v351, 2
    %v354 = vrot.slane %v325, 7
    %v355 = vsel %vm333, %v353, %v354
    %v356 = vrot.slane %v127, 7
    %v357 = vrot.slane %v356, 2
    %v358 = vrot.slane %v135, 7
    %v359 = vsel %vm333, %v357, %v358
    %v360 = vrot.slane %v358, 2
    %v361 = vrot.slane %v134, 7
    %v362 = vsel %vm333, %v360, %v361
    %v363 = vrot.slane %v361, 2
    %v364 = vrot.slane %v136, 7
    %v365 = vsel %vm333, %v363, %v364
    %v366 = vrot.slane %v364, 2
    %v367 = vrot.slane %v144, 7
    %v368 = vsel %vm333, %v366, %v367
    %v369 = vrot.slane %v367, 2
    %v370 = vrot.slane %v152, 7
    %v371 = vsel %vm333, %v369, %v370
    %v372 = vrot.slane %v370, 2
    %v373 = vrot.slane %v151, 7
    %v374 = vsel %vm333, %v372, %v373
    %v375 = vrot.slane %v373, 2
    %v376 = vrot.slane %v326, 7
    %v377 = vsel %vm333, %v375, %v376
    %v378 = vcombine.low %v337, %v340
    %v379 = vcombine.low %v343, %v346
    %v381 = vunpack.c.l.s4 1983009808
    %v382 = vunpack.c.0.s8 %v381
    %v383 = vlaneseq
    %v384 = vshrl.u32 %v383, 7
    %v385 = vsub.s32 %v382, %v384
    %v386 = vrot.slane %v378, %v385
    %v388 = vunpack.c.l.s4 1983009808
    %v389 = vunpack.c.0.s8 %v388
    %v390 = vlaneseq
    %v391 = vshrl.u32 %v390, 7
    %v392 = vsub.s32 %v389, %v391
    %v393 = vrot.slane %v379, %v392
    %v394 = vcombine.low %v386, %v393
    %v395 = vcombine.low %v349, %v352
    %v396 = vcombine.low %v355, %v359
    %v398 = vunpack.c.l.s4 1983009808
    %v399 = vunpack.c.0.s8 %v398
    %v400 = vlaneseq
    %v401 = vshrl.u32 %v400, 7
    %v402 = vsub.s32 %v399, %v401
    %v403 = vrot.slane %v395, %v402
    %v405 = vunpack.c.l.s4 1983009808
    %v406 = vunpack.c.0.s8 %v405
    %v407 = vlaneseq
    %v408 = vshrl.u32 %v407, 7
    %v409 = vsub.s32 %v406, %v408
    %v410 = vrot.slane %v396, %v409
    %v411 = vcombine.low %v403, %v410
    %v412 = vcombine.low %v362, %v365
    %v413 = vcombine.low %v368, %v371
    %v415 = vunpack.c.l.s4 1983009808
    %v416 = vunpack.c.0.s8 %v415
    %v417 = vlaneseq
    %v418 = vshrl.u32 %v417, 7
    %v419 = vsub.s32 %v416, %v418
    %v420 = vrot.slane %v412, %v419
    %v422 = vunpack.c.l.s4 1983009808
    %v423 = vunpack.c.0.s8 %v422
    %v424 = vlaneseq
    %v425 = vshrl.u32 %v424, 7
    %v426 = vsub.s32 %v423, %v425
    %v427 = vrot.slane %v413, %v426
    %v428 = vcombine.low %v420, %v427
    %v429 = vcombine.low %v374, %v377
    %v431 = vunpack.c.l.s4 1983009808
    %v432 = vunpack.c.0.s8 %v431
    %v433 = vlaneseq
    %v434 = vshrl.u32 %v433, 7
    %v435 = vsub.s32 %v432, %v434
    %v436 = vrot.slane %v429, %v435
    %v441 = vpack.c.bf16 %v411, %v394
    %v442 = vpack.c.bf16 %v436, %v428
    %v459 = vunpack.c.l.b16 %v50
    %v460 = vunpack.c.l.b16 %v51
    %v461 = vunpack.c.l.b16 %v52
    %v462 = vunpack.c.l.b16 %v53
    %v463 = vunpack.c.l.b16 %v54
    %v464 = vunpack.c.l.b16 %v55
    %v465 = vunpack.c.l.b16 %v56
    %v466 = vunpack.c.l.b16 %v57
    %v467 = vunpack.c.l.b16 %v58
    %v468 = vunpack.c.l.b16 %v59
    %v469 = vunpack.c.l.b16 %v60
    %v470 = vunpack.c.l.b16 %v61
    %v471 = vunpack.c.l.b16 %v62
    %v472 = vunpack.c.l.b16 %v63
    %v473 = vunpack.c.l.b16 %v64
    %v474 = vunpack.c.l.b16 %v65
    %v475 = vpack.c.b16 %v460, %v459
    %v476 = vpack.c.b16 %v462, %v461
    %v477 = vpack.c.b16 %v464, %v463
    %v478 = vpack.c.b16 %v466, %v465
    %v479 = vpack.c.b16 %v468, %v467
    %v480 = vpack.c.b16 %v470, %v469
    %v481 = vpack.c.b16 %v472, %v471
    %v482 = vpack.c.b16 %v474, %v473
    %491 = vmatprep.subr.bf16.mxu0 0
    %492 = vmatpush1.bf16.msra.mxu0 %v475
    %493 = vmatprep.subr.bf16.mxu0 0
    %494 = vmatpush1.bf16.msra.mxu0 %v476
    %495 = vmatprep.subr.bf16.mxu0 0
    %496 = vmatpush1.bf16.msra.mxu0 %v477
    %497 = vmatprep.subr.bf16.mxu0 0
    %498 = vmatpush1.bf16.msra.mxu0 %v478
    %499 = vmatprep.subr.bf16.mxu0 0
    %500 = vmatpush1.bf16.msra.mxu0 %v479
    %501 = vmatprep.subr.bf16.mxu0 0
    %502 = vmatpush1.bf16.msra.mxu0 %v480
    %503 = vmatprep.subr.bf16.mxu0 0
    %504 = vmatpush1.bf16.msra.mxu0 %v481
    %505 = vmatprep.subr.bf16.mxu0 0
    %506 = vmatpush1.bf16.msra.mxu0 %v482
    %507 = vmatprep.subr.bf16.mxu0 0
    %508 = vmatpush1.bf16.msra.mxu0 0
    %509 = vmatprep.subr.bf16.mxu0 0
    %510 = vmatpush1.bf16.msra.mxu0 0
    %511 = vmatprep.subr.bf16.mxu0 0
    %512 = vmatpush1.bf16.msra.mxu0 0
    %513 = vmatprep.subr.bf16.mxu0 0
    %514 = vmatpush1.bf16.msra.mxu0 0
    %515 = vmatprep.subr.bf16.mxu0 0
    %516 = vmatpush1.bf16.msra.mxu0 0
    %517 = vmatprep.subr.bf16.mxu0 0
    %518 = vmatpush1.bf16.msra.mxu0 0
    %519 = vmatprep.subr.bf16.mxu0 0
    %520 = vmatpush1.bf16.msra.mxu0 0
    %521 = vmatprep.subr.bf16.mxu0 0
    %522 = vmatpush1.bf16.msra.mxu0 0
    %523 = vmatprep.mubr.bf16.mxu0 0
    %524 = vmatmul.mubr.bf16.gmra.mrb[0].mxu0 %v441
    %v525 = vpop.f32.mrb[0].mxu0
    %v526 = vadd.f32 0.0, %v525
    %v527 = vpop.f32.mrb[0].mxu0
    %v528 = vpop.f32.mrb[0].mxu0
    %v529 = vadd.f32 0.0, %v528
    %v530 = vpop.f32.mrb[0].mxu0
    %531 = vmatprep.mubr.bf16.mxu0 0
    %532 = vmatmul.mubr.bf16.gmra.mrb[0].mxu0 %v442
    %v533 = vpop.f32.mrb[0].mxu0
    %v534 = vadd.f32 0.0, %v533
    %v535 = vpop.f32.mrb[0].mxu0
    %v536 = vpop.f32.mrb[0].mxu0
    %v537 = vadd.f32 0.0, %v536
    %v538 = vpop.f32.mrb[0].mxu0
    %539 = vdwg.mxu0
    %v540 = vadd.f32 %v321, %v526
    %v541 = vadd.f32 %v322, %v529
    %v542 = vadd.f32 %v323, %v534
    %v543 = vadd.f32 %v324, %v537
    %v544 = vcombine.low %v102, %v101
    %v545 = vcombine.low %v103, %v111
    %v547 = vunpack.c.l.s4 1983009808
    %v548 = vunpack.c.0.s8 %v547
    %v549 = vlaneseq
    %v550 = vshrl.u32 %v549, 7
    %v551 = vsub.s32 %v548, %v550
    %v552 = vrot.slane %v544, %v551
    %v554 = vunpack.c.l.s4 1983009808
    %v555 = vunpack.c.0.s8 %v554
    %v556 = vlaneseq
    %v557 = vshrl.u32 %v556, 7
    %v558 = vsub.s32 %v555, %v557
    %v559 = vrot.slane %v545, %v558
    %v560 = vcombine.low %v552, %v559
    %v561 = vcombine.low %v119, %v118
    %v562 = vcombine.low %v325, %v135
    %v564 = vunpack.c.l.s4 1983009808
    %v565 = vunpack.c.0.s8 %v564
    %v566 = vlaneseq
    %v567 = vshrl.u32 %v566, 7
    %v568 = vsub.s32 %v565, %v567
    %v569 = vrot.slane %v561, %v568
    %v571 = vunpack.c.l.s4 1983009808
    %v572 = vunpack.c.0.s8 %v571
    %v573 = vlaneseq
    %v574 = vshrl.u32 %v573, 7
    %v575 = vsub.s32 %v572, %v574
    %v576 = vrot.slane %v562, %v575
    %v577 = vcombine.low %v569, %v576
    %v578 = vcombine.low %v134, %v136
    %v579 = vcombine.low %v144, %v152
    %v581 = vunpack.c.l.s4 1983009808
    %v582 = vunpack.c.0.s8 %v581
    %v583 = vlaneseq
    %v584 = vshrl.u32 %v583, 7
    %v585 = vsub.s32 %v582, %v584
    %v586 = vrot.slane %v578, %v585
    %v588 = vunpack.c.l.s4 1983009808
    %v589 = vunpack.c.0.s8 %v588
    %v590 = vlaneseq
    %v591 = vshrl.u32 %v590, 7
    %v592 = vsub.s32 %v589, %v591
    %v593 = vrot.slane %v579, %v592
    %v594 = vcombine.low %v586, %v593
    %v595 = vcombine.low %v151, %v326
    %v597 = vunpack.c.l.s4 1983009808
    %v598 = vunpack.c.0.s8 %v597
    %v599 = vlaneseq
    %v600 = vshrl.u32 %v599, 7
    %v601 = vsub.s32 %v598, %v600
    %v602 = vrot.slane %v595, %v601
    %v607 = vpack.c.bf16 %v577, %v560
    %v608 = vpack.c.bf16 %v602, %v594
    %v625 = vunpack.c.l.b16 %v66
    %v626 = vunpack.c.l.b16 %v67
    %v627 = vunpack.c.l.b16 %v68
    %v628 = vunpack.c.l.b16 %v69
    %v629 = vunpack.c.l.b16 %v70
    %v630 = vunpack.c.l.b16 %v71
    %v631 = vunpack.c.l.b16 %v72
    %v632 = vunpack.c.l.b16 %v73
    %v633 = vunpack.c.l.b16 %v74
    %v634 = vunpack.c.l.b16 %v75
    %v635 = vunpack.c.l.b16 %v76
    %v636 = vunpack.c.l.b16 %v77
    %v637 = vunpack.c.l.b16 %v78
    %v638 = vunpack.c.l.b16 %v79
    %v639 = vunpack.c.l.b16 %v80
    %v640 = vunpack.c.l.b16 %v81
    %v641 = vpack.c.b16 %v626, %v625
    %v642 = vpack.c.b16 %v628, %v627
    %v643 = vpack.c.b16 %v630, %v629
    %v644 = vpack.c.b16 %v632, %v631
    %v645 = vpack.c.b16 %v634, %v633
    %v646 = vpack.c.b16 %v636, %v635
    %v647 = vpack.c.b16 %v638, %v637
    %v648 = vpack.c.b16 %v640, %v639
    %657 = vmatprep.subr.bf16.mxu0 0
    %658 = vmatpush1.bf16.msra.mxu0 %v641
    %659 = vmatprep.subr.bf16.mxu0 0
    %660 = vmatpush1.bf16.msra.mxu0 %v642
    %661 = vmatprep.subr.bf16.mxu0 0
    %662 = vmatpush1.bf16.msra.mxu0 %v643
    %663 = vmatprep.subr.bf16.mxu0 0
    %664 = vmatpush1.bf16.msra.mxu0 %v644
    %665 = vmatprep.subr.bf16.mxu0 0
    %666 = vmatpush1.bf16.msra.mxu0 %v645
    %667 = vmatprep.subr.bf16.mxu0 0
    %668 = vmatpush1.bf16.msra.mxu0 %v646
    %669 = vmatprep.subr.bf16.mxu0 0
    %670 = vmatpush1.bf16.msra.mxu0 %v647
    %671 = vmatprep.subr.bf16.mxu0 0
    %672 = vmatpush1.bf16.msra.mxu0 %v648
    %673 = vmatprep.subr.bf16.mxu0 0
    %674 = vmatpush1.bf16.msra.mxu0 0
    %675 = vmatprep.subr.bf16.mxu0 0
    %676 = vmatpush1.bf16.msra.mxu0 0
    %677 = vmatprep.subr.bf16.mxu0 0
    %678 = vmatpush1.bf16.msra.mxu0 0
    %679 = vmatprep.subr.bf16.mxu0 0
    %680 = vmatpush1.bf16.msra.mxu0 0
    %681 = vmatprep.subr.bf16.mxu0 0
    %682 = vmatpush1.bf16.msra.mxu0 0
    %683 = vmatprep.subr.bf16.mxu0 0
    %684 = vmatpush1.bf16.msra.mxu0 0
    %685 = vmatprep.subr.bf16.mxu0 0
    %686 = vmatpush1.bf16.msra.mxu0 0
    %687 = vmatprep.subr.bf16.mxu0 0
    %688 = vmatpush1.bf16.msra.mxu0 0
    %689 = vmatprep.mubr.bf16.mxu0 0
    %690 = vmatmul.mubr.bf16.gmra.mrb[0].mxu0 %v607
    %v691 = vpop.f32.mrb[0].mxu0
    %v692 = vadd.f32 0.0, %v691
    %v693 = vpop.f32.mrb[0].mxu0
    %v694 = vpop.f32.mrb[0].mxu0
    %v695 = vadd.f32 0.0, %v694
    %v696 = vpop.f32.mrb[0].mxu0
    %697 = vmatprep.mubr.bf16.mxu0 0
    %698 = vmatmul.mubr.bf16.gmra.mrb[0].mxu0 %v608
    %v699 = vpop.f32.mrb[0].mxu0
    %v700 = vadd.f32 0.0, %v699
    %v701 = vpop.f32.mrb[0].mxu0
    %v702 = vpop.f32.mrb[0].mxu0
    %v703 = vadd.f32 0.0, %v702
    %v704 = vpop.f32.mrb[0].mxu0
    %705 = vdwg.mxu0
    %v706 = vadd.f32 %v540, %v692
    %v707 = vadd.f32 %v541, %v695
    %v708 = vadd.f32 %v542, %v700
    %v709 = vadd.f32 %v543, %v703
    %v710 = vmax.f32 %v706, 0.0
    %v711 = vmax.f32 %v707, 0.0
    %v712 = vmax.f32 %v708, 0.0
    %v713 = vmax.f32 %v709, 0.0
    %v718 = vcombine.high %v710, %v710
    %v720 = vunpack.c.l.s4 1983009808
    %v721 = vunpack.c.0.s8 %v720
    %v722 = vlaneseq
    %v723 = vshrl.u32 %v722, 7
    %v724 = vsub.s32 %v721, %v723
    %v725 = vrot.slane %v710, %v724
    %v727 = vunpack.c.l.s4 1983009808
    %v728 = vunpack.c.0.s8 %v727
    %v729 = vlaneseq
    %v730 = vshrl.u32 %v729, 7
    %v731 = vsub.s32 %v728, %v730
    %v732 = vrot.slane %v718, %v731
    %v733 = vcombine.high %v725, %v725
    %v734 = vcombine.high %v732, %v732
    %v735 = vcombine.high %v711, %v711
    %v737 = vunpack.c.l.s4 1983009808
    %v738 = vunpack.c.0.s8 %v737
    %v739 = vlaneseq
    %v740 = vshrl.u32 %v739, 7
    %v741 = vsub.s32 %v738, %v740
    %v742 = vrot.slane %v711, %v741
    %v744 = vunpack.c.l.s4 1983009808
    %v745 = vunpack.c.0.s8 %v744
    %v746 = vlaneseq
    %v747 = vshrl.u32 %v746, 7
    %v748 = vsub.s32 %v745, %v747
    %v749 = vrot.slane %v735, %v748
    %v750 = vcombine.high %v742, %v742
    %v751 = vcombine.high %v749, %v749
    %v752 = vcombine.high %v712, %v712
    %v754 = vunpack.c.l.s4 1983009808
    %v755 = vunpack.c.0.s8 %v754
    %v756 = vlaneseq
    %v757 = vshrl.u32 %v756, 7
    %v758 = vsub.s32 %v755, %v757
    %v759 = vrot.slane %v712, %v758
    %v761 = vunpack.c.l.s4 1983009808
    %v762 = vunpack.c.0.s8 %v761
    %v763 = vlaneseq
    %v764 = vshrl.u32 %v763, 7
    %v765 = vsub.s32 %v762, %v764
    %v766 = vrot.slane %v752, %v765
    %v767 = vcombine.high %v759, %v759
    %v768 = vcombine.high %v766, %v766
    %v770 = vunpack.c.l.s4 1983009808
    %v771 = vunpack.c.0.s8 %v770
    %v772 = vlaneseq
    %v773 = vshrl.u32 %v772, 7
    %v774 = vsub.s32 %v771, %v773
    %v775 = vrot.slane %v713, %v774
    %v776 = vcombine.high %v775, %v775
    %v777 = vcombine.low %v725, %v733
    %v778 = vcombine.low %v732, %v734
    %v780 = vunpack.c.l.s4 1983009808
    %v781 = vunpack.c.0.s8 %v780
    %v782 = vlaneseq
    %v783 = vshrl.u32 %v782, 7
    %v784 = vsub.s32 %v781, %v783
    %v785 = vrot.slane %v777, %v784
    %v787 = vunpack.c.l.s4 1983009808
    %v788 = vunpack.c.0.s8 %v787
    %v789 = vlaneseq
    %v790 = vshrl.u32 %v789, 7
    %v791 = vsub.s32 %v788, %v790
    %v792 = vrot.slane %v778, %v791
    %v793 = vcombine.low %v785, %v792
    %v794 = vcombine.low %v742, %v750
    %v796 = vunpack.c.l.s4 1983009808
    %v797 = vunpack.c.0.s8 %v796
    %v798 = vlaneseq
    %v799 = vshrl.u32 %v798, 7
    %v800 = vsub.s32 %v797, %v799
    %v801 = vrot.slane %v794, %v800
    %v803 = vunpack.c.l.s4 1983009808
    %v804 = vunpack.c.0.s8 %v803
    %v805 = vlaneseq
    %v806 = vshrl.u32 %v805, 7
    %v807 = vsub.s32 %v804, %v806
    %v808 = vrot.slane %v749, %v807
    %v809 = vcombine.low %v801, %v808
    %v810 = vcombine.low %v751, %v759
    %v811 = vcombine.low %v767, %v766
    %v813 = vunpack.c.l.s4 1983009808
    %v814 = vunpack.c.0.s8 %v813
    %v815 = vlaneseq
    %v816 = vshrl.u32 %v815, 7
    %v817 = vsub.s32 %v814, %v816
    %v818 = vrot.slane %v810, %v817
    %v820 = vunpack.c.l.s4 1983009808
    %v821 = vunpack.c.0.s8 %v820
    %v822 = vlaneseq
    %v823 = vshrl.u32 %v822, 7
    %v824 = vsub.s32 %v821, %v823
    %v825 = vrot.slane %v811, %v824
    %v826 = vcombine.low %v818, %v825
    %v827 = vcombine.low %v768, %v775
    %v829 = vunpack.c.l.s4 1983009808
    %v830 = vunpack.c.0.s8 %v829
    %v831 = vlaneseq
    %v832 = vshrl.u32 %v831, 7
    %v833 = vsub.s32 %v830, %v832
    %v834 = vrot.slane %v827, %v833
    %v836 = vunpack.c.l.s4 1983009808
    %v837 = vunpack.c.0.s8 %v836
    %v838 = vlaneseq
    %v839 = vshrl.u32 %v838, 7
    %v840 = vsub.s32 %v837, %v839
    %v841 = vrot.slane %v776, %v840
    %v842 = vcombine.low %v834, %v841
    %v843 = vrot.slane %v793, 7
    %v844 = vrot.slane %v809, 7
    %v845 = vsel %vm327, %v843, %v844
    %v846 = vrot.slane %v826, 7
    %v847 = vrot.slane %v842, 7
    %v848 = vsel %vm327, %v846, %v847
    %v853 = vsel %vm327, 0.0, %v843
    %v854 = vsel %vm327, 0.0, %v846
    %vm855 = vcmask 1046528
    %v856 = vsel %vm855, %v845, 0.0
    %v857 = vsel %vm855, %v848, 0.0
    %v858 = vld [vmem:[%s3] sm:$0xf]
    %v859 = vld [vmem:[%s3 + $0x4] sm:$0xf]
    %v860 = vld [vmem:[%s3 + $0x8] sm:$0xf]
    %v861 = vld [vmem:[%s3 + $0xc] sm:$0xf]
    %v862 = vld [vmem:[%s3 + $0x10] sm:$0xf]
    %v863 = vld [vmem:[%s3 + $0x14] sm:$0xf]
    %v864 = vld [vmem:[%s3 + $0x18] sm:$0xf]
    %v865 = vld [vmem:[%s3 + $0x1c] sm:$0xf]
    %v866 = vld [vmem:[%s3 + $0x20] sm:$0xf]
    %v867 = vld [vmem:[%s3 + $0x24] sm:$0xf]
    %v868 = vld [vmem:[%s3 + $0x28] sm:$0xf]
    %v869 = vld [vmem:[%s3 + $0x2c] sm:$0xf]
    %v870 = vld [vmem:[%s3 + $0x30] sm:$0xf]
    %v871 = vld [vmem:[%s3 + $0x34] sm:$0xf]
    %v872 = vld [vmem:[%s3 + $0x38] sm:$0xf]
    %v873 = vld [vmem:[%s3 + $0x3c] sm:$0xf]
    %v874 = vld [vmem:[%s3 + $0x40] sm:$0xf]
    %v875 = vld [vmem:[%s3 + $0x44] sm:$0xf]
    %v876 = vld [vmem:[%s3 + $0x48] sm:$0xf]
    %v877 = vld [vmem:[%s3 + $0x4c] sm:$0xf]
    %v878 = vld [vmem:[%s3 + $0x50] sm:$0xf]
    %v879 = vld [vmem:[%s3 + $0x54] sm:$0xf]
    %v880 = vld [vmem:[%s3 + $0x58] sm:$0xf]
    %v881 = vld [vmem:[%s3 + $0x5c] sm:$0xf]
    %v882 = vld [vmem:[%s3 + $0x60] sm:$0xf]
    %v883 = vld [vmem:[%s3 + $0x64] sm:$0xf]
    %v884 = vld [vmem:[%s3 + $0x68] sm:$0xf]
    %v885 = vld [vmem:[%s3 + $0x6c] sm:$0xf]
    %v886 = vld [vmem:[%s3 + $0x70] sm:$0xf]
    %v887 = vld [vmem:[%s3 + $0x74] sm:$0xf]
    %v888 = vld [vmem:[%s3 + $0x78] sm:$0xf]
    %v889 = vld [vmem:[%s3 + $0x7c] sm:$0xf]
    %v890 = vld [vmem:[%s3 + $0x80] sm:$0xf]
    %v891 = vld [vmem:[%s3 + $0x84] sm:$0xf]
    %v892 = vld [vmem:[%s3 + $0x88] sm:$0xf]
    %v893 = vld [vmem:[%s3 + $0x8c] sm:$0xf]
    %v894 = vld [vmem:[%s3 + $0x90] sm:$0xf]
    %v895 = vld [vmem:[%s3 + $0x94] sm:$0xf]
    %v896 = vld [vmem:[%s3 + $0x98] sm:$0xf]
    %v897 = vld [vmem:[%s3 + $0x9c] sm:$0xf]
    %v898 = vld [vmem:[%s3 + $0xa0] sm:$0xf]
    %v899 = vld [vmem:[%s3 + $0xa4] sm:$0xf]
    %v900 = vld [vmem:[%s3 + $0xa8] sm:$0xf]
    %v901 = vld [vmem:[%s3 + $0xac] sm:$0xf]
    %v902 = vld [vmem:[%s3 + $0xb0] sm:$0xf]
    %v903 = vld [vmem:[%s3 + $0xb4] sm:$0xf]
    %v904 = vld [vmem:[%s3 + $0xb8] sm:$0xf]
    %v905 = vld [vmem:[%s3 + $0xbc] sm:$0xf]
    %v906 = vld [vmem:[%s4] sm:$0x1]
    %v911 = vcombine.high %v853, %v853
    %v913 = vunpack.c.l.s4 1983009808
    %v914 = vunpack.c.0.s8 %v913
    %v915 = vlaneseq
    %v916 = vshrl.u32 %v915, 7
    %v917 = vsub.s32 %v914, %v916
    %v918 = vrot.slane %v853, %v917
    %v920 = vunpack.c.l.s4 1983009808
    %v921 = vunpack.c.0.s8 %v920
    %v922 = vlaneseq
    %v923 = vshrl.u32 %v922, 7
    %v924 = vsub.s32 %v921, %v923
    %v925 = vrot.slane %v911, %v924
    %v926 = vcombine.high %v918, %v918
    %v927 = vcombine.high %v925, %v925
    %v928 = vcombine.high %v856, %v856
    %v930 = vunpack.c.l.s4 1983009808
    %v931 = vunpack.c.0.s8 %v930
    %v932 = vlaneseq
    %v933 = vshrl.u32 %v932, 7
    %v934 = vsub.s32 %v931, %v933
    %v935 = vrot.slane %v856, %v934
    %v937 = vunpack.c.l.s4 1983009808
    %v938 = vunpack.c.0.s8 %v937
    %v939 = vlaneseq
    %v940 = vshrl.u32 %v939, 7
    %v941 = vsub.s32 %v938, %v940
    %v942 = vrot.slane %v928, %v941
    %v943 = vcombine.high %v935, %v935
    %v944 = vcombine.high %v854, %v854
    %v946 = vunpack.c.l.s4 1983009808
    %v947 = vunpack.c.0.s8 %v946
    %v948 = vlaneseq
    %v949 = vshrl.u32 %v948, 7
    %v950 = vsub.s32 %v947, %v949
    %v951 = vrot.slane %v854, %v950
    %v953 = vunpack.c.l.s4 1983009808
    %v954 = vunpack.c.0.s8 %v953
    %v955 = vlaneseq
    %v956 = vshrl.u32 %v955, 7
    %v957 = vsub.s32 %v954, %v956
    %v958 = vrot.slane %v944, %v957
    %v959 = vcombine.high %v951, %v951
    %v960 = vcombine.high %v958, %v958
    %v961 = vcombine.high %v857, %v857
    %v963 = vunpack.c.l.s4 1983009808
    %v964 = vunpack.c.0.s8 %v963
    %v965 = vlaneseq
    %v966 = vshrl.u32 %v965, 7
    %v967 = vsub.s32 %v964, %v966
    %v968 = vrot.slane %v857, %v967
    %v970 = vunpack.c.l.s4 1983009808
    %v971 = vunpack.c.0.s8 %v970
    %v972 = vlaneseq
    %v973 = vshrl.u32 %v972, 7
    %v974 = vsub.s32 %v971, %v973
    %v975 = vrot.slane %v961, %v974
    %v976 = vcombine.high %v968, %v968
    %v977 = vcombine.low %v918, %v926
    %v978 = vcombine.low %v925, %v927
    %v980 = vunpack.c.l.s4 1983009808
    %v981 = vunpack.c.0.s8 %v980
    %v982 = vlaneseq
    %v983 = vshrl.u32 %v982, 7
    %v984 = vsub.s32 %v981, %v983
    %v985 = vrot.slane %v977, %v984
    %v987 = vunpack.c.l.s4 1983009808
    %v988 = vunpack.c.0.s8 %v987
    %v989 = vlaneseq
    %v990 = vshrl.u32 %v989, 7
    %v991 = vsub.s32 %v988, %v990
    %v992 = vrot.slane %v978, %v991
    %v993 = vcombine.low %v985, %v992
    %v994 = vcombine.low %v935, %v943
    %v995 = vcombine.low %v942, %v951
    %v997 = vunpack.c.l.s4 1983009808
    %v998 = vunpack.c.0.s8 %v997
    %v999 = vlaneseq
    %v1000 = vshrl.u32 %v999, 7
    %v1001 = vsub.s32 %v998, %v1000
    %v1002 = vrot.slane %v994, %v1001
    %v1004 = vunpack.c.l.s4 1983009808
    %v1005 = vunpack.c.0.s8 %v1004
    %v1006 = vlaneseq
    %v1007 = vshrl.u32 %v1006, 7
    %v1008 = vsub.s32 %v1005, %v1007
    %v1009 = vrot.slane %v995, %v1008
    %v1010 = vcombine.low %v1002, %v1009
    %v1011 = vcombine.low %v959, %v958
    %v1012 = vcombine.low %v960, %v968
    %v1014 = vunpack.c.l.s4 1983009808
    %v1015 = vunpack.c.0.s8 %v1014
    %v1016 = vlaneseq
    %v1017 = vshrl.u32 %v1016, 7
    %v1018 = vsub.s32 %v1015, %v1017
    %v1019 = vrot.slane %v1011, %v1018
    %v1021 = vunpack.c.l.s4 1983009808
    %v1022 = vunpack.c.0.s8 %v1021
    %v1023 = vlaneseq
    %v1024 = vshrl.u32 %v1023, 7
    %v1025 = vsub.s32 %v1022, %v1024
    %v1026 = vrot.slane %v1012, %v1025
    %v1027 = vcombine.low %v1019, %v1026
    %v1028 = vcombine.low %v976, %v975
    %v1030 = vunpack.c.l.s4 1983009808
    %v1031 = vunpack.c.0.s8 %v1030
    %v1032 = vlaneseq
    %v1033 = vshrl.u32 %v1032, 7
    %v1034 = vsub.s32 %v1031, %v1033
    %v1035 = vrot.slane %v1028, %v1034
    %v1040 = vpack.c.bf16 %v1010, %v993
    %v1041 = vpack.c.bf16 %v1035, %v1027
    %v1058 = vunpack.c.l.b16 %v858
    %v1059 = vunpack.c.l.b16 %v859
    %v1060 = vunpack.c.l.b16 %v860
    %v1061 = vunpack.c.l.b16 %v861
    %v1062 = vunpack.c.l.b16 %v862
    %v1063 = vunpack.c.l.b16 %v863
    %v1064 = vunpack.c.l.b16 %v864
    %v1065 = vunpack.c.l.b16 %v865
    %v1066 = vunpack.c.l.b16 %v866
    %v1067 = vunpack.c.l.b16 %v867
    %v1068 = vunpack.c.l.b16 %v868
    %v1069 = vunpack.c.l.b16 %v869
    %v1070 = vunpack.c.l.b16 %v870
    %v1071 = vunpack.c.l.b16 %v871
    %v1072 = vunpack.c.l.b16 %v872
    %v1073 = vunpack.c.l.b16 %v873
    %v1074 = vpack.c.b16 %v1059, %v1058
    %v1075 = vpack.c.b16 %v1061, %v1060
    %v1076 = vpack.c.b16 %v1063, %v1062
    %v1077 = vpack.c.b16 %v1065, %v1064
    %v1078 = vpack.c.b16 %v1067, %v1066
    %v1079 = vpack.c.b16 %v1069, %v1068
    %v1080 = vpack.c.b16 %v1071, %v1070
    %v1081 = vpack.c.b16 %v1073, %v1072
    %1090 = vmatprep.subr.bf16.mxu0 0
    %1091 = vmatpush1.bf16.msra.mxu0 %v1074
    %1092 = vmatprep.subr.bf16.mxu0 0
    %1093 = vmatpush1.bf16.msra.mxu0 %v1075
    %1094 = vmatprep.subr.bf16.mxu0 0
    %1095 = vmatpush1.bf16.msra.mxu0 %v1076
    %1096 = vmatprep.subr.bf16.mxu0 0
    %1097 = vmatpush1.bf16.msra.mxu0 %v1077
    %1098 = vmatprep.subr.bf16.mxu0 0
    %1099 = vmatpush1.bf16.msra.mxu0 %v1078
    %1100 = vmatprep.subr.bf16.mxu0 0
    %1101 = vmatpush1.bf16.msra.mxu0 %v1079
    %1102 = vmatprep.subr.bf16.mxu0 0
    %1103 = vmatpush1.bf16.msra.mxu0 %v1080
    %1104 = vmatprep.subr.bf16.mxu0 0
    %1105 = vmatpush1.bf16.msra.mxu0 %v1081
    %1106 = vmatprep.subr.bf16.mxu0 0
    %1107 = vmatpush1.bf16.msra.mxu0 0
    %1108 = vmatprep.subr.bf16.mxu0 0
    %1109 = vmatpush1.bf16.msra.mxu0 0
    %1110 = vmatprep.subr.bf16.mxu0 0
    %1111 = vmatpush1.bf16.msra.mxu0 0
    %1112 = vmatprep.subr.bf16.mxu0 0
    %1113 = vmatpush1.bf16.msra.mxu0 0
    %1114 = vmatprep.subr.bf16.mxu0 0
    %1115 = vmatpush1.bf16.msra.mxu0 0
    %1116 = vmatprep.subr.bf16.mxu0 0
    %1117 = vmatpush1.bf16.msra.mxu0 0
    %1118 = vmatprep.subr.bf16.mxu0 0
    %1119 = vmatpush1.bf16.msra.mxu0 0
    %1120 = vmatprep.subr.bf16.mxu0 0
    %1121 = vmatpush1.bf16.msra.mxu0 0
    %1122 = vmatprep.mubr.bf16.mxu0 0
    %1123 = vmatmul.mubr.bf16.gmra.mrb[0].mxu0 %v1040
    %v1124 = vpop.f32.mrb[0].mxu0
    %v1125 = vadd.f32 0.0, %v1124
    %v1126 = vpop.f32.mrb[0].mxu0
    %v1127 = vpop.f32.mrb[0].mxu0
    %v1128 = vadd.f32 0.0, %v1127
    %v1129 = vpop.f32.mrb[0].mxu0
    %1130 = vmatprep.mubr.bf16.mxu0 0
    %1131 = vmatmul.mubr.bf16.gmra.mrb[0].mxu0 %v1041
    %v1132 = vpop.f32.mrb[0].mxu0
    %v1133 = vadd.f32 0.0, %v1132
    %v1134 = vpop.f32.mrb[0].mxu0
    %v1135 = vpop.f32.mrb[0].mxu0
    %v1136 = vadd.f32 0.0, %v1135
    %v1137 = vpop.f32.mrb[0].mxu0
    %1138 = vdwg.mxu0
    %v1140 = vlaneseq
    %v1141 = vshrl.u32 %v1140, 7
    %v1142 = vsub.s32 0, %v1141
    %v1143 = vrot.slane %v906, %v1142
    %v1145 = vadd.f32 %v1143, %v1125
    %v1146 = vadd.f32 %v1143, %v1128
    %v1147 = vadd.f32 %v1143, %v1133
    %v1148 = vadd.f32 %v1143, %v1136
    %v1149 = vcombine.high %v942, %v942
    %v1150 = vcombine.high %v975, %v975
    %v1151 = vrot.slane %v918, 7
    %v1152 = vrot.slane %v1151, 2
    %v1153 = vrot.slane %v926, 7
    %v1154 = vsel %vm333, %v1152, %v1153
    %v1155 = vrot.slane %v1153, 2
    %v1156 = vrot.slane %v925, 7
    %v1157 = vsel %vm333, %v1155, %v1156
    %v1158 = vrot.slane %v1156, 2
    %v1159 = vrot.slane %v927, 7
    %v1160 = vsel %vm333, %v1158, %v1159
    %v1161 = vrot.slane %v1159, 2
    %v1162 = vrot.slane %v935, 7
    %v1163 = vsel %vm333, %v1161, %v1162
    %v1164 = vrot.slane %v1162, 2
    %v1165 = vrot.slane %v943, 7
    %v1166 = vsel %vm333, %v1164, %v1165
    %v1167 = vrot.slane %v1165, 2
    %v1168 = vrot.slane %v942, 7
    %v1169 = vsel %vm333, %v1167, %v1168
    %v1170 = vrot.slane %v1168, 2
    %v1171 = vrot.slane %v1149, 7
    %v1172 = vsel %vm333, %v1170, %v1171
    %v1173 = vrot.slane %v951, 7
    %v1174 = vrot.slane %v1173, 2
    %v1175 = vrot.slane %v959, 7
    %v1176 = vsel %vm333, %v1174, %v1175
    %v1177 = vrot.slane %v1175, 2
    %v1178 = vrot.slane %v958, 7
    %v1179 = vsel %vm333, %v1177, %v1178
    %v1180 = vrot.slane %v1178, 2
    %v1181 = vrot.slane %v960, 7
    %v1182 = vsel %vm333, %v1180, %v1181
    %v1183 = vrot.slane %v1181, 2
    %v1184 = vrot.slane %v968, 7
    %v1185 = vsel %vm333, %v1183, %v1184
    %v1186 = vrot.slane %v1184, 2
    %v1187 = vrot.slane %v976, 7
    %v1188 = vsel %vm333, %v1186, %v1187
    %v1189 = vrot.slane %v1187, 2
    %v1190 = vrot.slane %v975, 7
    %v1191 = vsel %vm333, %v1189, %v1190
    %v1192 = vrot.slane %v1190, 2
    %v1193 = vrot.slane %v1150, 7
    %v1194 = vsel %vm333, %v1192, %v1193
    %v1195 = vcombine.low %v1154, %v1157
    %v1196 = vcombine.low %v1160, %v1163
    %v1198 = vunpack.c.l.s4 1983009808
    %v1199 = vunpack.c.0.s8 %v1198
    %v1200 = vlaneseq
    %v1201 = vshrl.u32 %v1200, 7
    %v1202 = vsub.s32 %v1199, %v1201
    %v1203 = vrot.slane %v1195, %v1202
    %v1205 = vunpack.c.l.s4 1983009808
    %v1206 = vunpack.c.0.s8 %v1205
    %v1207 = vlaneseq
    %v1208 = vshrl.u32 %v1207, 7
    %v1209 = vsub.s32 %v1206, %v1208
    %v1210 = vrot.slane %v1196, %v1209
    %v1211 = vcombine.low %v1203, %v1210
    %v1212 = vcombine.low %v1166, %v1169
    %v1213 = vcombine.low %v1172, %v1176
    %v1215 = vunpack.c.l.s4 1983009808
    %v1216 = vunpack.c.0.s8 %v1215
    %v1217 = vlaneseq
    %v1218 = vshrl.u32 %v1217, 7
    %v1219 = vsub.s32 %v1216, %v1218
    %v1220 = vrot.slane %v1212, %v1219
    %v1222 = vunpack.c.l.s4 1983009808
    %v1223 = vunpack.c.0.s8 %v1222
    %v1224 = vlaneseq
    %v1225 = vshrl.u32 %v1224, 7
    %v1226 = vsub.s32 %v1223, %v1225
    %v1227 = vrot.slane %v1213, %v1226
    %v1228 = vcombine.low %v1220, %v1227
    %v1229 = vcombine.low %v1179, %v1182
    %v1230 = vcombine.low %v1185, %v1188
    %v1232 = vunpack.c.l.s4 1983009808
    %v1233 = vunpack.c.0.s8 %v1232
    %v1234 = vlaneseq
    %v1235 = vshrl.u32 %v1234, 7
    %v1236 = vsub.s32 %v1233, %v1235
    %v1237 = vrot.slane %v1229, %v1236
    %v1239 = vunpack.c.l.s4 1983009808
    %v1240 = vunpack.c.0.s8 %v1239
    %v1241 = vlaneseq
    %v1242 = vshrl.u32 %v1241, 7
    %v1243 = vsub.s32 %v1240, %v1242
    %v1244 = vrot.slane %v1230, %v1243
    %v1245 = vcombine.low %v1237, %v1244
    %v1246 = vcombine.low %v1191, %v1194
    %v1248 = vunpack.c.l.s4 1983009808
    %v1249 = vunpack.c.0.s8 %v1248
    %v1250 = vlaneseq
    %v1251 = vshrl.u32 %v1250, 7
    %v1252 = vsub.s32 %v1249, %v1251
    %v1253 = vrot.slane %v1246, %v1252
    %v1258 = vpack.c.bf16 %v1228, %v1211
    %v1259 = vpack.c.bf16 %v1253, %v1245
    %v1276 = vunpack.c.l.b16 %v874
    %v1277 = vunpack.c.l.b16 %v875
    %v1278 = vunpack.c.l.b16 %v876
    %v1279 = vunpack.c.l.b16 %v877
    %v1280 = vunpack.c.l.b16 %v878
    %v1281 = vunpack.c.l.b16 %v879
    %v1282 = vunpack.c.l.b16 %v880
    %v1283 = vunpack.c.l.b16 %v881
    %v1284 = vunpack.c.l.b16 %v882
    %v1285 = vunpack.c.l.b16 %v883
    %v1286 = vunpack.c.l.b16 %v884
    %v1287 = vunpack.c.l.b16 %v885
    %v1288 = vunpack.c.l.b16 %v886
    %v1289 = vunpack.c.l.b16 %v887
    %v1290 = vunpack.c.l.b16 %v888
    %v1291 = vunpack.c.l.b16 %v889
    %v1292 = vpack.c.b16 %v1277, %v1276
    %v1293 = vpack.c.b16 %v1279, %v1278
    %v1294 = vpack.c.b16 %v1281, %v1280
    %v1295 = vpack.c.b16 %v1283, %v1282
    %v1296 = vpack.c.b16 %v1285, %v1284
    %v1297 = vpack.c.b16 %v1287, %v1286
    %v1298 = vpack.c.b16 %v1289, %v1288
    %v1299 = vpack.c.b16 %v1291, %v1290
    %1308 = vmatprep.subr.bf16.mxu0 0
    %1309 = vmatpush1.bf16.msra.mxu0 %v1292
    %1310 = vmatprep.subr.bf16.mxu0 0
    %1311 = vmatpush1.bf16.msra.mxu0 %v1293
    %1312 = vmatprep.subr.bf16.mxu0 0
    %1313 = vmatpush1.bf16.msra.mxu0 %v1294
    %1314 = vmatprep.subr.bf16.mxu0 0
    %1315 = vmatpush1.bf16.msra.mxu0 %v1295
    %1316 = vmatprep.subr.bf16.mxu0 0
    %1317 = vmatpush1.bf16.msra.mxu0 %v1296
    %1318 = vmatprep.subr.bf16.mxu0 0
    %1319 = vmatpush1.bf16.msra.mxu0 %v1297
    %1320 = vmatprep.subr.bf16.mxu0 0
    %1321 = vmatpush1.bf16.msra.mxu0 %v1298
    %1322 = vmatprep.subr.bf16.mxu0 0
    %1323 = vmatpush1.bf16.msra.mxu0 %v1299
    %1324 = vmatprep.subr.bf16.mxu0 0
    %1325 = vmatpush1.bf16.msra.mxu0 0
    %1326 = vmatprep.subr.bf16.mxu0 0
    %1327 = vmatpush1.bf16.msra.mxu0 0
    %1328 = vmatprep.subr.bf16.mxu0 0
    %1329 = vmatpush1.bf16.msra.mxu0 0
    %1330 = vmatprep.subr.bf16.mxu0 0
    %1331 = vmatpush1.bf16.msra.mxu0 0
    %1332 = vmatprep.subr.bf16.mxu0 0
    %1333 = vmatpush1.bf16.msra.mxu0 0
    %1334 = vmatprep.subr.bf16.mxu0 0
    %1335 = vmatpush1.bf16.msra.mxu0 0
    %1336 = vmatprep.subr.bf16.mxu0 0
    %1337 = vmatpush1.bf16.msra.mxu0 0
    %1338 = vmatprep.subr.bf16.mxu0 0
    %1339 = vmatpush1.bf16.msra.mxu0 0
    %1340 = vmatprep.mubr.bf16.mxu0 0
    %1341 = vmatmul.mubr.bf16.gmra.mrb[0].mxu0 %v1258
    %v1342 = vpop.f32.mrb[0].mxu0
    %v1343 = vadd.f32 0.0, %v1342
    %v1344 = vpop.f32.mrb[0].mxu0
    %v1345 = vpop.f32.mrb[0].mxu0
    %v1346 = vadd.f32 0.0, %v1345
    %v1347 = vpop.f32.mrb[0].mxu0
    %1348 = vmatprep.mubr.bf16.mxu0 0
    %1349 = vmatmul.mubr.bf16.gmra.mrb[0].mxu0 %v1259
    %v1350 = vpop.f32.mrb[0].mxu0
    %v1351 = vadd.f32 0.0, %v1350
    %v1352 = vpop.f32.mrb[0].mxu0
    %v1353 = vpop.f32.mrb[0].mxu0
    %v1354 = vadd.f32 0.0, %v1353
    %v1355 = vpop.f32.mrb[0].mxu0
    %1356 = vdwg.mxu0
    %v1357 = vadd.f32 %v1145, %v1343
    %v1358 = vadd.f32 %v1146, %v1346
    %v1359 = vadd.f32 %v1147, %v1351
    %v1360 = vadd.f32 %v1148, %v1354
    %v1361 = vcombine.low %v926, %v925
    %v1362 = vcombine.low %v927, %v935
    %v1364 = vunpack.c.l.s4 1983009808
    %v1365 = vunpack.c.0.s8 %v1364
    %v1366 = vlaneseq
    %v1367 = vshrl.u32 %v1366, 7
    %v1368 = vsub.s32 %v1365, %v1367
    %v1369 = vrot.slane %v1361, %v1368
    %v1371 = vunpack.c.l.s4 1983009808
    %v1372 = vunpack.c.0.s8 %v1371
    %v1373 = vlaneseq
    %v1374 = vshrl.u32 %v1373, 7
    %v1375 = vsub.s32 %v1372, %v1374
    %v1376 = vrot.slane %v1362, %v1375
    %v1377 = vcombine.low %v1369, %v1376
    %v1378 = vcombine.low %v943, %v942
    %v1379 = vcombine.low %v1149, %v959
    %v1381 = vunpack.c.l.s4 1983009808
    %v1382 = vunpack.c.0.s8 %v1381
    %v1383 = vlaneseq
    %v1384 = vshrl.u32 %v1383, 7
    %v1385 = vsub.s32 %v1382, %v1384
    %v1386 = vrot.slane %v1378, %v1385
    %v1388 = vunpack.c.l.s4 1983009808
    %v1389 = vunpack.c.0.s8 %v1388
    %v1390 = vlaneseq
    %v1391 = vshrl.u32 %v1390, 7
    %v1392 = vsub.s32 %v1389, %v1391
    %v1393 = vrot.slane %v1379, %v1392
    %v1394 = vcombine.low %v1386, %v1393
    %v1395 = vcombine.low %v958, %v960
    %v1396 = vcombine.low %v968, %v976
    %v1398 = vunpack.c.l.s4 1983009808
    %v1399 = vunpack.c.0.s8 %v1398
    %v1400 = vlaneseq
    %v1401 = vshrl.u32 %v1400, 7
    %v1402 = vsub.s32 %v1399, %v1401
    %v1403 = vrot.slane %v1395, %v1402
    %v1405 = vunpack.c.l.s4 1983009808
    %v1406 = vunpack.c.0.s8 %v1405
    %v1407 = vlaneseq
    %v1408 = vshrl.u32 %v1407, 7
    %v1409 = vsub.s32 %v1406, %v1408
    %v1410 = vrot.slane %v1396, %v1409
    %v1411 = vcombine.low %v1403, %v1410
    %v1412 = vcombine.low %v975, %v1150
    %v1414 = vunpack.c.l.s4 1983009808
    %v1415 = vunpack.c.0.s8 %v1414
    %v1416 = vlaneseq
    %v1417 = vshrl.u32 %v1416, 7
    %v1418 = vsub.s32 %v1415, %v1417
    %v1419 = vrot.slane %v1412, %v1418
    %v1424 = vpack.c.bf16 %v1394, %v1377
    %v1425 = vpack.c.bf16 %v1419, %v1411
    %v1442 = vunpack.c.l.b16 %v890
    %v1443 = vunpack.c.l.b16 %v891
    %v1444 = vunpack.c.l.b16 %v892
    %v1445 = vunpack.c.l.b16 %v893
    %v1446 = vunpack.c.l.b16 %v894
    %v1447 = vunpack.c.l.b16 %v895
    %v1448 = vunpack.c.l.b16 %v896
    %v1449 = vunpack.c.l.b16 %v897
    %v1450 = vunpack.c.l.b16 %v898
    %v1451 = vunpack.c.l.b16 %v899
    %v1452 = vunpack.c.l.b16 %v900
    %v1453 = vunpack.c.l.b16 %v901
    %v1454 = vunpack.c.l.b16 %v902
    %v1455 = vunpack.c.l.b16 %v903
    %v1456 = vunpack.c.l.b16 %v904
    %v1457 = vunpack.c.l.b16 %v905
    %v1458 = vpack.c.b16 %v1443, %v1442
    %v1459 = vpack.c.b16 %v1445, %v1444
    %v1460 = vpack.c.b16 %v1447, %v1446
    %v1461 = vpack.c.b16 %v1449, %v1448
    %v1462 = vpack.c.b16 %v1451, %v1450
    %v1463 = vpack.c.b16 %v1453, %v1452
    %v1464 = vpack.c.b16 %v1455, %v1454
    %v1465 = vpack.c.b16 %v1457, %v1456
    %1474 = vmatprep.subr.bf16.mxu0 0
    %1475 = vmatpush1.bf16.msra.mxu0 %v1458
    %1476 = vmatprep.subr.bf16.mxu0 0
    %1477 = vmatpush1.bf16.msra.mxu0 %v1459
    %1478 = vmatprep.subr.bf16.mxu0 0
    %1479 = vmatpush1.bf16.msra.mxu0 %v1460
    %1480 = vmatprep.subr.bf16.mxu0 0
    %1481 = vmatpush1.bf16.msra.mxu0 %v1461
    %1482 = vmatprep.subr.bf16.mxu0 0
    %1483 = vmatpush1.bf16.msra.mxu0 %v1462
    %1484 = vmatprep.subr.bf16.mxu0 0
    %1485 = vmatpush1.bf16.msra.mxu0 %v1463
    %1486 = vmatprep.subr.bf16.mxu0 0
    %1487 = vmatpush1.bf16.msra.mxu0 %v1464
    %1488 = vmatprep.subr.bf16.mxu0 0
    %1489 = vmatpush1.bf16.msra.mxu0 %v1465
    %1490 = vmatprep.subr.bf16.mxu0 0
    %1491 = vmatpush1.bf16.msra.mxu0 0
    %1492 = vmatprep.subr.bf16.mxu0 0
    %1493 = vmatpush1.bf16.msra.mxu0 0
    %1494 = vmatprep.subr.bf16.mxu0 0
    %1495 = vmatpush1.bf16.msra.mxu0 0
    %1496 = vmatprep.subr.bf16.mxu0 0
    %1497 = vmatpush1.bf16.msra.mxu0 0
    %1498 = vmatprep.subr.bf16.mxu0 0
    %1499 = vmatpush1.bf16.msra.mxu0 0
    %1500 = vmatprep.subr.bf16.mxu0 0
    %1501 = vmatpush1.bf16.msra.mxu0 0
    %1502 = vmatprep.subr.bf16.mxu0 0
    %1503 = vmatpush1.bf16.msra.mxu0 0
    %1504 = vmatprep.subr.bf16.mxu0 0
    %1505 = vmatpush1.bf16.msra.mxu0 0
    %1506 = vmatprep.mubr.bf16.mxu0 0
    %1507 = vmatmul.mubr.bf16.gmra.mrb[0].mxu0 %v1424
    %v1508 = vpop.f32.mrb[0].mxu0
    %v1509 = vadd.f32 0.0, %v1508
    %v1510 = vpop.f32.mrb[0].mxu0
    %v1511 = vpop.f32.mrb[0].mxu0
    %v1512 = vadd.f32 0.0, %v1511
    %v1513 = vpop.f32.mrb[0].mxu0
    %1514 = vmatprep.mubr.bf16.mxu0 0
    %1515 = vmatmul.mubr.bf16.gmra.mrb[0].mxu0 %v1425
    %v1516 = vpop.f32.mrb[0].mxu0
    %v1517 = vadd.f32 0.0, %v1516
    %v1518 = vpop.f32.mrb[0].mxu0
    %v1519 = vpop.f32.mrb[0].mxu0
    %v1520 = vadd.f32 0.0, %v1519
    %v1521 = vpop.f32.mrb[0].mxu0
    %1522 = vdwg.mxu0
    %v1523 = vadd.f32 %v1357, %v1509
    %v1524 = vadd.f32 %v1358, %v1512
    %v1525 = vadd.f32 %v1359, %v1517
    %v1526 = vadd.f32 %v1360, %v1520
    %v1527 = vmax.f32 %v1523, 0.0
    %v1528 = vmax.f32 %v1524, 0.0
    %v1529 = vmax.f32 %v1525, 0.0
    %v1530 = vmax.f32 %v1526, 0.0
    %v1535 = vcombine.high %v1527, %v1527
    %v1537 = vunpack.c.l.s4 1983009808
    %v1538 = vunpack.c.0.s8 %v1537
    %v1539 = vlaneseq
    %v1540 = vshrl.u32 %v1539, 7
    %v1541 = vsub.s32 %v1538, %v1540
    %v1542 = vrot.slane %v1527, %v1541
    %v1544 = vunpack.c.l.s4 1983009808
    %v1545 = vunpack.c.0.s8 %v1544
    %v1546 = vlaneseq
    %v1547 = vshrl.u32 %v1546, 7
    %v1548 = vsub.s32 %v1545, %v1547
    %v1549 = vrot.slane %v1535, %v1548
    %v1550 = vcombine.high %v1542, %v1542
    %v1551 = vcombine.high %v1549, %v1549
    %v1552 = vcombine.high %v1528, %v1528
    %v1554 = vunpack.c.l.s4 1983009808
    %v1555 = vunpack.c.0.s8 %v1554
    %v1556 = vlaneseq
    %v1557 = vshrl.u32 %v1556, 7
    %v1558 = vsub.s32 %v1555, %v1557
    %v1559 = vrot.slane %v1528, %v1558
    %v1561 = vunpack.c.l.s4 1983009808
    %v1562 = vunpack.c.0.s8 %v1561
    %v1563 = vlaneseq
    %v1564 = vshrl.u32 %v1563, 7
    %v1565 = vsub.s32 %v1562, %v1564
    %v1566 = vrot.slane %v1552, %v1565
    %v1567 = vcombine.high %v1559, %v1559
    %v1568 = vcombine.high %v1566, %v1566
    %v1569 = vcombine.high %v1529, %v1529
    %v1571 = vunpack.c.l.s4 1983009808
    %v1572 = vunpack.c.0.s8 %v1571
    %v1573 = vlaneseq
    %v1574 = vshrl.u32 %v1573, 7
    %v1575 = vsub.s32 %v1572, %v1574
    %v1576 = vrot.slane %v1529, %v1575
    %v1578 = vunpack.c.l.s4 1983009808
    %v1579 = vunpack.c.0.s8 %v1578
    %v1580 = vlaneseq
    %v1581 = vshrl.u32 %v1580, 7
    %v1582 = vsub.s32 %v1579, %v1581
    %v1583 = vrot.slane %v1569, %v1582
    %v1584 = vcombine.high %v1576, %v1576
    %v1585 = vcombine.high %v1583, %v1583
    %v1587 = vunpack.c.l.s4 1983009808
    %v1588 = vunpack.c.0.s8 %v1587
    %v1589 = vlaneseq
    %v1590 = vshrl.u32 %v1589, 7
    %v1591 = vsub.s32 %v1588, %v1590
    %v1592 = vrot.slane %v1530, %v1591
    %v1593 = vcombine.high %v1592, %v1592
    %v1594 = vcombine.low %v1542, %v1550
    %v1595 = vcombine.low %v1549, %v1551
    %v1597 = vunpack.c.l.s4 1983009808
    %v1598 = vunpack.c.0.s8 %v1597
    %v1599 = vlaneseq
    %v1600 = vshrl.u32 %v1599, 7
    %v1601 = vsub.s32 %v1598, %v1600
    %v1602 = vrot.slane %v1594, %v1601
    %v1604 = vunpack.c.l.s4 1983009808
    %v1605 = vunpack.c.0.s8 %v1604
    %v1606 = vlaneseq
    %v1607 = vshrl.u32 %v1606, 7
    %v1608 = vsub.s32 %v1605, %v1607
    %v1609 = vrot.slane %v1595, %v1608
    %v1610 = vcombine.low %v1602, %v1609
    %v1611 = vcombine.low %v1559, %v1567
    %v1613 = vunpack.c.l.s4 1983009808
    %v1614 = vunpack.c.0.s8 %v1613
    %v1615 = vlaneseq
    %v1616 = vshrl.u32 %v1615, 7
    %v1617 = vsub.s32 %v1614, %v1616
    %v1618 = vrot.slane %v1611, %v1617
    %v1620 = vunpack.c.l.s4 1983009808
    %v1621 = vunpack.c.0.s8 %v1620
    %v1622 = vlaneseq
    %v1623 = vshrl.u32 %v1622, 7
    %v1624 = vsub.s32 %v1621, %v1623
    %v1625 = vrot.slane %v1566, %v1624
    %v1626 = vcombine.low %v1618, %v1625
    %v1627 = vcombine.low %v1568, %v1576
    %v1628 = vcombine.low %v1584, %v1583
    %v1630 = vunpack.c.l.s4 1983009808
    %v1631 = vunpack.c.0.s8 %v1630
    %v1632 = vlaneseq
    %v1633 = vshrl.u32 %v1632, 7
    %v1634 = vsub.s32 %v1631, %v1633
    %v1635 = vrot.slane %v1627, %v1634
    %v1637 = vunpack.c.l.s4 1983009808
    %v1638 = vunpack.c.0.s8 %v1637
    %v1639 = vlaneseq
    %v1640 = vshrl.u32 %v1639, 7
    %v1641 = vsub.s32 %v1638, %v1640
    %v1642 = vrot.slane %v1628, %v1641
    %v1643 = vcombine.low %v1635, %v1642
    %v1644 = vcombine.low %v1585, %v1592
    %v1646 = vunpack.c.l.s4 1983009808
    %v1647 = vunpack.c.0.s8 %v1646
    %v1648 = vlaneseq
    %v1649 = vshrl.u32 %v1648, 7
    %v1650 = vsub.s32 %v1647, %v1649
    %v1651 = vrot.slane %v1644, %v1650
    %v1653 = vunpack.c.l.s4 1983009808
    %v1654 = vunpack.c.0.s8 %v1653
    %v1655 = vlaneseq
    %v1656 = vshrl.u32 %v1655, 7
    %v1657 = vsub.s32 %v1654, %v1656
    %v1658 = vrot.slane %v1593, %v1657
    %v1659 = vcombine.low %v1651, %v1658
    %v1660 = vrot.slane %v1610, 7
    %v1661 = vrot.slane %v1626, 7
    %v1662 = vsel %vm327, %v1660, %v1661
    %v1663 = vrot.slane %v1643, 7
    %v1664 = vrot.slane %v1659, 7
    %v1665 = vsel %vm327, %v1663, %v1664
    %v1670 = vsel %vm327, 0.0, %v1660
    %v1671 = vsel %vm327, 0.0, %v1663
    %v1672 = vsel %vm855, %v1662, 0.0
    %v1673 = vsel %vm855, %v1665, 0.0
    %v1674 = vld [vmem:[%s5] sm:$0xff]
    %v1675 = vld [vmem:[%s5 + $0x8] sm:$0xff]
    %v1676 = vld [vmem:[%s5 + $0x10] sm:$0xff]
    %v1677 = vld [vmem:[%s5 + $0x18] sm:$0xff]
    %v1678 = vld [vmem:[%s5 + $0x20] sm:$0xff]
    %v1679 = vld [vmem:[%s5 + $0x28] sm:$0xff]
    %v1680 = vld [vmem:[%s5 + $0x30] sm:$0xff]
    %v1681 = vld [vmem:[%s5 + $0x38] sm:$0xff]
    %v1682 = vld [vmem:[%s5 + $0x40] sm:$0xff]
    %v1683 = vld [vmem:[%s5 + $0x48] sm:$0xff]
    %v1684 = vld [vmem:[%s5 + $0x50] sm:$0xff]
    %v1685 = vld [vmem:[%s5 + $0x58] sm:$0xff]
    %v1686 = vld [vmem:[%s5 + $0x60] sm:$0xff]
    %v1687 = vld [vmem:[%s5 + $0x68] sm:$0xff]
    %v1688 = vld [vmem:[%s5 + $0x70] sm:$0xff]
    %v1689 = vld [vmem:[%s5 + $0x78] sm:$0xff]
    %v1690 = vld [vmem:[%s5 + $0x80] sm:$0xff]
    %v1691 = vld [vmem:[%s5 + $0x88] sm:$0xff]
    %v1692 = vld [vmem:[%s5 + $0x90] sm:$0xff]
    %v1693 = vld [vmem:[%s5 + $0x98] sm:$0xff]
    %v1694 = vld [vmem:[%s5 + $0xa0] sm:$0xff]
    %v1695 = vld [vmem:[%s5 + $0xa8] sm:$0xff]
    %v1696 = vld [vmem:[%s5 + $0xb0] sm:$0xff]
    %v1697 = vld [vmem:[%s5 + $0xb8] sm:$0xff]
    %v1698 = vld [vmem:[%s5 + $0xc0] sm:$0xff]
    %v1699 = vld [vmem:[%s5 + $0xc8] sm:$0xff]
    %v1700 = vld [vmem:[%s5 + $0xd0] sm:$0xff]
    %v1701 = vld [vmem:[%s5 + $0xd8] sm:$0xff]
    %v1702 = vld [vmem:[%s5 + $0xe0] sm:$0xff]
    %v1703 = vld [vmem:[%s5 + $0xe8] sm:$0xff]
    %v1704 = vld [vmem:[%s5 + $0xf0] sm:$0xff]
    %v1705 = vld [vmem:[%s5 + $0xf8] sm:$0xff]
    %v1706 = vld [vmem:[%s5 + $0x100] sm:$0xff]
    %v1707 = vld [vmem:[%s5 + $0x108] sm:$0xff]
    %v1708 = vld [vmem:[%s5 + $0x110] sm:$0xff]
    %v1709 = vld [vmem:[%s5 + $0x118] sm:$0xff]
    %v1710 = vld [vmem:[%s5 + $0x120] sm:$0xff]
    %v1711 = vld [vmem:[%s5 + $0x128] sm:$0xff]
    %v1712 = vld [vmem:[%s5 + $0x130] sm:$0xff]
    %v1713 = vld [vmem:[%s5 + $0x138] sm:$0xff]
    %v1714 = vld [vmem:[%s5 + $0x140] sm:$0xff]
    %v1715 = vld [vmem:[%s5 + $0x148] sm:$0xff]
    %v1716 = vld [vmem:[%s5 + $0x150] sm:$0xff]
    %v1717 = vld [vmem:[%s5 + $0x158] sm:$0xff]
    %v1718 = vld [vmem:[%s5 + $0x160] sm:$0xff]
    %v1719 = vld [vmem:[%s5 + $0x168] sm:$0xff]
    %v1720 = vld [vmem:[%s5 + $0x170] sm:$0xff]
    %v1721 = vld [vmem:[%s5 + $0x178] sm:$0xff]
    %1738 = vset.pattern.permute.xlu0 0
    %1739 = vperm.xlu0 %1738, %v1674
    %v1740 = vpop.permute.xlu0 %1739
    %1741 = vset.pattern.permute.xlu0 0
    %1742 = vperm.xlu0 %1741, %v1675
    %v1743 = vpop.permute.xlu0 %1742
    %1744 = vset.pattern.permute.xlu0 0
    %1745 = vperm.xlu0 %1744, %v1676
    %v1746 = vpop.permute.xlu0 %1745
    %1747 = vset.pattern.permute.xlu0 0
    %1748 = vperm.xlu0 %1747, %v1677
    %v1749 = vpop.permute.xlu0 %1748
    %1750 = vset.pattern.permute.xlu0 0
    %1751 = vperm.xlu0 %1750, %v1678
    %v1752 = vpop.permute.xlu0 %1751
    %1753 = vset.pattern.permute.xlu0 0
    %1754 = vperm.xlu0 %1753, %v1679
    %v1755 = vpop.permute.xlu0 %1754
    %1756 = vset.pattern.permute.xlu0 0
    %1757 = vperm.xlu0 %1756, %v1680
    %v1758 = vpop.permute.xlu0 %1757
    %1759 = vset.pattern.permute.xlu0 0
    %1760 = vperm.xlu0 %1759, %v1681
    %v1761 = vpop.permute.xlu0 %1760
    %1762 = vset.pattern.permute.xlu0 0
    %1763 = vperm.xlu0 %1762, %v1682
    %v1764 = vpop.permute.xlu0 %1763
    %1765 = vset.pattern.permute.xlu0 0
    %1766 = vperm.xlu0 %1765, %v1683
    %v1767 = vpop.permute.xlu0 %1766
    %1768 = vset.pattern.permute.xlu0 0
    %1769 = vperm.xlu0 %1768, %v1684
    %v1770 = vpop.permute.xlu0 %1769
    %1771 = vset.pattern.permute.xlu0 0
    %1772 = vperm.xlu0 %1771, %v1685
    %v1773 = vpop.permute.xlu0 %1772
    %1774 = vset.pattern.permute.xlu0 0
    %1775 = vperm.xlu0 %1774, %v1686
    %v1776 = vpop.permute.xlu0 %1775
    %1777 = vset.pattern.permute.xlu0 0
    %1778 = vperm.xlu0 %1777, %v1687
    %v1779 = vpop.permute.xlu0 %1778
    %1780 = vset.pattern.permute.xlu0 0
    %1781 = vperm.xlu0 %1780, %v1688
    %v1782 = vpop.permute.xlu0 %1781
    %1783 = vset.pattern.permute.xlu0 0
    %1784 = vperm.xlu0 %1783, %v1689
    %v1785 = vpop.permute.xlu0 %1784
    %v1786 = vlaneseq
    %v1787 = vand.u32 %v1786, 127
    %v1788 = vlaneseq
    %v1789 = vshrl.u32 %v1788, 7
    %v1790 = vsub.s32 %v1787, %v1789
    %v1791 = vrot.slane %v1740, %v1790
    %v1792 = vadd.s32 %v1787, 4294967288
    %v1793 = vlaneseq
    %v1794 = vshrl.u32 %v1793, 7
    %v1795 = vsub.s32 %v1792, %v1794
    %v1796 = vrot.slane %v1743, %v1795
    %vm1797 = vcmask 130112
    %v1798 = vsel %vm1797, %v1796, %v1791
    %v1799 = vadd.s32 %v1787, 4294967280
    %v1800 = vlaneseq
    %v1801 = vshrl.u32 %v1800, 7
    %v1802 = vsub.s32 %v1799, %v1801
    %v1803 = vrot.slane %v1746, %v1802
    %vm1804 = vcmask 195712
    %v1805 = vsel %vm1804, %v1803, %v1798
    %v1806 = vadd.s32 %v1787, 4294967272
    %v1807 = vlaneseq
    %v1808 = vshrl.u32 %v1807, 7
    %v1809 = vsub.s32 %v1806, %v1808
    %v1810 = vrot.slane %v1749, %v1809
    %vm1811 = vcmask 261312
    %v1812 = vsel %vm1811, %v1810, %v1805
    %v1813 = vadd.s32 %v1787, 4294967264
    %v1814 = vlaneseq
    %v1815 = vshrl.u32 %v1814, 7
    %v1816 = vsub.s32 %v1813, %v1815
    %v1817 = vrot.slane %v1752, %v1816
    %vm1818 = vcmask 326912
    %v1819 = vsel %vm1818, %v1817, %v1812
    %v1820 = vadd.s32 %v1787, 4294967256
    %v1821 = vlaneseq
    %v1822 = vshrl.u32 %v1821, 7
    %v1823 = vsub.s32 %v1820, %v1822
    %v1824 = vrot.slane %v1755, %v1823
    %vm1825 = vcmask 392512
    %v1826 = vsel %vm1825, %v1824, %v1819
    %v1827 = vadd.s32 %v1787, 4294967248
    %v1828 = vlaneseq
    %v1829 = vshrl.u32 %v1828, 7
    %v1830 = vsub.s32 %v1827, %v1829
    %v1831 = vrot.slane %v1758, %v1830
    %vm1832 = vcmask 458112
    %v1833 = vsel %vm1832, %v1831, %v1826
    %v1834 = vadd.s32 %v1787, 4294967240
    %v1835 = vlaneseq
    %v1836 = vshrl.u32 %v1835, 7
    %v1837 = vsub.s32 %v1834, %v1836
    %v1838 = vrot.slane %v1761, %v1837
    %vm1839 = vcmask 523712
    %v1840 = vsel %vm1839, %v1838, %v1833
    %v1841 = vadd.s32 %v1787, 4294967232
    %v1842 = vlaneseq
    %v1843 = vshrl.u32 %v1842, 7
    %v1844 = vsub.s32 %v1841, %v1843
    %v1845 = vrot.slane %v1764, %v1844
    %vm1846 = vcmask 589312
    %v1847 = vsel %vm1846, %v1845, %v1840
    %v1848 = vadd.s32 %v1787, 4294967224
    %v1849 = vlaneseq
    %v1850 = vshrl.u32 %v1849, 7
    %v1851 = vsub.s32 %v1848, %v1850
    %v1852 = vrot.slane %v1767, %v1851
    %vm1853 = vcmask 654912
    %v1854 = vsel %vm1853, %v1852, %v1847
    %v1855 = vadd.s32 %v1787, 4294967216
    %v1856 = vlaneseq
    %v1857 = vshrl.u32 %v1856, 7
    %v1858 = vsub.s32 %v1855, %v1857
    %v1859 = vrot.slane %v1770, %v1858
    %vm1860 = vcmask 720512
    %v1861 = vsel %vm1860, %v1859, %v1854
    %v1862 = vadd.s32 %v1787, 4294967208
    %v1863 = vlaneseq
    %v1864 = vshrl.u32 %v1863, 7
    %v1865 = vsub.s32 %v1862, %v1864
    %v1866 = vrot.slane %v1773, %v1865
    %vm1867 = vcmask 786112
    %v1868 = vsel %vm1867, %v1866, %v1861
    %v1869 = vadd.s32 %v1787, 4294967200
    %v1870 = vlaneseq
    %v1871 = vshrl.u32 %v1870, 7
    %v1872 = vsub.s32 %v1869, %v1871
    %v1873 = vrot.slane %v1776, %v1872
    %vm1874 = vcmask 851712
    %v1875 = vsel %vm1874, %v1873, %v1868
    %v1876 = vadd.s32 %v1787, 4294967192
    %v1877 = vlaneseq
    %v1878 = vshrl.u32 %v1877, 7
    %v1879 = vsub.s32 %v1876, %v1878
    %v1880 = vrot.slane %v1779, %v1879
    %vm1881 = vcmask 917312
    %v1882 = vsel %vm1881, %v1880, %v1875
    %v1883 = vadd.s32 %v1787, 4294967184
    %v1884 = vlaneseq
    %v1885 = vshrl.u32 %v1884, 7
    %v1886 = vsub.s32 %v1883, %v1885
    %v1887 = vrot.slane %v1782, %v1886
    %vm1888 = vcmask 982912
    %v1889 = vsel %vm1888, %v1887, %v1882
    %v1890 = vadd.s32 %v1787, 4294967176
    %v1891 = vlaneseq
    %v1892 = vshrl.u32 %v1891, 7
    %v1893 = vsub.s32 %v1890, %v1892
    %v1894 = vrot.slane %v1785, %v1893
    %vm1895 = vcmask 1048512
    %v1896 = vsel %vm1895, %v1894, %v1889
    %vm1897 = vcmask 1041409
    %v1898 = vsel %vm328, %v1896, %v1896
    %vm1899 = vcmask 1043459
    %v1900 = vsel %vm1899, %v1896, %v1898
    %v1901 = vsel %vm330, %v1896, %v1900
    %vm1902 = vcmask 1045509
    %v1903 = vsel %vm1902, %v1896, %v1901
    %v1904 = vsel %vm332, %v1896, %v1903
    %vm1905 = vcmask 1047559
    %v1906 = vsel %vm1905, %v1896, %v1904
    %v1909 = vmul.f32 %v1670, %v1906
    %v1910 = vmul.f32 %v1672, %v1903
    %v1911 = vmul.f32 %v1671, %v1906
    %v1912 = vmul.f32 %v1673, %v1903
    %1913 = vadd.xlane.f32.xlu0 %v1909
    %v1914 = vpop.xlane.xlu0 %1913
    %vm1915 = vcmask 1045504
    %v1916 = vsel %vm1915, %v1910, 0.0
    %1917 = vadd.xlane.f32.xlu0 %v1916
    %v1918 = vpop.xlane.xlu0 %1917
    %1919 = vadd.xlane.f32.xlu0 %v1911
    %v1920 = vpop.xlane.xlu0 %1919
    %v1921 = vsel %vm1915, %v1912, 0.0
    %1922 = vadd.xlane.f32.xlu0 %v1921
    %v1923 = vpop.xlane.xlu0 %1922
    %v1924 = vadd.f32 %v1914, 0.0
    %v1925 = vadd.f32 %v1918, 0.0
    %v1926 = vadd.f32 %v1920, 0.0
    %v1927 = vadd.f32 %v1923, 0.0
    %1944 = vset.pattern.permute.xlu0 0
    %1945 = vperm.xlu0 %1944, %v1690
    %v1946 = vpop.permute.xlu0 %1945
    %1947 = vset.pattern.permute.xlu0 0
    %1948 = vperm.xlu0 %1947, %v1691
    %v1949 = vpop.permute.xlu0 %1948
    %1950 = vset.pattern.permute.xlu0 0
    %1951 = vperm.xlu0 %1950, %v1692
    %v1952 = vpop.permute.xlu0 %1951
    %1953 = vset.pattern.permute.xlu0 0
    %1954 = vperm.xlu0 %1953, %v1693
    %v1955 = vpop.permute.xlu0 %1954
    %1956 = vset.pattern.permute.xlu0 0
    %1957 = vperm.xlu0 %1956, %v1694
    %v1958 = vpop.permute.xlu0 %1957
    %1959 = vset.pattern.permute.xlu0 0
    %1960 = vperm.xlu0 %1959, %v1695
    %v1961 = vpop.permute.xlu0 %1960
    %1962 = vset.pattern.permute.xlu0 0
    %1963 = vperm.xlu0 %1962, %v1696
    %v1964 = vpop.permute.xlu0 %1963
    %1965 = vset.pattern.permute.xlu0 0
    %1966 = vperm.xlu0 %1965, %v1697
    %v1967 = vpop.permute.xlu0 %1966
    %1968 = vset.pattern.permute.xlu0 0
    %1969 = vperm.xlu0 %1968, %v1698
    %v1970 = vpop.permute.xlu0 %1969
    %1971 = vset.pattern.permute.xlu0 0
    %1972 = vperm.xlu0 %1971, %v1699
    %v1973 = vpop.permute.xlu0 %1972
    %1974 = vset.pattern.permute.xlu0 0
    %1975 = vperm.xlu0 %1974, %v1700
    %v1976 = vpop.permute.xlu0 %1975
    %1977 = vset.pattern.permute.xlu0 0
    %1978 = vperm.xlu0 %1977, %v1701
    %v1979 = vpop.permute.xlu0 %1978
    %1980 = vset.pattern.permute.xlu0 0
    %1981 = vperm.xlu0 %1980, %v1702
    %v1982 = vpop.permute.xlu0 %1981
    %1983 = vset.pattern.permute.xlu0 0
    %1984 = vperm.xlu0 %1983, %v1703
    %v1985 = vpop.permute.xlu0 %1984
    %1986 = vset.pattern.permute.xlu0 0
    %1987 = vperm.xlu0 %1986, %v1704
    %v1988 = vpop.permute.xlu0 %1987
    %1989 = vset.pattern.permute.xlu0 0
    %1990 = vperm.xlu0 %1989, %v1705
    %v1991 = vpop.permute.xlu0 %1990
    %v1992 = vlaneseq
    %v1993 = vshrl.u32 %v1992, 7
    %v1994 = vsub.s32 %v1787, %v1993
    %v1995 = vrot.slane %v1946, %v1994
    %v1996 = vlaneseq
    %v1997 = vshrl.u32 %v1996, 7
    %v1998 = vsub.s32 %v1792, %v1997
    %v1999 = vrot.slane %v1949, %v1998
    %v2000 = vsel %vm1797, %v1999, %v1995
    %v2001 = vlaneseq
    %v2002 = vshrl.u32 %v2001, 7
    %v2003 = vsub.s32 %v1799, %v2002
    %v2004 = vrot.slane %v1952, %v2003
    %v2005 = vsel %vm1804, %v2004, %v2000
    %v2006 = vlaneseq
    %v2007 = vshrl.u32 %v2006, 7
    %v2008 = vsub.s32 %v1806, %v2007
    %v2009 = vrot.slane %v1955, %v2008
    %v2010 = vsel %vm1811, %v2009, %v2005
    %v2011 = vlaneseq
    %v2012 = vshrl.u32 %v2011, 7
    %v2013 = vsub.s32 %v1813, %v2012
    %v2014 = vrot.slane %v1958, %v2013
    %v2015 = vsel %vm1818, %v2014, %v2010
    %v2016 = vlaneseq
    %v2017 = vshrl.u32 %v2016, 7
    %v2018 = vsub.s32 %v1820, %v2017
    %v2019 = vrot.slane %v1961, %v2018
    %v2020 = vsel %vm1825, %v2019, %v2015
    %v2021 = vlaneseq
    %v2022 = vshrl.u32 %v2021, 7
    %v2023 = vsub.s32 %v1827, %v2022
    %v2024 = vrot.slane %v1964, %v2023
    %v2025 = vsel %vm1832, %v2024, %v2020
    %v2026 = vlaneseq
    %v2027 = vshrl.u32 %v2026, 7
    %v2028 = vsub.s32 %v1834, %v2027
    %v2029 = vrot.slane %v1967, %v2028
    %v2030 = vsel %vm1839, %v2029, %v2025
    %v2031 = vlaneseq
    %v2032 = vshrl.u32 %v2031, 7
    %v2033 = vsub.s32 %v1841, %v2032
    %v2034 = vrot.slane %v1970, %v2033
    %v2035 = vsel %vm1846, %v2034, %v2030
    %v2036 = vlaneseq
    %v2037 = vshrl.u32 %v2036, 7
    %v2038 = vsub.s32 %v1848, %v2037
    %v2039 = vrot.slane %v1973, %v2038
    %v2040 = vsel %vm1853, %v2039, %v2035
    %v2041 = vlaneseq
    %v2042 = vshrl.u32 %v2041, 7
    %v2043 = vsub.s32 %v1855, %v2042
    %v2044 = vrot.slane %v1976, %v2043
    %v2045 = vsel %vm1860, %v2044, %v2040
    %v2046 = vlaneseq
    %v2047 = vshrl.u32 %v2046, 7
    %v2048 = vsub.s32 %v1862, %v2047
    %v2049 = vrot.slane %v1979, %v2048
    %v2050 = vsel %vm1867, %v2049, %v2045
    %v2051 = vlaneseq
    %v2052 = vshrl.u32 %v2051, 7
    %v2053 = vsub.s32 %v1869, %v2052
    %v2054 = vrot.slane %v1982, %v2053
    %v2055 = vsel %vm1874, %v2054, %v2050
    %v2056 = vlaneseq
    %v2057 = vshrl.u32 %v2056, 7
    %v2058 = vsub.s32 %v1876, %v2057
    %v2059 = vrot.slane %v1985, %v2058
    %v2060 = vsel %vm1881, %v2059, %v2055
    %v2061 = vlaneseq
    %v2062 = vshrl.u32 %v2061, 7
    %v2063 = vsub.s32 %v1883, %v2062
    %v2064 = vrot.slane %v1988, %v2063
    %v2065 = vsel %vm1888, %v2064, %v2060
    %v2066 = vlaneseq
    %v2067 = vshrl.u32 %v2066, 7
    %v2068 = vsub.s32 %v1890, %v2067
    %v2069 = vrot.slane %v1991, %v2068
    %v2070 = vsel %vm1895, %v2069, %v2065
    %v2071 = vsel %vm1899, %v2070, %v2070
    %v2072 = vsel %vm330, %v2070, %v2071
    %v2073 = vsel %vm1902, %v2070, %v2072
    %v2074 = vsel %vm332, %v2070, %v2073
    %v2075 = vsel %vm1905, %v2070, %v2074
    %v2076 = vsel %vm328, %v2070, %v2070
    %v2077 = vsel %vm1899, %v2070, %v2076
    %v2078 = vsel %vm330, %v2070, %v2077
    %v2079 = vsel %vm1902, %v2070, %v2078
    %v2080 = vsel %vm332, %v2070, %v2079
    %v2083 = vmul.f32 %v1670, %v2075
    %v2084 = vmul.f32 %v1672, %v2080
    %v2085 = vmul.f32 %v1671, %v2075
    %v2086 = vmul.f32 %v1673, %v2080
    %vm2087 = vcmask 1047553
    %v2088 = vsel %vm2087, %v2083, 0.0
    %2089 = vadd.xlane.f32.xlu0 %v2088
    %v2090 = vpop.xlane.xlu0 %2089
    %v2091 = vsel %vm855, %v2084, 0.0
    %2092 = vadd.xlane.f32.xlu0 %v2091
    %v2093 = vpop.xlane.xlu0 %2092
    %v2094 = vsel %vm2087, %v2085, 0.0
    %2095 = vadd.xlane.f32.xlu0 %v2094
    %v2096 = vpop.xlane.xlu0 %2095
    %v2097 = vsel %vm855, %v2086, 0.0
    %2098 = vadd.xlane.f32.xlu0 %v2097
    %v2099 = vpop.xlane.xlu0 %2098
    %v2104 = vrot.slane %v2090, 1
    %v2105 = vrot.slane %v2093, 1
    %v2106 = vsel %vm855, %v2104, %v2105
    %v2107 = vrot.slane %v2096, 1
    %v2108 = vrot.slane %v2099, 1
    %v2109 = vsel %vm855, %v2107, %v2108
    %v2114 = vadd.f32 %v1924, %v2106
    %v2115 = vadd.f32 %v1925, %v2105
    %v2116 = vadd.f32 %v1926, %v2109
    %v2117 = vadd.f32 %v1927, %v2108
    %2134 = vset.pattern.permute.xlu0 0
    %2135 = vperm.xlu0 %2134, %v1706
    %v2136 = vpop.permute.xlu0 %2135
    %2137 = vset.pattern.permute.xlu0 0
    %2138 = vperm.xlu0 %2137, %v1707
    %v2139 = vpop.permute.xlu0 %2138
    %2140 = vset.pattern.permute.xlu0 0
    %2141 = vperm.xlu0 %2140, %v1708
    %v2142 = vpop.permute.xlu0 %2141
    %2143 = vset.pattern.permute.xlu0 0
    %2144 = vperm.xlu0 %2143, %v1709
    %v2145 = vpop.permute.xlu0 %2144
    %2146 = vset.pattern.permute.xlu0 0
    %2147 = vperm.xlu0 %2146, %v1710
    %v2148 = vpop.permute.xlu0 %2147
    %2149 = vset.pattern.permute.xlu0 0
    %2150 = vperm.xlu0 %2149, %v1711
    %v2151 = vpop.permute.xlu0 %2150
    %2152 = vset.pattern.permute.xlu0 0
    %2153 = vperm.xlu0 %2152, %v1712
    %v2154 = vpop.permute.xlu0 %2153
    %2155 = vset.pattern.permute.xlu0 0
    %2156 = vperm.xlu0 %2155, %v1713
    %v2157 = vpop.permute.xlu0 %2156
    %2158 = vset.pattern.permute.xlu0 0
    %2159 = vperm.xlu0 %2158, %v1714
    %v2160 = vpop.permute.xlu0 %2159
    %2161 = vset.pattern.permute.xlu0 0
    %2162 = vperm.xlu0 %2161, %v1715
    %v2163 = vpop.permute.xlu0 %2162
    %2164 = vset.pattern.permute.xlu0 0
    %2165 = vperm.xlu0 %2164, %v1716
    %v2166 = vpop.permute.xlu0 %2165
    %2167 = vset.pattern.permute.xlu0 0
    %2168 = vperm.xlu0 %2167, %v1717
    %v2169 = vpop.permute.xlu0 %2168
    %2170 = vset.pattern.permute.xlu0 0
    %2171 = vperm.xlu0 %2170, %v1718
    %v2172 = vpop.permute.xlu0 %2171
    %2173 = vset.pattern.permute.xlu0 0
    %2174 = vperm.xlu0 %2173, %v1719
    %v2175 = vpop.permute.xlu0 %2174
    %2176 = vset.pattern.permute.xlu0 0
    %2177 = vperm.xlu0 %2176, %v1720
    %v2178 = vpop.permute.xlu0 %2177
    %2179 = vset.pattern.permute.xlu0 0
    %2180 = vperm.xlu0 %2179, %v1721
    %v2181 = vpop.permute.xlu0 %2180
    %v2182 = vlaneseq
    %v2183 = vshrl.u32 %v2182, 7
    %v2184 = vsub.s32 %v1787, %v2183
    %v2185 = vrot.slane %v2136, %v2184
    %v2186 = vlaneseq
    %v2187 = vshrl.u32 %v2186, 7
    %v2188 = vsub.s32 %v1792, %v2187
    %v2189 = vrot.slane %v2139, %v2188
    %v2190 = vsel %vm1797, %v2189, %v2185
    %v2191 = vlaneseq
    %v2192 = vshrl.u32 %v2191, 7
    %v2193 = vsub.s32 %v1799, %v2192
    %v2194 = vrot.slane %v2142, %v2193
    %v2195 = vsel %vm1804, %v2194, %v2190
    %v2196 = vlaneseq
    %v2197 = vshrl.u32 %v2196, 7
    %v2198 = vsub.s32 %v1806, %v2197
    %v2199 = vrot.slane %v2145, %v2198
    %v2200 = vsel %vm1811, %v2199, %v2195
    %v2201 = vlaneseq
    %v2202 = vshrl.u32 %v2201, 7
    %v2203 = vsub.s32 %v1813, %v2202
    %v2204 = vrot.slane %v2148, %v2203
    %v2205 = vsel %vm1818, %v2204, %v2200
    %v2206 = vlaneseq
    %v2207 = vshrl.u32 %v2206, 7
    %v2208 = vsub.s32 %v1820, %v2207
    %v2209 = vrot.slane %v2151, %v2208
    %v2210 = vsel %vm1825, %v2209, %v2205
    %v2211 = vlaneseq
    %v2212 = vshrl.u32 %v2211, 7
    %v2213 = vsub.s32 %v1827, %v2212
    %v2214 = vrot.slane %v2154, %v2213
    %v2215 = vsel %vm1832, %v2214, %v2210
    %v2216 = vlaneseq
    %v2217 = vshrl.u32 %v2216, 7
    %v2218 = vsub.s32 %v1834, %v2217
    %v2219 = vrot.slane %v2157, %v2218
    %v2220 = vsel %vm1839, %v2219, %v2215
    %v2221 = vlaneseq
    %v2222 = vshrl.u32 %v2221, 7
    %v2223 = vsub.s32 %v1841, %v2222
    %v2224 = vrot.slane %v2160, %v2223
    %v2225 = vsel %vm1846, %v2224, %v2220
    %v2226 = vlaneseq
    %v2227 = vshrl.u32 %v2226, 7
    %v2228 = vsub.s32 %v1848, %v2227
    %v2229 = vrot.slane %v2163, %v2228
    %v2230 = vsel %vm1853, %v2229, %v2225
    %v2231 = vlaneseq
    %v2232 = vshrl.u32 %v2231, 7
    %v2233 = vsub.s32 %v1855, %v2232
    %v2234 = vrot.slane %v2166, %v2233
    %v2235 = vsel %vm1860, %v2234, %v2230
    %v2236 = vlaneseq
    %v2237 = vshrl.u32 %v2236, 7
    %v2238 = vsub.s32 %v1862, %v2237
    %v2239 = vrot.slane %v2169, %v2238
    %v2240 = vsel %vm1867, %v2239, %v2235
    %v2241 = vlaneseq
    %v2242 = vshrl.u32 %v2241, 7
    %v2243 = vsub.s32 %v1869, %v2242
    %v2244 = vrot.slane %v2172, %v2243
    %v2245 = vsel %vm1874, %v2244, %v2240
    %v2246 = vlaneseq
    %v2247 = vshrl.u32 %v2246, 7
    %v2248 = vsub.s32 %v1876, %v2247
    %v2249 = vrot.slane %v2175, %v2248
    %v2250 = vsel %vm1881, %v2249, %v2245
    %v2251 = vlaneseq
    %v2252 = vshrl.u32 %v2251, 7
    %v2253 = vsub.s32 %v1883, %v2252
    %v2254 = vrot.slane %v2178, %v2253
    %v2255 = vsel %vm1888, %v2254, %v2250
    %v2256 = vlaneseq
    %v2257 = vshrl.u32 %v2256, 7
    %v2258 = vsub.s32 %v1890, %v2257
    %v2259 = vrot.slane %v2181, %v2258
    %v2260 = vsel %vm1895, %v2259, %v2255
    %v2261 = vsel %vm330, %v2260, %v2260
    %v2262 = vsel %vm1902, %v2260, %v2261
    %v2263 = vsel %vm332, %v2260, %v2262
    %v2264 = vsel %vm1905, %v2260, %v2263
    %v2265 = vsel %vm328, %v2260, %v2260
    %v2266 = vsel %vm1899, %v2260, %v2265
    %v2267 = vsel %vm330, %v2260, %v2266
    %v2268 = vsel %vm1902, %v2260, %v2267
    %v2269 = vsel %vm332, %v2260, %v2268
    %v2270 = vsel %vm1905, %v2260, %v2269
    %v2273 = vmul.f32 %v1670, %v2264
    %v2274 = vmul.f32 %v1672, %v2270
    %v2275 = vmul.f32 %v1671, %v2264
    %v2276 = vmul.f32 %v1673, %v2270
    %vm2277 = vcmask 1047554
    %v2278 = vsel %vm2277, %v2273, 0.0
    %2279 = vadd.xlane.f32.xlu0 %v2278
    %v2280 = vpop.xlane.xlu0 %2279
    %2281 = vadd.xlane.f32.xlu0 %v2274
    %v2282 = vpop.xlane.xlu0 %2281
    %v2283 = vsel %vm2277, %v2275, 0.0
    %2284 = vadd.xlane.f32.xlu0 %v2283
    %v2285 = vpop.xlane.xlu0 %2284
    %2286 = vadd.xlane.f32.xlu0 %v2276
    %v2287 = vpop.xlane.xlu0 %2286
    %v2292 = vrot.slane %v2280, 2
    %v2293 = vrot.slane %v2282, 2
    %v2294 = vsel %vm1915, %v2292, %v2293
    %v2295 = vrot.slane %v2285, 2
    %v2296 = vrot.slane %v2287, 2
    %v2297 = vsel %vm1915, %v2295, %v2296
    %v2302 = vadd.f32 %v2114, %v2294
    %v2303 = vadd.f32 %v2115, %v2293
    %v2304 = vadd.f32 %v2116, %v2297
    %v2305 = vadd.f32 %v2117, %v2296
    %2310 = vset.pattern.permute.xlu0 0
    %2311 = vperm.xlu0 %2310, %v2302
    %v2312 = vpop.permute.xlu0 %2311
    %2313 = vset.pattern.permute.xlu0 0
    %2314 = vperm.xlu0 %2313, %v2303
    %v2315 = vpop.permute.xlu0 %2314
    %2316 = vset.pattern.permute.xlu0 0
    %2317 = vperm.xlu0 %2316, %v2304
    %v2318 = vpop.permute.xlu0 %2317
    %2319 = vset.pattern.permute.xlu0 0
    %2320 = vperm.xlu0 %2319, %v2305
    %v2321 = vpop.permute.xlu0 %2320
    %v2322 = vlaneseq
    %v2323 = vshrl.u32 %v2322, 7
    %v2324 = vsub.s32 %v1787, %v2323
    %v2325 = vrot.slane %v2312, %v2324
    %v2326 = vlaneseq
    %v2327 = vshrl.u32 %v2326, 7
    %v2328 = vsub.s32 %v1792, %v2327
    %v2329 = vrot.slane %v2315, %v2328
    %v2330 = vsel %vm1797, %v2329, %v2325
    %v2331 = vlaneseq
    %v2332 = vshrl.u32 %v2331, 7
    %v2333 = vsub.s32 %v1787, %v2332
    %v2334 = vrot.slane %v2318, %v2333
    %v2335 = vlaneseq
    %v2336 = vshrl.u32 %v2335, 7
    %v2337 = vsub.s32 %v1792, %v2336
    %v2338 = vrot.slane %v2321, %v2337
    %v2339 = vsel %vm1797, %v2338, %v2334
    %v2340 = vsel %vm1897, %v2339, %v2330
    %vm2342 = vcmask 107520
    %v2343 = vsel %vm2342, %v2340, 0.0
    %2344 = vadd.xlane.f32.xlu0 %v2343
    %v2345 = vpop.xlane.xlu0 %2344
    %v2346 = vrcp.pop 14.0
    %v2347 = vmul.f32 %v2345, %v2346
    %v2348 = vld [vmem:[#allocation2] sm:$0x1]
    %s2349 = vtos %v2348
    %v2350 = vstv %s2349
    %v2351 = vadd.f32 %v2347, %v2350
    %v2353 = vlaneseq
    %v2354 = vshrl.u32 %v2353, 7
    %v2355 = vsub.s32 %v1787, %v2354
    %v2356 = vrot.slane %v2351, %v2355
    %vm2358 = vcmask 8192
    %2359 = vst.msk [vmem:[#allocation3] sm:$0x1] %vm2358, %v2356
    // Predicated region
    $region30: #{aotn_forward.35} parent=1 // pred_check
      _
    $region31: #{aotn_forward.35} parent=1 // pred_check_branch
      %2361 = sbr.rel (0) target = $region33
    $region32: #{aotn_forward.35} parent=1 // pred_region
      %s2363 = ssub.s32 16, 16
      %2364 = vsyncadd [#allocation4], %s2363
      %s2366 = sshll.u32 [#allocation3], 4
      %s2367 = int_to_ptr.vmem [resolvable:$true] %s2366
      %2369 = dma.vmem_to_hbm [thread:$0]  %s2367, 16, %s7, [#allocation4]
    $region33: #{aotn_forward.35} parent=1 // pred_fallthru
      _
    // Predicated region
    $region34: #{aotn_forward.35} parent=1 // pred_check
      _
    $region35: #{aotn_forward.35} parent=1 // pred_check_branch
      %2371 = sbr.rel (0) target = $region37
    $region36: #{aotn_forward.35} parent=1 // pred_region
      %2372 = dma.done [#allocation4], 16
    $region37: #{aotn_forward.35} parent=1 // pred_fallthru
      _
    %2373 = vsyncpa [#allocation4], 1

</llo_original>
